<compile_context>
chip_gen: v7x
topology: tpu7x:2x2x1
jax: 0.10.0
libtpu: 0.0.40
codegen_flags: <defaults>
</compile_context>

<pallas_src>
import functools

import jax
import jax.numpy as jnp
from jax.experimental import pallas as pl
from jax.experimental.pallas import tpu as pltpu

C_SE = 144      # in-channels of conv2d77 (SE squeeze path)
C = 576         # out-channels of conv2d77 / in & out channels of conv2d78
H = W = 14
HW = H * W      # 196
HW_PAD = ((HW + 127) // 128) * 128   # 196 -> 256 lane padding inside VMEM


def _prefer_even_grid_steps():
    """v7x shards a 'parallel' grid axis across its 2 TensorCores; an odd step count
    leaves one core an extra step. v5e/v6e have a single TC -> biggest block wins."""
    try:
        kind = jax.devices()[0].device_kind.lower()
    except Exception:
        return False
    return ("v7" in kind) or ("7x" in kind)


def _pick_bn(n, itemsize, prefer_even_steps):
    """Largest divisor of n (samples per grid step). bf16 activations allow bn=16,
    f32 bn=8 (padding-aware VMEM accounting below keeps this under v7x's 64 MiB)."""
    # TODO(synk): prime / non-divisible N degrades to bn=1; a cdiv grid + tail mask
    # would be better for odd batch sizes.
    max_bn = 16 if itemsize <= 2 else 8
    divs = [d for d in range(1, n + 1) if n % d == 0 and d <= max_bn]
    bn = divs[-1]
    if prefer_even_steps:
        even = [d for d in divs if (n // d) % 2 == 0]
        if even:
            bn = even[-1]
    return bn


def prepare_params(w1, b1, w2):
    """One-time parameter preparation (at load time, NOT per forward call)."""
    return (w1.astype(jnp.bfloat16),                    # conv2d77 weight (576,144) bf16
            b1.astype(jnp.float32).reshape(C, 1),       # conv2d77 bias as a column
            w2.astype(jnp.bfloat16))                    # conv2d78 weight (576,576) bf16


def se_gate_conv_kernel(bn, xse_ref, w1_ref, b1_ref, x_ref, w2_ref, o_ref, g_scr):
    # xse_ref: (N, C_SE)        whole SE input, resident (tiny)
    # w1_ref:  (C, C_SE) bf16   conv2d77 weight
    # b1_ref:  (C, 1)    f32    conv2d77 bias (column)
    # x_ref:   (bn, C, HW)      activation block (bf16 or f32)
    # w2_ref:  (C, C)    bf16   conv2d78 weight
    # o_ref:   (bn, C, HW)      output block (same dtype as x239)
    # g_scr:   (C, bn)   f32    per-sample sigmoid gate columns (VMEM scratch)
    i = pl.program_id(0)

    # --- SE gate for the whole bn-block, column form (C, bn) ---
    se = jnp.maximum(xse_ref[pl.ds(i * bn, bn), :], 0.0).astype(jnp.bfloat16)  # ReLU
    z = jax.lax.dot_general(
        w1_ref[...], se,
        dimension_numbers=(((1,), (1,)), ((), ())),       # contract the C_SE dims
        preferred_element_type=jnp.float32)                # (C, bn), f32 accumulation
    g_scr[...] = jax.nn.sigmoid(z + b1_ref[...])           # bias + sigmoid kept in f32

    # --- gated 1x1 conv (conv2d78): bf16 MXU matmul, f32 accumulation ---
    w2 = w2_ref[...]                                       # (C, C) bf16, hoisted

    def body(b, carry):
        gated = (x_ref[b] * g_scr[:, pl.ds(b, 1)]).astype(jnp.bfloat16)   # (C, HW)
        o_ref[b] = jnp.dot(w2, gated,
                           preferred_element_type=jnp.float32).astype(o_ref.dtype)
        return carry

    jax.lax.fori_loop(0, bn, body, 0, unroll=True)


def m_forward(x241, x239, w1b, b1c, w2b):
    """x241: (N, C_SE, 1, 1), x239: (N, C, H, W) NCHW (bf16 or f32).
    (w1b, b1c, w2b) come from prepare_params(). Output dtype == x239.dtype."""
    N = x239.shape[0]
    out_dtype = x239.dtype
    bn = _pick_bn(N, x239.dtype.itemsize, _prefer_even_grid_steps())

    xse = x241.reshape(N, C_SE)            # free reshape
    x = x239.reshape(N, C, HW)             # free reshape, stays NCHW

    # Padding-aware VMEM budget: in+out blocks double-buffered, resident weights,
    # scratch/temporaries headroom. Capped well under v7x's 64 MiB physical VMEM.
    blk_bytes = bn * C * HW_PAD * (x.dtype.itemsize + jnp.dtype(out_dtype).itemsize)
    weight_bytes = 2 * (w1b.size * w1b.dtype.itemsize + w2b.size * w2b.dtype.itemsize)
    vmem_limit = int(min(56 * 2**20, 2 * blk_bytes + weight_bytes + 12 * 2**20))

    cost = pl.CostEstimate(
        flops=2 * C * C * HW * N + 2 * C * C_SE * N,
        transcendentals=N * C,
        bytes_accessed=int(x.size * x.dtype.itemsize
                           + N * C * HW * jnp.dtype(out_dtype).itemsize
                           + xse.size * xse.dtype.itemsize
                           + w1b.size * w1b.dtype.itemsize
                           + w2b.size * w2b.dtype.itemsize
                           + b1c.size * b1c.dtype.itemsize),
    )

    out = pl.pallas_call(
        functools.partial(se_gate_conv_kernel, bn),
        out_shape=jax.ShapeDtypeStruct((N, C, HW), out_dtype),
        grid_spec=pltpu.PrefetchScalarGridSpec(
            num_scalar_prefetch=0,
            grid=(N // bn,),
            in_specs=[
                pl.BlockSpec((N, C_SE), lambda i: (0, 0)),       # xse: tiny, resident
                pl.BlockSpec((C, C_SE), lambda i: (0, 0)),       # w1 (bf16)
                pl.BlockSpec((C, 1), lambda i: (0, 0)),          # b1 column (f32)
                pl.BlockSpec((bn, C, HW), lambda i: (i, 0, 0)),  # x block: bn samples
                pl.BlockSpec((C, C), lambda i: (0, 0)),          # w2 (bf16)
            ],
            out_specs=pl.BlockSpec((bn, C, HW), lambda i: (i, 0, 0)),
            scratch_shapes=[pltpu.VMEM((C, bn), jnp.float32)],   # gate columns
        ),
        compiler_params=pltpu.CompilerParams(
            dimension_semantics=("parallel",),
            vmem_limit_bytes=vmem_limit,
        ),
        cost_estimate=cost,
    )(xse, w1b, b1c, x, w2b)

    return out.reshape(N, C, H, W)


def reference_forward(x241, x239, w1, b1, w2):
    """Pure-JAX f32 reference with the original module's semantics."""
    x241 = x241.astype(jnp.float32)
    x239 = x239.astype(jnp.float32)
    N = x239.shape[0]
    se = jnp.maximum(x241.reshape(N, C_SE), 0.0)
    g = jax.nn.sigmoid(se @ w1.T + b1)                 # (N, C)
    xg = x239 * g[:, :, None, None]                    # (N, C, H, W)
    return jnp.einsum('oc,nchw->nohw', w2, xg)


def reference_forward_mixed(x241, x239, w1, b1, w2):
    """Reference mirroring the kernel's numerics (bf16 matmul operands, f32 accum)."""
    N = x239.shape[0]
    se = jnp.maximum(x241.reshape(N, C_SE), 0.0).astype(jnp.bfloat16)
    z = jnp.einsum('nc,oc->no', se, w1.astype(jnp.bfloat16),
                   preferred_element_type=jnp.float32)
    g = jax.nn.sigmoid(z + b1)
    xg = (x239.astype(jnp.float32) * g[:, :, None, None]).astype(jnp.bfloat16)
    return jnp.einsum('oc,nchw->nohw', w2.astype(jnp.bfloat16), xg,
                      preferred_element_type=jnp.float32)


if __name__ == "__main__":
    key = jax.random.PRNGKey(0)
    k1, k2, k3, k4, k5 = jax.random.split(key, 5)

    # deterministic synthetic parameters (shapes from the module __init__)
    w1 = jax.random.normal(k1, (C, C_SE), dtype=jnp.float32) * 0.05   # conv2d77 weight
    b1 = jax.random.normal(k2, (C,), dtype=jnp.float32) * 0.05        # conv2d77 bias
    w2 = jax.random.normal(k3, (C, C), dtype=jnp.float32) * 0.05      # conv2d78 weight
    params = prepare_params(w1, b1, w2)                               # one-time prep

    # small batch (N=4) to exercise the batched grid
    N = 4
    # primary perf path: bf16 activations end-to-end (half the HBM traffic)
    x241 = jax.random.normal(k4, (N, C_SE, 1, 1), dtype=jnp.float32).astype(jnp.bfloat16)
    x239 = jax.random.normal(k5, (N, C, H, W), dtype=jnp.float32).astype(jnp.bfloat16)

    out = jax.block_until_ready(m_forward(x241, x239, *params))
    assert out.shape == (N, C, H, W), out.shape
    assert out.dtype == jnp.bfloat16, out.dtype

    o32 = out.astype(jnp.float32)
    ref_mixed = reference_forward_mixed(x241, x239, w1, b1, w2).astype(out.dtype).astype(jnp.float32)
    ref_f32 = reference_forward(x241, x239, w1, b1, w2)
    assert jnp.allclose(o32, ref_mixed, atol=2e-2, rtol=2e-2), \
        float(jnp.max(jnp.abs(o32 - ref_mixed)))
    assert jnp.allclose(o32, ref_f32, atol=8e-2, rtol=8e-2), \
        float(jnp.max(jnp.abs(o32 - ref_f32)))

    # f32 activation path also supported (module-fidelity check, same kernel)
    x241f = x241.astype(jnp.float32)
    x239f = x239.astype(jnp.float32)
    outf = jax.block_until_ready(m_forward(x241f, x239f, *params))
    assert outf.dtype == jnp.float32
    ref_f32b = reference_forward(x241f, x239f, w1, b1, w2)
    assert jnp.allclose(outf, ref_f32b, atol=5e-2, rtol=5e-2), \
        float(jnp.max(jnp.abs(outf - ref_f32b)))

    print("KERNEL_OK")
</pallas_src>

<mosaic_0001>
module attributes {stable_mosaic.version = 11 : i64} {
  func.func @se_gate_conv_kernel(%arg0: i32, %arg1: memref<4x144xbf16, #tpu.memory_space<vmem>>, %arg2: memref<576x144xbf16, #tpu.memory_space<vmem>>, %arg3: memref<576x1xf32, #tpu.memory_space<vmem>>, %arg4: memref<4x576x196xbf16, #tpu.memory_space<vmem>>, %arg5: memref<576x576xbf16, #tpu.memory_space<vmem>>, %arg6: memref<4x576x196xbf16, #tpu.memory_space<vmem>>, %arg7: memref<576x4xf32, #tpu.memory_space<vmem>>) attributes {dimension_semantics = [#tpu.dimension_semantics<parallel>], iteration_bounds = array<i64: 1>, scalar_prefetch = 0 : i64, scratch_operands = 1 : i64, tpu.core_type = #tpu.core_type<tc>, window_params = [{pipeline_mode = #tpu.pipeline_mode<synchronous>, transform_indices = @transform_0, window_bounds = array<i64: 4, 144>}, {pipeline_mode = #tpu.pipeline_mode<synchronous>, transform_indices = @transform_1, window_bounds = array<i64: 576, 144>}, {pipeline_mode = #tpu.pipeline_mode<synchronous>, transform_indices = @transform_2, window_bounds = array<i64: 576, 1>}, {transform_indices = @transform_3, window_bounds = array<i64: 4, 576, 196>}, {pipeline_mode = #tpu.pipeline_mode<synchronous>, transform_indices = @transform_4, window_bounds = array<i64: 576, 576>}, {transform_indices = @transform_5, window_bounds = array<i64: 4, 576, 196>}]} {
    %c4_i32 = arith.constant 4 : i32
    %0 = arith.muli %arg0, %c4_i32 : i32
    %1 = arith.index_cast %0 : i32 to index
    %c0 = arith.constant 0 : index
    %2 = vector.load %arg1[%1, %c0] : memref<4x144xbf16, #tpu.memory_space<vmem>>, vector<4x144xbf16>
    %cst = arith.constant 0.000000e+00 : bf16
    %3 = vector.broadcast %cst : bf16 to vector<4x144xbf16>
    %4 = arith.maximumf %2, %3 : vector<4x144xbf16>
    %c0_0 = arith.constant 0 : index
    %c0_1 = arith.constant 0 : index
    %5 = vector.load %arg2[%c0_0, %c0_1] : memref<576x144xbf16, #tpu.memory_space<vmem>>, vector<576x144xbf16>
    %cst_2 = arith.constant dense<0.000000e+00> : vector<576x4xf32>
    %6 = tpu.matmul %5, %4, %cst_2 {dimension_numbers = #tpu.dot_dimension_numbers<[1], [1], [0], [0], [0, 0, 1, 0], [], []>} : vector<576x144xbf16>, vector<4x144xbf16>, vector<576x4xf32> -> vector<576x4xf32>
    %c0_3 = arith.constant 0 : index
    %c0_4 = arith.constant 0 : index
    %7 = vector.load %arg3[%c0_3, %c0_4] : memref<576x1xf32, #tpu.memory_space<vmem>>, vector<576x1xf32>
    %8 = vector.broadcast %7 : vector<576x1xf32> to vector<576x4xf32>
    %9 = arith.addf %6, %8 : vector<576x4xf32>
    %10 = arith.negf %9 : vector<576x4xf32>
    %11 = math.exp %10 : vector<576x4xf32>
    %cst_5 = arith.constant 1.000000e+00 : f32
    %12 = vector.broadcast %cst_5 : f32 to vector<576x4xf32>
    %13 = arith.addf %12, %11 : vector<576x4xf32>
    %14 = arith.divf %12, %13 : vector<576x4xf32>
    %c0_6 = arith.constant 0 : index
    %c0_7 = arith.constant 0 : index
    %15 = vector.load %arg7[%c0_6, %c0_7] : memref<576x4xf32, #tpu.memory_space<vmem>>, vector<576x4xf32>
    tpu.vector_store %arg7[%c0_6, %c0_7], %14 {strides = array<i32>} : memref<576x4xf32, #tpu.memory_space<vmem>>, vector<576x4xf32>,
    %c0_8 = arith.constant 0 : index
    %c0_9 = arith.constant 0 : index
    %16 = vector.load %arg5[%c0_8, %c0_9] : memref<576x576xbf16, #tpu.memory_space<vmem>>, vector<576x576xbf16>
    %c0_i32 = arith.constant 0 : i32
    %17 = arith.index_cast %c0_i32 : i32 to index
    %c0_10 = arith.constant 0 : index
    %c0_11 = arith.constant 0 : index
    %18 = vector.load %arg4[%17, %c0_10, %c0_11] : memref<4x576x196xbf16, #tpu.memory_space<vmem>>, vector<1x576x196xbf16>
    %19 = vector.shape_cast %18 : vector<1x576x196xbf16> to vector<576x196xbf16>
    %c0_12 = arith.constant 0 : index
    %20 = arith.index_cast %c0_i32 : i32 to index
    %21 = vector.load %arg7[%c0_12, %20] : memref<576x4xf32, #tpu.memory_space<vmem>>, vector<576x1xf32>
    %22 = arith.extf %19 : vector<576x196xbf16> to vector<576x196xf32>
    %23 = vector.broadcast %21 : vector<576x1xf32> to vector<576x196xf32>
    %24 = arith.mulf %22, %23 : vector<576x196xf32>
    %25 = arith.truncf %24 : vector<576x196xf32> to vector<576x196xbf16>
    %cst_13 = arith.constant dense<0.000000e+00> : vector<576x196xf32>
    %26 = tpu.matmul %16, %25, %cst_13 {dimension_numbers = #tpu.dot_dimension_numbers<[1], [0], [0], [1], [0, 0, 1, 1], [], []>} : vector<576x576xbf16>, vector<576x196xbf16>, vector<576x196xf32> -> vector<576x196xf32>
    %27 = arith.truncf %26 : vector<576x196xf32> to vector<576x196xbf16>
    %28 = arith.index_cast %c0_i32 : i32 to index
    %c0_14 = arith.constant 0 : index
    %c0_15 = arith.constant 0 : index
    %29 = vector.load %arg6[%28, %c0_14, %c0_15] : memref<4x576x196xbf16, #tpu.memory_space<vmem>>, vector<1x576x196xbf16>
    %30 = vector.shape_cast %29 : vector<1x576x196xbf16> to vector<576x196xbf16>
    %31 = vector.shape_cast %27 : vector<576x196xbf16> to vector<1x576x196xbf16>
    tpu.vector_store %arg6[%28, %c0_14, %c0_15], %31 {strides = array<i32>} : memref<4x576x196xbf16, #tpu.memory_space<vmem>>, vector<1x576x196xbf16>,
    %c1_i32 = arith.constant 1 : i32
    %32 = arith.index_cast %c1_i32 : i32 to index
    %c0_16 = arith.constant 0 : index
    %c0_17 = arith.constant 0 : index
    %33 = vector.load %arg4[%32, %c0_16, %c0_17] : memref<4x576x196xbf16, #tpu.memory_space<vmem>>, vector<1x576x196xbf16>
    %34 = vector.shape_cast %33 : vector<1x576x196xbf16> to vector<576x196xbf16>
    %c0_18 = arith.constant 0 : index
    %35 = arith.index_cast %c1_i32 : i32 to index
    %36 = vector.load %arg7[%c0_18, %35] : memref<576x4xf32, #tpu.memory_space<vmem>>, vector<576x1xf32>
    %37 = arith.extf %34 : vector<576x196xbf16> to vector<576x196xf32>
    %38 = vector.broadcast %36 : vector<576x1xf32> to vector<576x196xf32>
    %39 = arith.mulf %37, %38 : vector<576x196xf32>
    %40 = arith.truncf %39 : vector<576x196xf32> to vector<576x196xbf16>
    %cst_19 = arith.constant dense<0.000000e+00> : vector<576x196xf32>
    %41 = tpu.matmul %16, %40, %cst_19 {dimension_numbers = #tpu.dot_dimension_numbers<[1], [0], [0], [1], [0, 0, 1, 1], [], []>} : vector<576x576xbf16>, vector<576x196xbf16>, vector<576x196xf32> -> vector<576x196xf32>
    %42 = arith.truncf %41 : vector<576x196xf32> to vector<576x196xbf16>
    %43 = arith.index_cast %c1_i32 : i32 to index
    %c0_20 = arith.constant 0 : index
    %c0_21 = arith.constant 0 : index
    %44 = vector.load %arg6[%43, %c0_20, %c0_21] : memref<4x576x196xbf16, #tpu.memory_space<vmem>>, vector<1x576x196xbf16>
    %45 = vector.shape_cast %44 : vector<1x576x196xbf16> to vector<576x196xbf16>
    %46 = vector.shape_cast %42 : vector<576x196xbf16> to vector<1x576x196xbf16>
    tpu.vector_store %arg6[%43, %c0_20, %c0_21], %46 {strides = array<i32>} : memref<4x576x196xbf16, #tpu.memory_space<vmem>>, vector<1x576x196xbf16>,
    %c2_i32 = arith.constant 2 : i32
    %47 = arith.index_cast %c2_i32 : i32 to index
    %c0_22 = arith.constant 0 : index
    %c0_23 = arith.constant 0 : index
    %48 = vector.load %arg4[%47, %c0_22, %c0_23] : memref<4x576x196xbf16, #tpu.memory_space<vmem>>, vector<1x576x196xbf16>
    %49 = vector.shape_cast %48 : vector<1x576x196xbf16> to vector<576x196xbf16>
    %c0_24 = arith.constant 0 : index
    %50 = arith.index_cast %c2_i32 : i32 to index
    %51 = vector.load %arg7[%c0_24, %50] : memref<576x4xf32, #tpu.memory_space<vmem>>, vector<576x1xf32>
    %52 = arith.extf %49 : vector<576x196xbf16> to vector<576x196xf32>
    %53 = vector.broadcast %51 : vector<576x1xf32> to vector<576x196xf32>
    %54 = arith.mulf %52, %53 : vector<576x196xf32>
    %55 = arith.truncf %54 : vector<576x196xf32> to vector<576x196xbf16>
    %cst_25 = arith.constant dense<0.000000e+00> : vector<576x196xf32>
    %56 = tpu.matmul %16, %55, %cst_25 {dimension_numbers = #tpu.dot_dimension_numbers<[1], [0], [0], [1], [0, 0, 1, 1], [], []>} : vector<576x576xbf16>, vector<576x196xbf16>, vector<576x196xf32> -> vector<576x196xf32>
    %57 = arith.truncf %56 : vector<576x196xf32> to vector<576x196xbf16>
    %58 = arith.index_cast %c2_i32 : i32 to index
    %c0_26 = arith.constant 0 : index
    %c0_27 = arith.constant 0 : index
    %59 = vector.load %arg6[%58, %c0_26, %c0_27] : memref<4x576x196xbf16, #tpu.memory_space<vmem>>, vector<1x576x196xbf16>
    %60 = vector.shape_cast %59 : vector<1x576x196xbf16> to vector<576x196xbf16>
    %61 = vector.shape_cast %57 : vector<576x196xbf16> to vector<1x576x196xbf16>
    tpu.vector_store %arg6[%58, %c0_26, %c0_27], %61 {strides = array<i32>} : memref<4x576x196xbf16, #tpu.memory_space<vmem>>, vector<1x576x196xbf16>,
    %c3_i32 = arith.constant 3 : i32
    %62 = arith.index_cast %c3_i32 : i32 to index
    %c0_28 = arith.constant 0 : index
    %c0_29 = arith.constant 0 : index
    %63 = vector.load %arg4[%62, %c0_28, %c0_29] : memref<4x576x196xbf16, #tpu.memory_space<vmem>>, vector<1x576x196xbf16>
    %64 = vector.shape_cast %63 : vector<1x576x196xbf16> to vector<576x196xbf16>
    %c0_30 = arith.constant 0 : index
    %65 = arith.index_cast %c3_i32 : i32 to index
    %66 = vector.load %arg7[%c0_30, %65] : memref<576x4xf32, #tpu.memory_space<vmem>>, vector<576x1xf32>
    %67 = arith.extf %64 : vector<576x196xbf16> to vector<576x196xf32>
    %68 = vector.broadcast %66 : vector<576x1xf32> to vector<576x196xf32>
    %69 = arith.mulf %67, %68 : vector<576x196xf32>
    %70 = arith.truncf %69 : vector<576x196xf32> to vector<576x196xbf16>
    %cst_31 = arith.constant dense<0.000000e+00> : vector<576x196xf32>
    %71 = tpu.matmul %16, %70, %cst_31 {dimension_numbers = #tpu.dot_dimension_numbers<[1], [0], [0], [1], [0, 0, 1, 1], [], []>} : vector<576x576xbf16>, vector<576x196xbf16>, vector<576x196xf32> -> vector<576x196xf32>
    %72 = arith.truncf %71 : vector<576x196xf32> to vector<576x196xbf16>
    %73 = arith.index_cast %c3_i32 : i32 to index
    %c0_32 = arith.constant 0 : index
    %c0_33 = arith.constant 0 : index
    %74 = vector.load %arg6[%73, %c0_32, %c0_33] : memref<4x576x196xbf16, #tpu.memory_space<vmem>>, vector<1x576x196xbf16>
    %75 = vector.shape_cast %74 : vector<1x576x196xbf16> to vector<576x196xbf16>
    %76 = vector.shape_cast %72 : vector<576x196xbf16> to vector<1x576x196xbf16>
    tpu.vector_store %arg6[%73, %c0_32, %c0_33], %76 {strides = array<i32>} : memref<4x576x196xbf16, #tpu.memory_space<vmem>>, vector<1x576x196xbf16>,
    %c4_i32_34 = arith.constant 4 : i32
    return
  }
  func.func @transform_0(%arg0: i32) -> (i32, i32) {
    %c0_i32 = arith.constant 0 : i32
    %c0_i32_0 = arith.constant 0 : i32
    %c0_i32_1 = arith.constant 0 : i32
    return %c0_i32, %c0_i32_0 : i32, i32
  }
  func.func @transform_1(%arg0: i32) -> (i32, i32) {
    %c0_i32 = arith.constant 0 : i32
    %c0_i32_0 = arith.constant 0 : i32
    %c0_i32_1 = arith.constant 0 : i32
    return %c0_i32, %c0_i32_0 : i32, i32
  }
  func.func @transform_2(%arg0: i32) -> (i32, i32) {
    %c0_i32 = arith.constant 0 : i32
    %c0_i32_0 = arith.constant 0 : i32
    %c0_i32_1 = arith.constant 0 : i32
    return %c0_i32, %c0_i32_0 : i32, i32
  }
  func.func @transform_3(%arg0: i32) -> (i32, i32, i32) {
    %c0_i32 = arith.constant 0 : i32
    %c0_i32_0 = arith.constant 0 : i32
    %c0_i32_1 = arith.constant 0 : i32
    return %arg0, %c0_i32, %c0_i32_0 : i32, i32, i32
  }
  func.func @transform_4(%arg0: i32) -> (i32, i32) {
    %c0_i32 = arith.constant 0 : i32
    %c0_i32_0 = arith.constant 0 : i32
    %c0_i32_1 = arith.constant 0 : i32
    return %c0_i32, %c0_i32_0 : i32, i32
  }
  func.func @transform_5(%arg0: i32) -> (i32, i32, i32) {
    %c0_i32 = arith.constant 0 : i32
    %c0_i32_0 = arith.constant 0 : i32
    %c0_i32_1 = arith.constant 0 : i32
    return %arg0, %c0_i32, %c0_i32_0 : i32, i32, i32
  }
}

</mosaic_0001>

<llo_original>
// kernel: tpu_custom_call.1
$region0: #{tpu_custom_call.1}
  #allocation0 [shape = 'u32[]', space=smem, size = 0x4, offset = 0x4, fixed_abs, tag = 'smem constant byte address 0x4 - core index']
  #allocation1 [shape = 'u32[144,128]{1,0:T(1,128)}', space=vmem, size = 0x12000, scoped, tag = 'internal scratch']
  #allocation2 [shape = 'f32[576,4]{1,0:T(8,128)}', space=vmem, size = 0x48000, scoped, tag = 'scratch operand']
  %s0 = inlined_call_operand.vmem [shape: bf16[4,144], index: 0, kind: input, shape index: {}]
  %s1 = inlined_call_operand.vmem [shape: bf16[576,144], index: 1, kind: input, shape index: {}]
  %s2 = inlined_call_operand.vmem [shape: f32[576,1], index: 2, kind: input, shape index: {}]
  %s3 = inlined_call_operand.vmem [shape: bf16[4,576,196], index: 3, kind: input, shape index: {}]
  %s4 = inlined_call_operand.vmem [shape: bf16[576,576], index: 4, kind: input, shape index: {}]
  %s5 = inlined_call_operand.vmem [shape: bf16[4,576,196], index: 5, kind: output, shape index: {}]
  %s6 = sld [smem:[#allocation0]]
  $region30: #{tpu_custom_call.1} parent=0
    _
  %s8 = ssub.s32 1, %s6
  %s9 = scalar_select 0, %s8, %s6
  // Predicated region
  $region2: #{tpu_custom_call.1} parent=0 // pred_check
    _
  $region3: #{tpu_custom_call.1} parent=0 // pred_check_branch
    %11 = sbr.rel (0) target = $region5
  $region4: #{tpu_custom_call.1} parent=0 // pred_region
    _
  $region5: #{tpu_custom_call.1} parent=0 // pred_fallthru
    _
  // Predicated region
  $region6: #{tpu_custom_call.1} parent=0 // pred_check
    _
  $region7: #{tpu_custom_call.1} parent=0 // pred_check_branch
    %13 = sbr.rel (0) target = $region9
  $region8: #{tpu_custom_call.1} parent=0 // pred_region
    _
  $region9: #{tpu_custom_call.1} parent=0 // pred_fallthru
    _
  // Predicated region
  $region10: #{tpu_custom_call.1} parent=0 // pred_check
    _
  $region11: #{tpu_custom_call.1} parent=0 // pred_check_branch
    %15 = sbr.rel (0) target = $region13
  $region12: #{tpu_custom_call.1} parent=0 // pred_region
    _
  $region13: #{tpu_custom_call.1} parent=0 // pred_fallthru
    _
  // Predicated region
  $region14: #{tpu_custom_call.1} parent=0 // pred_check
    _
  $region15: #{tpu_custom_call.1} parent=0 // pred_check_branch
    %17 = sbr.rel (0) target = $region17
  $region16: #{tpu_custom_call.1} parent=0 // pred_region
    _
  $region17: #{tpu_custom_call.1} parent=0 // pred_fallthru
    _
  // Predicated region
  $region18: #{tpu_custom_call.1} parent=0 // pred_check
    _
  $region19: #{tpu_custom_call.1} parent=0 // pred_check_branch
    %19 = sbr.rel (0) target = $region21
  $region20: #{tpu_custom_call.1} parent=0 // pred_region
    _
  $region21: #{tpu_custom_call.1} parent=0 // pred_fallthru
    _
  %s21 = smul.u32 0, 4
  %s22 = sshra.s32 %s21, 2
  %s23 = sand.u32 %s21, 3
  %s24 = smul.u32 %s22, 2
  %s25 = smul.addr %s24, 2
  %s26 = scalar_lea.vmem %s0, %s25
  %v27 = vld [vmem:[%s26] sm:$0xf]
  %v28 = vmax.bf16 %v27, 0
  %v29 = vld [vmem:[%s1] sm:$0xff]
  %v30 = vld [vmem:[%s1 + $0x8] sm:$0xff]
  %v31 = vld [vmem:[%s1 + $0x10] sm:$0xff]
  %v32 = vld [vmem:[%s1 + $0x18] sm:$0xff]
  %v33 = vld [vmem:[%s1 + $0x20] sm:$0xff]
  %v34 = vld [vmem:[%s1 + $0x28] sm:$0xff]
  %v35 = vld [vmem:[%s1 + $0x30] sm:$0xff]
  %v36 = vld [vmem:[%s1 + $0x38] sm:$0xff]
  %v37 = vld [vmem:[%s1 + $0x40] sm:$0xff]
  %v38 = vld [vmem:[%s1 + $0x48] sm:$0xff]
  %v39 = vld [vmem:[%s1 + $0x50] sm:$0xff]
  %v40 = vld [vmem:[%s1 + $0x58] sm:$0xff]
  %v41 = vld [vmem:[%s1 + $0x60] sm:$0xff]
  %v42 = vld [vmem:[%s1 + $0x68] sm:$0xff]
  %v43 = vld [vmem:[%s1 + $0x70] sm:$0xff]
  %v44 = vld [vmem:[%s1 + $0x78] sm:$0xff]
  %v45 = vld [vmem:[%s1 + $0x80] sm:$0xff]
  %v46 = vld [vmem:[%s1 + $0x88] sm:$0xff]
  %v47 = vld [vmem:[%s1 + $0x90] sm:$0xff]
  %v48 = vld [vmem:[%s1 + $0x98] sm:$0xff]
  %v49 = vld [vmem:[%s1 + $0xa0] sm:$0xff]
  %v50 = vld [vmem:[%s1 + $0xa8] sm:$0xff]
  %v51 = vld [vmem:[%s1 + $0xb0] sm:$0xff]
  %v52 = vld [vmem:[%s1 + $0xb8] sm:$0xff]
  %v53 = vld [vmem:[%s1 + $0xc0] sm:$0xff]
  %v54 = vld [vmem:[%s1 + $0xc8] sm:$0xff]
  %v55 = vld [vmem:[%s1 + $0xd0] sm:$0xff]
  %v56 = vld [vmem:[%s1 + $0xd8] sm:$0xff]
  %v57 = vld [vmem:[%s1 + $0xe0] sm:$0xff]
  %v58 = vld [vmem:[%s1 + $0xe8] sm:$0xff]
  %v59 = vld [vmem:[%s1 + $0xf0] sm:$0xff]
  %v60 = vld [vmem:[%s1 + $0xf8] sm:$0xff]
  %v61 = vld [vmem:[%s1 + $0x100] sm:$0xff]
  %v62 = vld [vmem:[%s1 + $0x108] sm:$0xff]
  %v63 = vld [vmem:[%s1 + $0x110] sm:$0xff]
  %v64 = vld [vmem:[%s1 + $0x118] sm:$0xff]
  %v65 = vld [vmem:[%s1 + $0x120] sm:$0xff]
  %v66 = vld [vmem:[%s1 + $0x128] sm:$0xff]
  %v67 = vld [vmem:[%s1 + $0x130] sm:$0xff]
  %v68 = vld [vmem:[%s1 + $0x138] sm:$0xff]
  %v69 = vld [vmem:[%s1 + $0x140] sm:$0xff]
  %v70 = vld [vmem:[%s1 + $0x148] sm:$0xff]
  %v71 = vld [vmem:[%s1 + $0x150] sm:$0xff]
  %v72 = vld [vmem:[%s1 + $0x158] sm:$0xff]
  %v73 = vld [vmem:[%s1 + $0x160] sm:$0xff]
  %v74 = vld [vmem:[%s1 + $0x168] sm:$0xff]
  %v75 = vld [vmem:[%s1 + $0x170] sm:$0xff]
  %v76 = vld [vmem:[%s1 + $0x178] sm:$0xff]
  %v77 = vld [vmem:[%s1 + $0x180] sm:$0xff]
  %v78 = vld [vmem:[%s1 + $0x188] sm:$0xff]
  %v79 = vld [vmem:[%s1 + $0x190] sm:$0xff]
  %v80 = vld [vmem:[%s1 + $0x198] sm:$0xff]
  %v81 = vld [vmem:[%s1 + $0x1a0] sm:$0xff]
  %v82 = vld [vmem:[%s1 + $0x1a8] sm:$0xff]
  %v83 = vld [vmem:[%s1 + $0x1b0] sm:$0xff]
  %v84 = vld [vmem:[%s1 + $0x1b8] sm:$0xff]
  %v85 = vld [vmem:[%s1 + $0x1c0] sm:$0xff]
  %v86 = vld [vmem:[%s1 + $0x1c8] sm:$0xff]
  %v87 = vld [vmem:[%s1 + $0x1d0] sm:$0xff]
  %v88 = vld [vmem:[%s1 + $0x1d8] sm:$0xff]
  %v89 = vld [vmem:[%s1 + $0x1e0] sm:$0xff]
  %v90 = vld [vmem:[%s1 + $0x1e8] sm:$0xff]
  %v91 = vld [vmem:[%s1 + $0x1f0] sm:$0xff]
  %v92 = vld [vmem:[%s1 + $0x1f8] sm:$0xff]
  %v93 = vld [vmem:[%s1 + $0x200] sm:$0xff]
  %v94 = vld [vmem:[%s1 + $0x208] sm:$0xff]
  %v95 = vld [vmem:[%s1 + $0x210] sm:$0xff]
  %v96 = vld [vmem:[%s1 + $0x218] sm:$0xff]
  %v97 = vld [vmem:[%s1 + $0x220] sm:$0xff]
  %v98 = vld [vmem:[%s1 + $0x228] sm:$0xff]
  %v99 = vld [vmem:[%s1 + $0x230] sm:$0xff]
  %v100 = vld [vmem:[%s1 + $0x238] sm:$0xff]
  %v101 = vld [vmem:[%s2] sm:$0xff]
  %v102 = vld [vmem:[%s2 + $0x8] sm:$0xff]
  %v103 = vld [vmem:[%s2 + $0x10] sm:$0xff]
  %v104 = vld [vmem:[%s2 + $0x18] sm:$0xff]
  %v105 = vld [vmem:[%s2 + $0x20] sm:$0xff]
  %v106 = vld [vmem:[%s2 + $0x28] sm:$0xff]
  %v107 = vld [vmem:[%s2 + $0x30] sm:$0xff]
  %v108 = vld [vmem:[%s2 + $0x38] sm:$0xff]
  %v109 = vld [vmem:[%s2 + $0x40] sm:$0xff]
  %v110 = vld [vmem:[%s2 + $0x48] sm:$0xff]
  %v111 = vld [vmem:[%s2 + $0x50] sm:$0xff]
  %v112 = vld [vmem:[%s2 + $0x58] sm:$0xff]
  %v113 = vld [vmem:[%s2 + $0x60] sm:$0xff]
  %v114 = vld [vmem:[%s2 + $0x68] sm:$0xff]
  %v115 = vld [vmem:[%s2 + $0x70] sm:$0xff]
  %v116 = vld [vmem:[%s2 + $0x78] sm:$0xff]
  %v117 = vld [vmem:[%s2 + $0x80] sm:$0xff]
  %v118 = vld [vmem:[%s2 + $0x88] sm:$0xff]
  %v119 = vld [vmem:[%s2 + $0x90] sm:$0xff]
  %v120 = vld [vmem:[%s2 + $0x98] sm:$0xff]
  %v121 = vld [vmem:[%s2 + $0xa0] sm:$0xff]
  %v122 = vld [vmem:[%s2 + $0xa8] sm:$0xff]
  %v123 = vld [vmem:[%s2 + $0xb0] sm:$0xff]
  %v124 = vld [vmem:[%s2 + $0xb8] sm:$0xff]
  %v125 = vld [vmem:[%s2 + $0xc0] sm:$0xff]
  %v126 = vld [vmem:[%s2 + $0xc8] sm:$0xff]
  %v127 = vld [vmem:[%s2 + $0xd0] sm:$0xff]
  %v128 = vld [vmem:[%s2 + $0xd8] sm:$0xff]
  %v129 = vld [vmem:[%s2 + $0xe0] sm:$0xff]
  %v130 = vld [vmem:[%s2 + $0xe8] sm:$0xff]
  %v131 = vld [vmem:[%s2 + $0xf0] sm:$0xff]
  %v132 = vld [vmem:[%s2 + $0xf8] sm:$0xff]
  %v133 = vld [vmem:[%s2 + $0x100] sm:$0xff]
  %v134 = vld [vmem:[%s2 + $0x108] sm:$0xff]
  %v135 = vld [vmem:[%s2 + $0x110] sm:$0xff]
  %v136 = vld [vmem:[%s2 + $0x118] sm:$0xff]
  %v137 = vld [vmem:[%s2 + $0x120] sm:$0xff]
  %v138 = vld [vmem:[%s2 + $0x128] sm:$0xff]
  %v139 = vld [vmem:[%s2 + $0x130] sm:$0xff]
  %v140 = vld [vmem:[%s2 + $0x138] sm:$0xff]
  %v141 = vld [vmem:[%s2 + $0x140] sm:$0xff]
  %v142 = vld [vmem:[%s2 + $0x148] sm:$0xff]
  %v143 = vld [vmem:[%s2 + $0x150] sm:$0xff]
  %v144 = vld [vmem:[%s2 + $0x158] sm:$0xff]
  %v145 = vld [vmem:[%s2 + $0x160] sm:$0xff]
  %v146 = vld [vmem:[%s2 + $0x168] sm:$0xff]
  %v147 = vld [vmem:[%s2 + $0x170] sm:$0xff]
  %v148 = vld [vmem:[%s2 + $0x178] sm:$0xff]
  %v149 = vld [vmem:[%s2 + $0x180] sm:$0xff]
  %v150 = vld [vmem:[%s2 + $0x188] sm:$0xff]
  %v151 = vld [vmem:[%s2 + $0x190] sm:$0xff]
  %v152 = vld [vmem:[%s2 + $0x198] sm:$0xff]
  %v153 = vld [vmem:[%s2 + $0x1a0] sm:$0xff]
  %v154 = vld [vmem:[%s2 + $0x1a8] sm:$0xff]
  %v155 = vld [vmem:[%s2 + $0x1b0] sm:$0xff]
  %v156 = vld [vmem:[%s2 + $0x1b8] sm:$0xff]
  %v157 = vld [vmem:[%s2 + $0x1c0] sm:$0xff]
  %v158 = vld [vmem:[%s2 + $0x1c8] sm:$0xff]
  %v159 = vld [vmem:[%s2 + $0x1d0] sm:$0xff]
  %v160 = vld [vmem:[%s2 + $0x1d8] sm:$0xff]
  %v161 = vld [vmem:[%s2 + $0x1e0] sm:$0xff]
  %v162 = vld [vmem:[%s2 + $0x1e8] sm:$0xff]
  %v163 = vld [vmem:[%s2 + $0x1f0] sm:$0xff]
  %v164 = vld [vmem:[%s2 + $0x1f8] sm:$0xff]
  %v165 = vld [vmem:[%s2 + $0x200] sm:$0xff]
  %v166 = vld [vmem:[%s2 + $0x208] sm:$0xff]
  %v167 = vld [vmem:[%s2 + $0x210] sm:$0xff]
  %v168 = vld [vmem:[%s2 + $0x218] sm:$0xff]
  %v169 = vld [vmem:[%s2 + $0x220] sm:$0xff]
  %v170 = vld [vmem:[%s2 + $0x228] sm:$0xff]
  %v171 = vld [vmem:[%s2 + $0x230] sm:$0xff]
  %v172 = vld [vmem:[%s2 + $0x238] sm:$0xff]
  %174 = vset.pattern.permute.xlu0 0
  %175 = vperm.xlu0 %174, %v101
  %v176 = vpop.permute.xlu0 %175
  %179 = vset.pattern.permute.xlu0 0
  %180 = vperm.xlu0 %179, %v102
  %v181 = vpop.permute.xlu0 %180
  %184 = vset.pattern.permute.xlu0 0
  %185 = vperm.xlu0 %184, %v103
  %v186 = vpop.permute.xlu0 %185
  %189 = vset.pattern.permute.xlu0 0
  %190 = vperm.xlu0 %189, %v104
  %v191 = vpop.permute.xlu0 %190
  %194 = vset.pattern.permute.xlu0 0
  %195 = vperm.xlu0 %194, %v105
  %v196 = vpop.permute.xlu0 %195
  %199 = vset.pattern.permute.xlu0 0
  %200 = vperm.xlu0 %199, %v106
  %v201 = vpop.permute.xlu0 %200
  %204 = vset.pattern.permute.xlu0 0
  %205 = vperm.xlu0 %204, %v107
  %v206 = vpop.permute.xlu0 %205
  %209 = vset.pattern.permute.xlu0 0
  %210 = vperm.xlu0 %209, %v108
  %v211 = vpop.permute.xlu0 %210
  %214 = vset.pattern.permute.xlu0 0
  %215 = vperm.xlu0 %214, %v109
  %v216 = vpop.permute.xlu0 %215
  %219 = vset.pattern.permute.xlu0 0
  %220 = vperm.xlu0 %219, %v110
  %v221 = vpop.permute.xlu0 %220
  %224 = vset.pattern.permute.xlu0 0
  %225 = vperm.xlu0 %224, %v111
  %v226 = vpop.permute.xlu0 %225
  %229 = vset.pattern.permute.xlu0 0
  %230 = vperm.xlu0 %229, %v112
  %v231 = vpop.permute.xlu0 %230
  %234 = vset.pattern.permute.xlu0 0
  %235 = vperm.xlu0 %234, %v113
  %v236 = vpop.permute.xlu0 %235
  %239 = vset.pattern.permute.xlu0 0
  %240 = vperm.xlu0 %239, %v114
  %v241 = vpop.permute.xlu0 %240
  %244 = vset.pattern.permute.xlu0 0
  %245 = vperm.xlu0 %244, %v115
  %v246 = vpop.permute.xlu0 %245
  %249 = vset.pattern.permute.xlu0 0
  %250 = vperm.xlu0 %249, %v116
  %v251 = vpop.permute.xlu0 %250
  %254 = vset.pattern.permute.xlu0 0
  %255 = vperm.xlu0 %254, %v117
  %v256 = vpop.permute.xlu0 %255
  %259 = vset.pattern.permute.xlu0 0
  %260 = vperm.xlu0 %259, %v118
  %v261 = vpop.permute.xlu0 %260
  %264 = vset.pattern.permute.xlu0 0
  %265 = vperm.xlu0 %264, %v119
  %v266 = vpop.permute.xlu0 %265
  %269 = vset.pattern.permute.xlu0 0
  %270 = vperm.xlu0 %269, %v120
  %v271 = vpop.permute.xlu0 %270
  %274 = vset.pattern.permute.xlu0 0
  %275 = vperm.xlu0 %274, %v121
  %v276 = vpop.permute.xlu0 %275
  %279 = vset.pattern.permute.xlu0 0
  %280 = vperm.xlu0 %279, %v122
  %v281 = vpop.permute.xlu0 %280
  %284 = vset.pattern.permute.xlu0 0
  %285 = vperm.xlu0 %284, %v123
  %v286 = vpop.permute.xlu0 %285
  %289 = vset.pattern.permute.xlu0 0
  %290 = vperm.xlu0 %289, %v124
  %v291 = vpop.permute.xlu0 %290
  %294 = vset.pattern.permute.xlu0 0
  %295 = vperm.xlu0 %294, %v125
  %v296 = vpop.permute.xlu0 %295
  %299 = vset.pattern.permute.xlu0 0
  %300 = vperm.xlu0 %299, %v126
  %v301 = vpop.permute.xlu0 %300
  %304 = vset.pattern.permute.xlu0 0
  %305 = vperm.xlu0 %304, %v127
  %v306 = vpop.permute.xlu0 %305
  %309 = vset.pattern.permute.xlu0 0
  %310 = vperm.xlu0 %309, %v128
  %v311 = vpop.permute.xlu0 %310
  %314 = vset.pattern.permute.xlu0 0
  %315 = vperm.xlu0 %314, %v129
  %v316 = vpop.permute.xlu0 %315
  %319 = vset.pattern.permute.xlu0 0
  %320 = vperm.xlu0 %319, %v130
  %v321 = vpop.permute.xlu0 %320
  %324 = vset.pattern.permute.xlu0 0
  %325 = vperm.xlu0 %324, %v131
  %v326 = vpop.permute.xlu0 %325
  %329 = vset.pattern.permute.xlu0 0
  %330 = vperm.xlu0 %329, %v132
  %v331 = vpop.permute.xlu0 %330
  %334 = vset.pattern.permute.xlu0 0
  %335 = vperm.xlu0 %334, %v133
  %v336 = vpop.permute.xlu0 %335
  %339 = vset.pattern.permute.xlu0 0
  %340 = vperm.xlu0 %339, %v134
  %v341 = vpop.permute.xlu0 %340
  %344 = vset.pattern.permute.xlu0 0
  %345 = vperm.xlu0 %344, %v135
  %v346 = vpop.permute.xlu0 %345
  %349 = vset.pattern.permute.xlu0 0
  %350 = vperm.xlu0 %349, %v136
  %v351 = vpop.permute.xlu0 %350
  %354 = vset.pattern.permute.xlu0 0
  %355 = vperm.xlu0 %354, %v137
  %v356 = vpop.permute.xlu0 %355
  %359 = vset.pattern.permute.xlu0 0
  %360 = vperm.xlu0 %359, %v138
  %v361 = vpop.permute.xlu0 %360
  %364 = vset.pattern.permute.xlu0 0
  %365 = vperm.xlu0 %364, %v139
  %v366 = vpop.permute.xlu0 %365
  %369 = vset.pattern.permute.xlu0 0
  %370 = vperm.xlu0 %369, %v140
  %v371 = vpop.permute.xlu0 %370
  %374 = vset.pattern.permute.xlu0 0
  %375 = vperm.xlu0 %374, %v141
  %v376 = vpop.permute.xlu0 %375
  %379 = vset.pattern.permute.xlu0 0
  %380 = vperm.xlu0 %379, %v142
  %v381 = vpop.permute.xlu0 %380
  %384 = vset.pattern.permute.xlu0 0
  %385 = vperm.xlu0 %384, %v143
  %v386 = vpop.permute.xlu0 %385
  %389 = vset.pattern.permute.xlu0 0
  %390 = vperm.xlu0 %389, %v144
  %v391 = vpop.permute.xlu0 %390
  %394 = vset.pattern.permute.xlu0 0
  %395 = vperm.xlu0 %394, %v145
  %v396 = vpop.permute.xlu0 %395
  %399 = vset.pattern.permute.xlu0 0
  %400 = vperm.xlu0 %399, %v146
  %v401 = vpop.permute.xlu0 %400
  %404 = vset.pattern.permute.xlu0 0
  %405 = vperm.xlu0 %404, %v147
  %v406 = vpop.permute.xlu0 %405
  %409 = vset.pattern.permute.xlu0 0
  %410 = vperm.xlu0 %409, %v148
  %v411 = vpop.permute.xlu0 %410
  %414 = vset.pattern.permute.xlu0 0
  %415 = vperm.xlu0 %414, %v149
  %v416 = vpop.permute.xlu0 %415
  %419 = vset.pattern.permute.xlu0 0
  %420 = vperm.xlu0 %419, %v150
  %v421 = vpop.permute.xlu0 %420
  %424 = vset.pattern.permute.xlu0 0
  %425 = vperm.xlu0 %424, %v151
  %v426 = vpop.permute.xlu0 %425
  %429 = vset.pattern.permute.xlu0 0
  %430 = vperm.xlu0 %429, %v152
  %v431 = vpop.permute.xlu0 %430
  %434 = vset.pattern.permute.xlu0 0
  %435 = vperm.xlu0 %434, %v153
  %v436 = vpop.permute.xlu0 %435
  %439 = vset.pattern.permute.xlu0 0
  %440 = vperm.xlu0 %439, %v154
  %v441 = vpop.permute.xlu0 %440
  %444 = vset.pattern.permute.xlu0 0
  %445 = vperm.xlu0 %444, %v155
  %v446 = vpop.permute.xlu0 %445
  %449 = vset.pattern.permute.xlu0 0
  %450 = vperm.xlu0 %449, %v156
  %v451 = vpop.permute.xlu0 %450
  %454 = vset.pattern.permute.xlu0 0
  %455 = vperm.xlu0 %454, %v157
  %v456 = vpop.permute.xlu0 %455
  %459 = vset.pattern.permute.xlu0 0
  %460 = vperm.xlu0 %459, %v158
  %v461 = vpop.permute.xlu0 %460
  %464 = vset.pattern.permute.xlu0 0
  %465 = vperm.xlu0 %464, %v159
  %v466 = vpop.permute.xlu0 %465
  %469 = vset.pattern.permute.xlu0 0
  %470 = vperm.xlu0 %469, %v160
  %v471 = vpop.permute.xlu0 %470
  %474 = vset.pattern.permute.xlu0 0
  %475 = vperm.xlu0 %474, %v161
  %v476 = vpop.permute.xlu0 %475
  %479 = vset.pattern.permute.xlu0 0
  %480 = vperm.xlu0 %479, %v162
  %v481 = vpop.permute.xlu0 %480
  %484 = vset.pattern.permute.xlu0 0
  %485 = vperm.xlu0 %484, %v163
  %v486 = vpop.permute.xlu0 %485
  %489 = vset.pattern.permute.xlu0 0
  %490 = vperm.xlu0 %489, %v164
  %v491 = vpop.permute.xlu0 %490
  %494 = vset.pattern.permute.xlu0 0
  %495 = vperm.xlu0 %494, %v165
  %v496 = vpop.permute.xlu0 %495
  %499 = vset.pattern.permute.xlu0 0
  %500 = vperm.xlu0 %499, %v166
  %v501 = vpop.permute.xlu0 %500
  %504 = vset.pattern.permute.xlu0 0
  %505 = vperm.xlu0 %504, %v167
  %v506 = vpop.permute.xlu0 %505
  %509 = vset.pattern.permute.xlu0 0
  %510 = vperm.xlu0 %509, %v168
  %v511 = vpop.permute.xlu0 %510
  %514 = vset.pattern.permute.xlu0 0
  %515 = vperm.xlu0 %514, %v169
  %v516 = vpop.permute.xlu0 %515
  %519 = vset.pattern.permute.xlu0 0
  %520 = vperm.xlu0 %519, %v170
  %v521 = vpop.permute.xlu0 %520
  %524 = vset.pattern.permute.xlu0 0
  %525 = vperm.xlu0 %524, %v171
  %v526 = vpop.permute.xlu0 %525
  %529 = vset.pattern.permute.xlu0 0
  %530 = vperm.xlu0 %529, %v172
  %v531 = vpop.permute.xlu0 %530
  %v605 = vunpack.c.l.b16 %v29
  %v606 = vunpack.c.h.b16 %v29
  %v607 = vunpack.c.l.b16 %v30
  %v608 = vunpack.c.h.b16 %v30
  %v609 = vunpack.c.l.b16 %v31
  %v610 = vunpack.c.h.b16 %v31
  %v611 = vunpack.c.l.b16 %v32
  %v612 = vunpack.c.h.b16 %v32
  %v613 = vunpack.c.l.b16 %v33
  %v614 = vunpack.c.h.b16 %v33
  %v615 = vunpack.c.l.b16 %v34
  %v616 = vunpack.c.h.b16 %v34
  %v617 = vunpack.c.l.b16 %v35
  %v618 = vunpack.c.h.b16 %v35
  %v619 = vunpack.c.l.b16 %v36
  %v620 = vunpack.c.h.b16 %v36
  %v621 = vunpack.c.l.b16 %v37
  %v622 = vunpack.c.h.b16 %v37
  %v623 = vunpack.c.l.b16 %v38
  %v624 = vunpack.c.h.b16 %v38
  %v625 = vunpack.c.l.b16 %v39
  %v626 = vunpack.c.h.b16 %v39
  %v627 = vunpack.c.l.b16 %v40
  %v628 = vunpack.c.h.b16 %v40
  %v629 = vunpack.c.l.b16 %v41
  %v630 = vunpack.c.h.b16 %v41
  %v631 = vunpack.c.l.b16 %v42
  %v632 = vunpack.c.h.b16 %v42
  %v633 = vunpack.c.l.b16 %v43
  %v634 = vunpack.c.h.b16 %v43
  %v635 = vunpack.c.l.b16 %v44
  %v636 = vunpack.c.h.b16 %v44
  %v637 = vunpack.c.l.b16 %v45
  %v638 = vunpack.c.h.b16 %v45
  %v639 = vunpack.c.l.b16 %v46
  %v640 = vunpack.c.h.b16 %v46
  %v641 = vunpack.c.l.b16 %v47
  %v642 = vunpack.c.h.b16 %v47
  %v643 = vunpack.c.l.b16 %v48
  %v644 = vunpack.c.h.b16 %v48
  %v645 = vunpack.c.l.b16 %v49
  %v646 = vunpack.c.h.b16 %v49
  %v647 = vunpack.c.l.b16 %v50
  %v648 = vunpack.c.h.b16 %v50
  %v649 = vunpack.c.l.b16 %v51
  %v650 = vunpack.c.h.b16 %v51
  %v651 = vunpack.c.l.b16 %v52
  %v652 = vunpack.c.h.b16 %v52
  %v653 = vunpack.c.l.b16 %v53
  %v654 = vunpack.c.h.b16 %v53
  %v655 = vunpack.c.l.b16 %v54
  %v656 = vunpack.c.h.b16 %v54
  %v657 = vunpack.c.l.b16 %v55
  %v658 = vunpack.c.h.b16 %v55
  %v659 = vunpack.c.l.b16 %v56
  %v660 = vunpack.c.h.b16 %v56
  %v661 = vunpack.c.l.b16 %v57
  %v662 = vunpack.c.h.b16 %v57
  %v663 = vunpack.c.l.b16 %v58
  %v664 = vunpack.c.h.b16 %v58
  %v665 = vunpack.c.l.b16 %v59
  %v666 = vunpack.c.h.b16 %v59
  %v667 = vunpack.c.l.b16 %v60
  %v668 = vunpack.c.h.b16 %v60
  %v669 = vunpack.c.l.b16 %v61
  %v670 = vunpack.c.h.b16 %v61
  %v671 = vunpack.c.l.b16 %v62
  %v672 = vunpack.c.h.b16 %v62
  %v673 = vunpack.c.l.b16 %v63
  %v674 = vunpack.c.h.b16 %v63
  %v675 = vunpack.c.l.b16 %v64
  %v676 = vunpack.c.h.b16 %v64
  %v677 = vunpack.c.l.b16 %v65
  %v678 = vunpack.c.h.b16 %v65
  %v679 = vunpack.c.l.b16 %v66
  %v680 = vunpack.c.h.b16 %v66
  %v681 = vunpack.c.l.b16 %v67
  %v682 = vunpack.c.h.b16 %v67
  %v683 = vunpack.c.l.b16 %v68
  %v684 = vunpack.c.h.b16 %v68
  %v685 = vunpack.c.l.b16 %v69
  %v686 = vunpack.c.h.b16 %v69
  %v687 = vunpack.c.l.b16 %v70
  %v688 = vunpack.c.h.b16 %v70
  %v689 = vunpack.c.l.b16 %v71
  %v690 = vunpack.c.h.b16 %v71
  %v691 = vunpack.c.l.b16 %v72
  %v692 = vunpack.c.h.b16 %v72
  %v693 = vunpack.c.l.b16 %v73
  %v694 = vunpack.c.h.b16 %v73
  %v695 = vunpack.c.l.b16 %v74
  %v696 = vunpack.c.h.b16 %v74
  %v697 = vunpack.c.l.b16 %v75
  %v698 = vunpack.c.h.b16 %v75
  %v699 = vunpack.c.l.b16 %v76
  %v700 = vunpack.c.h.b16 %v76
  %v701 = vunpack.c.l.b16 %v77
  %v702 = vunpack.c.h.b16 %v77
  %v703 = vunpack.c.l.b16 %v78
  %v704 = vunpack.c.h.b16 %v78
  %v705 = vunpack.c.l.b16 %v79
  %v706 = vunpack.c.h.b16 %v79
  %v707 = vunpack.c.l.b16 %v80
  %v708 = vunpack.c.h.b16 %v80
  %v709 = vunpack.c.l.b16 %v81
  %v710 = vunpack.c.h.b16 %v81
  %v711 = vunpack.c.l.b16 %v82
  %v712 = vunpack.c.h.b16 %v82
  %v713 = vunpack.c.l.b16 %v83
  %v714 = vunpack.c.h.b16 %v83
  %v715 = vunpack.c.l.b16 %v84
  %v716 = vunpack.c.h.b16 %v84
  %v717 = vunpack.c.l.b16 %v85
  %v718 = vunpack.c.h.b16 %v85
  %v719 = vunpack.c.l.b16 %v86
  %v720 = vunpack.c.h.b16 %v86
  %v721 = vunpack.c.l.b16 %v87
  %v722 = vunpack.c.h.b16 %v87
  %v723 = vunpack.c.l.b16 %v88
  %v724 = vunpack.c.h.b16 %v88
  %v725 = vunpack.c.l.b16 %v89
  %v726 = vunpack.c.h.b16 %v89
  %v727 = vunpack.c.l.b16 %v90
  %v728 = vunpack.c.h.b16 %v90
  %v729 = vunpack.c.l.b16 %v91
  %v730 = vunpack.c.h.b16 %v91
  %v731 = vunpack.c.l.b16 %v92
  %v732 = vunpack.c.h.b16 %v92
  %v733 = vunpack.c.l.b16 %v93
  %v734 = vunpack.c.h.b16 %v93
  %v735 = vunpack.c.l.b16 %v94
  %v736 = vunpack.c.h.b16 %v94
  %v737 = vunpack.c.l.b16 %v95
  %v738 = vunpack.c.h.b16 %v95
  %v739 = vunpack.c.l.b16 %v96
  %v740 = vunpack.c.h.b16 %v96
  %v741 = vunpack.c.l.b16 %v97
  %v742 = vunpack.c.h.b16 %v97
  %v743 = vunpack.c.l.b16 %v98
  %v744 = vunpack.c.h.b16 %v98
  %v745 = vunpack.c.l.b16 %v99
  %v746 = vunpack.c.h.b16 %v99
  %v747 = vunpack.c.l.b16 %v100
  %v748 = vunpack.c.h.b16 %v100
  %v749 = vpack.c.b16 %v607, %v605
  %v750 = vpack.c.b16 %v608, %v606
  %v751 = vpack.c.b16 %v611, %v609
  %v752 = vpack.c.b16 %v612, %v610
  %v753 = vpack.c.b16 %v615, %v613
  %v754 = vpack.c.b16 %v616, %v614
  %v755 = vpack.c.b16 %v619, %v617
  %v756 = vpack.c.b16 %v620, %v618
  %v757 = vpack.c.b16 %v623, %v621
  %v758 = vpack.c.b16 %v624, %v622
  %v759 = vpack.c.b16 %v627, %v625
  %v760 = vpack.c.b16 %v628, %v626
  %v761 = vpack.c.b16 %v631, %v629
  %v762 = vpack.c.b16 %v632, %v630
  %v763 = vpack.c.b16 %v635, %v633
  %v764 = vpack.c.b16 %v636, %v634
  %v765 = vpack.c.b16 %v639, %v637
  %v766 = vpack.c.b16 %v640, %v638
  %v767 = vpack.c.b16 %v643, %v641
  %v768 = vpack.c.b16 %v644, %v642
  %v769 = vpack.c.b16 %v647, %v645
  %v770 = vpack.c.b16 %v648, %v646
  %v771 = vpack.c.b16 %v651, %v649
  %v772 = vpack.c.b16 %v652, %v650
  %v773 = vpack.c.b16 %v655, %v653
  %v774 = vpack.c.b16 %v656, %v654
  %v775 = vpack.c.b16 %v659, %v657
  %v776 = vpack.c.b16 %v660, %v658
  %v777 = vpack.c.b16 %v663, %v661
  %v778 = vpack.c.b16 %v664, %v662
  %v779 = vpack.c.b16 %v667, %v665
  %v780 = vpack.c.b16 %v668, %v666
  %v781 = vpack.c.b16 %v671, %v669
  %v782 = vpack.c.b16 %v672, %v670
  %v783 = vpack.c.b16 %v675, %v673
  %v784 = vpack.c.b16 %v676, %v674
  %v785 = vpack.c.b16 %v679, %v677
  %v786 = vpack.c.b16 %v680, %v678
  %v787 = vpack.c.b16 %v683, %v681
  %v788 = vpack.c.b16 %v684, %v682
  %v789 = vpack.c.b16 %v687, %v685
  %v790 = vpack.c.b16 %v688, %v686
  %v791 = vpack.c.b16 %v691, %v689
  %v792 = vpack.c.b16 %v692, %v690
  %v793 = vpack.c.b16 %v695, %v693
  %v794 = vpack.c.b16 %v696, %v694
  %v795 = vpack.c.b16 %v699, %v697
  %v796 = vpack.c.b16 %v700, %v698
  %v797 = vpack.c.b16 %v703, %v701
  %v798 = vpack.c.b16 %v704, %v702
  %v799 = vpack.c.b16 %v707, %v705
  %v800 = vpack.c.b16 %v708, %v706
  %v801 = vpack.c.b16 %v711, %v709
  %v802 = vpack.c.b16 %v712, %v710
  %v803 = vpack.c.b16 %v715, %v713
  %v804 = vpack.c.b16 %v716, %v714
  %v805 = vpack.c.b16 %v719, %v717
  %v806 = vpack.c.b16 %v720, %v718
  %v807 = vpack.c.b16 %v723, %v721
  %v808 = vpack.c.b16 %v724, %v722
  %v809 = vpack.c.b16 %v727, %v725
  %v810 = vpack.c.b16 %v728, %v726
  %v811 = vpack.c.b16 %v731, %v729
  %v812 = vpack.c.b16 %v732, %v730
  %v813 = vpack.c.b16 %v735, %v733
  %v814 = vpack.c.b16 %v736, %v734
  %v815 = vpack.c.b16 %v739, %v737
  %v816 = vpack.c.b16 %v740, %v738
  %v817 = vpack.c.b16 %v743, %v741
  %v818 = vpack.c.b16 %v744, %v742
  %v819 = vpack.c.b16 %v747, %v745
  %v820 = vpack.c.b16 %v748, %v746
  %v859 = vunpack.c.l.s4 1983009808
  %v860 = vunpack.c.0.s8 %v859
  %v861 = vlaneseq
  %v862 = vshrl.u32 %v861, 7
  %v863 = vsub.s32 %v860, %v862
  %v864 = vrot.slane %v28, %v863
  %v865 = vcombine.high %v864, %v864
  %vm867 = vcmask 130048
  %v869 = vsel %vm867, %v750, 0
  %v872 = vsel %vm867, %v752, 0
  %v875 = vsel %vm867, %v754, 0
  %v878 = vsel %vm867, %v756, 0
  %v881 = vsel %vm867, %v758, 0
  %v884 = vsel %vm867, %v760, 0
  %v887 = vsel %vm867, %v762, 0
  %v890 = vsel %vm867, %v764, 0
  %v893 = vsel %vm867, %v766, 0
  %v896 = vsel %vm867, %v768, 0
  %v899 = vsel %vm867, %v770, 0
  %v902 = vsel %vm867, %v772, 0
  %v905 = vsel %vm867, %v774, 0
  %v908 = vsel %vm867, %v776, 0
  %v911 = vsel %vm867, %v778, 0
  %v914 = vsel %vm867, %v780, 0
  %v917 = vsel %vm867, %v782, 0
  %v920 = vsel %vm867, %v784, 0
  %v923 = vsel %vm867, %v786, 0
  %v926 = vsel %vm867, %v788, 0
  %v929 = vsel %vm867, %v790, 0
  %v932 = vsel %vm867, %v792, 0
  %v935 = vsel %vm867, %v794, 0
  %v938 = vsel %vm867, %v796, 0
  %v941 = vsel %vm867, %v798, 0
  %v944 = vsel %vm867, %v800, 0
  %v947 = vsel %vm867, %v802, 0
  %v950 = vsel %vm867, %v804, 0
  %v953 = vsel %vm867, %v806, 0
  %v956 = vsel %vm867, %v808, 0
  %v959 = vsel %vm867, %v810, 0
  %v962 = vsel %vm867, %v812, 0
  %v965 = vsel %vm867, %v814, 0
  %v968 = vsel %vm867, %v816, 0
  %v971 = vsel %vm867, %v818, 0
  %v974 = vsel %vm867, %v820, 0
  %v977 = vsel %vm867, %v865, 0
  %979 = vmatprep.subr.bf16.mxu0 %v977
  %980 = vmatpush1.bf16.xpose.msra.mxu0 %v864
  %981 = vmatprep.subr.bf16.mxu0 0
  %982 = vmatpush1.bf16.xpose.msra.mxu0 0
  %983 = vmatprep.subr.bf16.mxu0 0
  %984 = vmatpush1.bf16.xpose.msra.mxu0 0
  %985 = vmatprep.subr.bf16.mxu0 0
  %986 = vmatpush1.bf16.xpose.msra.mxu0 0
  %987 = vmatprep.subr.bf16.mxu0 0
  %988 = vmatpush1.bf16.xpose.msra.mxu0 0
  %989 = vmatprep.subr.bf16.mxu0 0
  %990 = vmatpush1.bf16.xpose.msra.mxu0 0
  %991 = vmatprep.subr.bf16.mxu0 0
  %992 = vmatpush1.bf16.xpose.msra.mxu0 0
  %993 = vmatprep.subr.bf16.mxu0 0
  %994 = vmatpush1.bf16.xpose.msra.mxu0 0
  %995 = vmatprep.subr.bf16.mxu0 0
  %996 = vmatpush1.bf16.xpose.msra.mxu0 0
  %997 = vmatprep.subr.bf16.mxu0 0
  %998 = vmatpush1.bf16.xpose.msra.mxu0 0
  %999 = vmatprep.subr.bf16.mxu0 0
  %1000 = vmatpush1.bf16.xpose.msra.mxu0 0
  %1001 = vmatprep.subr.bf16.mxu0 0
  %1002 = vmatpush1.bf16.xpose.msra.mxu0 0
  %1003 = vmatprep.subr.bf16.mxu0 0
  %1004 = vmatpush1.bf16.xpose.msra.mxu0 0
  %1005 = vmatprep.subr.bf16.mxu0 0
  %1006 = vmatpush1.bf16.xpose.msra.mxu0 0
  %1007 = vmatprep.subr.bf16.mxu0 0
  %1008 = vmatpush1.bf16.xpose.msra.mxu0 0
  %1009 = vmatprep.subr.bf16.mxu0 0
  %1010 = vmatpush1.bf16.xpose.msra.mxu0 0
  %1011 = vmatprep.mubr.bf16.mxu0 %v869
  %1012 = vmatmul.mubr.bf16.gmra.mrb[0].mxu0 %v749
  %v1013 = vpop.f32.mrb[0].mxu0
  %v1014 = vadd.f32 %v176, %v1013
  %v1015 = vpop.f32.mrb[0].mxu0
  %v1016 = vpop.f32.mrb[0].mxu0
  %v1017 = vadd.f32 %v181, %v1016
  %v1018 = vpop.f32.mrb[0].mxu0
  %1019 = vmatprep.mubr.bf16.mxu0 %v872
  %1020 = vmatmul.mubr.bf16.gmra.mrb[0].mxu0 %v751
  %v1021 = vpop.f32.mrb[0].mxu0
  %v1022 = vadd.f32 %v186, %v1021
  %v1023 = vpop.f32.mrb[0].mxu0
  %v1024 = vpop.f32.mrb[0].mxu0
  %v1025 = vadd.f32 %v191, %v1024
  %v1026 = vpop.f32.mrb[0].mxu0
  %1027 = vmatprep.mubr.bf16.mxu0 %v875
  %1028 = vmatmul.mubr.bf16.gmra.mrb[0].mxu0 %v753
  %v1029 = vpop.f32.mrb[0].mxu0
  %v1030 = vadd.f32 %v196, %v1029
  %v1031 = vpop.f32.mrb[0].mxu0
  %v1032 = vpop.f32.mrb[0].mxu0
  %v1033 = vadd.f32 %v201, %v1032
  %v1034 = vpop.f32.mrb[0].mxu0
  %1035 = vmatprep.mubr.bf16.mxu0 %v878
  %1036 = vmatmul.mubr.bf16.gmra.mrb[0].mxu0 %v755
  %v1037 = vpop.f32.mrb[0].mxu0
  %v1038 = vadd.f32 %v206, %v1037
  %v1039 = vpop.f32.mrb[0].mxu0
  %v1040 = vpop.f32.mrb[0].mxu0
  %v1041 = vadd.f32 %v211, %v1040
  %v1042 = vpop.f32.mrb[0].mxu0
  %1043 = vmatprep.mubr.bf16.mxu0 %v881
  %1044 = vmatmul.mubr.bf16.gmra.mrb[0].mxu0 %v757
  %v1045 = vpop.f32.mrb[0].mxu0
  %v1046 = vadd.f32 %v216, %v1045
  %v1047 = vpop.f32.mrb[0].mxu0
  %v1048 = vpop.f32.mrb[0].mxu0
  %v1049 = vadd.f32 %v221, %v1048
  %v1050 = vpop.f32.mrb[0].mxu0
  %1051 = vmatprep.mubr.bf16.mxu0 %v884
  %1052 = vmatmul.mubr.bf16.gmra.mrb[0].mxu0 %v759
  %v1053 = vpop.f32.mrb[0].mxu0
  %v1054 = vadd.f32 %v226, %v1053
  %v1055 = vpop.f32.mrb[0].mxu0
  %v1056 = vpop.f32.mrb[0].mxu0
  %v1057 = vadd.f32 %v231, %v1056
  %v1058 = vpop.f32.mrb[0].mxu0
  %1059 = vmatprep.mubr.bf16.mxu0 %v887
  %1060 = vmatmul.mubr.bf16.gmra.mrb[0].mxu0 %v761
  %v1061 = vpop.f32.mrb[0].mxu0
  %v1062 = vadd.f32 %v236, %v1061
  %v1063 = vpop.f32.mrb[0].mxu0
  %v1064 = vpop.f32.mrb[0].mxu0
  %v1065 = vadd.f32 %v241, %v1064
  %v1066 = vpop.f32.mrb[0].mxu0
  %1067 = vmatprep.mubr.bf16.mxu0 %v890
  %1068 = vmatmul.mubr.bf16.gmra.mrb[0].mxu0 %v763
  %v1069 = vpop.f32.mrb[0].mxu0
  %v1070 = vadd.f32 %v246, %v1069
  %v1071 = vpop.f32.mrb[0].mxu0
  %v1072 = vpop.f32.mrb[0].mxu0
  %v1073 = vadd.f32 %v251, %v1072
  %v1074 = vpop.f32.mrb[0].mxu0
  %1075 = vmatprep.mubr.bf16.mxu0 %v893
  %1076 = vmatmul.mubr.bf16.gmra.mrb[0].mxu0 %v765
  %v1077 = vpop.f32.mrb[0].mxu0
  %v1078 = vadd.f32 %v256, %v1077
  %v1079 = vpop.f32.mrb[0].mxu0
  %v1080 = vpop.f32.mrb[0].mxu0
  %v1081 = vadd.f32 %v261, %v1080
  %v1082 = vpop.f32.mrb[0].mxu0
  %1083 = vmatprep.mubr.bf16.mxu0 %v896
  %1084 = vmatmul.mubr.bf16.gmra.mrb[0].mxu0 %v767
  %v1085 = vpop.f32.mrb[0].mxu0
  %v1086 = vadd.f32 %v266, %v1085
  %v1087 = vpop.f32.mrb[0].mxu0
  %v1088 = vpop.f32.mrb[0].mxu0
  %v1089 = vadd.f32 %v271, %v1088
  %v1090 = vpop.f32.mrb[0].mxu0
  %1091 = vmatprep.mubr.bf16.mxu0 %v899
  %1092 = vmatmul.mubr.bf16.gmra.mrb[0].mxu0 %v769
  %v1093 = vpop.f32.mrb[0].mxu0
  %v1094 = vadd.f32 %v276, %v1093
  %v1095 = vpop.f32.mrb[0].mxu0
  %v1096 = vpop.f32.mrb[0].mxu0
  %v1097 = vadd.f32 %v281, %v1096
  %v1098 = vpop.f32.mrb[0].mxu0
  %1099 = vmatprep.mubr.bf16.mxu0 %v902
  %1100 = vmatmul.mubr.bf16.gmra.mrb[0].mxu0 %v771
  %v1101 = vpop.f32.mrb[0].mxu0
  %v1102 = vadd.f32 %v286, %v1101
  %v1103 = vpop.f32.mrb[0].mxu0
  %v1104 = vpop.f32.mrb[0].mxu0
  %v1105 = vadd.f32 %v291, %v1104
  %v1106 = vpop.f32.mrb[0].mxu0
  %1107 = vmatprep.mubr.bf16.mxu0 %v905
  %1108 = vmatmul.mubr.bf16.gmra.mrb[0].mxu0 %v773
  %v1109 = vpop.f32.mrb[0].mxu0
  %v1110 = vadd.f32 %v296, %v1109
  %v1111 = vpop.f32.mrb[0].mxu0
  %v1112 = vpop.f32.mrb[0].mxu0
  %v1113 = vadd.f32 %v301, %v1112
  %v1114 = vpop.f32.mrb[0].mxu0
  %1115 = vmatprep.mubr.bf16.mxu0 %v908
  %1116 = vmatmul.mubr.bf16.gmra.mrb[0].mxu0 %v775
  %v1117 = vpop.f32.mrb[0].mxu0
  %v1118 = vadd.f32 %v306, %v1117
  %v1119 = vpop.f32.mrb[0].mxu0
  %v1120 = vpop.f32.mrb[0].mxu0
  %v1121 = vadd.f32 %v311, %v1120
  %v1122 = vpop.f32.mrb[0].mxu0
  %1123 = vmatprep.mubr.bf16.mxu0 %v911
  %1124 = vmatmul.mubr.bf16.gmra.mrb[0].mxu0 %v777
  %v1125 = vpop.f32.mrb[0].mxu0
  %v1126 = vadd.f32 %v316, %v1125
  %v1127 = vpop.f32.mrb[0].mxu0
  %v1128 = vpop.f32.mrb[0].mxu0
  %v1129 = vadd.f32 %v321, %v1128
  %v1130 = vpop.f32.mrb[0].mxu0
  %1131 = vmatprep.mubr.bf16.mxu0 %v914
  %1132 = vmatmul.mubr.bf16.gmra.mrb[0].mxu0 %v779
  %v1133 = vpop.f32.mrb[0].mxu0
  %v1134 = vadd.f32 %v326, %v1133
  %v1135 = vpop.f32.mrb[0].mxu0
  %v1136 = vpop.f32.mrb[0].mxu0
  %v1137 = vadd.f32 %v331, %v1136
  %v1138 = vpop.f32.mrb[0].mxu0
  %1139 = vmatprep.mubr.bf16.mxu0 %v917
  %1140 = vmatmul.mubr.bf16.gmra.mrb[0].mxu0 %v781
  %v1141 = vpop.f32.mrb[0].mxu0
  %v1142 = vadd.f32 %v336, %v1141
  %v1143 = vpop.f32.mrb[0].mxu0
  %v1144 = vpop.f32.mrb[0].mxu0
  %v1145 = vadd.f32 %v341, %v1144
  %v1146 = vpop.f32.mrb[0].mxu0
  %1147 = vmatprep.mubr.bf16.mxu0 %v920
  %1148 = vmatmul.mubr.bf16.gmra.mrb[0].mxu0 %v783
  %v1149 = vpop.f32.mrb[0].mxu0
  %v1150 = vadd.f32 %v346, %v1149
  %v1151 = vpop.f32.mrb[0].mxu0
  %v1152 = vpop.f32.mrb[0].mxu0
  %v1153 = vadd.f32 %v351, %v1152
  %v1154 = vpop.f32.mrb[0].mxu0
  %1155 = vmatprep.mubr.bf16.mxu0 %v923
  %1156 = vmatmul.mubr.bf16.gmra.mrb[0].mxu0 %v785
  %v1157 = vpop.f32.mrb[0].mxu0
  %v1158 = vadd.f32 %v356, %v1157
  %v1159 = vpop.f32.mrb[0].mxu0
  %v1160 = vpop.f32.mrb[0].mxu0
  %v1161 = vadd.f32 %v361, %v1160
  %v1162 = vpop.f32.mrb[0].mxu0
  %1163 = vmatprep.mubr.bf16.mxu0 %v926
  %1164 = vmatmul.mubr.bf16.gmra.mrb[0].mxu0 %v787
  %v1165 = vpop.f32.mrb[0].mxu0
  %v1166 = vadd.f32 %v366, %v1165
  %v1167 = vpop.f32.mrb[0].mxu0
  %v1168 = vpop.f32.mrb[0].mxu0
  %v1169 = vadd.f32 %v371, %v1168
  %v1170 = vpop.f32.mrb[0].mxu0
  %1171 = vmatprep.mubr.bf16.mxu0 %v929
  %1172 = vmatmul.mubr.bf16.gmra.mrb[0].mxu0 %v789
  %v1173 = vpop.f32.mrb[0].mxu0
  %v1174 = vadd.f32 %v376, %v1173
  %v1175 = vpop.f32.mrb[0].mxu0
  %v1176 = vpop.f32.mrb[0].mxu0
  %v1177 = vadd.f32 %v381, %v1176
  %v1178 = vpop.f32.mrb[0].mxu0
  %1179 = vmatprep.mubr.bf16.mxu0 %v932
  %1180 = vmatmul.mubr.bf16.gmra.mrb[0].mxu0 %v791
  %v1181 = vpop.f32.mrb[0].mxu0
  %v1182 = vadd.f32 %v386, %v1181
  %v1183 = vpop.f32.mrb[0].mxu0
  %v1184 = vpop.f32.mrb[0].mxu0
  %v1185 = vadd.f32 %v391, %v1184
  %v1186 = vpop.f32.mrb[0].mxu0
  %1187 = vmatprep.mubr.bf16.mxu0 %v935
  %1188 = vmatmul.mubr.bf16.gmra.mrb[0].mxu0 %v793
  %v1189 = vpop.f32.mrb[0].mxu0
  %v1190 = vadd.f32 %v396, %v1189
  %v1191 = vpop.f32.mrb[0].mxu0
  %v1192 = vpop.f32.mrb[0].mxu0
  %v1193 = vadd.f32 %v401, %v1192
  %v1194 = vpop.f32.mrb[0].mxu0
  %1195 = vmatprep.mubr.bf16.mxu0 %v938
  %1196 = vmatmul.mubr.bf16.gmra.mrb[0].mxu0 %v795
  %v1197 = vpop.f32.mrb[0].mxu0
  %v1198 = vadd.f32 %v406, %v1197
  %v1199 = vpop.f32.mrb[0].mxu0
  %v1200 = vpop.f32.mrb[0].mxu0
  %v1201 = vadd.f32 %v411, %v1200
  %v1202 = vpop.f32.mrb[0].mxu0
  %1203 = vmatprep.mubr.bf16.mxu0 %v941
  %1204 = vmatmul.mubr.bf16.gmra.mrb[0].mxu0 %v797
  %v1205 = vpop.f32.mrb[0].mxu0
  %v1206 = vadd.f32 %v416, %v1205
  %v1207 = vpop.f32.mrb[0].mxu0
  %v1208 = vpop.f32.mrb[0].mxu0
  %v1209 = vadd.f32 %v421, %v1208
  %v1210 = vpop.f32.mrb[0].mxu0
  %1211 = vmatprep.mubr.bf16.mxu0 %v944
  %1212 = vmatmul.mubr.bf16.gmra.mrb[0].mxu0 %v799
  %v1213 = vpop.f32.mrb[0].mxu0
  %v1214 = vadd.f32 %v426, %v1213
  %v1215 = vpop.f32.mrb[0].mxu0
  %v1216 = vpop.f32.mrb[0].mxu0
  %v1217 = vadd.f32 %v431, %v1216
  %v1218 = vpop.f32.mrb[0].mxu0
  %1219 = vmatprep.mubr.bf16.mxu0 %v947
  %1220 = vmatmul.mubr.bf16.gmra.mrb[0].mxu0 %v801
  %v1221 = vpop.f32.mrb[0].mxu0
  %v1222 = vadd.f32 %v436, %v1221
  %v1223 = vpop.f32.mrb[0].mxu0
  %v1224 = vpop.f32.mrb[0].mxu0
  %v1225 = vadd.f32 %v441, %v1224
  %v1226 = vpop.f32.mrb[0].mxu0
  %1227 = vmatprep.mubr.bf16.mxu0 %v950
  %1228 = vmatmul.mubr.bf16.gmra.mrb[0].mxu0 %v803
  %v1229 = vpop.f32.mrb[0].mxu0
  %v1230 = vadd.f32 %v446, %v1229
  %v1231 = vpop.f32.mrb[0].mxu0
  %v1232 = vpop.f32.mrb[0].mxu0
  %v1233 = vadd.f32 %v451, %v1232
  %v1234 = vpop.f32.mrb[0].mxu0
  %1235 = vmatprep.mubr.bf16.mxu0 %v953
  %1236 = vmatmul.mubr.bf16.gmra.mrb[0].mxu0 %v805
  %v1237 = vpop.f32.mrb[0].mxu0
  %v1238 = vadd.f32 %v456, %v1237
  %v1239 = vpop.f32.mrb[0].mxu0
  %v1240 = vpop.f32.mrb[0].mxu0
  %v1241 = vadd.f32 %v461, %v1240
  %v1242 = vpop.f32.mrb[0].mxu0
  %1243 = vmatprep.mubr.bf16.mxu0 %v956
  %1244 = vmatmul.mubr.bf16.gmra.mrb[0].mxu0 %v807
  %v1245 = vpop.f32.mrb[0].mxu0
  %v1246 = vadd.f32 %v466, %v1245
  %v1247 = vpop.f32.mrb[0].mxu0
  %v1248 = vpop.f32.mrb[0].mxu0
  %v1249 = vadd.f32 %v471, %v1248
  %v1250 = vpop.f32.mrb[0].mxu0
  %1251 = vmatprep.mubr.bf16.mxu0 %v959
  %1252 = vmatmul.mubr.bf16.gmra.mrb[0].mxu0 %v809
  %v1253 = vpop.f32.mrb[0].mxu0
  %v1254 = vadd.f32 %v476, %v1253
  %v1255 = vpop.f32.mrb[0].mxu0
  %v1256 = vpop.f32.mrb[0].mxu0
  %v1257 = vadd.f32 %v481, %v1256
  %v1258 = vpop.f32.mrb[0].mxu0
  %1259 = vmatprep.mubr.bf16.mxu0 %v962
  %1260 = vmatmul.mubr.bf16.gmra.mrb[0].mxu0 %v811
  %v1261 = vpop.f32.mrb[0].mxu0
  %v1262 = vadd.f32 %v486, %v1261
  %v1263 = vpop.f32.mrb[0].mxu0
  %v1264 = vpop.f32.mrb[0].mxu0
  %v1265 = vadd.f32 %v491, %v1264
  %v1266 = vpop.f32.mrb[0].mxu0
  %1267 = vmatprep.mubr.bf16.mxu0 %v965
  %1268 = vmatmul.mubr.bf16.gmra.mrb[0].mxu0 %v813
  %v1269 = vpop.f32.mrb[0].mxu0
  %v1270 = vadd.f32 %v496, %v1269
  %v1271 = vpop.f32.mrb[0].mxu0
  %v1272 = vpop.f32.mrb[0].mxu0
  %v1273 = vadd.f32 %v501, %v1272
  %v1274 = vpop.f32.mrb[0].mxu0
  %1275 = vmatprep.mubr.bf16.mxu0 %v968
  %1276 = vmatmul.mubr.bf16.gmra.mrb[0].mxu0 %v815
  %v1277 = vpop.f32.mrb[0].mxu0
  %v1278 = vadd.f32 %v506, %v1277
  %v1279 = vpop.f32.mrb[0].mxu0
  %v1280 = vpop.f32.mrb[0].mxu0
  %v1281 = vadd.f32 %v511, %v1280
  %v1282 = vpop.f32.mrb[0].mxu0
  %1283 = vmatprep.mubr.bf16.mxu0 %v971
  %1284 = vmatmul.mubr.bf16.gmra.mrb[0].mxu0 %v817
  %v1285 = vpop.f32.mrb[0].mxu0
  %v1286 = vadd.f32 %v516, %v1285
  %v1287 = vpop.f32.mrb[0].mxu0
  %v1288 = vpop.f32.mrb[0].mxu0
  %v1289 = vadd.f32 %v521, %v1288
  %v1290 = vpop.f32.mrb[0].mxu0
  %1291 = vmatprep.mubr.bf16.mxu0 %v974
  %1292 = vmatmul.mubr.bf16.gmra.mrb[0].mxu0 %v819
  %v1293 = vpop.f32.mrb[0].mxu0
  %v1294 = vadd.f32 %v526, %v1293
  %v1295 = vpop.f32.mrb[0].mxu0
  %v1296 = vpop.f32.mrb[0].mxu0
  %v1297 = vadd.f32 %v531, %v1296
  %v1298 = vpop.f32.mrb[0].mxu0
  %1299 = vdwg.mxu0
  %v1300 = vxor.u32 %v1014, 2147483648
  %v1301 = vxor.u32 %v1017, 2147483648
  %v1302 = vxor.u32 %v1022, 2147483648
  %v1303 = vxor.u32 %v1025, 2147483648
  %v1304 = vxor.u32 %v1030, 2147483648
  %v1305 = vxor.u32 %v1033, 2147483648
  %v1306 = vxor.u32 %v1038, 2147483648
  %v1307 = vxor.u32 %v1041, 2147483648
  %v1308 = vxor.u32 %v1046, 2147483648
  %v1309 = vxor.u32 %v1049, 2147483648
  %v1310 = vxor.u32 %v1054, 2147483648
  %v1311 = vxor.u32 %v1057, 2147483648
  %v1312 = vxor.u32 %v1062, 2147483648
  %v1313 = vxor.u32 %v1065, 2147483648
  %v1314 = vxor.u32 %v1070, 2147483648
  %v1315 = vxor.u32 %v1073, 2147483648
  %v1316 = vxor.u32 %v1078, 2147483648
  %v1317 = vxor.u32 %v1081, 2147483648
  %v1318 = vxor.u32 %v1086, 2147483648
  %v1319 = vxor.u32 %v1089, 2147483648
  %v1320 = vxor.u32 %v1094, 2147483648
  %v1321 = vxor.u32 %v1097, 2147483648
  %v1322 = vxor.u32 %v1102, 2147483648
  %v1323 = vxor.u32 %v1105, 2147483648
  %v1324 = vxor.u32 %v1110, 2147483648
  %v1325 = vxor.u32 %v1113, 2147483648
  %v1326 = vxor.u32 %v1118, 2147483648
  %v1327 = vxor.u32 %v1121, 2147483648
  %v1328 = vxor.u32 %v1126, 2147483648
  %v1329 = vxor.u32 %v1129, 2147483648
  %v1330 = vxor.u32 %v1134, 2147483648
  %v1331 = vxor.u32 %v1137, 2147483648
  %v1332 = vxor.u32 %v1142, 2147483648
  %v1333 = vxor.u32 %v1145, 2147483648
  %v1334 = vxor.u32 %v1150, 2147483648
  %v1335 = vxor.u32 %v1153, 2147483648
  %v1336 = vxor.u32 %v1158, 2147483648
  %v1337 = vxor.u32 %v1161, 2147483648
  %v1338 = vxor.u32 %v1166, 2147483648
  %v1339 = vxor.u32 %v1169, 2147483648
  %v1340 = vxor.u32 %v1174, 2147483648
  %v1341 = vxor.u32 %v1177, 2147483648
  %v1342 = vxor.u32 %v1182, 2147483648
  %v1343 = vxor.u32 %v1185, 2147483648
  %v1344 = vxor.u32 %v1190, 2147483648
  %v1345 = vxor.u32 %v1193, 2147483648
  %v1346 = vxor.u32 %v1198, 2147483648
  %v1347 = vxor.u32 %v1201, 2147483648
  %v1348 = vxor.u32 %v1206, 2147483648
  %v1349 = vxor.u32 %v1209, 2147483648
  %v1350 = vxor.u32 %v1214, 2147483648
  %v1351 = vxor.u32 %v1217, 2147483648
  %v1352 = vxor.u32 %v1222, 2147483648
  %v1353 = vxor.u32 %v1225, 2147483648
  %v1354 = vxor.u32 %v1230, 2147483648
  %v1355 = vxor.u32 %v1233, 2147483648
  %v1356 = vxor.u32 %v1238, 2147483648
  %v1357 = vxor.u32 %v1241, 2147483648
  %v1358 = vxor.u32 %v1246, 2147483648
  %v1359 = vxor.u32 %v1249, 2147483648
  %v1360 = vxor.u32 %v1254, 2147483648
  %v1361 = vxor.u32 %v1257, 2147483648
  %v1362 = vxor.u32 %v1262, 2147483648
  %v1363 = vxor.u32 %v1265, 2147483648
  %v1364 = vxor.u32 %v1270, 2147483648
  %v1365 = vxor.u32 %v1273, 2147483648
  %v1366 = vxor.u32 %v1278, 2147483648
  %v1367 = vxor.u32 %v1281, 2147483648
  %v1368 = vxor.u32 %v1286, 2147483648
  %v1369 = vxor.u32 %v1289, 2147483648
  %v1370 = vxor.u32 %v1294, 2147483648
  %v1371 = vxor.u32 %v1297, 2147483648
  %v1372 = vmul.f32 %v1300, 1.442695
  %v1373 = vpow.pop %v1372
  %v1374 = vmul.f32 %v1301, 1.442695
  %v1375 = vpow.pop %v1374
  %v1376 = vmul.f32 %v1302, 1.442695
  %v1377 = vpow.pop %v1376
  %v1378 = vmul.f32 %v1303, 1.442695
  %v1379 = vpow.pop %v1378
  %v1380 = vmul.f32 %v1304, 1.442695
  %v1381 = vpow.pop %v1380
  %v1382 = vmul.f32 %v1305, 1.442695
  %v1383 = vpow.pop %v1382
  %v1384 = vmul.f32 %v1306, 1.442695
  %v1385 = vpow.pop %v1384
  %v1386 = vmul.f32 %v1307, 1.442695
  %v1387 = vpow.pop %v1386
  %v1388 = vmul.f32 %v1308, 1.442695
  %v1389 = vpow.pop %v1388
  %v1390 = vmul.f32 %v1309, 1.442695
  %v1391 = vpow.pop %v1390
  %v1392 = vmul.f32 %v1310, 1.442695
  %v1393 = vpow.pop %v1392
  %v1394 = vmul.f32 %v1311, 1.442695
  %v1395 = vpow.pop %v1394
  %v1396 = vmul.f32 %v1312, 1.442695
  %v1397 = vpow.pop %v1396
  %v1398 = vmul.f32 %v1313, 1.442695
  %v1399 = vpow.pop %v1398
  %v1400 = vmul.f32 %v1314, 1.442695
  %v1401 = vpow.pop %v1400
  %v1402 = vmul.f32 %v1315, 1.442695
  %v1403 = vpow.pop %v1402
  %v1404 = vmul.f32 %v1316, 1.442695
  %v1405 = vpow.pop %v1404
  %v1406 = vmul.f32 %v1317, 1.442695
  %v1407 = vpow.pop %v1406
  %v1408 = vmul.f32 %v1318, 1.442695
  %v1409 = vpow.pop %v1408
  %v1410 = vmul.f32 %v1319, 1.442695
  %v1411 = vpow.pop %v1410
  %v1412 = vmul.f32 %v1320, 1.442695
  %v1413 = vpow.pop %v1412
  %v1414 = vmul.f32 %v1321, 1.442695
  %v1415 = vpow.pop %v1414
  %v1416 = vmul.f32 %v1322, 1.442695
  %v1417 = vpow.pop %v1416
  %v1418 = vmul.f32 %v1323, 1.442695
  %v1419 = vpow.pop %v1418
  %v1420 = vmul.f32 %v1324, 1.442695
  %v1421 = vpow.pop %v1420
  %v1422 = vmul.f32 %v1325, 1.442695
  %v1423 = vpow.pop %v1422
  %v1424 = vmul.f32 %v1326, 1.442695
  %v1425 = vpow.pop %v1424
  %v1426 = vmul.f32 %v1327, 1.442695
  %v1427 = vpow.pop %v1426
  %v1428 = vmul.f32 %v1328, 1.442695
  %v1429 = vpow.pop %v1428
  %v1430 = vmul.f32 %v1329, 1.442695
  %v1431 = vpow.pop %v1430
  %v1432 = vmul.f32 %v1330, 1.442695
  %v1433 = vpow.pop %v1432
  %v1434 = vmul.f32 %v1331, 1.442695
  %v1435 = vpow.pop %v1434
  %v1436 = vmul.f32 %v1332, 1.442695
  %v1437 = vpow.pop %v1436
  %v1438 = vmul.f32 %v1333, 1.442695
  %v1439 = vpow.pop %v1438
  %v1440 = vmul.f32 %v1334, 1.442695
  %v1441 = vpow.pop %v1440
  %v1442 = vmul.f32 %v1335, 1.442695
  %v1443 = vpow.pop %v1442
  %v1444 = vmul.f32 %v1336, 1.442695
  %v1445 = vpow.pop %v1444
  %v1446 = vmul.f32 %v1337, 1.442695
  %v1447 = vpow.pop %v1446
  %v1448 = vmul.f32 %v1338, 1.442695
  %v1449 = vpow.pop %v1448
  %v1450 = vmul.f32 %v1339, 1.442695
  %v1451 = vpow.pop %v1450
  %v1452 = vmul.f32 %v1340, 1.442695
  %v1453 = vpow.pop %v1452
  %v1454 = vmul.f32 %v1341, 1.442695
  %v1455 = vpow.pop %v1454
  %v1456 = vmul.f32 %v1342, 1.442695
  %v1457 = vpow.pop %v1456
  %v1458 = vmul.f32 %v1343, 1.442695
  %v1459 = vpow.pop %v1458
  %v1460 = vmul.f32 %v1344, 1.442695
  %v1461 = vpow.pop %v1460
  %v1462 = vmul.f32 %v1345, 1.442695
  %v1463 = vpow.pop %v1462
  %v1464 = vmul.f32 %v1346, 1.442695
  %v1465 = vpow.pop %v1464
  %v1466 = vmul.f32 %v1347, 1.442695
  %v1467 = vpow.pop %v1466
  %v1468 = vmul.f32 %v1348, 1.442695
  %v1469 = vpow.pop %v1468
  %v1470 = vmul.f32 %v1349, 1.442695
  %v1471 = vpow.pop %v1470
  %v1472 = vmul.f32 %v1350, 1.442695
  %v1473 = vpow.pop %v1472
  %v1474 = vmul.f32 %v1351, 1.442695
  %v1475 = vpow.pop %v1474
  %v1476 = vmul.f32 %v1352, 1.442695
  %v1477 = vpow.pop %v1476
  %v1478 = vmul.f32 %v1353, 1.442695
  %v1479 = vpow.pop %v1478
  %v1480 = vmul.f32 %v1354, 1.442695
  %v1481 = vpow.pop %v1480
  %v1482 = vmul.f32 %v1355, 1.442695
  %v1483 = vpow.pop %v1482
  %v1484 = vmul.f32 %v1356, 1.442695
  %v1485 = vpow.pop %v1484
  %v1486 = vmul.f32 %v1357, 1.442695
  %v1487 = vpow.pop %v1486
  %v1488 = vmul.f32 %v1358, 1.442695
  %v1489 = vpow.pop %v1488
  %v1490 = vmul.f32 %v1359, 1.442695
  %v1491 = vpow.pop %v1490
  %v1492 = vmul.f32 %v1360, 1.442695
  %v1493 = vpow.pop %v1492
  %v1494 = vmul.f32 %v1361, 1.442695
  %v1495 = vpow.pop %v1494
  %v1496 = vmul.f32 %v1362, 1.442695
  %v1497 = vpow.pop %v1496
  %v1498 = vmul.f32 %v1363, 1.442695
  %v1499 = vpow.pop %v1498
  %v1500 = vmul.f32 %v1364, 1.442695
  %v1501 = vpow.pop %v1500
  %v1502 = vmul.f32 %v1365, 1.442695
  %v1503 = vpow.pop %v1502
  %v1504 = vmul.f32 %v1366, 1.442695
  %v1505 = vpow.pop %v1504
  %v1506 = vmul.f32 %v1367, 1.442695
  %v1507 = vpow.pop %v1506
  %v1508 = vmul.f32 %v1368, 1.442695
  %v1509 = vpow.pop %v1508
  %v1510 = vmul.f32 %v1369, 1.442695
  %v1511 = vpow.pop %v1510
  %v1512 = vmul.f32 %v1370, 1.442695
  %v1513 = vpow.pop %v1512
  %v1514 = vmul.f32 %v1371, 1.442695
  %v1515 = vpow.pop %v1514
  %v1516 = vadd.f32 %v1373, 1.0
  %v1517 = vadd.f32 %v1375, 1.0
  %v1518 = vadd.f32 %v1377, 1.0
  %v1519 = vadd.f32 %v1379, 1.0
  %v1520 = vadd.f32 %v1381, 1.0
  %v1521 = vadd.f32 %v1383, 1.0
  %v1522 = vadd.f32 %v1385, 1.0
  %v1523 = vadd.f32 %v1387, 1.0
  %v1524 = vadd.f32 %v1389, 1.0
  %v1525 = vadd.f32 %v1391, 1.0
  %v1526 = vadd.f32 %v1393, 1.0
  %v1527 = vadd.f32 %v1395, 1.0
  %v1528 = vadd.f32 %v1397, 1.0
  %v1529 = vadd.f32 %v1399, 1.0
  %v1530 = vadd.f32 %v1401, 1.0
  %v1531 = vadd.f32 %v1403, 1.0
  %v1532 = vadd.f32 %v1405, 1.0
  %v1533 = vadd.f32 %v1407, 1.0
  %v1534 = vadd.f32 %v1409, 1.0
  %v1535 = vadd.f32 %v1411, 1.0
  %v1536 = vadd.f32 %v1413, 1.0
  %v1537 = vadd.f32 %v1415, 1.0
  %v1538 = vadd.f32 %v1417, 1.0
  %v1539 = vadd.f32 %v1419, 1.0
  %v1540 = vadd.f32 %v1421, 1.0
  %v1541 = vadd.f32 %v1423, 1.0
  %v1542 = vadd.f32 %v1425, 1.0
  %v1543 = vadd.f32 %v1427, 1.0
  %v1544 = vadd.f32 %v1429, 1.0
  %v1545 = vadd.f32 %v1431, 1.0
  %v1546 = vadd.f32 %v1433, 1.0
  %v1547 = vadd.f32 %v1435, 1.0
  %v1548 = vadd.f32 %v1437, 1.0
  %v1549 = vadd.f32 %v1439, 1.0
  %v1550 = vadd.f32 %v1441, 1.0
  %v1551 = vadd.f32 %v1443, 1.0
  %v1552 = vadd.f32 %v1445, 1.0
  %v1553 = vadd.f32 %v1447, 1.0
  %v1554 = vadd.f32 %v1449, 1.0
  %v1555 = vadd.f32 %v1451, 1.0
  %v1556 = vadd.f32 %v1453, 1.0
  %v1557 = vadd.f32 %v1455, 1.0
  %v1558 = vadd.f32 %v1457, 1.0
  %v1559 = vadd.f32 %v1459, 1.0
  %v1560 = vadd.f32 %v1461, 1.0
  %v1561 = vadd.f32 %v1463, 1.0
  %v1562 = vadd.f32 %v1465, 1.0
  %v1563 = vadd.f32 %v1467, 1.0
  %v1564 = vadd.f32 %v1469, 1.0
  %v1565 = vadd.f32 %v1471, 1.0
  %v1566 = vadd.f32 %v1473, 1.0
  %v1567 = vadd.f32 %v1475, 1.0
  %v1568 = vadd.f32 %v1477, 1.0
  %v1569 = vadd.f32 %v1479, 1.0
  %v1570 = vadd.f32 %v1481, 1.0
  %v1571 = vadd.f32 %v1483, 1.0
  %v1572 = vadd.f32 %v1485, 1.0
  %v1573 = vadd.f32 %v1487, 1.0
  %v1574 = vadd.f32 %v1489, 1.0
  %v1575 = vadd.f32 %v1491, 1.0
  %v1576 = vadd.f32 %v1493, 1.0
  %v1577 = vadd.f32 %v1495, 1.0
  %v1578 = vadd.f32 %v1497, 1.0
  %v1579 = vadd.f32 %v1499, 1.0
  %v1580 = vadd.f32 %v1501, 1.0
  %v1581 = vadd.f32 %v1503, 1.0
  %v1582 = vadd.f32 %v1505, 1.0
  %v1583 = vadd.f32 %v1507, 1.0
  %v1584 = vadd.f32 %v1509, 1.0
  %v1585 = vadd.f32 %v1511, 1.0
  %v1586 = vadd.f32 %v1513, 1.0
  %v1587 = vadd.f32 %v1515, 1.0
  %v1588 = vrcp.pop %v1516
  %v1589 = vmul.f32 1.0, %v1588
  %v1590 = vrcp.pop %v1517
  %v1591 = vmul.f32 1.0, %v1590
  %v1592 = vrcp.pop %v1518
  %v1593 = vmul.f32 1.0, %v1592
  %v1594 = vrcp.pop %v1519
  %v1595 = vmul.f32 1.0, %v1594
  %v1596 = vrcp.pop %v1520
  %v1597 = vmul.f32 1.0, %v1596
  %v1598 = vrcp.pop %v1521
  %v1599 = vmul.f32 1.0, %v1598
  %v1600 = vrcp.pop %v1522
  %v1601 = vmul.f32 1.0, %v1600
  %v1602 = vrcp.pop %v1523
  %v1603 = vmul.f32 1.0, %v1602
  %v1604 = vrcp.pop %v1524
  %v1605 = vmul.f32 1.0, %v1604
  %v1606 = vrcp.pop %v1525
  %v1607 = vmul.f32 1.0, %v1606
  %v1608 = vrcp.pop %v1526
  %v1609 = vmul.f32 1.0, %v1608
  %v1610 = vrcp.pop %v1527
  %v1611 = vmul.f32 1.0, %v1610
  %v1612 = vrcp.pop %v1528
  %v1613 = vmul.f32 1.0, %v1612
  %v1614 = vrcp.pop %v1529
  %v1615 = vmul.f32 1.0, %v1614
  %v1616 = vrcp.pop %v1530
  %v1617 = vmul.f32 1.0, %v1616
  %v1618 = vrcp.pop %v1531
  %v1619 = vmul.f32 1.0, %v1618
  %v1620 = vrcp.pop %v1532
  %v1621 = vmul.f32 1.0, %v1620
  %v1622 = vrcp.pop %v1533
  %v1623 = vmul.f32 1.0, %v1622
  %v1624 = vrcp.pop %v1534
  %v1625 = vmul.f32 1.0, %v1624
  %v1626 = vrcp.pop %v1535
  %v1627 = vmul.f32 1.0, %v1626
  %v1628 = vrcp.pop %v1536
  %v1629 = vmul.f32 1.0, %v1628
  %v1630 = vrcp.pop %v1537
  %v1631 = vmul.f32 1.0, %v1630
  %v1632 = vrcp.pop %v1538
  %v1633 = vmul.f32 1.0, %v1632
  %v1634 = vrcp.pop %v1539
  %v1635 = vmul.f32 1.0, %v1634
  %v1636 = vrcp.pop %v1540
  %v1637 = vmul.f32 1.0, %v1636
  %v1638 = vrcp.pop %v1541
  %v1639 = vmul.f32 1.0, %v1638
  %v1640 = vrcp.pop %v1542
  %v1641 = vmul.f32 1.0, %v1640
  %v1642 = vrcp.pop %v1543
  %v1643 = vmul.f32 1.0, %v1642
  %v1644 = vrcp.pop %v1544
  %v1645 = vmul.f32 1.0, %v1644
  %v1646 = vrcp.pop %v1545
  %v1647 = vmul.f32 1.0, %v1646
  %v1648 = vrcp.pop %v1546
  %v1649 = vmul.f32 1.0, %v1648
  %v1650 = vrcp.pop %v1547
  %v1651 = vmul.f32 1.0, %v1650
  %v1652 = vrcp.pop %v1548
  %v1653 = vmul.f32 1.0, %v1652
  %v1654 = vrcp.pop %v1549
  %v1655 = vmul.f32 1.0, %v1654
  %v1656 = vrcp.pop %v1550
  %v1657 = vmul.f32 1.0, %v1656
  %v1658 = vrcp.pop %v1551
  %v1659 = vmul.f32 1.0, %v1658
  %v1660 = vrcp.pop %v1552
  %v1661 = vmul.f32 1.0, %v1660
  %v1662 = vrcp.pop %v1553
  %v1663 = vmul.f32 1.0, %v1662
  %v1664 = vrcp.pop %v1554
  %v1665 = vmul.f32 1.0, %v1664
  %v1666 = vrcp.pop %v1555
  %v1667 = vmul.f32 1.0, %v1666
  %v1668 = vrcp.pop %v1556
  %v1669 = vmul.f32 1.0, %v1668
  %v1670 = vrcp.pop %v1557
  %v1671 = vmul.f32 1.0, %v1670
  %v1672 = vrcp.pop %v1558
  %v1673 = vmul.f32 1.0, %v1672
  %v1674 = vrcp.pop %v1559
  %v1675 = vmul.f32 1.0, %v1674
  %v1676 = vrcp.pop %v1560
  %v1677 = vmul.f32 1.0, %v1676
  %v1678 = vrcp.pop %v1561
  %v1679 = vmul.f32 1.0, %v1678
  %v1680 = vrcp.pop %v1562
  %v1681 = vmul.f32 1.0, %v1680
  %v1682 = vrcp.pop %v1563
  %v1683 = vmul.f32 1.0, %v1682
  %v1684 = vrcp.pop %v1564
  %v1685 = vmul.f32 1.0, %v1684
  %v1686 = vrcp.pop %v1565
  %v1687 = vmul.f32 1.0, %v1686
  %v1688 = vrcp.pop %v1566
  %v1689 = vmul.f32 1.0, %v1688
  %v1690 = vrcp.pop %v1567
  %v1691 = vmul.f32 1.0, %v1690
  %v1692 = vrcp.pop %v1568
  %v1693 = vmul.f32 1.0, %v1692
  %v1694 = vrcp.pop %v1569
  %v1695 = vmul.f32 1.0, %v1694
  %v1696 = vrcp.pop %v1570
  %v1697 = vmul.f32 1.0, %v1696
  %v1698 = vrcp.pop %v1571
  %v1699 = vmul.f32 1.0, %v1698
  %v1700 = vrcp.pop %v1572
  %v1701 = vmul.f32 1.0, %v1700
  %v1702 = vrcp.pop %v1573
  %v1703 = vmul.f32 1.0, %v1702
  %v1704 = vrcp.pop %v1574
  %v1705 = vmul.f32 1.0, %v1704
  %v1706 = vrcp.pop %v1575
  %v1707 = vmul.f32 1.0, %v1706
  %v1708 = vrcp.pop %v1576
  %v1709 = vmul.f32 1.0, %v1708
  %v1710 = vrcp.pop %v1577
  %v1711 = vmul.f32 1.0, %v1710
  %v1712 = vrcp.pop %v1578
  %v1713 = vmul.f32 1.0, %v1712
  %v1714 = vrcp.pop %v1579
  %v1715 = vmul.f32 1.0, %v1714
  %v1716 = vrcp.pop %v1580
  %v1717 = vmul.f32 1.0, %v1716
  %v1718 = vrcp.pop %v1581
  %v1719 = vmul.f32 1.0, %v1718
  %v1720 = vrcp.pop %v1582
  %v1721 = vmul.f32 1.0, %v1720
  %v1722 = vrcp.pop %v1583
  %v1723 = vmul.f32 1.0, %v1722
  %v1724 = vrcp.pop %v1584
  %v1725 = vmul.f32 1.0, %v1724
  %v1726 = vrcp.pop %v1585
  %v1727 = vmul.f32 1.0, %v1726
  %v1728 = vrcp.pop %v1586
  %v1729 = vmul.f32 1.0, %v1728
  %v1730 = vrcp.pop %v1587
  %v1731 = vmul.f32 1.0, %v1730
  %vm1732 = vcmask 31744
  %1733 = vst.msk [vmem:[#allocation2] sm:$0xff] %vm1732, %v1589
  %1734 = vst.msk [vmem:[#allocation2 + $0x8] sm:$0xff] %vm1732, %v1591
  %1735 = vst.msk [vmem:[#allocation2 + $0x10] sm:$0xff] %vm1732, %v1593
  %1736 = vst.msk [vmem:[#allocation2 + $0x18] sm:$0xff] %vm1732, %v1595
  %1737 = vst.msk [vmem:[#allocation2 + $0x20] sm:$0xff] %vm1732, %v1597
  %1738 = vst.msk [vmem:[#allocation2 + $0x28] sm:$0xff] %vm1732, %v1599
  %1739 = vst.msk [vmem:[#allocation2 + $0x30] sm:$0xff] %vm1732, %v1601
  %1740 = vst.msk [vmem:[#allocation2 + $0x38] sm:$0xff] %vm1732, %v1603
  %1741 = vst.msk [vmem:[#allocation2 + $0x40] sm:$0xff] %vm1732, %v1605
  %1742 = vst.msk [vmem:[#allocation2 + $0x48] sm:$0xff] %vm1732, %v1607
  %1743 = vst.msk [vmem:[#allocation2 + $0x50] sm:$0xff] %vm1732, %v1609
  %1744 = vst.msk [vmem:[#allocation2 + $0x58] sm:$0xff] %vm1732, %v1611
  %1745 = vst.msk [vmem:[#allocation2 + $0x60] sm:$0xff] %vm1732, %v1613
  %1746 = vst.msk [vmem:[#allocation2 + $0x68] sm:$0xff] %vm1732, %v1615
  %1747 = vst.msk [vmem:[#allocation2 + $0x70] sm:$0xff] %vm1732, %v1617
  %1748 = vst.msk [vmem:[#allocation2 + $0x78] sm:$0xff] %vm1732, %v1619
  %1749 = vst.msk [vmem:[#allocation2 + $0x80] sm:$0xff] %vm1732, %v1621
  %1750 = vst.msk [vmem:[#allocation2 + $0x88] sm:$0xff] %vm1732, %v1623
  %1751 = vst.msk [vmem:[#allocation2 + $0x90] sm:$0xff] %vm1732, %v1625
  %1752 = vst.msk [vmem:[#allocation2 + $0x98] sm:$0xff] %vm1732, %v1627
  %1753 = vst.msk [vmem:[#allocation2 + $0xa0] sm:$0xff] %vm1732, %v1629
  %1754 = vst.msk [vmem:[#allocation2 + $0xa8] sm:$0xff] %vm1732, %v1631
  %1755 = vst.msk [vmem:[#allocation2 + $0xb0] sm:$0xff] %vm1732, %v1633
  %1756 = vst.msk [vmem:[#allocation2 + $0xb8] sm:$0xff] %vm1732, %v1635
  %1757 = vst.msk [vmem:[#allocation2 + $0xc0] sm:$0xff] %vm1732, %v1637
  %1758 = vst.msk [vmem:[#allocation2 + $0xc8] sm:$0xff] %vm1732, %v1639
  %1759 = vst.msk [vmem:[#allocation2 + $0xd0] sm:$0xff] %vm1732, %v1641
  %1760 = vst.msk [vmem:[#allocation2 + $0xd8] sm:$0xff] %vm1732, %v1643
  %1761 = vst.msk [vmem:[#allocation2 + $0xe0] sm:$0xff] %vm1732, %v1645
  %1762 = vst.msk [vmem:[#allocation2 + $0xe8] sm:$0xff] %vm1732, %v1647
  %1763 = vst.msk [vmem:[#allocation2 + $0xf0] sm:$0xff] %vm1732, %v1649
  %1764 = vst.msk [vmem:[#allocation2 + $0xf8] sm:$0xff] %vm1732, %v1651
  %1765 = vst.msk [vmem:[#allocation2 + $0x100] sm:$0xff] %vm1732, %v1653
  %1766 = vst.msk [vmem:[#allocation2 + $0x108] sm:$0xff] %vm1732, %v1655
  %1767 = vst.msk [vmem:[#allocation2 + $0x110] sm:$0xff] %vm1732, %v1657
  %1768 = vst.msk [vmem:[#allocation2 + $0x118] sm:$0xff] %vm1732, %v1659
  %1769 = vst.msk [vmem:[#allocation2 + $0x120] sm:$0xff] %vm1732, %v1661
  %1770 = vst.msk [vmem:[#allocation2 + $0x128] sm:$0xff] %vm1732, %v1663
  %1771 = vst.msk [vmem:[#allocation2 + $0x130] sm:$0xff] %vm1732, %v1665
  %1772 = vst.msk [vmem:[#allocation2 + $0x138] sm:$0xff] %vm1732, %v1667
  %1773 = vst.msk [vmem:[#allocation2 + $0x140] sm:$0xff] %vm1732, %v1669
  %1774 = vst.msk [vmem:[#allocation2 + $0x148] sm:$0xff] %vm1732, %v1671
  %1775 = vst.msk [vmem:[#allocation2 + $0x150] sm:$0xff] %vm1732, %v1673
  %1776 = vst.msk [vmem:[#allocation2 + $0x158] sm:$0xff] %vm1732, %v1675
  %1777 = vst.msk [vmem:[#allocation2 + $0x160] sm:$0xff] %vm1732, %v1677
  %1778 = vst.msk [vmem:[#allocation2 + $0x168] sm:$0xff] %vm1732, %v1679
  %1779 = vst.msk [vmem:[#allocation2 + $0x170] sm:$0xff] %vm1732, %v1681
  %1780 = vst.msk [vmem:[#allocation2 + $0x178] sm:$0xff] %vm1732, %v1683
  %1781 = vst.msk [vmem:[#allocation2 + $0x180] sm:$0xff] %vm1732, %v1685
  %1782 = vst.msk [vmem:[#allocation2 + $0x188] sm:$0xff] %vm1732, %v1687
  %1783 = vst.msk [vmem:[#allocation2 + $0x190] sm:$0xff] %vm1732, %v1689
  %1784 = vst.msk [vmem:[#allocation2 + $0x198] sm:$0xff] %vm1732, %v1691
  %1785 = vst.msk [vmem:[#allocation2 + $0x1a0] sm:$0xff] %vm1732, %v1693
  %1786 = vst.msk [vmem:[#allocation2 + $0x1a8] sm:$0xff] %vm1732, %v1695
  %1787 = vst.msk [vmem:[#allocation2 + $0x1b0] sm:$0xff] %vm1732, %v1697
  %1788 = vst.msk [vmem:[#allocation2 + $0x1b8] sm:$0xff] %vm1732, %v1699
  %1789 = vst.msk [vmem:[#allocation2 + $0x1c0] sm:$0xff] %vm1732, %v1701
  %1790 = vst.msk [vmem:[#allocation2 + $0x1c8] sm:$0xff] %vm1732, %v1703
  %1791 = vst.msk [vmem:[#allocation2 + $0x1d0] sm:$0xff] %vm1732, %v1705
  %1792 = vst.msk [vmem:[#allocation2 + $0x1d8] sm:$0xff] %vm1732, %v1707
  %1793 = vst.msk [vmem:[#allocation2 + $0x1e0] sm:$0xff] %vm1732, %v1709
  %1794 = vst.msk [vmem:[#allocation2 + $0x1e8] sm:$0xff] %vm1732, %v1711
  %1795 = vst.msk [vmem:[#allocation2 + $0x1f0] sm:$0xff] %vm1732, %v1713
  %1796 = vst.msk [vmem:[#allocation2 + $0x1f8] sm:$0xff] %vm1732, %v1715
  %1797 = vst.msk [vmem:[#allocation2 + $0x200] sm:$0xff] %vm1732, %v1717
  %1798 = vst.msk [vmem:[#allocation2 + $0x208] sm:$0xff] %vm1732, %v1719
  %1799 = vst.msk [vmem:[#allocation2 + $0x210] sm:$0xff] %vm1732, %v1721
  %1800 = vst.msk [vmem:[#allocation2 + $0x218] sm:$0xff] %vm1732, %v1723
  %1801 = vst.msk [vmem:[#allocation2 + $0x220] sm:$0xff] %vm1732, %v1725
  %1802 = vst.msk [vmem:[#allocation2 + $0x228] sm:$0xff] %vm1732, %v1727
  %1803 = vst.msk [vmem:[#allocation2 + $0x230] sm:$0xff] %vm1732, %v1729
  %1804 = vst.msk [vmem:[#allocation2 + $0x238] sm:$0xff] %vm1732, %v1731
  %v1805 = vld [vmem:[%s4] sm:$0xff]
  %v1806 = vld [vmem:[%s4 + $0x8] sm:$0xff]
  %v1807 = vld [vmem:[%s4 + $0x10] sm:$0xf]
  %v1808 = vld [vmem:[%s4 + $0x14] sm:$0xff]
  %v1809 = vld [vmem:[%s4 + $0x1c] sm:$0xff]
  %v1810 = vld [vmem:[%s4 + $0x24] sm:$0xf]
  %v1811 = vld [vmem:[%s4 + $0x28] sm:$0xff]
  %v1812 = vld [vmem:[%s4 + $0x30] sm:$0xff]
  %v1813 = vld [vmem:[%s4 + $0x38] sm:$0xf]
  %v1814 = vld [vmem:[%s4 + $0x3c] sm:$0xff]
  %v1815 = vld [vmem:[%s4 + $0x44] sm:$0xff]
  %v1816 = vld [vmem:[%s4 + $0x4c] sm:$0xf]
  %v1817 = vld [vmem:[%s4 + $0x50] sm:$0xff]
  %v1818 = vld [vmem:[%s4 + $0x58] sm:$0xff]
  %v1819 = vld [vmem:[%s4 + $0x60] sm:$0xf]
  %v1820 = vld [vmem:[%s4 + $0x64] sm:$0xff]
  %v1821 = vld [vmem:[%s4 + $0x6c] sm:$0xff]
  %v1822 = vld [vmem:[%s4 + $0x74] sm:$0xf]
  %v1823 = vld [vmem:[%s4 + $0x78] sm:$0xff]
  %v1824 = vld [vmem:[%s4 + $0x80] sm:$0xff]
  %v1825 = vld [vmem:[%s4 + $0x88] sm:$0xf]
  %v1826 = vld [vmem:[%s4 + $0x8c] sm:$0xff]
  %v1827 = vld [vmem:[%s4 + $0x94] sm:$0xff]
  %v1828 = vld [vmem:[%s4 + $0x9c] sm:$0xf]
  %v1829 = vld [vmem:[%s4 + $0xa0] sm:$0xff]
  %v1830 = vld [vmem:[%s4 + $0xa8] sm:$0xff]
  %v1831 = vld [vmem:[%s4 + $0xb0] sm:$0xf]
  %v1832 = vld [vmem:[%s4 + $0xb4] sm:$0xff]
  %v1833 = vld [vmem:[%s4 + $0xbc] sm:$0xff]
  %v1834 = vld [vmem:[%s4 + $0xc4] sm:$0xf]
  %v1835 = vld [vmem:[%s4 + $0xc8] sm:$0xff]
  %v1836 = vld [vmem:[%s4 + $0xd0] sm:$0xff]
  %v1837 = vld [vmem:[%s4 + $0xd8] sm:$0xf]
  %v1838 = vld [vmem:[%s4 + $0xdc] sm:$0xff]
  %v1839 = vld [vmem:[%s4 + $0xe4] sm:$0xff]
  %v1840 = vld [vmem:[%s4 + $0xec] sm:$0xf]
  %v1841 = vld [vmem:[%s4 + $0xf0] sm:$0xff]
  %v1842 = vld [vmem:[%s4 + $0xf8] sm:$0xff]
  %v1843 = vld [vmem:[%s4 + $0x100] sm:$0xf]
  %v1844 = vld [vmem:[%s4 + $0x104] sm:$0xff]
  %v1845 = vld [vmem:[%s4 + $0x10c] sm:$0xff]
  %v1846 = vld [vmem:[%s4 + $0x114] sm:$0xf]
  %v1847 = vld [vmem:[%s4 + $0x118] sm:$0xff]
  %v1848 = vld [vmem:[%s4 + $0x120] sm:$0xff]
  %v1849 = vld [vmem:[%s4 + $0x128] sm:$0xf]
  %v1850 = vld [vmem:[%s4 + $0x12c] sm:$0xff]
  %v1851 = vld [vmem:[%s4 + $0x134] sm:$0xff]
  %v1852 = vld [vmem:[%s4 + $0x13c] sm:$0xf]
  %v1853 = vld [vmem:[%s4 + $0x140] sm:$0xff]
  %v1854 = vld [vmem:[%s4 + $0x148] sm:$0xff]
  %v1855 = vld [vmem:[%s4 + $0x150] sm:$0xf]
  %v1856 = vld [vmem:[%s4 + $0x154] sm:$0xff]
  %v1857 = vld [vmem:[%s4 + $0x15c] sm:$0xff]
  %v1858 = vld [vmem:[%s4 + $0x164] sm:$0xf]
  %v1859 = vld [vmem:[%s4 + $0x168] sm:$0xff]
  %v1860 = vld [vmem:[%s4 + $0x170] sm:$0xff]
  %v1861 = vld [vmem:[%s4 + $0x178] sm:$0xf]
  %v1862 = vld [vmem:[%s4 + $0x17c] sm:$0xff]
  %v1863 = vld [vmem:[%s4 + $0x184] sm:$0xff]
  %v1864 = vld [vmem:[%s4 + $0x18c] sm:$0xf]
  %v1865 = vld [vmem:[%s4 + $0x190] sm:$0xff]
  %v1866 = vld [vmem:[%s4 + $0x198] sm:$0xff]
  %v1867 = vld [vmem:[%s4 + $0x1a0] sm:$0xf]
  %v1868 = vld [vmem:[%s4 + $0x1a4] sm:$0xff]
  %v1869 = vld [vmem:[%s4 + $0x1ac] sm:$0xff]
  %v1870 = vld [vmem:[%s4 + $0x1b4] sm:$0xf]
  %v1871 = vld [vmem:[%s4 + $0x1b8] sm:$0xff]
  %v1872 = vld [vmem:[%s4 + $0x1c0] sm:$0xff]
  %v1873 = vld [vmem:[%s4 + $0x1c8] sm:$0xf]
  %v1874 = vld [vmem:[%s4 + $0x1cc] sm:$0xff]
  %v1875 = vld [vmem:[%s4 + $0x1d4] sm:$0xff]
  %v1876 = vld [vmem:[%s4 + $0x1dc] sm:$0xf]
  %v1877 = vld [vmem:[%s4 + $0x1e0] sm:$0xff]
  %v1878 = vld [vmem:[%s4 + $0x1e8] sm:$0xff]
  %v1879 = vld [vmem:[%s4 + $0x1f0] sm:$0xf]
  %v1880 = vld [vmem:[%s4 + $0x1f4] sm:$0xff]
  %v1881 = vld [vmem:[%s4 + $0x1fc] sm:$0xff]
  %v1882 = vld [vmem:[%s4 + $0x204] sm:$0xf]
  %v1883 = vld [vmem:[%s4 + $0x208] sm:$0xff]
  %v1884 = vld [vmem:[%s4 + $0x210] sm:$0xff]
  %v1885 = vld [vmem:[%s4 + $0x218] sm:$0xf]
  %v1886 = vld [vmem:[%s4 + $0x21c] sm:$0xff]
  %v1887 = vld [vmem:[%s4 + $0x224] sm:$0xff]
  %v1888 = vld [vmem:[%s4 + $0x22c] sm:$0xf]
  %v1889 = vld [vmem:[%s4 + $0x230] sm:$0xff]
  %v1890 = vld [vmem:[%s4 + $0x238] sm:$0xff]
  %v1891 = vld [vmem:[%s4 + $0x240] sm:$0xf]
  %v1892 = vld [vmem:[%s4 + $0x244] sm:$0xff]
  %v1893 = vld [vmem:[%s4 + $0x24c] sm:$0xff]
  %v1894 = vld [vmem:[%s4 + $0x254] sm:$0xf]
  %v1895 = vld [vmem:[%s4 + $0x258] sm:$0xff]
  %v1896 = vld [vmem:[%s4 + $0x260] sm:$0xff]
  %v1897 = vld [vmem:[%s4 + $0x268] sm:$0xf]
  %v1898 = vld [vmem:[%s4 + $0x26c] sm:$0xff]
  %v1899 = vld [vmem:[%s4 + $0x274] sm:$0xff]
  %v1900 = vld [vmem:[%s4 + $0x27c] sm:$0xf]
  %v1901 = vld [vmem:[%s4 + $0x280] sm:$0xff]
  %v1902 = vld [vmem:[%s4 + $0x288] sm:$0xff]
  %v1903 = vld [vmem:[%s4 + $0x290] sm:$0xf]
  %v1904 = vld [vmem:[%s4 + $0x294] sm:$0xff]
  %v1905 = vld [vmem:[%s4 + $0x29c] sm:$0xff]
  %v1906 = vld [vmem:[%s4 + $0x2a4] sm:$0xf]
  %v1907 = vld [vmem:[%s4 + $0x2a8] sm:$0xff]
  %v1908 = vld [vmem:[%s4 + $0x2b0] sm:$0xff]
  %v1909 = vld [vmem:[%s4 + $0x2b8] sm:$0xf]
  %v1910 = vld [vmem:[%s4 + $0x2bc] sm:$0xff]
  %v1911 = vld [vmem:[%s4 + $0x2c4] sm:$0xff]
  %v1912 = vld [vmem:[%s4 + $0x2cc] sm:$0xf]
  %v1913 = vld [vmem:[%s4 + $0x2d0] sm:$0xff]
  %v1914 = vld [vmem:[%s4 + $0x2d8] sm:$0xff]
  %v1915 = vld [vmem:[%s4 + $0x2e0] sm:$0xf]
  %v1916 = vld [vmem:[%s4 + $0x2e4] sm:$0xff]
  %v1917 = vld [vmem:[%s4 + $0x2ec] sm:$0xff]
  %v1918 = vld [vmem:[%s4 + $0x2f4] sm:$0xf]
  %v1919 = vld [vmem:[%s4 + $0x2f8] sm:$0xff]
  %v1920 = vld [vmem:[%s4 + $0x300] sm:$0xff]
  %v1921 = vld [vmem:[%s4 + $0x308] sm:$0xf]
  %v1922 = vld [vmem:[%s4 + $0x30c] sm:$0xff]
  %v1923 = vld [vmem:[%s4 + $0x314] sm:$0xff]
  %v1924 = vld [vmem:[%s4 + $0x31c] sm:$0xf]
  %v1925 = vld [vmem:[%s4 + $0x320] sm:$0xff]
  %v1926 = vld [vmem:[%s4 + $0x328] sm:$0xff]
  %v1927 = vld [vmem:[%s4 + $0x330] sm:$0xf]
  %v1928 = vld [vmem:[%s4 + $0x334] sm:$0xff]
  %v1929 = vld [vmem:[%s4 + $0x33c] sm:$0xff]
  %v1930 = vld [vmem:[%s4 + $0x344] sm:$0xf]
  %v1931 = vld [vmem:[%s4 + $0x348] sm:$0xff]
  %v1932 = vld [vmem:[%s4 + $0x350] sm:$0xff]
  %v1933 = vld [vmem:[%s4 + $0x358] sm:$0xf]
  %v1934 = vld [vmem:[%s4 + $0x35c] sm:$0xff]
  %v1935 = vld [vmem:[%s4 + $0x364] sm:$0xff]
  %v1936 = vld [vmem:[%s4 + $0x36c] sm:$0xf]
  %v1937 = vld [vmem:[%s4 + $0x370] sm:$0xff]
  %v1938 = vld [vmem:[%s4 + $0x378] sm:$0xff]
  %v1939 = vld [vmem:[%s4 + $0x380] sm:$0xf]
  %v1940 = vld [vmem:[%s4 + $0x384] sm:$0xff]
  %v1941 = vld [vmem:[%s4 + $0x38c] sm:$0xff]
  %v1942 = vld [vmem:[%s4 + $0x394] sm:$0xf]
  %v1943 = vld [vmem:[%s4 + $0x398] sm:$0xff]
  %v1944 = vld [vmem:[%s4 + $0x3a0] sm:$0xff]
  %v1945 = vld [vmem:[%s4 + $0x3a8] sm:$0xf]
  %v1946 = vld [vmem:[%s4 + $0x3ac] sm:$0xff]
  %v1947 = vld [vmem:[%s4 + $0x3b4] sm:$0xff]
  %v1948 = vld [vmem:[%s4 + $0x3bc] sm:$0xf]
  %v1949 = vld [vmem:[%s4 + $0x3c0] sm:$0xff]
  %v1950 = vld [vmem:[%s4 + $0x3c8] sm:$0xff]
  %v1951 = vld [vmem:[%s4 + $0x3d0] sm:$0xf]
  %v1952 = vld [vmem:[%s4 + $0x3d4] sm:$0xff]
  %v1953 = vld [vmem:[%s4 + $0x3dc] sm:$0xff]
  %v1954 = vld [vmem:[%s4 + $0x3e4] sm:$0xf]
  %v1955 = vld [vmem:[%s4 + $0x3e8] sm:$0xff]
  %v1956 = vld [vmem:[%s4 + $0x3f0] sm:$0xff]
  %v1957 = vld [vmem:[%s4 + $0x3f8] sm:$0xf]
  %v1958 = vld [vmem:[%s4 + $0x3fc] sm:$0xff]
  %v1959 = vld [vmem:[%s4 + $0x404] sm:$0xff]
  %v1960 = vld [vmem:[%s4 + $0x40c] sm:$0xf]
  %v1961 = vld [vmem:[%s4 + $0x410] sm:$0xff]
  %v1962 = vld [vmem:[%s4 + $0x418] sm:$0xff]
  %v1963 = vld [vmem:[%s4 + $0x420] sm:$0xf]
  %v1964 = vld [vmem:[%s4 + $0x424] sm:$0xff]
  %v1965 = vld [vmem:[%s4 + $0x42c] sm:$0xff]
  %v1966 = vld [vmem:[%s4 + $0x434] sm:$0xf]
  %v1967 = vld [vmem:[%s4 + $0x438] sm:$0xff]
  %v1968 = vld [vmem:[%s4 + $0x440] sm:$0xff]
  %v1969 = vld [vmem:[%s4 + $0x448] sm:$0xf]
  %v1970 = vld [vmem:[%s4 + $0x44c] sm:$0xff]
  %v1971 = vld [vmem:[%s4 + $0x454] sm:$0xff]
  %v1972 = vld [vmem:[%s4 + $0x45c] sm:$0xf]
  %v1973 = vld [vmem:[%s4 + $0x460] sm:$0xff]
  %v1974 = vld [vmem:[%s4 + $0x468] sm:$0xff]
  %v1975 = vld [vmem:[%s4 + $0x470] sm:$0xf]
  %v1976 = vld [vmem:[%s4 + $0x474] sm:$0xff]
  %v1977 = vld [vmem:[%s4 + $0x47c] sm:$0xff]
  %v1978 = vld [vmem:[%s4 + $0x484] sm:$0xf]
  %v1979 = vld [vmem:[%s4 + $0x488] sm:$0xff]
  %v1980 = vld [vmem:[%s4 + $0x490] sm:$0xff]
  %v1981 = vld [vmem:[%s4 + $0x498] sm:$0xf]
  %v1982 = vld [vmem:[%s4 + $0x49c] sm:$0xff]
  %v1983 = vld [vmem:[%s4 + $0x4a4] sm:$0xff]
  %v1984 = vld [vmem:[%s4 + $0x4ac] sm:$0xf]
  %v1985 = vld [vmem:[%s4 + $0x4b0] sm:$0xff]
  %v1986 = vld [vmem:[%s4 + $0x4b8] sm:$0xff]
  %v1987 = vld [vmem:[%s4 + $0x4c0] sm:$0xf]
  %v1988 = vld [vmem:[%s4 + $0x4c4] sm:$0xff]
  %v1989 = vld [vmem:[%s4 + $0x4cc] sm:$0xff]
  %v1990 = vld [vmem:[%s4 + $0x4d4] sm:$0xf]
  %v1991 = vld [vmem:[%s4 + $0x4d8] sm:$0xff]
  %v1992 = vld [vmem:[%s4 + $0x4e0] sm:$0xff]
  %v1993 = vld [vmem:[%s4 + $0x4e8] sm:$0xf]
  %v1994 = vld [vmem:[%s4 + $0x4ec] sm:$0xff]
  %v1995 = vld [vmem:[%s4 + $0x4f4] sm:$0xff]
  %v1996 = vld [vmem:[%s4 + $0x4fc] sm:$0xf]
  %v1997 = vld [vmem:[%s4 + $0x500] sm:$0xff]
  %v1998 = vld [vmem:[%s4 + $0x508] sm:$0xff]
  %v1999 = vld [vmem:[%s4 + $0x510] sm:$0xf]
  %v2000 = vld [vmem:[%s4 + $0x514] sm:$0xff]
  %v2001 = vld [vmem:[%s4 + $0x51c] sm:$0xff]
  %v2002 = vld [vmem:[%s4 + $0x524] sm:$0xf]
  %v2003 = vld [vmem:[%s4 + $0x528] sm:$0xff]
  %v2004 = vld [vmem:[%s4 + $0x530] sm:$0xff]
  %v2005 = vld [vmem:[%s4 + $0x538] sm:$0xf]
  %v2006 = vld [vmem:[%s4 + $0x53c] sm:$0xff]
  %v2007 = vld [vmem:[%s4 + $0x544] sm:$0xff]
  %v2008 = vld [vmem:[%s4 + $0x54c] sm:$0xf]
  %v2009 = vld [vmem:[%s4 + $0x550] sm:$0xff]
  %v2010 = vld [vmem:[%s4 + $0x558] sm:$0xff]
  %v2011 = vld [vmem:[%s4 + $0x560] sm:$0xf]
  %v2012 = vld [vmem:[%s4 + $0x564] sm:$0xff]
  %v2013 = vld [vmem:[%s4 + $0x56c] sm:$0xff]
  %v2014 = vld [vmem:[%s4 + $0x574] sm:$0xf]
  %v2015 = vld [vmem:[%s4 + $0x578] sm:$0xff]
  %v2016 = vld [vmem:[%s4 + $0x580] sm:$0xff]
  %v2017 = vld [vmem:[%s4 + $0x588] sm:$0xf]
  %v2018 = vld [vmem:[%s4 + $0x58c] sm:$0xff]
  %v2019 = vld [vmem:[%s4 + $0x594] sm:$0xff]
  %v2020 = vld [vmem:[%s4 + $0x59c] sm:$0xf]
  %v2021 = vld [vmem:[%s3] sm:$0xff]
  %v2022 = vld [vmem:[%s3 + $0x8] sm:$0xff]
  %v2023 = vld [vmem:[%s3 + $0x10] sm:$0xff]
  %v2024 = vld [vmem:[%s3 + $0x18] sm:$0xff]
  %v2025 = vld [vmem:[%s3 + $0x20] sm:$0xff]
  %v2026 = vld [vmem:[%s3 + $0x28] sm:$0xff]
  %v2027 = vld [vmem:[%s3 + $0x30] sm:$0xff]
  %v2028 = vld [vmem:[%s3 + $0x38] sm:$0xff]
  %v2029 = vld [vmem:[%s3 + $0x40] sm:$0xff]
  %v2030 = vld [vmem:[%s3 + $0x48] sm:$0xff]
  %v2031 = vld [vmem:[%s3 + $0x50] sm:$0xff]
  %v2032 = vld [vmem:[%s3 + $0x58] sm:$0xff]
  %v2033 = vld [vmem:[%s3 + $0x60] sm:$0xff]
  %v2034 = vld [vmem:[%s3 + $0x68] sm:$0xff]
  %v2035 = vld [vmem:[%s3 + $0x70] sm:$0xff]
  %v2036 = vld [vmem:[%s3 + $0x78] sm:$0xff]
  %v2037 = vld [vmem:[%s3 + $0x80] sm:$0xff]
  %v2038 = vld [vmem:[%s3 + $0x88] sm:$0xff]
  %v2039 = vld [vmem:[%s3 + $0x90] sm:$0xff]
  %v2040 = vld [vmem:[%s3 + $0x98] sm:$0xff]
  %v2041 = vld [vmem:[%s3 + $0xa0] sm:$0xff]
  %v2042 = vld [vmem:[%s3 + $0xa8] sm:$0xff]
  %v2043 = vld [vmem:[%s3 + $0xb0] sm:$0xff]
  %v2044 = vld [vmem:[%s3 + $0xb8] sm:$0xff]
  %v2045 = vld [vmem:[%s3 + $0xc0] sm:$0xff]
  %v2046 = vld [vmem:[%s3 + $0xc8] sm:$0xff]
  %v2047 = vld [vmem:[%s3 + $0xd0] sm:$0xff]
  %v2048 = vld [vmem:[%s3 + $0xd8] sm:$0xff]
  %v2049 = vld [vmem:[%s3 + $0xe0] sm:$0xff]
  %v2050 = vld [vmem:[%s3 + $0xe8] sm:$0xff]
  %v2051 = vld [vmem:[%s3 + $0xf0] sm:$0xff]
  %v2052 = vld [vmem:[%s3 + $0xf8] sm:$0xff]
  %v2053 = vld [vmem:[%s3 + $0x100] sm:$0xff]
  %v2054 = vld [vmem:[%s3 + $0x108] sm:$0xff]
  %v2055 = vld [vmem:[%s3 + $0x110] sm:$0xff]
  %v2056 = vld [vmem:[%s3 + $0x118] sm:$0xff]
  %v2057 = vld [vmem:[%s3 + $0x120] sm:$0xff]
  %v2058 = vld [vmem:[%s3 + $0x128] sm:$0xff]
  %v2059 = vld [vmem:[%s3 + $0x130] sm:$0xff]
  %v2060 = vld [vmem:[%s3 + $0x138] sm:$0xff]
  %v2061 = vld [vmem:[%s3 + $0x140] sm:$0xff]
  %v2062 = vld [vmem:[%s3 + $0x148] sm:$0xff]
  %v2063 = vld [vmem:[%s3 + $0x150] sm:$0xff]
  %v2064 = vld [vmem:[%s3 + $0x158] sm:$0xff]
  %v2065 = vld [vmem:[%s3 + $0x160] sm:$0xff]
  %v2066 = vld [vmem:[%s3 + $0x168] sm:$0xff]
  %v2067 = vld [vmem:[%s3 + $0x170] sm:$0xff]
  %v2068 = vld [vmem:[%s3 + $0x178] sm:$0xff]
  %v2069 = vld [vmem:[%s3 + $0x180] sm:$0xff]
  %v2070 = vld [vmem:[%s3 + $0x188] sm:$0xff]
  %v2071 = vld [vmem:[%s3 + $0x190] sm:$0xff]
  %v2072 = vld [vmem:[%s3 + $0x198] sm:$0xff]
  %v2073 = vld [vmem:[%s3 + $0x1a0] sm:$0xff]
  %v2074 = vld [vmem:[%s3 + $0x1a8] sm:$0xff]
  %v2075 = vld [vmem:[%s3 + $0x1b0] sm:$0xff]
  %v2076 = vld [vmem:[%s3 + $0x1b8] sm:$0xff]
  %v2077 = vld [vmem:[%s3 + $0x1c0] sm:$0xff]
  %v2078 = vld [vmem:[%s3 + $0x1c8] sm:$0xff]
  %v2079 = vld [vmem:[%s3 + $0x1d0] sm:$0xff]
  %v2080 = vld [vmem:[%s3 + $0x1d8] sm:$0xff]
  %v2081 = vld [vmem:[%s3 + $0x1e0] sm:$0xff]
  %v2082 = vld [vmem:[%s3 + $0x1e8] sm:$0xff]
  %v2083 = vld [vmem:[%s3 + $0x1f0] sm:$0xff]
  %v2084 = vld [vmem:[%s3 + $0x1f8] sm:$0xff]
  %v2085 = vld [vmem:[%s3 + $0x200] sm:$0xff]
  %v2086 = vld [vmem:[%s3 + $0x208] sm:$0xff]
  %v2087 = vld [vmem:[%s3 + $0x210] sm:$0xff]
  %v2088 = vld [vmem:[%s3 + $0x218] sm:$0xff]
  %v2089 = vld [vmem:[%s3 + $0x220] sm:$0xff]
  %v2090 = vld [vmem:[%s3 + $0x228] sm:$0xff]
  %v2091 = vld [vmem:[%s3 + $0x230] sm:$0xff]
  %v2092 = vld [vmem:[%s3 + $0x238] sm:$0xff]
  %v2093 = vld [vmem:[#allocation2] sm:$0xff]
  %v2094 = vld [vmem:[#allocation2 + $0x8] sm:$0xff]
  %v2095 = vld [vmem:[#allocation2 + $0x10] sm:$0xff]
  %v2096 = vld [vmem:[#allocation2 + $0x18] sm:$0xff]
  %v2097 = vld [vmem:[#allocation2 + $0x20] sm:$0xff]
  %v2098 = vld [vmem:[#allocation2 + $0x28] sm:$0xff]
  %v2099 = vld [vmem:[#allocation2 + $0x30] sm:$0xff]
  %v2100 = vld [vmem:[#allocation2 + $0x38] sm:$0xff]
  %v2101 = vld [vmem:[#allocation2 + $0x40] sm:$0xff]
  %v2102 = vld [vmem:[#allocation2 + $0x48] sm:$0xff]
  %v2103 = vld [vmem:[#allocation2 + $0x50] sm:$0xff]
  %v2104 = vld [vmem:[#allocation2 + $0x58] sm:$0xff]
  %v2105 = vld [vmem:[#allocation2 + $0x60] sm:$0xff]
  %v2106 = vld [vmem:[#allocation2 + $0x68] sm:$0xff]
  %v2107 = vld [vmem:[#allocation2 + $0x70] sm:$0xff]
  %v2108 = vld [vmem:[#allocation2 + $0x78] sm:$0xff]
  %v2109 = vld [vmem:[#allocation2 + $0x80] sm:$0xff]
  %v2110 = vld [vmem:[#allocation2 + $0x88] sm:$0xff]
  %v2111 = vld [vmem:[#allocation2 + $0x90] sm:$0xff]
  %v2112 = vld [vmem:[#allocation2 + $0x98] sm:$0xff]
  %v2113 = vld [vmem:[#allocation2 + $0xa0] sm:$0xff]
  %v2114 = vld [vmem:[#allocation2 + $0xa8] sm:$0xff]
  %v2115 = vld [vmem:[#allocation2 + $0xb0] sm:$0xff]
  %v2116 = vld [vmem:[#allocation2 + $0xb8] sm:$0xff]
  %v2117 = vld [vmem:[#allocation2 + $0xc0] sm:$0xff]
  %v2118 = vld [vmem:[#allocation2 + $0xc8] sm:$0xff]
  %v2119 = vld [vmem:[#allocation2 + $0xd0] sm:$0xff]
  %v2120 = vld [vmem:[#allocation2 + $0xd8] sm:$0xff]
  %v2121 = vld [vmem:[#allocation2 + $0xe0] sm:$0xff]
  %v2122 = vld [vmem:[#allocation2 + $0xe8] sm:$0xff]
  %v2123 = vld [vmem:[#allocation2 + $0xf0] sm:$0xff]
  %v2124 = vld [vmem:[#allocation2 + $0xf8] sm:$0xff]
  %v2125 = vld [vmem:[#allocation2 + $0x100] sm:$0xff]
  %v2126 = vld [vmem:[#allocation2 + $0x108] sm:$0xff]
  %v2127 = vld [vmem:[#allocation2 + $0x110] sm:$0xff]
  %v2128 = vld [vmem:[#allocation2 + $0x118] sm:$0xff]
  %v2129 = vld [vmem:[#allocation2 + $0x120] sm:$0xff]
  %v2130 = vld [vmem:[#allocation2 + $0x128] sm:$0xff]
  %v2131 = vld [vmem:[#allocation2 + $0x130] sm:$0xff]
  %v2132 = vld [vmem:[#allocation2 + $0x138] sm:$0xff]
  %v2133 = vld [vmem:[#allocation2 + $0x140] sm:$0xff]
  %v2134 = vld [vmem:[#allocation2 + $0x148] sm:$0xff]
  %v2135 = vld [vmem:[#allocation2 + $0x150] sm:$0xff]
  %v2136 = vld [vmem:[#allocation2 + $0x158] sm:$0xff]
  %v2137 = vld [vmem:[#allocation2 + $0x160] sm:$0xff]
  %v2138 = vld [vmem:[#allocation2 + $0x168] sm:$0xff]
  %v2139 = vld [vmem:[#allocation2 + $0x170] sm:$0xff]
  %v2140 = vld [vmem:[#allocation2 + $0x178] sm:$0xff]
  %v2141 = vld [vmem:[#allocation2 + $0x180] sm:$0xff]
  %v2142 = vld [vmem:[#allocation2 + $0x188] sm:$0xff]
  %v2143 = vld [vmem:[#allocation2 + $0x190] sm:$0xff]
  %v2144 = vld [vmem:[#allocation2 + $0x198] sm:$0xff]
  %v2145 = vld [vmem:[#allocation2 + $0x1a0] sm:$0xff]
  %v2146 = vld [vmem:[#allocation2 + $0x1a8] sm:$0xff]
  %v2147 = vld [vmem:[#allocation2 + $0x1b0] sm:$0xff]
  %v2148 = vld [vmem:[#allocation2 + $0x1b8] sm:$0xff]
  %v2149 = vld [vmem:[#allocation2 + $0x1c0] sm:$0xff]
  %v2150 = vld [vmem:[#allocation2 + $0x1c8] sm:$0xff]
  %v2151 = vld [vmem:[#allocation2 + $0x1d0] sm:$0xff]
  %v2152 = vld [vmem:[#allocation2 + $0x1d8] sm:$0xff]
  %v2153 = vld [vmem:[#allocation2 + $0x1e0] sm:$0xff]
  %v2154 = vld [vmem:[#allocation2 + $0x1e8] sm:$0xff]
  %v2155 = vld [vmem:[#allocation2 + $0x1f0] sm:$0xff]
  %v2156 = vld [vmem:[#allocation2 + $0x1f8] sm:$0xff]
  %v2157 = vld [vmem:[#allocation2 + $0x200] sm:$0xff]
  %v2158 = vld [vmem:[#allocation2 + $0x208] sm:$0xff]
  %v2159 = vld [vmem:[#allocation2 + $0x210] sm:$0xff]
  %v2160 = vld [vmem:[#allocation2 + $0x218] sm:$0xff]
  %v2161 = vld [vmem:[#allocation2 + $0x220] sm:$0xff]
  %v2162 = vld [vmem:[#allocation2 + $0x228] sm:$0xff]
  %v2163 = vld [vmem:[#allocation2 + $0x230] sm:$0xff]
  %v2164 = vld [vmem:[#allocation2 + $0x238] sm:$0xff]
  %v2165 = vunpack.c.l.bf16 %v2021
  %v2166 = vunpack.c.h.bf16 %v2021
  %v2167 = vunpack.c.l.bf16 %v2022
  %v2168 = vunpack.c.h.bf16 %v2022
  %v2169 = vunpack.c.l.bf16 %v2023
  %v2170 = vunpack.c.h.bf16 %v2023
  %v2171 = vunpack.c.l.bf16 %v2024
  %v2172 = vunpack.c.h.bf16 %v2024
  %v2173 = vunpack.c.l.bf16 %v2025
  %v2174 = vunpack.c.h.bf16 %v2025
  %v2175 = vunpack.c.l.bf16 %v2026
  %v2176 = vunpack.c.h.bf16 %v2026
  %v2177 = vunpack.c.l.bf16 %v2027
  %v2178 = vunpack.c.h.bf16 %v2027
  %v2179 = vunpack.c.l.bf16 %v2028
  %v2180 = vunpack.c.h.bf16 %v2028
  %v2181 = vunpack.c.l.bf16 %v2029
  %v2182 = vunpack.c.h.bf16 %v2029
  %v2183 = vunpack.c.l.bf16 %v2030
  %v2184 = vunpack.c.h.bf16 %v2030
  %v2185 = vunpack.c.l.bf16 %v2031
  %v2186 = vunpack.c.h.bf16 %v2031
  %v2187 = vunpack.c.l.bf16 %v2032
  %v2188 = vunpack.c.h.bf16 %v2032
  %v2189 = vunpack.c.l.bf16 %v2033
  %v2190 = vunpack.c.h.bf16 %v2033
  %v2191 = vunpack.c.l.bf16 %v2034
  %v2192 = vunpack.c.h.bf16 %v2034
  %v2193 = vunpack.c.l.bf16 %v2035
  %v2194 = vunpack.c.h.bf16 %v2035
  %v2195 = vunpack.c.l.bf16 %v2036
  %v2196 = vunpack.c.h.bf16 %v2036
  %v2197 = vunpack.c.l.bf16 %v2037
  %v2198 = vunpack.c.h.bf16 %v2037
  %v2199 = vunpack.c.l.bf16 %v2038
  %v2200 = vunpack.c.h.bf16 %v2038
  %v2201 = vunpack.c.l.bf16 %v2039
  %v2202 = vunpack.c.h.bf16 %v2039
  %v2203 = vunpack.c.l.bf16 %v2040
  %v2204 = vunpack.c.h.bf16 %v2040
  %v2205 = vunpack.c.l.bf16 %v2041
  %v2206 = vunpack.c.h.bf16 %v2041
  %v2207 = vunpack.c.l.bf16 %v2042
  %v2208 = vunpack.c.h.bf16 %v2042
  %v2209 = vunpack.c.l.bf16 %v2043
  %v2210 = vunpack.c.h.bf16 %v2043
  %v2211 = vunpack.c.l.bf16 %v2044
  %v2212 = vunpack.c.h.bf16 %v2044
  %v2213 = vunpack.c.l.bf16 %v2045
  %v2214 = vunpack.c.h.bf16 %v2045
  %v2215 = vunpack.c.l.bf16 %v2046
  %v2216 = vunpack.c.h.bf16 %v2046
  %v2217 = vunpack.c.l.bf16 %v2047
  %v2218 = vunpack.c.h.bf16 %v2047
  %v2219 = vunpack.c.l.bf16 %v2048
  %v2220 = vunpack.c.h.bf16 %v2048
  %v2221 = vunpack.c.l.bf16 %v2049
  %v2222 = vunpack.c.h.bf16 %v2049
  %v2223 = vunpack.c.l.bf16 %v2050
  %v2224 = vunpack.c.h.bf16 %v2050
  %v2225 = vunpack.c.l.bf16 %v2051
  %v2226 = vunpack.c.h.bf16 %v2051
  %v2227 = vunpack.c.l.bf16 %v2052
  %v2228 = vunpack.c.h.bf16 %v2052
  %v2229 = vunpack.c.l.bf16 %v2053
  %v2230 = vunpack.c.h.bf16 %v2053
  %v2231 = vunpack.c.l.bf16 %v2054
  %v2232 = vunpack.c.h.bf16 %v2054
  %v2233 = vunpack.c.l.bf16 %v2055
  %v2234 = vunpack.c.h.bf16 %v2055
  %v2235 = vunpack.c.l.bf16 %v2056
  %v2236 = vunpack.c.h.bf16 %v2056
  %v2237 = vunpack.c.l.bf16 %v2057
  %v2238 = vunpack.c.h.bf16 %v2057
  %v2239 = vunpack.c.l.bf16 %v2058
  %v2240 = vunpack.c.h.bf16 %v2058
  %v2241 = vunpack.c.l.bf16 %v2059
  %v2242 = vunpack.c.h.bf16 %v2059
  %v2243 = vunpack.c.l.bf16 %v2060
  %v2244 = vunpack.c.h.bf16 %v2060
  %v2245 = vunpack.c.l.bf16 %v2061
  %v2246 = vunpack.c.h.bf16 %v2061
  %v2247 = vunpack.c.l.bf16 %v2062
  %v2248 = vunpack.c.h.bf16 %v2062
  %v2249 = vunpack.c.l.bf16 %v2063
  %v2250 = vunpack.c.h.bf16 %v2063
  %v2251 = vunpack.c.l.bf16 %v2064
  %v2252 = vunpack.c.h.bf16 %v2064
  %v2253 = vunpack.c.l.bf16 %v2065
  %v2254 = vunpack.c.h.bf16 %v2065
  %v2255 = vunpack.c.l.bf16 %v2066
  %v2256 = vunpack.c.h.bf16 %v2066
  %v2257 = vunpack.c.l.bf16 %v2067
  %v2258 = vunpack.c.h.bf16 %v2067
  %v2259 = vunpack.c.l.bf16 %v2068
  %v2260 = vunpack.c.h.bf16 %v2068
  %v2261 = vunpack.c.l.bf16 %v2069
  %v2262 = vunpack.c.h.bf16 %v2069
  %v2263 = vunpack.c.l.bf16 %v2070
  %v2264 = vunpack.c.h.bf16 %v2070
  %v2265 = vunpack.c.l.bf16 %v2071
  %v2266 = vunpack.c.h.bf16 %v2071
  %v2267 = vunpack.c.l.bf16 %v2072
  %v2268 = vunpack.c.h.bf16 %v2072
  %v2269 = vunpack.c.l.bf16 %v2073
  %v2270 = vunpack.c.h.bf16 %v2073
  %v2271 = vunpack.c.l.bf16 %v2074
  %v2272 = vunpack.c.h.bf16 %v2074
  %v2273 = vunpack.c.l.bf16 %v2075
  %v2274 = vunpack.c.h.bf16 %v2075
  %v2275 = vunpack.c.l.bf16 %v2076
  %v2276 = vunpack.c.h.bf16 %v2076
  %v2277 = vunpack.c.l.bf16 %v2077
  %v2278 = vunpack.c.h.bf16 %v2077
  %v2279 = vunpack.c.l.bf16 %v2078
  %v2280 = vunpack.c.h.bf16 %v2078
  %v2281 = vunpack.c.l.bf16 %v2079
  %v2282 = vunpack.c.h.bf16 %v2079
  %v2283 = vunpack.c.l.bf16 %v2080
  %v2284 = vunpack.c.h.bf16 %v2080
  %v2285 = vunpack.c.l.bf16 %v2081
  %v2286 = vunpack.c.h.bf16 %v2081
  %v2287 = vunpack.c.l.bf16 %v2082
  %v2288 = vunpack.c.h.bf16 %v2082
  %v2289 = vunpack.c.l.bf16 %v2083
  %v2290 = vunpack.c.h.bf16 %v2083
  %v2291 = vunpack.c.l.bf16 %v2084
  %v2292 = vunpack.c.h.bf16 %v2084
  %v2293 = vunpack.c.l.bf16 %v2085
  %v2294 = vunpack.c.h.bf16 %v2085
  %v2295 = vunpack.c.l.bf16 %v2086
  %v2296 = vunpack.c.h.bf16 %v2086
  %v2297 = vunpack.c.l.bf16 %v2087
  %v2298 = vunpack.c.h.bf16 %v2087
  %v2299 = vunpack.c.l.bf16 %v2088
  %v2300 = vunpack.c.h.bf16 %v2088
  %v2301 = vunpack.c.l.bf16 %v2089
  %v2302 = vunpack.c.h.bf16 %v2089
  %v2303 = vunpack.c.l.bf16 %v2090
  %v2304 = vunpack.c.h.bf16 %v2090
  %v2305 = vunpack.c.l.bf16 %v2091
  %v2306 = vunpack.c.h.bf16 %v2091
  %v2307 = vunpack.c.l.bf16 %v2092
  %v2308 = vunpack.c.h.bf16 %v2092
  %2310 = vset.pattern.permute.xlu0 0
  %2311 = vperm.xlu0 %2310, %v2093
  %v2312 = vpop.permute.xlu0 %2311
  %2315 = vset.pattern.permute.xlu0 0
  %2316 = vperm.xlu0 %2315, %v2094
  %v2317 = vpop.permute.xlu0 %2316
  %2320 = vset.pattern.permute.xlu0 0
  %2321 = vperm.xlu0 %2320, %v2095
  %v2322 = vpop.permute.xlu0 %2321
  %2325 = vset.pattern.permute.xlu0 0
  %2326 = vperm.xlu0 %2325, %v2096
  %v2327 = vpop.permute.xlu0 %2326
  %2330 = vset.pattern.permute.xlu0 0
  %2331 = vperm.xlu0 %2330, %v2097
  %v2332 = vpop.permute.xlu0 %2331
  %2335 = vset.pattern.permute.xlu0 0
  %2336 = vperm.xlu0 %2335, %v2098
  %v2337 = vpop.permute.xlu0 %2336
  %2340 = vset.pattern.permute.xlu0 0
  %2341 = vperm.xlu0 %2340, %v2099
  %v2342 = vpop.permute.xlu0 %2341
  %2345 = vset.pattern.permute.xlu0 0
  %2346 = vperm.xlu0 %2345, %v2100
  %v2347 = vpop.permute.xlu0 %2346
  %2350 = vset.pattern.permute.xlu0 0
  %2351 = vperm.xlu0 %2350, %v2101
  %v2352 = vpop.permute.xlu0 %2351
  %2355 = vset.pattern.permute.xlu0 0
  %2356 = vperm.xlu0 %2355, %v2102
  %v2357 = vpop.permute.xlu0 %2356
  %2360 = vset.pattern.permute.xlu0 0
  %2361 = vperm.xlu0 %2360, %v2103
  %v2362 = vpop.permute.xlu0 %2361
  %2365 = vset.pattern.permute.xlu0 0
  %2366 = vperm.xlu0 %2365, %v2104
  %v2367 = vpop.permute.xlu0 %2366
  %2370 = vset.pattern.permute.xlu0 0
  %2371 = vperm.xlu0 %2370, %v2105
  %v2372 = vpop.permute.xlu0 %2371
  %2375 = vset.pattern.permute.xlu0 0
  %2376 = vperm.xlu0 %2375, %v2106
  %v2377 = vpop.permute.xlu0 %2376
  %2380 = vset.pattern.permute.xlu0 0
  %2381 = vperm.xlu0 %2380, %v2107
  %v2382 = vpop.permute.xlu0 %2381
  %2385 = vset.pattern.permute.xlu0 0
  %2386 = vperm.xlu0 %2385, %v2108
  %v2387 = vpop.permute.xlu0 %2386
  %2390 = vset.pattern.permute.xlu0 0
  %2391 = vperm.xlu0 %2390, %v2109
  %v2392 = vpop.permute.xlu0 %2391
  %2395 = vset.pattern.permute.xlu0 0
  %2396 = vperm.xlu0 %2395, %v2110
  %v2397 = vpop.permute.xlu0 %2396
  %2400 = vset.pattern.permute.xlu0 0
  %2401 = vperm.xlu0 %2400, %v2111
  %v2402 = vpop.permute.xlu0 %2401
  %2405 = vset.pattern.permute.xlu0 0
  %2406 = vperm.xlu0 %2405, %v2112
  %v2407 = vpop.permute.xlu0 %2406
  %2410 = vset.pattern.permute.xlu0 0
  %2411 = vperm.xlu0 %2410, %v2113
  %v2412 = vpop.permute.xlu0 %2411
  %2415 = vset.pattern.permute.xlu0 0
  %2416 = vperm.xlu0 %2415, %v2114
  %v2417 = vpop.permute.xlu0 %2416
  %2420 = vset.pattern.permute.xlu0 0
  %2421 = vperm.xlu0 %2420, %v2115
  %v2422 = vpop.permute.xlu0 %2421
  %2425 = vset.pattern.permute.xlu0 0
  %2426 = vperm.xlu0 %2425, %v2116
  %v2427 = vpop.permute.xlu0 %2426
  %2430 = vset.pattern.permute.xlu0 0
  %2431 = vperm.xlu0 %2430, %v2117
  %v2432 = vpop.permute.xlu0 %2431
  %2435 = vset.pattern.permute.xlu0 0
  %2436 = vperm.xlu0 %2435, %v2118
  %v2437 = vpop.permute.xlu0 %2436
  %2440 = vset.pattern.permute.xlu0 0
  %2441 = vperm.xlu0 %2440, %v2119
  %v2442 = vpop.permute.xlu0 %2441
  %2445 = vset.pattern.permute.xlu0 0
  %2446 = vperm.xlu0 %2445, %v2120
  %v2447 = vpop.permute.xlu0 %2446
  %2450 = vset.pattern.permute.xlu0 0
  %2451 = vperm.xlu0 %2450, %v2121
  %v2452 = vpop.permute.xlu0 %2451
  %2455 = vset.pattern.permute.xlu0 0
  %2456 = vperm.xlu0 %2455, %v2122
  %v2457 = vpop.permute.xlu0 %2456
  %2460 = vset.pattern.permute.xlu0 0
  %2461 = vperm.xlu0 %2460, %v2123
  %v2462 = vpop.permute.xlu0 %2461
  %2465 = vset.pattern.permute.xlu0 0
  %2466 = vperm.xlu0 %2465, %v2124
  %v2467 = vpop.permute.xlu0 %2466
  %2470 = vset.pattern.permute.xlu0 0
  %2471 = vperm.xlu0 %2470, %v2125
  %v2472 = vpop.permute.xlu0 %2471
  %2475 = vset.pattern.permute.xlu0 0
  %2476 = vperm.xlu0 %2475, %v2126
  %v2477 = vpop.permute.xlu0 %2476
  %2480 = vset.pattern.permute.xlu0 0
  %2481 = vperm.xlu0 %2480, %v2127
  %v2482 = vpop.permute.xlu0 %2481
  %2485 = vset.pattern.permute.xlu0 0
  %2486 = vperm.xlu0 %2485, %v2128
  %v2487 = vpop.permute.xlu0 %2486
  %2490 = vset.pattern.permute.xlu0 0
  %2491 = vperm.xlu0 %2490, %v2129
  %v2492 = vpop.permute.xlu0 %2491
  %2495 = vset.pattern.permute.xlu0 0
  %2496 = vperm.xlu0 %2495, %v2130
  %v2497 = vpop.permute.xlu0 %2496
  %2500 = vset.pattern.permute.xlu0 0
  %2501 = vperm.xlu0 %2500, %v2131
  %v2502 = vpop.permute.xlu0 %2501
  %2505 = vset.pattern.permute.xlu0 0
  %2506 = vperm.xlu0 %2505, %v2132
  %v2507 = vpop.permute.xlu0 %2506
  %2510 = vset.pattern.permute.xlu0 0
  %2511 = vperm.xlu0 %2510, %v2133
  %v2512 = vpop.permute.xlu0 %2511
  %2515 = vset.pattern.permute.xlu0 0
  %2516 = vperm.xlu0 %2515, %v2134
  %v2517 = vpop.permute.xlu0 %2516
  %2520 = vset.pattern.permute.xlu0 0
  %2521 = vperm.xlu0 %2520, %v2135
  %v2522 = vpop.permute.xlu0 %2521
  %2525 = vset.pattern.permute.xlu0 0
  %2526 = vperm.xlu0 %2525, %v2136
  %v2527 = vpop.permute.xlu0 %2526
  %2530 = vset.pattern.permute.xlu0 0
  %2531 = vperm.xlu0 %2530, %v2137
  %v2532 = vpop.permute.xlu0 %2531
  %2535 = vset.pattern.permute.xlu0 0
  %2536 = vperm.xlu0 %2535, %v2138
  %v2537 = vpop.permute.xlu0 %2536
  %2540 = vset.pattern.permute.xlu0 0
  %2541 = vperm.xlu0 %2540, %v2139
  %v2542 = vpop.permute.xlu0 %2541
  %2545 = vset.pattern.permute.xlu0 0
  %2546 = vperm.xlu0 %2545, %v2140
  %v2547 = vpop.permute.xlu0 %2546
  %2550 = vset.pattern.permute.xlu0 0
  %2551 = vperm.xlu0 %2550, %v2141
  %v2552 = vpop.permute.xlu0 %2551
  %2555 = vset.pattern.permute.xlu0 0
  %2556 = vperm.xlu0 %2555, %v2142
  %v2557 = vpop.permute.xlu0 %2556
  %2560 = vset.pattern.permute.xlu0 0
  %2561 = vperm.xlu0 %2560, %v2143
  %v2562 = vpop.permute.xlu0 %2561
  %2565 = vset.pattern.permute.xlu0 0
  %2566 = vperm.xlu0 %2565, %v2144
  %v2567 = vpop.permute.xlu0 %2566
  %2570 = vset.pattern.permute.xlu0 0
  %2571 = vperm.xlu0 %2570, %v2145
  %v2572 = vpop.permute.xlu0 %2571
  %2575 = vset.pattern.permute.xlu0 0
  %2576 = vperm.xlu0 %2575, %v2146
  %v2577 = vpop.permute.xlu0 %2576
  %2580 = vset.pattern.permute.xlu0 0
  %2581 = vperm.xlu0 %2580, %v2147
  %v2582 = vpop.permute.xlu0 %2581
  %2585 = vset.pattern.permute.xlu0 0
  %2586 = vperm.xlu0 %2585, %v2148
  %v2587 = vpop.permute.xlu0 %2586
  %2590 = vset.pattern.permute.xlu0 0
  %2591 = vperm.xlu0 %2590, %v2149
  %v2592 = vpop.permute.xlu0 %2591
  %2595 = vset.pattern.permute.xlu0 0
  %2596 = vperm.xlu0 %2595, %v2150
  %v2597 = vpop.permute.xlu0 %2596
  %2600 = vset.pattern.permute.xlu0 0
  %2601 = vperm.xlu0 %2600, %v2151
  %v2602 = vpop.permute.xlu0 %2601
  %2605 = vset.pattern.permute.xlu0 0
  %2606 = vperm.xlu0 %2605, %v2152
  %v2607 = vpop.permute.xlu0 %2606
  %2610 = vset.pattern.permute.xlu0 0
  %2611 = vperm.xlu0 %2610, %v2153
  %v2612 = vpop.permute.xlu0 %2611
  %2615 = vset.pattern.permute.xlu0 0
  %2616 = vperm.xlu0 %2615, %v2154
  %v2617 = vpop.permute.xlu0 %2616
  %2620 = vset.pattern.permute.xlu0 0
  %2621 = vperm.xlu0 %2620, %v2155
  %v2622 = vpop.permute.xlu0 %2621
  %2625 = vset.pattern.permute.xlu0 0
  %2626 = vperm.xlu0 %2625, %v2156
  %v2627 = vpop.permute.xlu0 %2626
  %2630 = vset.pattern.permute.xlu0 0
  %2631 = vperm.xlu0 %2630, %v2157
  %v2632 = vpop.permute.xlu0 %2631
  %2635 = vset.pattern.permute.xlu0 0
  %2636 = vperm.xlu0 %2635, %v2158
  %v2637 = vpop.permute.xlu0 %2636
  %2640 = vset.pattern.permute.xlu0 0
  %2641 = vperm.xlu0 %2640, %v2159
  %v2642 = vpop.permute.xlu0 %2641
  %2645 = vset.pattern.permute.xlu0 0
  %2646 = vperm.xlu0 %2645, %v2160
  %v2647 = vpop.permute.xlu0 %2646
  %2650 = vset.pattern.permute.xlu0 0
  %2651 = vperm.xlu0 %2650, %v2161
  %v2652 = vpop.permute.xlu0 %2651
  %2655 = vset.pattern.permute.xlu0 0
  %2656 = vperm.xlu0 %2655, %v2162
  %v2657 = vpop.permute.xlu0 %2656
  %2660 = vset.pattern.permute.xlu0 0
  %2661 = vperm.xlu0 %2660, %v2163
  %v2662 = vpop.permute.xlu0 %2661
  %2665 = vset.pattern.permute.xlu0 0
  %2666 = vperm.xlu0 %2665, %v2164
  %v2667 = vpop.permute.xlu0 %2666
  %v2669 = vmul.f32 %v2165, %v2312
  %v2670 = vmul.f32 %v2166, %v2312
  %v2671 = vmul.f32 %v2167, %v2317
  %v2672 = vmul.f32 %v2168, %v2317
  %v2673 = vmul.f32 %v2169, %v2322
  %v2674 = vmul.f32 %v2170, %v2322
  %v2675 = vmul.f32 %v2171, %v2327
  %v2676 = vmul.f32 %v2172, %v2327
  %v2677 = vmul.f32 %v2173, %v2332
  %v2678 = vmul.f32 %v2174, %v2332
  %v2679 = vmul.f32 %v2175, %v2337
  %v2680 = vmul.f32 %v2176, %v2337
  %v2681 = vmul.f32 %v2177, %v2342
  %v2682 = vmul.f32 %v2178, %v2342
  %v2683 = vmul.f32 %v2179, %v2347
  %v2684 = vmul.f32 %v2180, %v2347
  %v2685 = vmul.f32 %v2181, %v2352
  %v2686 = vmul.f32 %v2182, %v2352
  %v2687 = vmul.f32 %v2183, %v2357
  %v2688 = vmul.f32 %v2184, %v2357
  %v2689 = vmul.f32 %v2185, %v2362
  %v2690 = vmul.f32 %v2186, %v2362
  %v2691 = vmul.f32 %v2187, %v2367
  %v2692 = vmul.f32 %v2188, %v2367
  %v2693 = vmul.f32 %v2189, %v2372
  %v2694 = vmul.f32 %v2190, %v2372
  %v2695 = vmul.f32 %v2191, %v2377
  %v2696 = vmul.f32 %v2192, %v2377
  %v2697 = vmul.f32 %v2193, %v2382
  %v2698 = vmul.f32 %v2194, %v2382
  %v2699 = vmul.f32 %v2195, %v2387
  %v2700 = vmul.f32 %v2196, %v2387
  %v2701 = vmul.f32 %v2197, %v2392
  %v2702 = vmul.f32 %v2198, %v2392
  %v2703 = vmul.f32 %v2199, %v2397
  %v2704 = vmul.f32 %v2200, %v2397
  %v2705 = vmul.f32 %v2201, %v2402
  %v2706 = vmul.f32 %v2202, %v2402
  %v2707 = vmul.f32 %v2203, %v2407
  %v2708 = vmul.f32 %v2204, %v2407
  %v2709 = vmul.f32 %v2205, %v2412
  %v2710 = vmul.f32 %v2206, %v2412
  %v2711 = vmul.f32 %v2207, %v2417
  %v2712 = vmul.f32 %v2208, %v2417
  %v2713 = vmul.f32 %v2209, %v2422
  %v2714 = vmul.f32 %v2210, %v2422
  %v2715 = vmul.f32 %v2211, %v2427
  %v2716 = vmul.f32 %v2212, %v2427
  %v2717 = vmul.f32 %v2213, %v2432
  %v2718 = vmul.f32 %v2214, %v2432
  %v2719 = vmul.f32 %v2215, %v2437
  %v2720 = vmul.f32 %v2216, %v2437
  %v2721 = vmul.f32 %v2217, %v2442
  %v2722 = vmul.f32 %v2218, %v2442
  %v2723 = vmul.f32 %v2219, %v2447
  %v2724 = vmul.f32 %v2220, %v2447
  %v2725 = vmul.f32 %v2221, %v2452
  %v2726 = vmul.f32 %v2222, %v2452
  %v2727 = vmul.f32 %v2223, %v2457
  %v2728 = vmul.f32 %v2224, %v2457
  %v2729 = vmul.f32 %v2225, %v2462
  %v2730 = vmul.f32 %v2226, %v2462
  %v2731 = vmul.f32 %v2227, %v2467
  %v2732 = vmul.f32 %v2228, %v2467
  %v2733 = vmul.f32 %v2229, %v2472
  %v2734 = vmul.f32 %v2230, %v2472
  %v2735 = vmul.f32 %v2231, %v2477
  %v2736 = vmul.f32 %v2232, %v2477
  %v2737 = vmul.f32 %v2233, %v2482
  %v2738 = vmul.f32 %v2234, %v2482
  %v2739 = vmul.f32 %v2235, %v2487
  %v2740 = vmul.f32 %v2236, %v2487
  %v2741 = vmul.f32 %v2237, %v2492
  %v2742 = vmul.f32 %v2238, %v2492
  %v2743 = vmul.f32 %v2239, %v2497
  %v2744 = vmul.f32 %v2240, %v2497
  %v2745 = vmul.f32 %v2241, %v2502
  %v2746 = vmul.f32 %v2242, %v2502
  %v2747 = vmul.f32 %v2243, %v2507
  %v2748 = vmul.f32 %v2244, %v2507
  %v2749 = vmul.f32 %v2245, %v2512
  %v2750 = vmul.f32 %v2246, %v2512
  %v2751 = vmul.f32 %v2247, %v2517
  %v2752 = vmul.f32 %v2248, %v2517
  %v2753 = vmul.f32 %v2249, %v2522
  %v2754 = vmul.f32 %v2250, %v2522
  %v2755 = vmul.f32 %v2251, %v2527
  %v2756 = vmul.f32 %v2252, %v2527
  %v2757 = vmul.f32 %v2253, %v2532
  %v2758 = vmul.f32 %v2254, %v2532
  %v2759 = vmul.f32 %v2255, %v2537
  %v2760 = vmul.f32 %v2256, %v2537
  %v2761 = vmul.f32 %v2257, %v2542
  %v2762 = vmul.f32 %v2258, %v2542
  %v2763 = vmul.f32 %v2259, %v2547
  %v2764 = vmul.f32 %v2260, %v2547
  %v2765 = vmul.f32 %v2261, %v2552
  %v2766 = vmul.f32 %v2262, %v2552
  %v2767 = vmul.f32 %v2263, %v2557
  %v2768 = vmul.f32 %v2264, %v2557
  %v2769 = vmul.f32 %v2265, %v2562
  %v2770 = vmul.f32 %v2266, %v2562
  %v2771 = vmul.f32 %v2267, %v2567
  %v2772 = vmul.f32 %v2268, %v2567
  %v2773 = vmul.f32 %v2269, %v2572
  %v2774 = vmul.f32 %v2270, %v2572
  %v2775 = vmul.f32 %v2271, %v2577
  %v2776 = vmul.f32 %v2272, %v2577
  %v2777 = vmul.f32 %v2273, %v2582
  %v2778 = vmul.f32 %v2274, %v2582
  %v2779 = vmul.f32 %v2275, %v2587
  %v2780 = vmul.f32 %v2276, %v2587
  %v2781 = vmul.f32 %v2277, %v2592
  %v2782 = vmul.f32 %v2278, %v2592
  %v2783 = vmul.f32 %v2279, %v2597
  %v2784 = vmul.f32 %v2280, %v2597
  %v2785 = vmul.f32 %v2281, %v2602
  %v2786 = vmul.f32 %v2282, %v2602
  %v2787 = vmul.f32 %v2283, %v2607
  %v2788 = vmul.f32 %v2284, %v2607
  %v2789 = vmul.f32 %v2285, %v2612
  %v2790 = vmul.f32 %v2286, %v2612
  %v2791 = vmul.f32 %v2287, %v2617
  %v2792 = vmul.f32 %v2288, %v2617
  %v2793 = vmul.f32 %v2289, %v2622
  %v2794 = vmul.f32 %v2290, %v2622
  %v2795 = vmul.f32 %v2291, %v2627
  %v2796 = vmul.f32 %v2292, %v2627
  %v2797 = vmul.f32 %v2293, %v2632
  %v2798 = vmul.f32 %v2294, %v2632
  %v2799 = vmul.f32 %v2295, %v2637
  %v2800 = vmul.f32 %v2296, %v2637
  %v2801 = vmul.f32 %v2297, %v2642
  %v2802 = vmul.f32 %v2298, %v2642
  %v2803 = vmul.f32 %v2299, %v2647
  %v2804 = vmul.f32 %v2300, %v2647
  %v2805 = vmul.f32 %v2301, %v2652
  %v2806 = vmul.f32 %v2302, %v2652
  %v2807 = vmul.f32 %v2303, %v2657
  %v2808 = vmul.f32 %v2304, %v2657
  %v2809 = vmul.f32 %v2305, %v2662
  %v2810 = vmul.f32 %v2306, %v2662
  %v2811 = vmul.f32 %v2307, %v2667
  %v2812 = vmul.f32 %v2308, %v2667
  %v2813 = vpack.c.bf16 %v2671, %v2669
  %v2814 = vpack.c.bf16 %v2672, %v2670
  %v2815 = vpack.c.bf16 %v2675, %v2673
  %v2816 = vpack.c.bf16 %v2676, %v2674
  %v2817 = vpack.c.bf16 %v2679, %v2677
  %v2818 = vpack.c.bf16 %v2680, %v2678
  %v2819 = vpack.c.bf16 %v2683, %v2681
  %v2820 = vpack.c.bf16 %v2684, %v2682
  %v2821 = vpack.c.bf16 %v2687, %v2685
  %v2822 = vpack.c.bf16 %v2688, %v2686
  %v2823 = vpack.c.bf16 %v2691, %v2689
  %v2824 = vpack.c.bf16 %v2692, %v2690
  %v2825 = vpack.c.bf16 %v2695, %v2693
  %v2826 = vpack.c.bf16 %v2696, %v2694
  %v2827 = vpack.c.bf16 %v2699, %v2697
  %v2828 = vpack.c.bf16 %v2700, %v2698
  %v2829 = vpack.c.bf16 %v2703, %v2701
  %v2830 = vpack.c.bf16 %v2704, %v2702
  %v2831 = vpack.c.bf16 %v2707, %v2705
  %v2832 = vpack.c.bf16 %v2708, %v2706
  %v2833 = vpack.c.bf16 %v2711, %v2709
  %v2834 = vpack.c.bf16 %v2712, %v2710
  %v2835 = vpack.c.bf16 %v2715, %v2713
  %v2836 = vpack.c.bf16 %v2716, %v2714
  %v2837 = vpack.c.bf16 %v2719, %v2717
  %v2838 = vpack.c.bf16 %v2720, %v2718
  %v2839 = vpack.c.bf16 %v2723, %v2721
  %v2840 = vpack.c.bf16 %v2724, %v2722
  %v2841 = vpack.c.bf16 %v2727, %v2725
  %v2842 = vpack.c.bf16 %v2728, %v2726
  %v2843 = vpack.c.bf16 %v2731, %v2729
  %v2844 = vpack.c.bf16 %v2732, %v2730
  %v2845 = vpack.c.bf16 %v2735, %v2733
  %v2846 = vpack.c.bf16 %v2736, %v2734
  %v2847 = vpack.c.bf16 %v2739, %v2737
  %v2848 = vpack.c.bf16 %v2740, %v2738
  %v2849 = vpack.c.bf16 %v2743, %v2741
  %v2850 = vpack.c.bf16 %v2744, %v2742
  %v2851 = vpack.c.bf16 %v2747, %v2745
  %v2852 = vpack.c.bf16 %v2748, %v2746
  %v2853 = vpack.c.bf16 %v2751, %v2749
  %v2854 = vpack.c.bf16 %v2752, %v2750
  %v2855 = vpack.c.bf16 %v2755, %v2753
  %v2856 = vpack.c.bf16 %v2756, %v2754
  %v2857 = vpack.c.bf16 %v2759, %v2757
  %v2858 = vpack.c.bf16 %v2760, %v2758
  %v2859 = vpack.c.bf16 %v2763, %v2761
  %v2860 = vpack.c.bf16 %v2764, %v2762
  %v2861 = vpack.c.bf16 %v2767, %v2765
  %v2862 = vpack.c.bf16 %v2768, %v2766
  %v2863 = vpack.c.bf16 %v2771, %v2769
  %v2864 = vpack.c.bf16 %v2772, %v2770
  %v2865 = vpack.c.bf16 %v2775, %v2773
  %v2866 = vpack.c.bf16 %v2776, %v2774
  %v2867 = vpack.c.bf16 %v2779, %v2777
  %v2868 = vpack.c.bf16 %v2780, %v2778
  %v2869 = vpack.c.bf16 %v2783, %v2781
  %v2870 = vpack.c.bf16 %v2784, %v2782
  %v2871 = vpack.c.bf16 %v2787, %v2785
  %v2872 = vpack.c.bf16 %v2788, %v2786
  %v2873 = vpack.c.bf16 %v2791, %v2789
  %v2874 = vpack.c.bf16 %v2792, %v2790
  %v2875 = vpack.c.bf16 %v2795, %v2793
  %v2876 = vpack.c.bf16 %v2796, %v2794
  %v2877 = vpack.c.bf16 %v2799, %v2797
  %v2878 = vpack.c.bf16 %v2800, %v2798
  %v2879 = vpack.c.bf16 %v2803, %v2801
  %v2880 = vpack.c.bf16 %v2804, %v2802
  %v2881 = vpack.c.bf16 %v2807, %v2805
  %v2882 = vpack.c.bf16 %v2808, %v2806
  %v2883 = vpack.c.bf16 %v2811, %v2809
  %v2884 = vpack.c.bf16 %v2812, %v2810
  %v3101 = vunpack.c.l.b16 %v1805
  %v3102 = vunpack.c.h.b16 %v1805
  %v3103 = vunpack.c.l.b16 %v1806
  %v3104 = vunpack.c.h.b16 %v1806
  %v3105 = vunpack.c.l.b16 %v1807
  %v3106 = vunpack.c.l.b16 %v1808
  %v3107 = vunpack.c.h.b16 %v1808
  %v3108 = vunpack.c.l.b16 %v1809
  %v3109 = vunpack.c.h.b16 %v1809
  %v3110 = vunpack.c.l.b16 %v1810
  %v3111 = vunpack.c.l.b16 %v1811
  %v3112 = vunpack.c.h.b16 %v1811
  %v3113 = vunpack.c.l.b16 %v1812
  %v3114 = vunpack.c.h.b16 %v1812
  %v3115 = vunpack.c.l.b16 %v1813
  %v3116 = vunpack.c.l.b16 %v1814
  %v3117 = vunpack.c.h.b16 %v1814
  %v3118 = vunpack.c.l.b16 %v1815
  %v3119 = vunpack.c.h.b16 %v1815
  %v3120 = vunpack.c.l.b16 %v1816
  %v3121 = vunpack.c.l.b16 %v1817
  %v3122 = vunpack.c.h.b16 %v1817
  %v3123 = vunpack.c.l.b16 %v1818
  %v3124 = vunpack.c.h.b16 %v1818
  %v3125 = vunpack.c.l.b16 %v1819
  %v3126 = vunpack.c.l.b16 %v1820
  %v3127 = vunpack.c.h.b16 %v1820
  %v3128 = vunpack.c.l.b16 %v1821
  %v3129 = vunpack.c.h.b16 %v1821
  %v3130 = vunpack.c.l.b16 %v1822
  %v3131 = vunpack.c.l.b16 %v1823
  %v3132 = vunpack.c.h.b16 %v1823
  %v3133 = vunpack.c.l.b16 %v1824
  %v3134 = vunpack.c.h.b16 %v1824
  %v3135 = vunpack.c.l.b16 %v1825
  %v3136 = vunpack.c.l.b16 %v1826
  %v3137 = vunpack.c.h.b16 %v1826
  %v3138 = vunpack.c.l.b16 %v1827
  %v3139 = vunpack.c.h.b16 %v1827
  %v3140 = vunpack.c.l.b16 %v1828
  %v3141 = vunpack.c.l.b16 %v1829
  %v3142 = vunpack.c.h.b16 %v1829
  %v3143 = vunpack.c.l.b16 %v1830
  %v3144 = vunpack.c.h.b16 %v1830
  %v3145 = vunpack.c.l.b16 %v1831
  %v3146 = vunpack.c.l.b16 %v1832
  %v3147 = vunpack.c.h.b16 %v1832
  %v3148 = vunpack.c.l.b16 %v1833
  %v3149 = vunpack.c.h.b16 %v1833
  %v3150 = vunpack.c.l.b16 %v1834
  %v3151 = vunpack.c.l.b16 %v1835
  %v3152 = vunpack.c.h.b16 %v1835
  %v3153 = vunpack.c.l.b16 %v1836
  %v3154 = vunpack.c.h.b16 %v1836
  %v3155 = vunpack.c.l.b16 %v1837
  %v3156 = vunpack.c.l.b16 %v1838
  %v3157 = vunpack.c.h.b16 %v1838
  %v3158 = vunpack.c.l.b16 %v1839
  %v3159 = vunpack.c.h.b16 %v1839
  %v3160 = vunpack.c.l.b16 %v1840
  %v3161 = vunpack.c.l.b16 %v1841
  %v3162 = vunpack.c.h.b16 %v1841
  %v3163 = vunpack.c.l.b16 %v1842
  %v3164 = vunpack.c.h.b16 %v1842
  %v3165 = vunpack.c.l.b16 %v1843
  %v3166 = vunpack.c.l.b16 %v1844
  %v3167 = vunpack.c.h.b16 %v1844
  %v3168 = vunpack.c.l.b16 %v1845
  %v3169 = vunpack.c.h.b16 %v1845
  %v3170 = vunpack.c.l.b16 %v1846
  %v3171 = vunpack.c.l.b16 %v1847
  %v3172 = vunpack.c.h.b16 %v1847
  %v3173 = vunpack.c.l.b16 %v1848
  %v3174 = vunpack.c.h.b16 %v1848
  %v3175 = vunpack.c.l.b16 %v1849
  %v3176 = vunpack.c.l.b16 %v1850
  %v3177 = vunpack.c.h.b16 %v1850
  %v3178 = vunpack.c.l.b16 %v1851
  %v3179 = vunpack.c.h.b16 %v1851
  %v3180 = vunpack.c.l.b16 %v1852
  %v3181 = vunpack.c.l.b16 %v1853
  %v3182 = vunpack.c.h.b16 %v1853
  %v3183 = vunpack.c.l.b16 %v1854
  %v3184 = vunpack.c.h.b16 %v1854
  %v3185 = vunpack.c.l.b16 %v1855
  %v3186 = vunpack.c.l.b16 %v1856
  %v3187 = vunpack.c.h.b16 %v1856
  %v3188 = vunpack.c.l.b16 %v1857
  %v3189 = vunpack.c.h.b16 %v1857
  %v3190 = vunpack.c.l.b16 %v1858
  %v3191 = vunpack.c.l.b16 %v1859
  %v3192 = vunpack.c.h.b16 %v1859
  %v3193 = vunpack.c.l.b16 %v1860
  %v3194 = vunpack.c.h.b16 %v1860
  %v3195 = vunpack.c.l.b16 %v1861
  %v3196 = vunpack.c.l.b16 %v1862
  %v3197 = vunpack.c.h.b16 %v1862
  %v3198 = vunpack.c.l.b16 %v1863
  %v3199 = vunpack.c.h.b16 %v1863
  %v3200 = vunpack.c.l.b16 %v1864
  %v3201 = vunpack.c.l.b16 %v1865
  %v3202 = vunpack.c.h.b16 %v1865
  %v3203 = vunpack.c.l.b16 %v1866
  %v3204 = vunpack.c.h.b16 %v1866
  %v3205 = vunpack.c.l.b16 %v1867
  %v3206 = vunpack.c.l.b16 %v1868
  %v3207 = vunpack.c.h.b16 %v1868
  %v3208 = vunpack.c.l.b16 %v1869
  %v3209 = vunpack.c.h.b16 %v1869
  %v3210 = vunpack.c.l.b16 %v1870
  %v3211 = vunpack.c.l.b16 %v1871
  %v3212 = vunpack.c.h.b16 %v1871
  %v3213 = vunpack.c.l.b16 %v1872
  %v3214 = vunpack.c.h.b16 %v1872
  %v3215 = vunpack.c.l.b16 %v1873
  %v3216 = vunpack.c.l.b16 %v1874
  %v3217 = vunpack.c.h.b16 %v1874
  %v3218 = vunpack.c.l.b16 %v1875
  %v3219 = vunpack.c.h.b16 %v1875
  %v3220 = vunpack.c.l.b16 %v1876
  %v3221 = vunpack.c.l.b16 %v1877
  %v3222 = vunpack.c.h.b16 %v1877
  %v3223 = vunpack.c.l.b16 %v1878
  %v3224 = vunpack.c.h.b16 %v1878
  %v3225 = vunpack.c.l.b16 %v1879
  %v3226 = vunpack.c.l.b16 %v1880
  %v3227 = vunpack.c.h.b16 %v1880
  %v3228 = vunpack.c.l.b16 %v1881
  %v3229 = vunpack.c.h.b16 %v1881
  %v3230 = vunpack.c.l.b16 %v1882
  %v3231 = vunpack.c.l.b16 %v1883
  %v3232 = vunpack.c.h.b16 %v1883
  %v3233 = vunpack.c.l.b16 %v1884
  %v3234 = vunpack.c.h.b16 %v1884
  %v3235 = vunpack.c.l.b16 %v1885
  %v3236 = vunpack.c.l.b16 %v1886
  %v3237 = vunpack.c.h.b16 %v1886
  %v3238 = vunpack.c.l.b16 %v1887
  %v3239 = vunpack.c.h.b16 %v1887
  %v3240 = vunpack.c.l.b16 %v1888
  %v3241 = vunpack.c.l.b16 %v1889
  %v3242 = vunpack.c.h.b16 %v1889
  %v3243 = vunpack.c.l.b16 %v1890
  %v3244 = vunpack.c.h.b16 %v1890
  %v3245 = vunpack.c.l.b16 %v1891
  %v3246 = vunpack.c.l.b16 %v1892
  %v3247 = vunpack.c.h.b16 %v1892
  %v3248 = vunpack.c.l.b16 %v1893
  %v3249 = vunpack.c.h.b16 %v1893
  %v3250 = vunpack.c.l.b16 %v1894
  %v3251 = vunpack.c.l.b16 %v1895
  %v3252 = vunpack.c.h.b16 %v1895
  %v3253 = vunpack.c.l.b16 %v1896
  %v3254 = vunpack.c.h.b16 %v1896
  %v3255 = vunpack.c.l.b16 %v1897
  %v3256 = vunpack.c.l.b16 %v1898
  %v3257 = vunpack.c.h.b16 %v1898
  %v3258 = vunpack.c.l.b16 %v1899
  %v3259 = vunpack.c.h.b16 %v1899
  %v3260 = vunpack.c.l.b16 %v1900
  %v3261 = vunpack.c.l.b16 %v1901
  %v3262 = vunpack.c.h.b16 %v1901
  %v3263 = vunpack.c.l.b16 %v1902
  %v3264 = vunpack.c.h.b16 %v1902
  %v3265 = vunpack.c.l.b16 %v1903
  %v3266 = vunpack.c.l.b16 %v1904
  %v3267 = vunpack.c.h.b16 %v1904
  %v3268 = vunpack.c.l.b16 %v1905
  %v3269 = vunpack.c.h.b16 %v1905
  %v3270 = vunpack.c.l.b16 %v1906
  %v3271 = vunpack.c.l.b16 %v1907
  %v3272 = vunpack.c.h.b16 %v1907
  %v3273 = vunpack.c.l.b16 %v1908
  %v3274 = vunpack.c.h.b16 %v1908
  %v3275 = vunpack.c.l.b16 %v1909
  %v3276 = vunpack.c.l.b16 %v1910
  %v3277 = vunpack.c.h.b16 %v1910
  %v3278 = vunpack.c.l.b16 %v1911
  %v3279 = vunpack.c.h.b16 %v1911
  %v3280 = vunpack.c.l.b16 %v1912
  %v3281 = vunpack.c.l.b16 %v1913
  %v3282 = vunpack.c.h.b16 %v1913
  %v3283 = vunpack.c.l.b16 %v1914
  %v3284 = vunpack.c.h.b16 %v1914
  %v3285 = vunpack.c.l.b16 %v1915
  %v3286 = vunpack.c.l.b16 %v1916
  %v3287 = vunpack.c.h.b16 %v1916
  %v3288 = vunpack.c.l.b16 %v1917
  %v3289 = vunpack.c.h.b16 %v1917
  %v3290 = vunpack.c.l.b16 %v1918
  %v3291 = vunpack.c.l.b16 %v1919
  %v3292 = vunpack.c.h.b16 %v1919
  %v3293 = vunpack.c.l.b16 %v1920
  %v3294 = vunpack.c.h.b16 %v1920
  %v3295 = vunpack.c.l.b16 %v1921
  %v3296 = vunpack.c.l.b16 %v1922
  %v3297 = vunpack.c.h.b16 %v1922
  %v3298 = vunpack.c.l.b16 %v1923
  %v3299 = vunpack.c.h.b16 %v1923
  %v3300 = vunpack.c.l.b16 %v1924
  %v3301 = vunpack.c.l.b16 %v1925
  %v3302 = vunpack.c.h.b16 %v1925
  %v3303 = vunpack.c.l.b16 %v1926
  %v3304 = vunpack.c.h.b16 %v1926
  %v3305 = vunpack.c.l.b16 %v1927
  %v3306 = vunpack.c.l.b16 %v1928
  %v3307 = vunpack.c.h.b16 %v1928
  %v3308 = vunpack.c.l.b16 %v1929
  %v3309 = vunpack.c.h.b16 %v1929
  %v3310 = vunpack.c.l.b16 %v1930
  %v3311 = vunpack.c.l.b16 %v1931
  %v3312 = vunpack.c.h.b16 %v1931
  %v3313 = vunpack.c.l.b16 %v1932
  %v3314 = vunpack.c.h.b16 %v1932
  %v3315 = vunpack.c.l.b16 %v1933
  %v3316 = vunpack.c.l.b16 %v1934
  %v3317 = vunpack.c.h.b16 %v1934
  %v3318 = vunpack.c.l.b16 %v1935
  %v3319 = vunpack.c.h.b16 %v1935
  %v3320 = vunpack.c.l.b16 %v1936
  %v3321 = vunpack.c.l.b16 %v1937
  %v3322 = vunpack.c.h.b16 %v1937
  %v3323 = vunpack.c.l.b16 %v1938
  %v3324 = vunpack.c.h.b16 %v1938
  %v3325 = vunpack.c.l.b16 %v1939
  %v3326 = vunpack.c.l.b16 %v1940
  %v3327 = vunpack.c.h.b16 %v1940
  %v3328 = vunpack.c.l.b16 %v1941
  %v3329 = vunpack.c.h.b16 %v1941
  %v3330 = vunpack.c.l.b16 %v1942
  %v3331 = vunpack.c.l.b16 %v1943
  %v3332 = vunpack.c.h.b16 %v1943
  %v3333 = vunpack.c.l.b16 %v1944
  %v3334 = vunpack.c.h.b16 %v1944
  %v3335 = vunpack.c.l.b16 %v1945
  %v3336 = vunpack.c.l.b16 %v1946
  %v3337 = vunpack.c.h.b16 %v1946
  %v3338 = vunpack.c.l.b16 %v1947
  %v3339 = vunpack.c.h.b16 %v1947
  %v3340 = vunpack.c.l.b16 %v1948
  %v3341 = vunpack.c.l.b16 %v1949
  %v3342 = vunpack.c.h.b16 %v1949
  %v3343 = vunpack.c.l.b16 %v1950
  %v3344 = vunpack.c.h.b16 %v1950
  %v3345 = vunpack.c.l.b16 %v1951
  %v3346 = vunpack.c.l.b16 %v1952
  %v3347 = vunpack.c.h.b16 %v1952
  %v3348 = vunpack.c.l.b16 %v1953
  %v3349 = vunpack.c.h.b16 %v1953
  %v3350 = vunpack.c.l.b16 %v1954
  %v3351 = vunpack.c.l.b16 %v1955
  %v3352 = vunpack.c.h.b16 %v1955
  %v3353 = vunpack.c.l.b16 %v1956
  %v3354 = vunpack.c.h.b16 %v1956
  %v3355 = vunpack.c.l.b16 %v1957
  %v3356 = vunpack.c.l.b16 %v1958
  %v3357 = vunpack.c.h.b16 %v1958
  %v3358 = vunpack.c.l.b16 %v1959
  %v3359 = vunpack.c.h.b16 %v1959
  %v3360 = vunpack.c.l.b16 %v1960
  %v3361 = vunpack.c.l.b16 %v1961
  %v3362 = vunpack.c.h.b16 %v1961
  %v3363 = vunpack.c.l.b16 %v1962
  %v3364 = vunpack.c.h.b16 %v1962
  %v3365 = vunpack.c.l.b16 %v1963
  %v3366 = vunpack.c.l.b16 %v1964
  %v3367 = vunpack.c.h.b16 %v1964
  %v3368 = vunpack.c.l.b16 %v1965
  %v3369 = vunpack.c.h.b16 %v1965
  %v3370 = vunpack.c.l.b16 %v1966
  %v3371 = vunpack.c.l.b16 %v1967
  %v3372 = vunpack.c.h.b16 %v1967
  %v3373 = vunpack.c.l.b16 %v1968
  %v3374 = vunpack.c.h.b16 %v1968
  %v3375 = vunpack.c.l.b16 %v1969
  %v3376 = vunpack.c.l.b16 %v1970
  %v3377 = vunpack.c.h.b16 %v1970
  %v3378 = vunpack.c.l.b16 %v1971
  %v3379 = vunpack.c.h.b16 %v1971
  %v3380 = vunpack.c.l.b16 %v1972
  %v3381 = vunpack.c.l.b16 %v1973
  %v3382 = vunpack.c.h.b16 %v1973
  %v3383 = vunpack.c.l.b16 %v1974
  %v3384 = vunpack.c.h.b16 %v1974
  %v3385 = vunpack.c.l.b16 %v1975
  %v3386 = vunpack.c.l.b16 %v1976
  %v3387 = vunpack.c.h.b16 %v1976
  %v3388 = vunpack.c.l.b16 %v1977
  %v3389 = vunpack.c.h.b16 %v1977
  %v3390 = vunpack.c.l.b16 %v1978
  %v3391 = vunpack.c.l.b16 %v1979
  %v3392 = vunpack.c.h.b16 %v1979
  %v3393 = vunpack.c.l.b16 %v1980
  %v3394 = vunpack.c.h.b16 %v1980
  %v3395 = vunpack.c.l.b16 %v1981
  %v3396 = vunpack.c.l.b16 %v1982
  %v3397 = vunpack.c.h.b16 %v1982
  %v3398 = vunpack.c.l.b16 %v1983
  %v3399 = vunpack.c.h.b16 %v1983
  %v3400 = vunpack.c.l.b16 %v1984
  %v3401 = vunpack.c.l.b16 %v1985
  %v3402 = vunpack.c.h.b16 %v1985
  %v3403 = vunpack.c.l.b16 %v1986
  %v3404 = vunpack.c.h.b16 %v1986
  %v3405 = vunpack.c.l.b16 %v1987
  %v3406 = vunpack.c.l.b16 %v1988
  %v3407 = vunpack.c.h.b16 %v1988
  %v3408 = vunpack.c.l.b16 %v1989
  %v3409 = vunpack.c.h.b16 %v1989
  %v3410 = vunpack.c.l.b16 %v1990
  %v3411 = vunpack.c.l.b16 %v1991
  %v3412 = vunpack.c.h.b16 %v1991
  %v3413 = vunpack.c.l.b16 %v1992
  %v3414 = vunpack.c.h.b16 %v1992
  %v3415 = vunpack.c.l.b16 %v1993
  %v3416 = vunpack.c.l.b16 %v1994
  %v3417 = vunpack.c.h.b16 %v1994
  %v3418 = vunpack.c.l.b16 %v1995
  %v3419 = vunpack.c.h.b16 %v1995
  %v3420 = vunpack.c.l.b16 %v1996
  %v3421 = vunpack.c.l.b16 %v1997
  %v3422 = vunpack.c.h.b16 %v1997
  %v3423 = vunpack.c.l.b16 %v1998
  %v3424 = vunpack.c.h.b16 %v1998
  %v3425 = vunpack.c.l.b16 %v1999
  %v3426 = vunpack.c.l.b16 %v2000
  %v3427 = vunpack.c.h.b16 %v2000
  %v3428 = vunpack.c.l.b16 %v2001
  %v3429 = vunpack.c.h.b16 %v2001
  %v3430 = vunpack.c.l.b16 %v2002
  %v3431 = vunpack.c.l.b16 %v2003
  %v3432 = vunpack.c.h.b16 %v2003
  %v3433 = vunpack.c.l.b16 %v2004
  %v3434 = vunpack.c.h.b16 %v2004
  %v3435 = vunpack.c.l.b16 %v2005
  %v3436 = vunpack.c.l.b16 %v2006
  %v3437 = vunpack.c.h.b16 %v2006
  %v3438 = vunpack.c.l.b16 %v2007
  %v3439 = vunpack.c.h.b16 %v2007
  %v3440 = vunpack.c.l.b16 %v2008
  %v3441 = vunpack.c.l.b16 %v2009
  %v3442 = vunpack.c.h.b16 %v2009
  %v3443 = vunpack.c.l.b16 %v2010
  %v3444 = vunpack.c.h.b16 %v2010
  %v3445 = vunpack.c.l.b16 %v2011
  %v3446 = vunpack.c.l.b16 %v2012
  %v3447 = vunpack.c.h.b16 %v2012
  %v3448 = vunpack.c.l.b16 %v2013
  %v3449 = vunpack.c.h.b16 %v2013
  %v3450 = vunpack.c.l.b16 %v2014
  %v3451 = vunpack.c.l.b16 %v2015
  %v3452 = vunpack.c.h.b16 %v2015
  %v3453 = vunpack.c.l.b16 %v2016
  %v3454 = vunpack.c.h.b16 %v2016
  %v3455 = vunpack.c.l.b16 %v2017
  %v3456 = vunpack.c.l.b16 %v2018
  %v3457 = vunpack.c.h.b16 %v2018
  %v3458 = vunpack.c.l.b16 %v2019
  %v3459 = vunpack.c.h.b16 %v2019
  %v3460 = vunpack.c.l.b16 %v2020
  %v3461 = vpack.c.b16 %v3106, %v3101
  %v3462 = vpack.c.b16 %v3107, %v3102
  %v3463 = vpack.c.b16 %v3108, %v3103
  %v3464 = vpack.c.b16 %v3109, %v3104
  %v3465 = vpack.c.b16 %v3110, %v3105
  %v3466 = vpack.c.b16 %v3116, %v3111
  %v3467 = vpack.c.b16 %v3117, %v3112
  %v3468 = vpack.c.b16 %v3118, %v3113
  %v3469 = vpack.c.b16 %v3119, %v3114
  %v3470 = vpack.c.b16 %v3120, %v3115
  %v3471 = vpack.c.b16 %v3126, %v3121
  %v3472 = vpack.c.b16 %v3127, %v3122
  %v3473 = vpack.c.b16 %v3128, %v3123
  %v3474 = vpack.c.b16 %v3129, %v3124
  %v3475 = vpack.c.b16 %v3130, %v3125
  %v3476 = vpack.c.b16 %v3136, %v3131
  %v3477 = vpack.c.b16 %v3137, %v3132
  %v3478 = vpack.c.b16 %v3138, %v3133
  %v3479 = vpack.c.b16 %v3139, %v3134
  %v3480 = vpack.c.b16 %v3140, %v3135
  %v3481 = vpack.c.b16 %v3146, %v3141
  %v3482 = vpack.c.b16 %v3147, %v3142
  %v3483 = vpack.c.b16 %v3148, %v3143
  %v3484 = vpack.c.b16 %v3149, %v3144
  %v3485 = vpack.c.b16 %v3150, %v3145
  %v3486 = vpack.c.b16 %v3156, %v3151
  %v3487 = vpack.c.b16 %v3157, %v3152
  %v3488 = vpack.c.b16 %v3158, %v3153
  %v3489 = vpack.c.b16 %v3159, %v3154
  %v3490 = vpack.c.b16 %v3160, %v3155
  %v3491 = vpack.c.b16 %v3166, %v3161
  %v3492 = vpack.c.b16 %v3167, %v3162
  %v3493 = vpack.c.b16 %v3168, %v3163
  %v3494 = vpack.c.b16 %v3169, %v3164
  %v3495 = vpack.c.b16 %v3170, %v3165
  %v3496 = vpack.c.b16 %v3176, %v3171
  %v3497 = vpack.c.b16 %v3177, %v3172
  %v3498 = vpack.c.b16 %v3178, %v3173
  %v3499 = vpack.c.b16 %v3179, %v3174
  %v3500 = vpack.c.b16 %v3180, %v3175
  %v3501 = vpack.c.b16 %v3186, %v3181
  %v3502 = vpack.c.b16 %v3187, %v3182
  %v3503 = vpack.c.b16 %v3188, %v3183
  %v3504 = vpack.c.b16 %v3189, %v3184
  %v3505 = vpack.c.b16 %v3190, %v3185
  %v3506 = vpack.c.b16 %v3196, %v3191
  %v3507 = vpack.c.b16 %v3197, %v3192
  %v3508 = vpack.c.b16 %v3198, %v3193
  %v3509 = vpack.c.b16 %v3199, %v3194
  %v3510 = vpack.c.b16 %v3200, %v3195
  %v3511 = vpack.c.b16 %v3206, %v3201
  %v3512 = vpack.c.b16 %v3207, %v3202
  %v3513 = vpack.c.b16 %v3208, %v3203
  %v3514 = vpack.c.b16 %v3209, %v3204
  %v3515 = vpack.c.b16 %v3210, %v3205
  %v3516 = vpack.c.b16 %v3216, %v3211
  %v3517 = vpack.c.b16 %v3217, %v3212
  %v3518 = vpack.c.b16 %v3218, %v3213
  %v3519 = vpack.c.b16 %v3219, %v3214
  %v3520 = vpack.c.b16 %v3220, %v3215
  %v3521 = vpack.c.b16 %v3226, %v3221
  %v3522 = vpack.c.b16 %v3227, %v3222
  %v3523 = vpack.c.b16 %v3228, %v3223
  %v3524 = vpack.c.b16 %v3229, %v3224
  %v3525 = vpack.c.b16 %v3230, %v3225
  %v3526 = vpack.c.b16 %v3236, %v3231
  %v3527 = vpack.c.b16 %v3237, %v3232
  %v3528 = vpack.c.b16 %v3238, %v3233
  %v3529 = vpack.c.b16 %v3239, %v3234
  %v3530 = vpack.c.b16 %v3240, %v3235
  %v3531 = vpack.c.b16 %v3246, %v3241
  %v3532 = vpack.c.b16 %v3247, %v3242
  %v3533 = vpack.c.b16 %v3248, %v3243
  %v3534 = vpack.c.b16 %v3249, %v3244
  %v3535 = vpack.c.b16 %v3250, %v3245
  %v3536 = vpack.c.b16 %v3256, %v3251
  %v3537 = vpack.c.b16 %v3257, %v3252
  %v3538 = vpack.c.b16 %v3258, %v3253
  %v3539 = vpack.c.b16 %v3259, %v3254
  %v3540 = vpack.c.b16 %v3260, %v3255
  %v3541 = vpack.c.b16 %v3266, %v3261
  %v3542 = vpack.c.b16 %v3267, %v3262
  %v3543 = vpack.c.b16 %v3268, %v3263
  %v3544 = vpack.c.b16 %v3269, %v3264
  %v3545 = vpack.c.b16 %v3270, %v3265
  %v3546 = vpack.c.b16 %v3276, %v3271
  %v3547 = vpack.c.b16 %v3277, %v3272
  %v3548 = vpack.c.b16 %v3278, %v3273
  %v3549 = vpack.c.b16 %v3279, %v3274
  %v3550 = vpack.c.b16 %v3280, %v3275
  %v3551 = vpack.c.b16 %v3286, %v3281
  %v3552 = vpack.c.b16 %v3287, %v3282
  %v3553 = vpack.c.b16 %v3288, %v3283
  %v3554 = vpack.c.b16 %v3289, %v3284
  %v3555 = vpack.c.b16 %v3290, %v3285
  %v3556 = vpack.c.b16 %v3296, %v3291
  %v3557 = vpack.c.b16 %v3297, %v3292
  %v3558 = vpack.c.b16 %v3298, %v3293
  %v3559 = vpack.c.b16 %v3299, %v3294
  %v3560 = vpack.c.b16 %v3300, %v3295
  %v3561 = vpack.c.b16 %v3306, %v3301
  %v3562 = vpack.c.b16 %v3307, %v3302
  %v3563 = vpack.c.b16 %v3308, %v3303
  %v3564 = vpack.c.b16 %v3309, %v3304
  %v3565 = vpack.c.b16 %v3310, %v3305
  %v3566 = vpack.c.b16 %v3316, %v3311
  %v3567 = vpack.c.b16 %v3317, %v3312
  %v3568 = vpack.c.b16 %v3318, %v3313
  %v3569 = vpack.c.b16 %v3319, %v3314
  %v3570 = vpack.c.b16 %v3320, %v3315
  %v3571 = vpack.c.b16 %v3326, %v3321
  %v3572 = vpack.c.b16 %v3327, %v3322
  %v3573 = vpack.c.b16 %v3328, %v3323
  %v3574 = vpack.c.b16 %v3329, %v3324
  %v3575 = vpack.c.b16 %v3330, %v3325
  %v3576 = vpack.c.b16 %v3336, %v3331
  %v3577 = vpack.c.b16 %v3337, %v3332
  %v3578 = vpack.c.b16 %v3338, %v3333
  %v3579 = vpack.c.b16 %v3339, %v3334
  %v3580 = vpack.c.b16 %v3340, %v3335
  %v3581 = vpack.c.b16 %v3346, %v3341
  %v3582 = vpack.c.b16 %v3347, %v3342
  %v3583 = vpack.c.b16 %v3348, %v3343
  %v3584 = vpack.c.b16 %v3349, %v3344
  %v3585 = vpack.c.b16 %v3350, %v3345
  %v3586 = vpack.c.b16 %v3356, %v3351
  %v3587 = vpack.c.b16 %v3357, %v3352
  %v3588 = vpack.c.b16 %v3358, %v3353
  %v3589 = vpack.c.b16 %v3359, %v3354
  %v3590 = vpack.c.b16 %v3360, %v3355
  %v3591 = vpack.c.b16 %v3366, %v3361
  %v3592 = vpack.c.b16 %v3367, %v3362
  %v3593 = vpack.c.b16 %v3368, %v3363
  %v3594 = vpack.c.b16 %v3369, %v3364
  %v3595 = vpack.c.b16 %v3370, %v3365
  %v3596 = vpack.c.b16 %v3376, %v3371
  %v3597 = vpack.c.b16 %v3377, %v3372
  %v3598 = vpack.c.b16 %v3378, %v3373
  %v3599 = vpack.c.b16 %v3379, %v3374
  %v3600 = vpack.c.b16 %v3380, %v3375
  %v3601 = vpack.c.b16 %v3386, %v3381
  %v3602 = vpack.c.b16 %v3387, %v3382
  %v3603 = vpack.c.b16 %v3388, %v3383
  %v3604 = vpack.c.b16 %v3389, %v3384
  %v3605 = vpack.c.b16 %v3390, %v3385
  %v3606 = vpack.c.b16 %v3396, %v3391
  %v3607 = vpack.c.b16 %v3397, %v3392
  %v3608 = vpack.c.b16 %v3398, %v3393
  %v3609 = vpack.c.b16 %v3399, %v3394
  %v3610 = vpack.c.b16 %v3400, %v3395
  %v3611 = vpack.c.b16 %v3406, %v3401
  %v3612 = vpack.c.b16 %v3407, %v3402
  %v3613 = vpack.c.b16 %v3408, %v3403
  %v3614 = vpack.c.b16 %v3409, %v3404
  %v3615 = vpack.c.b16 %v3410, %v3405
  %v3616 = vpack.c.b16 %v3416, %v3411
  %v3617 = vpack.c.b16 %v3417, %v3412
  %v3618 = vpack.c.b16 %v3418, %v3413
  %v3619 = vpack.c.b16 %v3419, %v3414
  %v3620 = vpack.c.b16 %v3420, %v3415
  %v3621 = vpack.c.b16 %v3426, %v3421
  %v3622 = vpack.c.b16 %v3427, %v3422
  %v3623 = vpack.c.b16 %v3428, %v3423
  %v3624 = vpack.c.b16 %v3429, %v3424
  %v3625 = vpack.c.b16 %v3430, %v3425
  %v3626 = vpack.c.b16 %v3436, %v3431
  %v3627 = vpack.c.b16 %v3437, %v3432
  %v3628 = vpack.c.b16 %v3438, %v3433
  %v3629 = vpack.c.b16 %v3439, %v3434
  %v3630 = vpack.c.b16 %v3440, %v3435
  %v3631 = vpack.c.b16 %v3446, %v3441
  %v3632 = vpack.c.b16 %v3447, %v3442
  %v3633 = vpack.c.b16 %v3448, %v3443
  %v3634 = vpack.c.b16 %v3449, %v3444
  %v3635 = vpack.c.b16 %v3450, %v3445
  %v3636 = vpack.c.b16 %v3456, %v3451
  %v3637 = vpack.c.b16 %v3457, %v3452
  %v3638 = vpack.c.b16 %v3458, %v3453
  %v3639 = vpack.c.b16 %v3459, %v3454
  %v3640 = vpack.c.b16 %v3460, %v3455
  %vm3785 = vcmask 523264
  %v3787 = vsel %vm3785, %v3465, 0
  %v3790 = vsel %vm3785, %v3470, 0
  %v3793 = vsel %vm3785, %v3475, 0
  %v3796 = vsel %vm3785, %v3480, 0
  %v3799 = vsel %vm3785, %v3485, 0
  %v3802 = vsel %vm3785, %v3490, 0
  %v3805 = vsel %vm3785, %v3495, 0
  %v3808 = vsel %vm3785, %v3500, 0
  %v3811 = vsel %vm3785, %v3505, 0
  %v3814 = vsel %vm3785, %v3510, 0
  %v3817 = vsel %vm3785, %v3515, 0
  %v3820 = vsel %vm3785, %v3520, 0
  %v3823 = vsel %vm3785, %v3525, 0
  %v3826 = vsel %vm3785, %v3530, 0
  %v3829 = vsel %vm3785, %v3535, 0
  %v3832 = vsel %vm3785, %v3540, 0
  %v3835 = vsel %vm3785, %v3545, 0
  %v3838 = vsel %vm3785, %v3550, 0
  %v3841 = vsel %vm3785, %v3555, 0
  %v3844 = vsel %vm3785, %v3560, 0
  %v3847 = vsel %vm3785, %v3565, 0
  %v3850 = vsel %vm3785, %v3570, 0
  %v3853 = vsel %vm3785, %v3575, 0
  %v3856 = vsel %vm3785, %v3580, 0
  %v3859 = vsel %vm3785, %v3585, 0
  %v3862 = vsel %vm3785, %v3590, 0
  %v3865 = vsel %vm3785, %v3595, 0
  %v3868 = vsel %vm3785, %v3600, 0
  %v3871 = vsel %vm3785, %v3605, 0
  %v3874 = vsel %vm3785, %v3610, 0
  %v3877 = vsel %vm3785, %v3615, 0
  %v3880 = vsel %vm3785, %v3620, 0
  %v3883 = vsel %vm3785, %v3625, 0
  %v3886 = vsel %vm3785, %v3630, 0
  %v3889 = vsel %vm3785, %v3635, 0
  %v3892 = vsel %vm3785, %v3640, 0
  %3894 = vmatprep.subr.bf16.mxu0 %v2814
  %3895 = vmatpush1.bf16.msra.mxu0 %v2813
  %3896 = vmatprep.subr.bf16.mxu0 %v2816
  %3897 = vmatpush1.bf16.msra.mxu0 %v2815
  %3898 = vmatprep.subr.bf16.mxu0 %v2818
  %3899 = vmatpush1.bf16.msra.mxu0 %v2817
  %3900 = vmatprep.subr.bf16.mxu0 %v2820
  %3901 = vmatpush1.bf16.msra.mxu0 %v2819
  %3902 = vmatprep.subr.bf16.mxu0 %v2822
  %3903 = vmatpush1.bf16.msra.mxu0 %v2821
  %3904 = vmatprep.subr.bf16.mxu0 %v2824
  %3905 = vmatpush1.bf16.msra.mxu0 %v2823
  %3906 = vmatprep.subr.bf16.mxu0 %v2826
  %3907 = vmatpush1.bf16.msra.mxu0 %v2825
  %3908 = vmatprep.subr.bf16.mxu0 %v2828
  %3909 = vmatpush1.bf16.msra.mxu0 %v2827
  %3910 = vmatprep.subr.bf16.mxu0 %v2830
  %3911 = vmatpush1.bf16.msra.mxu0 %v2829
  %3912 = vmatprep.subr.bf16.mxu0 %v2832
  %3913 = vmatpush1.bf16.msra.mxu0 %v2831
  %3914 = vmatprep.subr.bf16.mxu0 %v2834
  %3915 = vmatpush1.bf16.msra.mxu0 %v2833
  %3916 = vmatprep.subr.bf16.mxu0 %v2836
  %3917 = vmatpush1.bf16.msra.mxu0 %v2835
  %3918 = vmatprep.subr.bf16.mxu0 %v2838
  %3919 = vmatpush1.bf16.msra.mxu0 %v2837
  %3920 = vmatprep.subr.bf16.mxu0 %v2840
  %3921 = vmatpush1.bf16.msra.mxu0 %v2839
  %3922 = vmatprep.subr.bf16.mxu0 %v2842
  %3923 = vmatpush1.bf16.msra.mxu0 %v2841
  %3924 = vmatprep.subr.bf16.mxu0 %v2844
  %3925 = vmatpush1.bf16.msra.mxu0 %v2843
  %3926 = vmatprep.mubr.bf16.mxu0 %v3462
  %3927 = vmatmul.mubr.bf16.gmra.mrb[0].mxu0 %v3461
  %v3928 = vpop.f32.mrb[0].mxu0
  %v3929 = vadd.f32 0.0, %v3928
  %v3930 = vpop.f32.mrb[0].mxu0
  %v3931 = vadd.f32 0.0, %v3930
  %v3932 = vpop.f32.mrb[0].mxu0
  %v3933 = vadd.f32 0.0, %v3932
  %v3934 = vpop.f32.mrb[0].mxu0
  %v3935 = vadd.f32 0.0, %v3934
  %3936 = vmatprep.mubr.bf16.mxu0 %v3467
  %3937 = vmatmul.mubr.bf16.gmra.mrb[0].mxu0 %v3466
  %v3938 = vpop.f32.mrb[0].mxu0
  %v3939 = vadd.f32 0.0, %v3938
  %v3940 = vpop.f32.mrb[0].mxu0
  %v3941 = vadd.f32 0.0, %v3940
  %v3942 = vpop.f32.mrb[0].mxu0
  %v3943 = vadd.f32 0.0, %v3942
  %v3944 = vpop.f32.mrb[0].mxu0
  %v3945 = vadd.f32 0.0, %v3944
  %3946 = vmatprep.mubr.bf16.mxu0 %v3472
  %3947 = vmatmul.mubr.bf16.gmra.mrb[0].mxu0 %v3471
  %v3948 = vpop.f32.mrb[0].mxu0
  %v3949 = vadd.f32 0.0, %v3948
  %v3950 = vpop.f32.mrb[0].mxu0
  %v3951 = vadd.f32 0.0, %v3950
  %v3952 = vpop.f32.mrb[0].mxu0
  %v3953 = vadd.f32 0.0, %v3952
  %v3954 = vpop.f32.mrb[0].mxu0
  %v3955 = vadd.f32 0.0, %v3954
  %3956 = vmatprep.mubr.bf16.mxu0 %v3477
  %3957 = vmatmul.mubr.bf16.gmra.mrb[0].mxu0 %v3476
  %v3958 = vpop.f32.mrb[0].mxu0
  %v3959 = vadd.f32 0.0, %v3958
  %v3960 = vpop.f32.mrb[0].mxu0
  %v3961 = vadd.f32 0.0, %v3960
  %v3962 = vpop.f32.mrb[0].mxu0
  %v3963 = vadd.f32 0.0, %v3962
  %v3964 = vpop.f32.mrb[0].mxu0
  %v3965 = vadd.f32 0.0, %v3964
  %3966 = vmatprep.mubr.bf16.mxu0 %v3482
  %3967 = vmatmul.mubr.bf16.gmra.mrb[0].mxu0 %v3481
  %v3968 = vpop.f32.mrb[0].mxu0
  %v3969 = vadd.f32 0.0, %v3968
  %v3970 = vpop.f32.mrb[0].mxu0
  %v3971 = vadd.f32 0.0, %v3970
  %v3972 = vpop.f32.mrb[0].mxu0
  %v3973 = vadd.f32 0.0, %v3972
  %v3974 = vpop.f32.mrb[0].mxu0
  %v3975 = vadd.f32 0.0, %v3974
  %3976 = vmatprep.mubr.bf16.mxu0 %v3487
  %3977 = vmatmul.mubr.bf16.gmra.mrb[0].mxu0 %v3486
  %v3978 = vpop.f32.mrb[0].mxu0
  %v3979 = vadd.f32 0.0, %v3978
  %v3980 = vpop.f32.mrb[0].mxu0
  %v3981 = vadd.f32 0.0, %v3980
  %v3982 = vpop.f32.mrb[0].mxu0
  %v3983 = vadd.f32 0.0, %v3982
  %v3984 = vpop.f32.mrb[0].mxu0
  %v3985 = vadd.f32 0.0, %v3984
  %3986 = vmatprep.mubr.bf16.mxu0 %v3492
  %3987 = vmatmul.mubr.bf16.gmra.mrb[0].mxu0 %v3491
  %v3988 = vpop.f32.mrb[0].mxu0
  %v3989 = vadd.f32 0.0, %v3988
  %v3990 = vpop.f32.mrb[0].mxu0
  %v3991 = vadd.f32 0.0, %v3990
  %v3992 = vpop.f32.mrb[0].mxu0
  %v3993 = vadd.f32 0.0, %v3992
  %v3994 = vpop.f32.mrb[0].mxu0
  %v3995 = vadd.f32 0.0, %v3994
  %3996 = vmatprep.mubr.bf16.mxu0 %v3497
  %3997 = vmatmul.mubr.bf16.gmra.mrb[0].mxu0 %v3496
  %v3998 = vpop.f32.mrb[0].mxu0
  %v3999 = vadd.f32 0.0, %v3998
  %v4000 = vpop.f32.mrb[0].mxu0
  %v4001 = vadd.f32 0.0, %v4000
  %v4002 = vpop.f32.mrb[0].mxu0
  %v4003 = vadd.f32 0.0, %v4002
  %v4004 = vpop.f32.mrb[0].mxu0
  %v4005 = vadd.f32 0.0, %v4004
  %4006 = vmatprep.mubr.bf16.mxu0 %v3502
  %4007 = vmatmul.mubr.bf16.gmra.mrb[0].mxu0 %v3501
  %v4008 = vpop.f32.mrb[0].mxu0
  %v4009 = vadd.f32 0.0, %v4008
  %v4010 = vpop.f32.mrb[0].mxu0
  %v4011 = vadd.f32 0.0, %v4010
  %v4012 = vpop.f32.mrb[0].mxu0
  %v4013 = vadd.f32 0.0, %v4012
  %v4014 = vpop.f32.mrb[0].mxu0
  %v4015 = vadd.f32 0.0, %v4014
  %4016 = vmatprep.mubr.bf16.mxu0 %v3507
  %4017 = vmatmul.mubr.bf16.gmra.mrb[0].mxu0 %v3506
  %v4018 = vpop.f32.mrb[0].mxu0
  %v4019 = vadd.f32 0.0, %v4018
  %v4020 = vpop.f32.mrb[0].mxu0
  %v4021 = vadd.f32 0.0, %v4020
  %v4022 = vpop.f32.mrb[0].mxu0
  %v4023 = vadd.f32 0.0, %v4022
  %v4024 = vpop.f32.mrb[0].mxu0
  %v4025 = vadd.f32 0.0, %v4024
  %4026 = vmatprep.mubr.bf16.mxu0 %v3512
  %4027 = vmatmul.mubr.bf16.gmra.mrb[0].mxu0 %v3511
  %v4028 = vpop.f32.mrb[0].mxu0
  %v4029 = vadd.f32 0.0, %v4028
  %v4030 = vpop.f32.mrb[0].mxu0
  %v4031 = vadd.f32 0.0, %v4030
  %v4032 = vpop.f32.mrb[0].mxu0
  %v4033 = vadd.f32 0.0, %v4032
  %v4034 = vpop.f32.mrb[0].mxu0
  %v4035 = vadd.f32 0.0, %v4034
  %4036 = vmatprep.mubr.bf16.mxu0 %v3517
  %4037 = vmatmul.mubr.bf16.gmra.mrb[0].mxu0 %v3516
  %v4038 = vpop.f32.mrb[0].mxu0
  %v4039 = vadd.f32 0.0, %v4038
  %v4040 = vpop.f32.mrb[0].mxu0
  %v4041 = vadd.f32 0.0, %v4040
  %v4042 = vpop.f32.mrb[0].mxu0
  %v4043 = vadd.f32 0.0, %v4042
  %v4044 = vpop.f32.mrb[0].mxu0
  %v4045 = vadd.f32 0.0, %v4044
  %4046 = vmatprep.mubr.bf16.mxu0 %v3522
  %4047 = vmatmul.mubr.bf16.gmra.mrb[0].mxu0 %v3521
  %v4048 = vpop.f32.mrb[0].mxu0
  %v4049 = vadd.f32 0.0, %v4048
  %v4050 = vpop.f32.mrb[0].mxu0
  %v4051 = vadd.f32 0.0, %v4050
  %v4052 = vpop.f32.mrb[0].mxu0
  %v4053 = vadd.f32 0.0, %v4052
  %v4054 = vpop.f32.mrb[0].mxu0
  %v4055 = vadd.f32 0.0, %v4054
  %4056 = vmatprep.mubr.bf16.mxu0 %v3527
  %4057 = vmatmul.mubr.bf16.gmra.mrb[0].mxu0 %v3526
  %v4058 = vpop.f32.mrb[0].mxu0
  %v4059 = vadd.f32 0.0, %v4058
  %v4060 = vpop.f32.mrb[0].mxu0
  %v4061 = vadd.f32 0.0, %v4060
  %v4062 = vpop.f32.mrb[0].mxu0
  %v4063 = vadd.f32 0.0, %v4062
  %v4064 = vpop.f32.mrb[0].mxu0
  %v4065 = vadd.f32 0.0, %v4064
  %4066 = vmatprep.mubr.bf16.mxu0 %v3532
  %4067 = vmatmul.mubr.bf16.gmra.mrb[0].mxu0 %v3531
  %v4068 = vpop.f32.mrb[0].mxu0
  %v4069 = vadd.f32 0.0, %v4068
  %v4070 = vpop.f32.mrb[0].mxu0
  %v4071 = vadd.f32 0.0, %v4070
  %v4072 = vpop.f32.mrb[0].mxu0
  %v4073 = vadd.f32 0.0, %v4072
  %v4074 = vpop.f32.mrb[0].mxu0
  %v4075 = vadd.f32 0.0, %v4074
  %4076 = vmatprep.mubr.bf16.mxu0 %v3537
  %4077 = vmatmul.mubr.bf16.gmra.mrb[0].mxu0 %v3536
  %v4078 = vpop.f32.mrb[0].mxu0
  %v4079 = vadd.f32 0.0, %v4078
  %v4080 = vpop.f32.mrb[0].mxu0
  %v4081 = vadd.f32 0.0, %v4080
  %v4082 = vpop.f32.mrb[0].mxu0
  %v4083 = vadd.f32 0.0, %v4082
  %v4084 = vpop.f32.mrb[0].mxu0
  %v4085 = vadd.f32 0.0, %v4084
  %4086 = vmatprep.mubr.bf16.mxu0 %v3542
  %4087 = vmatmul.mubr.bf16.gmra.mrb[0].mxu0 %v3541
  %v4088 = vpop.f32.mrb[0].mxu0
  %v4089 = vadd.f32 0.0, %v4088
  %v4090 = vpop.f32.mrb[0].mxu0
  %v4091 = vadd.f32 0.0, %v4090
  %v4092 = vpop.f32.mrb[0].mxu0
  %v4093 = vadd.f32 0.0, %v4092
  %v4094 = vpop.f32.mrb[0].mxu0
  %v4095 = vadd.f32 0.0, %v4094
  %4096 = vmatprep.mubr.bf16.mxu0 %v3547
  %4097 = vmatmul.mubr.bf16.gmra.mrb[0].mxu0 %v3546
  %v4098 = vpop.f32.mrb[0].mxu0
  %v4099 = vadd.f32 0.0, %v4098
  %v4100 = vpop.f32.mrb[0].mxu0
  %v4101 = vadd.f32 0.0, %v4100
  %v4102 = vpop.f32.mrb[0].mxu0
  %v4103 = vadd.f32 0.0, %v4102
  %v4104 = vpop.f32.mrb[0].mxu0
  %v4105 = vadd.f32 0.0, %v4104
  %4106 = vmatprep.mubr.bf16.mxu0 %v3552
  %4107 = vmatmul.mubr.bf16.gmra.mrb[0].mxu0 %v3551
  %v4108 = vpop.f32.mrb[0].mxu0
  %v4109 = vadd.f32 0.0, %v4108
  %v4110 = vpop.f32.mrb[0].mxu0
  %v4111 = vadd.f32 0.0, %v4110
  %v4112 = vpop.f32.mrb[0].mxu0
  %v4113 = vadd.f32 0.0, %v4112
  %v4114 = vpop.f32.mrb[0].mxu0
  %v4115 = vadd.f32 0.0, %v4114
  %4116 = vmatprep.mubr.bf16.mxu0 %v3557
  %4117 = vmatmul.mubr.bf16.gmra.mrb[0].mxu0 %v3556
  %v4118 = vpop.f32.mrb[0].mxu0
  %v4119 = vadd.f32 0.0, %v4118
  %v4120 = vpop.f32.mrb[0].mxu0
  %v4121 = vadd.f32 0.0, %v4120
  %v4122 = vpop.f32.mrb[0].mxu0
  %v4123 = vadd.f32 0.0, %v4122
  %v4124 = vpop.f32.mrb[0].mxu0
  %v4125 = vadd.f32 0.0, %v4124
  %4126 = vmatprep.mubr.bf16.mxu0 %v3562
  %4127 = vmatmul.mubr.bf16.gmra.mrb[0].mxu0 %v3561
  %v4128 = vpop.f32.mrb[0].mxu0
  %v4129 = vadd.f32 0.0, %v4128
  %v4130 = vpop.f32.mrb[0].mxu0
  %v4131 = vadd.f32 0.0, %v4130
  %v4132 = vpop.f32.mrb[0].mxu0
  %v4133 = vadd.f32 0.0, %v4132
  %v4134 = vpop.f32.mrb[0].mxu0
  %v4135 = vadd.f32 0.0, %v4134
  %4136 = vmatprep.mubr.bf16.mxu0 %v3567
  %4137 = vmatmul.mubr.bf16.gmra.mrb[0].mxu0 %v3566
  %v4138 = vpop.f32.mrb[0].mxu0
  %v4139 = vadd.f32 0.0, %v4138
  %v4140 = vpop.f32.mrb[0].mxu0
  %v4141 = vadd.f32 0.0, %v4140
  %v4142 = vpop.f32.mrb[0].mxu0
  %v4143 = vadd.f32 0.0, %v4142
  %v4144 = vpop.f32.mrb[0].mxu0
  %v4145 = vadd.f32 0.0, %v4144
  %4146 = vmatprep.mubr.bf16.mxu0 %v3572
  %4147 = vmatmul.mubr.bf16.gmra.mrb[0].mxu0 %v3571
  %v4148 = vpop.f32.mrb[0].mxu0
  %v4149 = vadd.f32 0.0, %v4148
  %v4150 = vpop.f32.mrb[0].mxu0
  %v4151 = vadd.f32 0.0, %v4150
  %v4152 = vpop.f32.mrb[0].mxu0
  %v4153 = vadd.f32 0.0, %v4152
  %v4154 = vpop.f32.mrb[0].mxu0
  %v4155 = vadd.f32 0.0, %v4154
  %4156 = vmatprep.mubr.bf16.mxu0 %v3577
  %4157 = vmatmul.mubr.bf16.gmra.mrb[0].mxu0 %v3576
  %v4158 = vpop.f32.mrb[0].mxu0
  %v4159 = vadd.f32 0.0, %v4158
  %v4160 = vpop.f32.mrb[0].mxu0
  %v4161 = vadd.f32 0.0, %v4160
  %v4162 = vpop.f32.mrb[0].mxu0
  %v4163 = vadd.f32 0.0, %v4162
  %v4164 = vpop.f32.mrb[0].mxu0
  %v4165 = vadd.f32 0.0, %v4164
  %4166 = vmatprep.mubr.bf16.mxu0 %v3582
  %4167 = vmatmul.mubr.bf16.gmra.mrb[0].mxu0 %v3581
  %v4168 = vpop.f32.mrb[0].mxu0
  %v4169 = vadd.f32 0.0, %v4168
  %v4170 = vpop.f32.mrb[0].mxu0
  %v4171 = vadd.f32 0.0, %v4170
  %v4172 = vpop.f32.mrb[0].mxu0
  %v4173 = vadd.f32 0.0, %v4172
  %v4174 = vpop.f32.mrb[0].mxu0
  %v4175 = vadd.f32 0.0, %v4174
  %4176 = vmatprep.mubr.bf16.mxu0 %v3587
  %4177 = vmatmul.mubr.bf16.gmra.mrb[0].mxu0 %v3586
  %v4178 = vpop.f32.mrb[0].mxu0
  %v4179 = vadd.f32 0.0, %v4178
  %v4180 = vpop.f32.mrb[0].mxu0
  %v4181 = vadd.f32 0.0, %v4180
  %v4182 = vpop.f32.mrb[0].mxu0
  %v4183 = vadd.f32 0.0, %v4182
  %v4184 = vpop.f32.mrb[0].mxu0
  %v4185 = vadd.f32 0.0, %v4184
  %4186 = vmatprep.mubr.bf16.mxu0 %v3592
  %4187 = vmatmul.mubr.bf16.gmra.mrb[0].mxu0 %v3591
  %v4188 = vpop.f32.mrb[0].mxu0
  %v4189 = vadd.f32 0.0, %v4188
  %v4190 = vpop.f32.mrb[0].mxu0
  %v4191 = vadd.f32 0.0, %v4190
  %v4192 = vpop.f32.mrb[0].mxu0
  %v4193 = vadd.f32 0.0, %v4192
  %v4194 = vpop.f32.mrb[0].mxu0
  %v4195 = vadd.f32 0.0, %v4194
  %4196 = vmatprep.mubr.bf16.mxu0 %v3597
  %4197 = vmatmul.mubr.bf16.gmra.mrb[0].mxu0 %v3596
  %v4198 = vpop.f32.mrb[0].mxu0
  %v4199 = vadd.f32 0.0, %v4198
  %v4200 = vpop.f32.mrb[0].mxu0
  %v4201 = vadd.f32 0.0, %v4200
  %v4202 = vpop.f32.mrb[0].mxu0
  %v4203 = vadd.f32 0.0, %v4202
  %v4204 = vpop.f32.mrb[0].mxu0
  %v4205 = vadd.f32 0.0, %v4204
  %4206 = vmatprep.mubr.bf16.mxu0 %v3602
  %4207 = vmatmul.mubr.bf16.gmra.mrb[0].mxu0 %v3601
  %v4208 = vpop.f32.mrb[0].mxu0
  %v4209 = vadd.f32 0.0, %v4208
  %v4210 = vpop.f32.mrb[0].mxu0
  %v4211 = vadd.f32 0.0, %v4210
  %v4212 = vpop.f32.mrb[0].mxu0
  %v4213 = vadd.f32 0.0, %v4212
  %v4214 = vpop.f32.mrb[0].mxu0
  %v4215 = vadd.f32 0.0, %v4214
  %4216 = vmatprep.mubr.bf16.mxu0 %v3607
  %4217 = vmatmul.mubr.bf16.gmra.mrb[0].mxu0 %v3606
  %v4218 = vpop.f32.mrb[0].mxu0
  %v4219 = vadd.f32 0.0, %v4218
  %v4220 = vpop.f32.mrb[0].mxu0
  %v4221 = vadd.f32 0.0, %v4220
  %v4222 = vpop.f32.mrb[0].mxu0
  %v4223 = vadd.f32 0.0, %v4222
  %v4224 = vpop.f32.mrb[0].mxu0
  %v4225 = vadd.f32 0.0, %v4224
  %4226 = vmatprep.mubr.bf16.mxu0 %v3612
  %4227 = vmatmul.mubr.bf16.gmra.mrb[0].mxu0 %v3611
  %v4228 = vpop.f32.mrb[0].mxu0
  %v4229 = vadd.f32 0.0, %v4228
  %v4230 = vpop.f32.mrb[0].mxu0
  %v4231 = vadd.f32 0.0, %v4230
  %v4232 = vpop.f32.mrb[0].mxu0
  %v4233 = vadd.f32 0.0, %v4232
  %v4234 = vpop.f32.mrb[0].mxu0
  %v4235 = vadd.f32 0.0, %v4234
  %4236 = vmatprep.mubr.bf16.mxu0 %v3617
  %4237 = vmatmul.mubr.bf16.gmra.mrb[0].mxu0 %v3616
  %v4238 = vpop.f32.mrb[0].mxu0
  %v4239 = vadd.f32 0.0, %v4238
  %v4240 = vpop.f32.mrb[0].mxu0
  %v4241 = vadd.f32 0.0, %v4240
  %v4242 = vpop.f32.mrb[0].mxu0
  %v4243 = vadd.f32 0.0, %v4242
  %v4244 = vpop.f32.mrb[0].mxu0
  %v4245 = vadd.f32 0.0, %v4244
  %4246 = vmatprep.mubr.bf16.mxu0 %v3622
  %4247 = vmatmul.mubr.bf16.gmra.mrb[0].mxu0 %v3621
  %v4248 = vpop.f32.mrb[0].mxu0
  %v4249 = vadd.f32 0.0, %v4248
  %v4250 = vpop.f32.mrb[0].mxu0
  %v4251 = vadd.f32 0.0, %v4250
  %v4252 = vpop.f32.mrb[0].mxu0
  %v4253 = vadd.f32 0.0, %v4252
  %v4254 = vpop.f32.mrb[0].mxu0
  %v4255 = vadd.f32 0.0, %v4254
  %4256 = vmatprep.mubr.bf16.mxu0 %v3627
  %4257 = vmatmul.mubr.bf16.gmra.mrb[0].mxu0 %v3626
  %v4258 = vpop.f32.mrb[0].mxu0
  %v4259 = vadd.f32 0.0, %v4258
  %v4260 = vpop.f32.mrb[0].mxu0
  %v4261 = vadd.f32 0.0, %v4260
  %v4262 = vpop.f32.mrb[0].mxu0
  %v4263 = vadd.f32 0.0, %v4262
  %v4264 = vpop.f32.mrb[0].mxu0
  %v4265 = vadd.f32 0.0, %v4264
  %4266 = vmatprep.mubr.bf16.mxu0 %v3632
  %4267 = vmatmul.mubr.bf16.gmra.mrb[0].mxu0 %v3631
  %v4268 = vpop.f32.mrb[0].mxu0
  %v4269 = vadd.f32 0.0, %v4268
  %v4270 = vpop.f32.mrb[0].mxu0
  %v4271 = vadd.f32 0.0, %v4270
  %v4272 = vpop.f32.mrb[0].mxu0
  %v4273 = vadd.f32 0.0, %v4272
  %v4274 = vpop.f32.mrb[0].mxu0
  %v4275 = vadd.f32 0.0, %v4274
  %4276 = vmatprep.mubr.bf16.mxu0 %v3637
  %4277 = vmatmul.mubr.bf16.gmra.mrb[0].mxu0 %v3636
  %v4278 = vpop.f32.mrb[0].mxu0
  %v4279 = vadd.f32 0.0, %v4278
  %v4280 = vpop.f32.mrb[0].mxu0
  %v4281 = vadd.f32 0.0, %v4280
  %v4282 = vpop.f32.mrb[0].mxu0
  %v4283 = vadd.f32 0.0, %v4282
  %v4284 = vpop.f32.mrb[0].mxu0
  %v4285 = vadd.f32 0.0, %v4284
  %4286 = vdwg.mxu0
  %4287 = vmatprep.subr.bf16.mxu0 %v2846
  %4288 = vmatpush1.bf16.msra.mxu0 %v2845
  %4289 = vmatprep.subr.bf16.mxu0 %v2848
  %4290 = vmatpush1.bf16.msra.mxu0 %v2847
  %4291 = vmatprep.subr.bf16.mxu0 %v2850
  %4292 = vmatpush1.bf16.msra.mxu0 %v2849
  %4293 = vmatprep.subr.bf16.mxu0 %v2852
  %4294 = vmatpush1.bf16.msra.mxu0 %v2851
  %4295 = vmatprep.subr.bf16.mxu0 %v2854
  %4296 = vmatpush1.bf16.msra.mxu0 %v2853
  %4297 = vmatprep.subr.bf16.mxu0 %v2856
  %4298 = vmatpush1.bf16.msra.mxu0 %v2855
  %4299 = vmatprep.subr.bf16.mxu0 %v2858
  %4300 = vmatpush1.bf16.msra.mxu0 %v2857
  %4301 = vmatprep.subr.bf16.mxu0 %v2860
  %4302 = vmatpush1.bf16.msra.mxu0 %v2859
  %4303 = vmatprep.subr.bf16.mxu0 %v2862
  %4304 = vmatpush1.bf16.msra.mxu0 %v2861
  %4305 = vmatprep.subr.bf16.mxu0 %v2864
  %4306 = vmatpush1.bf16.msra.mxu0 %v2863
  %4307 = vmatprep.subr.bf16.mxu0 %v2866
  %4308 = vmatpush1.bf16.msra.mxu0 %v2865
  %4309 = vmatprep.subr.bf16.mxu0 %v2868
  %4310 = vmatpush1.bf16.msra.mxu0 %v2867
  %4311 = vmatprep.subr.bf16.mxu0 %v2870
  %4312 = vmatpush1.bf16.msra.mxu0 %v2869
  %4313 = vmatprep.subr.bf16.mxu0 %v2872
  %4314 = vmatpush1.bf16.msra.mxu0 %v2871
  %4315 = vmatprep.subr.bf16.mxu0 %v2874
  %4316 = vmatpush1.bf16.msra.mxu0 %v2873
  %4317 = vmatprep.subr.bf16.mxu0 %v2876
  %4318 = vmatpush1.bf16.msra.mxu0 %v2875
  %4319 = vmatprep.mubr.bf16.mxu0 %v3464
  %4320 = vmatmul.mubr.bf16.gmra.mrb[0].mxu0 %v3463
  %v4321 = vpop.f32.mrb[0].mxu0
  %v4322 = vadd.f32 %v3929, %v4321
  %v4323 = vpop.f32.mrb[0].mxu0
  %v4324 = vadd.f32 %v3931, %v4323
  %v4325 = vpop.f32.mrb[0].mxu0
  %v4326 = vadd.f32 %v3933, %v4325
  %v4327 = vpop.f32.mrb[0].mxu0
  %v4328 = vadd.f32 %v3935, %v4327
  %4329 = vmatprep.mubr.bf16.mxu0 %v3469
  %4330 = vmatmul.mubr.bf16.gmra.mrb[0].mxu0 %v3468
  %v4331 = vpop.f32.mrb[0].mxu0
  %v4332 = vadd.f32 %v3939, %v4331
  %v4333 = vpop.f32.mrb[0].mxu0
  %v4334 = vadd.f32 %v3941, %v4333
  %v4335 = vpop.f32.mrb[0].mxu0
  %v4336 = vadd.f32 %v3943, %v4335
  %v4337 = vpop.f32.mrb[0].mxu0
  %v4338 = vadd.f32 %v3945, %v4337
  %4339 = vmatprep.mubr.bf16.mxu0 %v3474
  %4340 = vmatmul.mubr.bf16.gmra.mrb[0].mxu0 %v3473
  %v4341 = vpop.f32.mrb[0].mxu0
  %v4342 = vadd.f32 %v3949, %v4341
  %v4343 = vpop.f32.mrb[0].mxu0
  %v4344 = vadd.f32 %v3951, %v4343
  %v4345 = vpop.f32.mrb[0].mxu0
  %v4346 = vadd.f32 %v3953, %v4345
  %v4347 = vpop.f32.mrb[0].mxu0
  %v4348 = vadd.f32 %v3955, %v4347
  %4349 = vmatprep.mubr.bf16.mxu0 %v3479
  %4350 = vmatmul.mubr.bf16.gmra.mrb[0].mxu0 %v3478
  %v4351 = vpop.f32.mrb[0].mxu0
  %v4352 = vadd.f32 %v3959, %v4351
  %v4353 = vpop.f32.mrb[0].mxu0
  %v4354 = vadd.f32 %v3961, %v4353
  %v4355 = vpop.f32.mrb[0].mxu0
  %v4356 = vadd.f32 %v3963, %v4355
  %v4357 = vpop.f32.mrb[0].mxu0
  %v4358 = vadd.f32 %v3965, %v4357
  %4359 = vmatprep.mubr.bf16.mxu0 %v3484
  %4360 = vmatmul.mubr.bf16.gmra.mrb[0].mxu0 %v3483
  %v4361 = vpop.f32.mrb[0].mxu0
  %v4362 = vadd.f32 %v3969, %v4361
  %v4363 = vpop.f32.mrb[0].mxu0
  %v4364 = vadd.f32 %v3971, %v4363
  %v4365 = vpop.f32.mrb[0].mxu0
  %v4366 = vadd.f32 %v3973, %v4365
  %v4367 = vpop.f32.mrb[0].mxu0
  %v4368 = vadd.f32 %v3975, %v4367
  %4369 = vmatprep.mubr.bf16.mxu0 %v3489
  %4370 = vmatmul.mubr.bf16.gmra.mrb[0].mxu0 %v3488
  %v4371 = vpop.f32.mrb[0].mxu0
  %v4372 = vadd.f32 %v3979, %v4371
  %v4373 = vpop.f32.mrb[0].mxu0
  %v4374 = vadd.f32 %v3981, %v4373
  %v4375 = vpop.f32.mrb[0].mxu0
  %v4376 = vadd.f32 %v3983, %v4375
  %v4377 = vpop.f32.mrb[0].mxu0
  %v4378 = vadd.f32 %v3985, %v4377
  %4379 = vmatprep.mubr.bf16.mxu0 %v3494
  %4380 = vmatmul.mubr.bf16.gmra.mrb[0].mxu0 %v3493
  %v4381 = vpop.f32.mrb[0].mxu0
  %v4382 = vadd.f32 %v3989, %v4381
  %v4383 = vpop.f32.mrb[0].mxu0
  %v4384 = vadd.f32 %v3991, %v4383
  %v4385 = vpop.f32.mrb[0].mxu0
  %v4386 = vadd.f32 %v3993, %v4385
  %v4387 = vpop.f32.mrb[0].mxu0
  %v4388 = vadd.f32 %v3995, %v4387
  %4389 = vmatprep.mubr.bf16.mxu0 %v3499
  %4390 = vmatmul.mubr.bf16.gmra.mrb[0].mxu0 %v3498
  %v4391 = vpop.f32.mrb[0].mxu0
  %v4392 = vadd.f32 %v3999, %v4391
  %v4393 = vpop.f32.mrb[0].mxu0
  %v4394 = vadd.f32 %v4001, %v4393
  %v4395 = vpop.f32.mrb[0].mxu0
  %v4396 = vadd.f32 %v4003, %v4395
  %v4397 = vpop.f32.mrb[0].mxu0
  %v4398 = vadd.f32 %v4005, %v4397
  %4399 = vmatprep.mubr.bf16.mxu0 %v3504
  %4400 = vmatmul.mubr.bf16.gmra.mrb[0].mxu0 %v3503
  %v4401 = vpop.f32.mrb[0].mxu0
  %v4402 = vadd.f32 %v4009, %v4401
  %v4403 = vpop.f32.mrb[0].mxu0
  %v4404 = vadd.f32 %v4011, %v4403
  %v4405 = vpop.f32.mrb[0].mxu0
  %v4406 = vadd.f32 %v4013, %v4405
  %v4407 = vpop.f32.mrb[0].mxu0
  %v4408 = vadd.f32 %v4015, %v4407
  %4409 = vmatprep.mubr.bf16.mxu0 %v3509
  %4410 = vmatmul.mubr.bf16.gmra.mrb[0].mxu0 %v3508
  %v4411 = vpop.f32.mrb[0].mxu0
  %v4412 = vadd.f32 %v4019, %v4411
  %v4413 = vpop.f32.mrb[0].mxu0
  %v4414 = vadd.f32 %v4021, %v4413
  %v4415 = vpop.f32.mrb[0].mxu0
  %v4416 = vadd.f32 %v4023, %v4415
  %v4417 = vpop.f32.mrb[0].mxu0
  %v4418 = vadd.f32 %v4025, %v4417
  %4419 = vmatprep.mubr.bf16.mxu0 %v3514
  %4420 = vmatmul.mubr.bf16.gmra.mrb[0].mxu0 %v3513
  %v4421 = vpop.f32.mrb[0].mxu0
  %v4422 = vadd.f32 %v4029, %v4421
  %v4423 = vpop.f32.mrb[0].mxu0
  %v4424 = vadd.f32 %v4031, %v4423
  %v4425 = vpop.f32.mrb[0].mxu0
  %v4426 = vadd.f32 %v4033, %v4425
  %v4427 = vpop.f32.mrb[0].mxu0
  %v4428 = vadd.f32 %v4035, %v4427
  %4429 = vmatprep.mubr.bf16.mxu0 %v3519
  %4430 = vmatmul.mubr.bf16.gmra.mrb[0].mxu0 %v3518
  %v4431 = vpop.f32.mrb[0].mxu0
  %v4432 = vadd.f32 %v4039, %v4431
  %v4433 = vpop.f32.mrb[0].mxu0
  %v4434 = vadd.f32 %v4041, %v4433
  %v4435 = vpop.f32.mrb[0].mxu0
  %v4436 = vadd.f32 %v4043, %v4435
  %v4437 = vpop.f32.mrb[0].mxu0
  %v4438 = vadd.f32 %v4045, %v4437
  %4439 = vmatprep.mubr.bf16.mxu0 %v3524
  %4440 = vmatmul.mubr.bf16.gmra.mrb[0].mxu0 %v3523
  %v4441 = vpop.f32.mrb[0].mxu0
  %v4442 = vadd.f32 %v4049, %v4441
  %v4443 = vpop.f32.mrb[0].mxu0
  %v4444 = vadd.f32 %v4051, %v4443
  %v4445 = vpop.f32.mrb[0].mxu0
  %v4446 = vadd.f32 %v4053, %v4445
  %v4447 = vpop.f32.mrb[0].mxu0
  %v4448 = vadd.f32 %v4055, %v4447
  %4449 = vmatprep.mubr.bf16.mxu0 %v3529
  %4450 = vmatmul.mubr.bf16.gmra.mrb[0].mxu0 %v3528
  %v4451 = vpop.f32.mrb[0].mxu0
  %v4452 = vadd.f32 %v4059, %v4451
  %v4453 = vpop.f32.mrb[0].mxu0
  %v4454 = vadd.f32 %v4061, %v4453
  %v4455 = vpop.f32.mrb[0].mxu0
  %v4456 = vadd.f32 %v4063, %v4455
  %v4457 = vpop.f32.mrb[0].mxu0
  %v4458 = vadd.f32 %v4065, %v4457
  %4459 = vmatprep.mubr.bf16.mxu0 %v3534
  %4460 = vmatmul.mubr.bf16.gmra.mrb[0].mxu0 %v3533
  %v4461 = vpop.f32.mrb[0].mxu0
  %v4462 = vadd.f32 %v4069, %v4461
  %v4463 = vpop.f32.mrb[0].mxu0
  %v4464 = vadd.f32 %v4071, %v4463
  %v4465 = vpop.f32.mrb[0].mxu0
  %v4466 = vadd.f32 %v4073, %v4465
  %v4467 = vpop.f32.mrb[0].mxu0
  %v4468 = vadd.f32 %v4075, %v4467
  %4469 = vmatprep.mubr.bf16.mxu0 %v3539
  %4470 = vmatmul.mubr.bf16.gmra.mrb[0].mxu0 %v3538
  %v4471 = vpop.f32.mrb[0].mxu0
  %v4472 = vadd.f32 %v4079, %v4471
  %v4473 = vpop.f32.mrb[0].mxu0
  %v4474 = vadd.f32 %v4081, %v4473
  %v4475 = vpop.f32.mrb[0].mxu0
  %v4476 = vadd.f32 %v4083, %v4475
  %v4477 = vpop.f32.mrb[0].mxu0
  %v4478 = vadd.f32 %v4085, %v4477
  %4479 = vmatprep.mubr.bf16.mxu0 %v3544
  %4480 = vmatmul.mubr.bf16.gmra.mrb[0].mxu0 %v3543
  %v4481 = vpop.f32.mrb[0].mxu0
  %v4482 = vadd.f32 %v4089, %v4481
  %v4483 = vpop.f32.mrb[0].mxu0
  %v4484 = vadd.f32 %v4091, %v4483
  %v4485 = vpop.f32.mrb[0].mxu0
  %v4486 = vadd.f32 %v4093, %v4485
  %v4487 = vpop.f32.mrb[0].mxu0
  %v4488 = vadd.f32 %v4095, %v4487
  %4489 = vmatprep.mubr.bf16.mxu0 %v3549
  %4490 = vmatmul.mubr.bf16.gmra.mrb[0].mxu0 %v3548
  %v4491 = vpop.f32.mrb[0].mxu0
  %v4492 = vadd.f32 %v4099, %v4491
  %v4493 = vpop.f32.mrb[0].mxu0
  %v4494 = vadd.f32 %v4101, %v4493
  %v4495 = vpop.f32.mrb[0].mxu0
  %v4496 = vadd.f32 %v4103, %v4495
  %v4497 = vpop.f32.mrb[0].mxu0
  %v4498 = vadd.f32 %v4105, %v4497
  %4499 = vmatprep.mubr.bf16.mxu0 %v3554
  %4500 = vmatmul.mubr.bf16.gmra.mrb[0].mxu0 %v3553
  %v4501 = vpop.f32.mrb[0].mxu0
  %v4502 = vadd.f32 %v4109, %v4501
  %v4503 = vpop.f32.mrb[0].mxu0
  %v4504 = vadd.f32 %v4111, %v4503
  %v4505 = vpop.f32.mrb[0].mxu0
  %v4506 = vadd.f32 %v4113, %v4505
  %v4507 = vpop.f32.mrb[0].mxu0
  %v4508 = vadd.f32 %v4115, %v4507
  %4509 = vmatprep.mubr.bf16.mxu0 %v3559
  %4510 = vmatmul.mubr.bf16.gmra.mrb[0].mxu0 %v3558
  %v4511 = vpop.f32.mrb[0].mxu0
  %v4512 = vadd.f32 %v4119, %v4511
  %v4513 = vpop.f32.mrb[0].mxu0
  %v4514 = vadd.f32 %v4121, %v4513
  %v4515 = vpop.f32.mrb[0].mxu0
  %v4516 = vadd.f32 %v4123, %v4515
  %v4517 = vpop.f32.mrb[0].mxu0
  %v4518 = vadd.f32 %v4125, %v4517
  %4519 = vmatprep.mubr.bf16.mxu0 %v3564
  %4520 = vmatmul.mubr.bf16.gmra.mrb[0].mxu0 %v3563
  %v4521 = vpop.f32.mrb[0].mxu0
  %v4522 = vadd.f32 %v4129, %v4521
  %v4523 = vpop.f32.mrb[0].mxu0
  %v4524 = vadd.f32 %v4131, %v4523
  %v4525 = vpop.f32.mrb[0].mxu0
  %v4526 = vadd.f32 %v4133, %v4525
  %v4527 = vpop.f32.mrb[0].mxu0
  %v4528 = vadd.f32 %v4135, %v4527
  %4529 = vmatprep.mubr.bf16.mxu0 %v3569
  %4530 = vmatmul.mubr.bf16.gmra.mrb[0].mxu0 %v3568
  %v4531 = vpop.f32.mrb[0].mxu0
  %v4532 = vadd.f32 %v4139, %v4531
  %v4533 = vpop.f32.mrb[0].mxu0
  %v4534 = vadd.f32 %v4141, %v4533
  %v4535 = vpop.f32.mrb[0].mxu0
  %v4536 = vadd.f32 %v4143, %v4535
  %v4537 = vpop.f32.mrb[0].mxu0
  %v4538 = vadd.f32 %v4145, %v4537
  %4539 = vmatprep.mubr.bf16.mxu0 %v3574
  %4540 = vmatmul.mubr.bf16.gmra.mrb[0].mxu0 %v3573
  %v4541 = vpop.f32.mrb[0].mxu0
  %v4542 = vadd.f32 %v4149, %v4541
  %v4543 = vpop.f32.mrb[0].mxu0
  %v4544 = vadd.f32 %v4151, %v4543
  %v4545 = vpop.f32.mrb[0].mxu0
  %v4546 = vadd.f32 %v4153, %v4545
  %v4547 = vpop.f32.mrb[0].mxu0
  %v4548 = vadd.f32 %v4155, %v4547
  %4549 = vmatprep.mubr.bf16.mxu0 %v3579
  %4550 = vmatmul.mubr.bf16.gmra.mrb[0].mxu0 %v3578
  %v4551 = vpop.f32.mrb[0].mxu0
  %v4552 = vadd.f32 %v4159, %v4551
  %v4553 = vpop.f32.mrb[0].mxu0
  %v4554 = vadd.f32 %v4161, %v4553
  %v4555 = vpop.f32.mrb[0].mxu0
  %v4556 = vadd.f32 %v4163, %v4555
  %v4557 = vpop.f32.mrb[0].mxu0
  %v4558 = vadd.f32 %v4165, %v4557
  %4559 = vmatprep.mubr.bf16.mxu0 %v3584
  %4560 = vmatmul.mubr.bf16.gmra.mrb[0].mxu0 %v3583
  %v4561 = vpop.f32.mrb[0].mxu0
  %v4562 = vadd.f32 %v4169, %v4561
  %v4563 = vpop.f32.mrb[0].mxu0
  %v4564 = vadd.f32 %v4171, %v4563
  %v4565 = vpop.f32.mrb[0].mxu0
  %v4566 = vadd.f32 %v4173, %v4565
  %v4567 = vpop.f32.mrb[0].mxu0
  %v4568 = vadd.f32 %v4175, %v4567
  %4569 = vmatprep.mubr.bf16.mxu0 %v3589
  %4570 = vmatmul.mubr.bf16.gmra.mrb[0].mxu0 %v3588
  %v4571 = vpop.f32.mrb[0].mxu0
  %v4572 = vadd.f32 %v4179, %v4571
  %v4573 = vpop.f32.mrb[0].mxu0
  %v4574 = vadd.f32 %v4181, %v4573
  %v4575 = vpop.f32.mrb[0].mxu0
  %v4576 = vadd.f32 %v4183, %v4575
  %v4577 = vpop.f32.mrb[0].mxu0
  %v4578 = vadd.f32 %v4185, %v4577
  %4579 = vmatprep.mubr.bf16.mxu0 %v3594
  %4580 = vmatmul.mubr.bf16.gmra.mrb[0].mxu0 %v3593
  %v4581 = vpop.f32.mrb[0].mxu0
  %v4582 = vadd.f32 %v4189, %v4581
  %v4583 = vpop.f32.mrb[0].mxu0
  %v4584 = vadd.f32 %v4191, %v4583
  %v4585 = vpop.f32.mrb[0].mxu0
  %v4586 = vadd.f32 %v4193, %v4585
  %v4587 = vpop.f32.mrb[0].mxu0
  %v4588 = vadd.f32 %v4195, %v4587
  %4589 = vmatprep.mubr.bf16.mxu0 %v3599
  %4590 = vmatmul.mubr.bf16.gmra.mrb[0].mxu0 %v3598
  %v4591 = vpop.f32.mrb[0].mxu0
  %v4592 = vadd.f32 %v4199, %v4591
  %v4593 = vpop.f32.mrb[0].mxu0
  %v4594 = vadd.f32 %v4201, %v4593
  %v4595 = vpop.f32.mrb[0].mxu0
  %v4596 = vadd.f32 %v4203, %v4595
  %v4597 = vpop.f32.mrb[0].mxu0
  %v4598 = vadd.f32 %v4205, %v4597
  %4599 = vmatprep.mubr.bf16.mxu0 %v3604
  %4600 = vmatmul.mubr.bf16.gmra.mrb[0].mxu0 %v3603
  %v4601 = vpop.f32.mrb[0].mxu0
  %v4602 = vadd.f32 %v4209, %v4601
  %v4603 = vpop.f32.mrb[0].mxu0
  %v4604 = vadd.f32 %v4211, %v4603
  %v4605 = vpop.f32.mrb[0].mxu0
  %v4606 = vadd.f32 %v4213, %v4605
  %v4607 = vpop.f32.mrb[0].mxu0
  %v4608 = vadd.f32 %v4215, %v4607
  %4609 = vmatprep.mubr.bf16.mxu0 %v3609
  %4610 = vmatmul.mubr.bf16.gmra.mrb[0].mxu0 %v3608
  %v4611 = vpop.f32.mrb[0].mxu0
  %v4612 = vadd.f32 %v4219, %v4611
  %v4613 = vpop.f32.mrb[0].mxu0
  %v4614 = vadd.f32 %v4221, %v4613
  %v4615 = vpop.f32.mrb[0].mxu0
  %v4616 = vadd.f32 %v4223, %v4615
  %v4617 = vpop.f32.mrb[0].mxu0
  %v4618 = vadd.f32 %v4225, %v4617
  %4619 = vmatprep.mubr.bf16.mxu0 %v3614
  %4620 = vmatmul.mubr.bf16.gmra.mrb[0].mxu0 %v3613
  %v4621 = vpop.f32.mrb[0].mxu0
  %v4622 = vadd.f32 %v4229, %v4621
  %v4623 = vpop.f32.mrb[0].mxu0
  %v4624 = vadd.f32 %v4231, %v4623
  %v4625 = vpop.f32.mrb[0].mxu0
  %v4626 = vadd.f32 %v4233, %v4625
  %v4627 = vpop.f32.mrb[0].mxu0
  %v4628 = vadd.f32 %v4235, %v4627
  %4629 = vmatprep.mubr.bf16.mxu0 %v3619
  %4630 = vmatmul.mubr.bf16.gmra.mrb[0].mxu0 %v3618
  %v4631 = vpop.f32.mrb[0].mxu0
  %v4632 = vadd.f32 %v4239, %v4631
  %v4633 = vpop.f32.mrb[0].mxu0
  %v4634 = vadd.f32 %v4241, %v4633
  %v4635 = vpop.f32.mrb[0].mxu0
  %v4636 = vadd.f32 %v4243, %v4635
  %v4637 = vpop.f32.mrb[0].mxu0
  %v4638 = vadd.f32 %v4245, %v4637
  %4639 = vmatprep.mubr.bf16.mxu0 %v3624
  %4640 = vmatmul.mubr.bf16.gmra.mrb[0].mxu0 %v3623
  %v4641 = vpop.f32.mrb[0].mxu0
  %v4642 = vadd.f32 %v4249, %v4641
  %v4643 = vpop.f32.mrb[0].mxu0
  %v4644 = vadd.f32 %v4251, %v4643
  %v4645 = vpop.f32.mrb[0].mxu0
  %v4646 = vadd.f32 %v4253, %v4645
  %v4647 = vpop.f32.mrb[0].mxu0
  %v4648 = vadd.f32 %v4255, %v4647
  %4649 = vmatprep.mubr.bf16.mxu0 %v3629
  %4650 = vmatmul.mubr.bf16.gmra.mrb[0].mxu0 %v3628
  %v4651 = vpop.f32.mrb[0].mxu0
  %v4652 = vadd.f32 %v4259, %v4651
  %v4653 = vpop.f32.mrb[0].mxu0
  %v4654 = vadd.f32 %v4261, %v4653
  %v4655 = vpop.f32.mrb[0].mxu0
  %v4656 = vadd.f32 %v4263, %v4655
  %v4657 = vpop.f32.mrb[0].mxu0
  %v4658 = vadd.f32 %v4265, %v4657
  %4659 = vmatprep.mubr.bf16.mxu0 %v3634
  %4660 = vmatmul.mubr.bf16.gmra.mrb[0].mxu0 %v3633
  %v4661 = vpop.f32.mrb[0].mxu0
  %v4662 = vadd.f32 %v4269, %v4661
  %v4663 = vpop.f32.mrb[0].mxu0
  %v4664 = vadd.f32 %v4271, %v4663
  %v4665 = vpop.f32.mrb[0].mxu0
  %v4666 = vadd.f32 %v4273, %v4665
  %v4667 = vpop.f32.mrb[0].mxu0
  %v4668 = vadd.f32 %v4275, %v4667
  %4669 = vmatprep.mubr.bf16.mxu0 %v3639
  %4670 = vmatmul.mubr.bf16.gmra.mrb[0].mxu0 %v3638
  %v4671 = vpop.f32.mrb[0].mxu0
  %v4672 = vadd.f32 %v4279, %v4671
  %v4673 = vpop.f32.mrb[0].mxu0
  %v4674 = vadd.f32 %v4281, %v4673
  %v4675 = vpop.f32.mrb[0].mxu0
  %v4676 = vadd.f32 %v4283, %v4675
  %v4677 = vpop.f32.mrb[0].mxu0
  %v4678 = vadd.f32 %v4285, %v4677
  %4679 = vdwg.mxu0
  %4680 = vmatprep.subr.bf16.mxu0 %v2878
  %4681 = vmatpush1.bf16.msra.mxu0 %v2877
  %4682 = vmatprep.subr.bf16.mxu0 %v2880
  %4683 = vmatpush1.bf16.msra.mxu0 %v2879
  %4684 = vmatprep.subr.bf16.mxu0 %v2882
  %4685 = vmatpush1.bf16.msra.mxu0 %v2881
  %4686 = vmatprep.subr.bf16.mxu0 %v2884
  %4687 = vmatpush1.bf16.msra.mxu0 %v2883
  %4688 = vmatprep.subr.bf16.mxu0 0
  %4689 = vmatpush1.bf16.msra.mxu0 0
  %4690 = vmatprep.subr.bf16.mxu0 0
  %4691 = vmatpush1.bf16.msra.mxu0 0
  %4692 = vmatprep.subr.bf16.mxu0 0
  %4693 = vmatpush1.bf16.msra.mxu0 0
  %4694 = vmatprep.subr.bf16.mxu0 0
  %4695 = vmatpush1.bf16.msra.mxu0 0
  %4696 = vmatprep.subr.bf16.mxu0 0
  %4697 = vmatpush1.bf16.msra.mxu0 0
  %4698 = vmatprep.subr.bf16.mxu0 0
  %4699 = vmatpush1.bf16.msra.mxu0 0
  %4700 = vmatprep.subr.bf16.mxu0 0
  %4701 = vmatpush1.bf16.msra.mxu0 0
  %4702 = vmatprep.subr.bf16.mxu0 0
  %4703 = vmatpush1.bf16.msra.mxu0 0
  %4704 = vmatprep.subr.bf16.mxu0 0
  %4705 = vmatpush1.bf16.msra.mxu0 0
  %4706 = vmatprep.subr.bf16.mxu0 0
  %4707 = vmatpush1.bf16.msra.mxu0 0
  %4708 = vmatprep.subr.bf16.mxu0 0
  %4709 = vmatpush1.bf16.msra.mxu0 0
  %4710 = vmatprep.subr.bf16.mxu0 0
  %4711 = vmatpush1.bf16.msra.mxu0 0
  %4712 = vmatprep.mubr.bf16.mxu0 0
  %4713 = vmatmul.mubr.bf16.gmra.mrb[0].mxu0 %v3787
  %v4714 = vpop.f32.mrb[0].mxu0
  %v4715 = vadd.f32 %v4322, %v4714
  %v4716 = vpop.f32.mrb[0].mxu0
  %v4717 = vadd.f32 %v4324, %v4716
  %v4718 = vpop.f32.mrb[0].mxu0
  %v4719 = vadd.f32 %v4326, %v4718
  %v4720 = vpop.f32.mrb[0].mxu0
  %v4721 = vadd.f32 %v4328, %v4720
  %4722 = vmatprep.mubr.bf16.mxu0 0
  %4723 = vmatmul.mubr.bf16.gmra.mrb[0].mxu0 %v3790
  %v4724 = vpop.f32.mrb[0].mxu0
  %v4725 = vadd.f32 %v4332, %v4724
  %v4726 = vpop.f32.mrb[0].mxu0
  %v4727 = vadd.f32 %v4334, %v4726
  %v4728 = vpop.f32.mrb[0].mxu0
  %v4729 = vadd.f32 %v4336, %v4728
  %v4730 = vpop.f32.mrb[0].mxu0
  %v4731 = vadd.f32 %v4338, %v4730
  %4732 = vmatprep.mubr.bf16.mxu0 0
  %4733 = vmatmul.mubr.bf16.gmra.mrb[0].mxu0 %v3793
  %v4734 = vpop.f32.mrb[0].mxu0
  %v4735 = vadd.f32 %v4342, %v4734
  %v4736 = vpop.f32.mrb[0].mxu0
  %v4737 = vadd.f32 %v4344, %v4736
  %v4738 = vpop.f32.mrb[0].mxu0
  %v4739 = vadd.f32 %v4346, %v4738
  %v4740 = vpop.f32.mrb[0].mxu0
  %v4741 = vadd.f32 %v4348, %v4740
  %4742 = vmatprep.mubr.bf16.mxu0 0
  %4743 = vmatmul.mubr.bf16.gmra.mrb[0].mxu0 %v3796
  %v4744 = vpop.f32.mrb[0].mxu0
  %v4745 = vadd.f32 %v4352, %v4744
  %v4746 = vpop.f32.mrb[0].mxu0
  %v4747 = vadd.f32 %v4354, %v4746
  %v4748 = vpop.f32.mrb[0].mxu0
  %v4749 = vadd.f32 %v4356, %v4748
  %v4750 = vpop.f32.mrb[0].mxu0
  %v4751 = vadd.f32 %v4358, %v4750
  %4752 = vmatprep.mubr.bf16.mxu0 0
  %4753 = vmatmul.mubr.bf16.gmra.mrb[0].mxu0 %v3799
  %v4754 = vpop.f32.mrb[0].mxu0
  %v4755 = vadd.f32 %v4362, %v4754
  %v4756 = vpop.f32.mrb[0].mxu0
  %v4757 = vadd.f32 %v4364, %v4756
  %v4758 = vpop.f32.mrb[0].mxu0
  %v4759 = vadd.f32 %v4366, %v4758
  %v4760 = vpop.f32.mrb[0].mxu0
  %v4761 = vadd.f32 %v4368, %v4760
  %4762 = vmatprep.mubr.bf16.mxu0 0
  %4763 = vmatmul.mubr.bf16.gmra.mrb[0].mxu0 %v3802
  %v4764 = vpop.f32.mrb[0].mxu0
  %v4765 = vadd.f32 %v4372, %v4764
  %v4766 = vpop.f32.mrb[0].mxu0
  %v4767 = vadd.f32 %v4374, %v4766
  %v4768 = vpop.f32.mrb[0].mxu0
  %v4769 = vadd.f32 %v4376, %v4768
  %v4770 = vpop.f32.mrb[0].mxu0
  %v4771 = vadd.f32 %v4378, %v4770
  %4772 = vmatprep.mubr.bf16.mxu0 0
  %4773 = vmatmul.mubr.bf16.gmra.mrb[0].mxu0 %v3805
  %v4774 = vpop.f32.mrb[0].mxu0
  %v4775 = vadd.f32 %v4382, %v4774
  %v4776 = vpop.f32.mrb[0].mxu0
  %v4777 = vadd.f32 %v4384, %v4776
  %v4778 = vpop.f32.mrb[0].mxu0
  %v4779 = vadd.f32 %v4386, %v4778
  %v4780 = vpop.f32.mrb[0].mxu0
  %v4781 = vadd.f32 %v4388, %v4780
  %4782 = vmatprep.mubr.bf16.mxu0 0
  %4783 = vmatmul.mubr.bf16.gmra.mrb[0].mxu0 %v3808
  %v4784 = vpop.f32.mrb[0].mxu0
  %v4785 = vadd.f32 %v4392, %v4784
  %v4786 = vpop.f32.mrb[0].mxu0
  %v4787 = vadd.f32 %v4394, %v4786
  %v4788 = vpop.f32.mrb[0].mxu0
  %v4789 = vadd.f32 %v4396, %v4788
  %v4790 = vpop.f32.mrb[0].mxu0
  %v4791 = vadd.f32 %v4398, %v4790
  %4792 = vmatprep.mubr.bf16.mxu0 0
  %4793 = vmatmul.mubr.bf16.gmra.mrb[0].mxu0 %v3811
  %v4794 = vpop.f32.mrb[0].mxu0
  %v4795 = vadd.f32 %v4402, %v4794
  %v4796 = vpop.f32.mrb[0].mxu0
  %v4797 = vadd.f32 %v4404, %v4796
  %v4798 = vpop.f32.mrb[0].mxu0
  %v4799 = vadd.f32 %v4406, %v4798
  %v4800 = vpop.f32.mrb[0].mxu0
  %v4801 = vadd.f32 %v4408, %v4800
  %4802 = vmatprep.mubr.bf16.mxu0 0
  %4803 = vmatmul.mubr.bf16.gmra.mrb[0].mxu0 %v3814
  %v4804 = vpop.f32.mrb[0].mxu0
  %v4805 = vadd.f32 %v4412, %v4804
  %v4806 = vpop.f32.mrb[0].mxu0
  %v4807 = vadd.f32 %v4414, %v4806
  %v4808 = vpop.f32.mrb[0].mxu0
  %v4809 = vadd.f32 %v4416, %v4808
  %v4810 = vpop.f32.mrb[0].mxu0
  %v4811 = vadd.f32 %v4418, %v4810
  %4812 = vmatprep.mubr.bf16.mxu0 0
  %4813 = vmatmul.mubr.bf16.gmra.mrb[0].mxu0 %v3817
  %v4814 = vpop.f32.mrb[0].mxu0
  %v4815 = vadd.f32 %v4422, %v4814
  %v4816 = vpop.f32.mrb[0].mxu0
  %v4817 = vadd.f32 %v4424, %v4816
  %v4818 = vpop.f32.mrb[0].mxu0
  %v4819 = vadd.f32 %v4426, %v4818
  %v4820 = vpop.f32.mrb[0].mxu0
  %v4821 = vadd.f32 %v4428, %v4820
  %4822 = vmatprep.mubr.bf16.mxu0 0
  %4823 = vmatmul.mubr.bf16.gmra.mrb[0].mxu0 %v3820
  %v4824 = vpop.f32.mrb[0].mxu0
  %v4825 = vadd.f32 %v4432, %v4824
  %v4826 = vpop.f32.mrb[0].mxu0
  %v4827 = vadd.f32 %v4434, %v4826
  %v4828 = vpop.f32.mrb[0].mxu0
  %v4829 = vadd.f32 %v4436, %v4828
  %v4830 = vpop.f32.mrb[0].mxu0
  %v4831 = vadd.f32 %v4438, %v4830
  %4832 = vmatprep.mubr.bf16.mxu0 0
  %4833 = vmatmul.mubr.bf16.gmra.mrb[0].mxu0 %v3823
  %v4834 = vpop.f32.mrb[0].mxu0
  %v4835 = vadd.f32 %v4442, %v4834
  %v4836 = vpop.f32.mrb[0].mxu0
  %v4837 = vadd.f32 %v4444, %v4836
  %v4838 = vpop.f32.mrb[0].mxu0
  %v4839 = vadd.f32 %v4446, %v4838
  %v4840 = vpop.f32.mrb[0].mxu0
  %v4841 = vadd.f32 %v4448, %v4840
  %4842 = vmatprep.mubr.bf16.mxu0 0
  %4843 = vmatmul.mubr.bf16.gmra.mrb[0].mxu0 %v3826
  %v4844 = vpop.f32.mrb[0].mxu0
  %v4845 = vadd.f32 %v4452, %v4844
  %v4846 = vpop.f32.mrb[0].mxu0
  %v4847 = vadd.f32 %v4454, %v4846
  %v4848 = vpop.f32.mrb[0].mxu0
  %v4849 = vadd.f32 %v4456, %v4848
  %v4850 = vpop.f32.mrb[0].mxu0
  %v4851 = vadd.f32 %v4458, %v4850
  %4852 = vmatprep.mubr.bf16.mxu0 0
  %4853 = vmatmul.mubr.bf16.gmra.mrb[0].mxu0 %v3829
  %v4854 = vpop.f32.mrb[0].mxu0
  %v4855 = vadd.f32 %v4462, %v4854
  %v4856 = vpop.f32.mrb[0].mxu0
  %v4857 = vadd.f32 %v4464, %v4856
  %v4858 = vpop.f32.mrb[0].mxu0
  %v4859 = vadd.f32 %v4466, %v4858
  %v4860 = vpop.f32.mrb[0].mxu0
  %v4861 = vadd.f32 %v4468, %v4860
  %4862 = vmatprep.mubr.bf16.mxu0 0
  %4863 = vmatmul.mubr.bf16.gmra.mrb[0].mxu0 %v3832
  %v4864 = vpop.f32.mrb[0].mxu0
  %v4865 = vadd.f32 %v4472, %v4864
  %v4866 = vpop.f32.mrb[0].mxu0
  %v4867 = vadd.f32 %v4474, %v4866
  %v4868 = vpop.f32.mrb[0].mxu0
  %v4869 = vadd.f32 %v4476, %v4868
  %v4870 = vpop.f32.mrb[0].mxu0
  %v4871 = vadd.f32 %v4478, %v4870
  %4872 = vmatprep.mubr.bf16.mxu0 0
  %4873 = vmatmul.mubr.bf16.gmra.mrb[0].mxu0 %v3835
  %v4874 = vpop.f32.mrb[0].mxu0
  %v4875 = vadd.f32 %v4482, %v4874
  %v4876 = vpop.f32.mrb[0].mxu0
  %v4877 = vadd.f32 %v4484, %v4876
  %v4878 = vpop.f32.mrb[0].mxu0
  %v4879 = vadd.f32 %v4486, %v4878
  %v4880 = vpop.f32.mrb[0].mxu0
  %v4881 = vadd.f32 %v4488, %v4880
  %4882 = vmatprep.mubr.bf16.mxu0 0
  %4883 = vmatmul.mubr.bf16.gmra.mrb[0].mxu0 %v3838
  %v4884 = vpop.f32.mrb[0].mxu0
  %v4885 = vadd.f32 %v4492, %v4884
  %v4886 = vpop.f32.mrb[0].mxu0
  %v4887 = vadd.f32 %v4494, %v4886
  %v4888 = vpop.f32.mrb[0].mxu0
  %v4889 = vadd.f32 %v4496, %v4888
  %v4890 = vpop.f32.mrb[0].mxu0
  %v4891 = vadd.f32 %v4498, %v4890
  %4892 = vmatprep.mubr.bf16.mxu0 0
  %4893 = vmatmul.mubr.bf16.gmra.mrb[0].mxu0 %v3841
  %v4894 = vpop.f32.mrb[0].mxu0
  %v4895 = vadd.f32 %v4502, %v4894
  %v4896 = vpop.f32.mrb[0].mxu0
  %v4897 = vadd.f32 %v4504, %v4896
  %v4898 = vpop.f32.mrb[0].mxu0
  %v4899 = vadd.f32 %v4506, %v4898
  %v4900 = vpop.f32.mrb[0].mxu0
  %v4901 = vadd.f32 %v4508, %v4900
  %4902 = vmatprep.mubr.bf16.mxu0 0
  %4903 = vmatmul.mubr.bf16.gmra.mrb[0].mxu0 %v3844
  %v4904 = vpop.f32.mrb[0].mxu0
  %v4905 = vadd.f32 %v4512, %v4904
  %v4906 = vpop.f32.mrb[0].mxu0
  %v4907 = vadd.f32 %v4514, %v4906
  %v4908 = vpop.f32.mrb[0].mxu0
  %v4909 = vadd.f32 %v4516, %v4908
  %v4910 = vpop.f32.mrb[0].mxu0
  %v4911 = vadd.f32 %v4518, %v4910
  %4912 = vmatprep.mubr.bf16.mxu0 0
  %4913 = vmatmul.mubr.bf16.gmra.mrb[0].mxu0 %v3847
  %v4914 = vpop.f32.mrb[0].mxu0
  %v4915 = vadd.f32 %v4522, %v4914
  %v4916 = vpop.f32.mrb[0].mxu0
  %v4917 = vadd.f32 %v4524, %v4916
  %v4918 = vpop.f32.mrb[0].mxu0
  %v4919 = vadd.f32 %v4526, %v4918
  %v4920 = vpop.f32.mrb[0].mxu0
  %v4921 = vadd.f32 %v4528, %v4920
  %4922 = vmatprep.mubr.bf16.mxu0 0
  %4923 = vmatmul.mubr.bf16.gmra.mrb[0].mxu0 %v3850
  %v4924 = vpop.f32.mrb[0].mxu0
  %v4925 = vadd.f32 %v4532, %v4924
  %v4926 = vpop.f32.mrb[0].mxu0
  %v4927 = vadd.f32 %v4534, %v4926
  %v4928 = vpop.f32.mrb[0].mxu0
  %v4929 = vadd.f32 %v4536, %v4928
  %v4930 = vpop.f32.mrb[0].mxu0
  %v4931 = vadd.f32 %v4538, %v4930
  %4932 = vmatprep.mubr.bf16.mxu0 0
  %4933 = vmatmul.mubr.bf16.gmra.mrb[0].mxu0 %v3853
  %v4934 = vpop.f32.mrb[0].mxu0
  %v4935 = vadd.f32 %v4542, %v4934
  %v4936 = vpop.f32.mrb[0].mxu0
  %v4937 = vadd.f32 %v4544, %v4936
  %v4938 = vpop.f32.mrb[0].mxu0
  %v4939 = vadd.f32 %v4546, %v4938
  %v4940 = vpop.f32.mrb[0].mxu0
  %v4941 = vadd.f32 %v4548, %v4940
  %4942 = vmatprep.mubr.bf16.mxu0 0
  %4943 = vmatmul.mubr.bf16.gmra.mrb[0].mxu0 %v3856
  %v4944 = vpop.f32.mrb[0].mxu0
  %v4945 = vadd.f32 %v4552, %v4944
  %v4946 = vpop.f32.mrb[0].mxu0
  %v4947 = vadd.f32 %v4554, %v4946
  %v4948 = vpop.f32.mrb[0].mxu0
  %v4949 = vadd.f32 %v4556, %v4948
  %v4950 = vpop.f32.mrb[0].mxu0
  %v4951 = vadd.f32 %v4558, %v4950
  %4952 = vmatprep.mubr.bf16.mxu0 0
  %4953 = vmatmul.mubr.bf16.gmra.mrb[0].mxu0 %v3859
  %v4954 = vpop.f32.mrb[0].mxu0
  %v4955 = vadd.f32 %v4562, %v4954
  %v4956 = vpop.f32.mrb[0].mxu0
  %v4957 = vadd.f32 %v4564, %v4956
  %v4958 = vpop.f32.mrb[0].mxu0
  %v4959 = vadd.f32 %v4566, %v4958
  %v4960 = vpop.f32.mrb[0].mxu0
  %v4961 = vadd.f32 %v4568, %v4960
  %4962 = vmatprep.mubr.bf16.mxu0 0
  %4963 = vmatmul.mubr.bf16.gmra.mrb[0].mxu0 %v3862
  %v4964 = vpop.f32.mrb[0].mxu0
  %v4965 = vadd.f32 %v4572, %v4964
  %v4966 = vpop.f32.mrb[0].mxu0
  %v4967 = vadd.f32 %v4574, %v4966
  %v4968 = vpop.f32.mrb[0].mxu0
  %v4969 = vadd.f32 %v4576, %v4968
  %v4970 = vpop.f32.mrb[0].mxu0
  %v4971 = vadd.f32 %v4578, %v4970
  %4972 = vmatprep.mubr.bf16.mxu0 0
  %4973 = vmatmul.mubr.bf16.gmra.mrb[0].mxu0 %v3865
  %v4974 = vpop.f32.mrb[0].mxu0
  %v4975 = vadd.f32 %v4582, %v4974
  %v4976 = vpop.f32.mrb[0].mxu0
  %v4977 = vadd.f32 %v4584, %v4976
  %v4978 = vpop.f32.mrb[0].mxu0
  %v4979 = vadd.f32 %v4586, %v4978
  %v4980 = vpop.f32.mrb[0].mxu0
  %v4981 = vadd.f32 %v4588, %v4980
  %4982 = vmatprep.mubr.bf16.mxu0 0
  %4983 = vmatmul.mubr.bf16.gmra.mrb[0].mxu0 %v3868
  %v4984 = vpop.f32.mrb[0].mxu0
  %v4985 = vadd.f32 %v4592, %v4984
  %v4986 = vpop.f32.mrb[0].mxu0
  %v4987 = vadd.f32 %v4594, %v4986
  %v4988 = vpop.f32.mrb[0].mxu0
  %v4989 = vadd.f32 %v4596, %v4988
  %v4990 = vpop.f32.mrb[0].mxu0
  %v4991 = vadd.f32 %v4598, %v4990
  %4992 = vmatprep.mubr.bf16.mxu0 0
  %4993 = vmatmul.mubr.bf16.gmra.mrb[0].mxu0 %v3871
  %v4994 = vpop.f32.mrb[0].mxu0
  %v4995 = vadd.f32 %v4602, %v4994
  %v4996 = vpop.f32.mrb[0].mxu0
  %v4997 = vadd.f32 %v4604, %v4996
  %v4998 = vpop.f32.mrb[0].mxu0
  %v4999 = vadd.f32 %v4606, %v4998
  %v5000 = vpop.f32.mrb[0].mxu0
  %v5001 = vadd.f32 %v4608, %v5000
  %5002 = vmatprep.mubr.bf16.mxu0 0
  %5003 = vmatmul.mubr.bf16.gmra.mrb[0].mxu0 %v3874
  %v5004 = vpop.f32.mrb[0].mxu0
  %v5005 = vadd.f32 %v4612, %v5004
  %v5006 = vpop.f32.mrb[0].mxu0
  %v5007 = vadd.f32 %v4614, %v5006
  %v5008 = vpop.f32.mrb[0].mxu0
  %v5009 = vadd.f32 %v4616, %v5008
  %v5010 = vpop.f32.mrb[0].mxu0
  %v5011 = vadd.f32 %v4618, %v5010
  %5012 = vmatprep.mubr.bf16.mxu0 0
  %5013 = vmatmul.mubr.bf16.gmra.mrb[0].mxu0 %v3877
  %v5014 = vpop.f32.mrb[0].mxu0
  %v5015 = vadd.f32 %v4622, %v5014
  %v5016 = vpop.f32.mrb[0].mxu0
  %v5017 = vadd.f32 %v4624, %v5016
  %v5018 = vpop.f32.mrb[0].mxu0
  %v5019 = vadd.f32 %v4626, %v5018
  %v5020 = vpop.f32.mrb[0].mxu0
  %v5021 = vadd.f32 %v4628, %v5020
  %5022 = vmatprep.mubr.bf16.mxu0 0
  %5023 = vmatmul.mubr.bf16.gmra.mrb[0].mxu0 %v3880
  %v5024 = vpop.f32.mrb[0].mxu0
  %v5025 = vadd.f32 %v4632, %v5024
  %v5026 = vpop.f32.mrb[0].mxu0
  %v5027 = vadd.f32 %v4634, %v5026
  %v5028 = vpop.f32.mrb[0].mxu0
  %v5029 = vadd.f32 %v4636, %v5028
  %v5030 = vpop.f32.mrb[0].mxu0
  %v5031 = vadd.f32 %v4638, %v5030
  %5032 = vmatprep.mubr.bf16.mxu0 0
  %5033 = vmatmul.mubr.bf16.gmra.mrb[0].mxu0 %v3883
  %v5034 = vpop.f32.mrb[0].mxu0
  %v5035 = vadd.f32 %v4642, %v5034
  %v5036 = vpop.f32.mrb[0].mxu0
  %v5037 = vadd.f32 %v4644, %v5036
  %v5038 = vpop.f32.mrb[0].mxu0
  %v5039 = vadd.f32 %v4646, %v5038
  %v5040 = vpop.f32.mrb[0].mxu0
  %v5041 = vadd.f32 %v4648, %v5040
  %5042 = vmatprep.mubr.bf16.mxu0 0
  %5043 = vmatmul.mubr.bf16.gmra.mrb[0].mxu0 %v3886
  %v5044 = vpop.f32.mrb[0].mxu0
  %v5045 = vadd.f32 %v4652, %v5044
  %v5046 = vpop.f32.mrb[0].mxu0
  %v5047 = vadd.f32 %v4654, %v5046
  %v5048 = vpop.f32.mrb[0].mxu0
  %v5049 = vadd.f32 %v4656, %v5048
  %v5050 = vpop.f32.mrb[0].mxu0
  %v5051 = vadd.f32 %v4658, %v5050
  %5052 = vmatprep.mubr.bf16.mxu0 0
  %5053 = vmatmul.mubr.bf16.gmra.mrb[0].mxu0 %v3889
  %v5054 = vpop.f32.mrb[0].mxu0
  %v5055 = vadd.f32 %v4662, %v5054
  %v5056 = vpop.f32.mrb[0].mxu0
  %v5057 = vadd.f32 %v4664, %v5056
  %v5058 = vpop.f32.mrb[0].mxu0
  %v5059 = vadd.f32 %v4666, %v5058
  %v5060 = vpop.f32.mrb[0].mxu0
  %v5061 = vadd.f32 %v4668, %v5060
  %5062 = vmatprep.mubr.bf16.mxu0 0
  %5063 = vmatmul.mubr.bf16.gmra.mrb[0].mxu0 %v3892
  %v5064 = vpop.f32.mrb[0].mxu0
  %v5065 = vadd.f32 %v4672, %v5064
  %v5066 = vpop.f32.mrb[0].mxu0
  %v5067 = vadd.f32 %v4674, %v5066
  %v5068 = vpop.f32.mrb[0].mxu0
  %v5069 = vadd.f32 %v4676, %v5068
  %v5070 = vpop.f32.mrb[0].mxu0
  %v5071 = vadd.f32 %v4678, %v5070
  %5072 = vdwg.mxu0
  %v5073 = vpack.c.bf16 %v4719, %v4715
  %v5074 = vpack.c.bf16 %v4721, %v4717
  %v5075 = vpack.c.bf16 %v4729, %v4725
  %v5076 = vpack.c.bf16 %v4731, %v4727
  %v5077 = vpack.c.bf16 %v4739, %v4735
  %v5078 = vpack.c.bf16 %v4741, %v4737
  %v5079 = vpack.c.bf16 %v4749, %v4745
  %v5080 = vpack.c.bf16 %v4751, %v4747
  %v5081 = vpack.c.bf16 %v4759, %v4755
  %v5082 = vpack.c.bf16 %v4761, %v4757
  %v5083 = vpack.c.bf16 %v4769, %v4765
  %v5084 = vpack.c.bf16 %v4771, %v4767
  %v5085 = vpack.c.bf16 %v4779, %v4775
  %v5086 = vpack.c.bf16 %v4781, %v4777
  %v5087 = vpack.c.bf16 %v4789, %v4785
  %v5088 = vpack.c.bf16 %v4791, %v4787
  %v5089 = vpack.c.bf16 %v4799, %v4795
  %v5090 = vpack.c.bf16 %v4801, %v4797
  %v5091 = vpack.c.bf16 %v4809, %v4805
  %v5092 = vpack.c.bf16 %v4811, %v4807
  %v5093 = vpack.c.bf16 %v4819, %v4815
  %v5094 = vpack.c.bf16 %v4821, %v4817
  %v5095 = vpack.c.bf16 %v4829, %v4825
  %v5096 = vpack.c.bf16 %v4831, %v4827
  %v5097 = vpack.c.bf16 %v4839, %v4835
  %v5098 = vpack.c.bf16 %v4841, %v4837
  %v5099 = vpack.c.bf16 %v4849, %v4845
  %v5100 = vpack.c.bf16 %v4851, %v4847
  %v5101 = vpack.c.bf16 %v4859, %v4855
  %v5102 = vpack.c.bf16 %v4861, %v4857
  %v5103 = vpack.c.bf16 %v4869, %v4865
  %v5104 = vpack.c.bf16 %v4871, %v4867
  %v5105 = vpack.c.bf16 %v4879, %v4875
  %v5106 = vpack.c.bf16 %v4881, %v4877
  %v5107 = vpack.c.bf16 %v4889, %v4885
  %v5108 = vpack.c.bf16 %v4891, %v4887
  %v5109 = vpack.c.bf16 %v4899, %v4895
  %v5110 = vpack.c.bf16 %v4901, %v4897
  %v5111 = vpack.c.bf16 %v4909, %v4905
  %v5112 = vpack.c.bf16 %v4911, %v4907
  %v5113 = vpack.c.bf16 %v4919, %v4915
  %v5114 = vpack.c.bf16 %v4921, %v4917
  %v5115 = vpack.c.bf16 %v4929, %v4925
  %v5116 = vpack.c.bf16 %v4931, %v4927
  %v5117 = vpack.c.bf16 %v4939, %v4935
  %v5118 = vpack.c.bf16 %v4941, %v4937
  %v5119 = vpack.c.bf16 %v4949, %v4945
  %v5120 = vpack.c.bf16 %v4951, %v4947
  %v5121 = vpack.c.bf16 %v4959, %v4955
  %v5122 = vpack.c.bf16 %v4961, %v4957
  %v5123 = vpack.c.bf16 %v4969, %v4965
  %v5124 = vpack.c.bf16 %v4971, %v4967
  %v5125 = vpack.c.bf16 %v4979, %v4975
  %v5126 = vpack.c.bf16 %v4981, %v4977
  %v5127 = vpack.c.bf16 %v4989, %v4985
  %v5128 = vpack.c.bf16 %v4991, %v4987
  %v5129 = vpack.c.bf16 %v4999, %v4995
  %v5130 = vpack.c.bf16 %v5001, %v4997
  %v5131 = vpack.c.bf16 %v5009, %v5005
  %v5132 = vpack.c.bf16 %v5011, %v5007
  %v5133 = vpack.c.bf16 %v5019, %v5015
  %v5134 = vpack.c.bf16 %v5021, %v5017
  %v5135 = vpack.c.bf16 %v5029, %v5025
  %v5136 = vpack.c.bf16 %v5031, %v5027
  %v5137 = vpack.c.bf16 %v5039, %v5035
  %v5138 = vpack.c.bf16 %v5041, %v5037
  %v5139 = vpack.c.bf16 %v5049, %v5045
  %v5140 = vpack.c.bf16 %v5051, %v5047
  %v5141 = vpack.c.bf16 %v5059, %v5055
  %v5142 = vpack.c.bf16 %v5061, %v5057
  %v5143 = vpack.c.bf16 %v5069, %v5065
  %v5144 = vpack.c.bf16 %v5071, %v5067
  %v5217 = vunpack.c.l.b16 %v5073
  %v5218 = vunpack.c.l.b16 %v5074
  %v5219 = vunpack.c.h.b16 %v5073
  %v5220 = vunpack.c.h.b16 %v5074
  %v5221 = vunpack.c.l.b16 %v5075
  %v5222 = vunpack.c.l.b16 %v5076
  %v5223 = vunpack.c.h.b16 %v5075
  %v5224 = vunpack.c.h.b16 %v5076
  %v5225 = vunpack.c.l.b16 %v5077
  %v5226 = vunpack.c.l.b16 %v5078
  %v5227 = vunpack.c.h.b16 %v5077
  %v5228 = vunpack.c.h.b16 %v5078
  %v5229 = vunpack.c.l.b16 %v5079
  %v5230 = vunpack.c.l.b16 %v5080
  %v5231 = vunpack.c.h.b16 %v5079
  %v5232 = vunpack.c.h.b16 %v5080
  %v5233 = vunpack.c.l.b16 %v5081
  %v5234 = vunpack.c.l.b16 %v5082
  %v5235 = vunpack.c.h.b16 %v5081
  %v5236 = vunpack.c.h.b16 %v5082
  %v5237 = vunpack.c.l.b16 %v5083
  %v5238 = vunpack.c.l.b16 %v5084
  %v5239 = vunpack.c.h.b16 %v5083
  %v5240 = vunpack.c.h.b16 %v5084
  %v5241 = vunpack.c.l.b16 %v5085
  %v5242 = vunpack.c.l.b16 %v5086
  %v5243 = vunpack.c.h.b16 %v5085
  %v5244 = vunpack.c.h.b16 %v5086
  %v5245 = vunpack.c.l.b16 %v5087
  %v5246 = vunpack.c.l.b16 %v5088
  %v5247 = vunpack.c.h.b16 %v5087
  %v5248 = vunpack.c.h.b16 %v5088
  %v5249 = vunpack.c.l.b16 %v5089
  %v5250 = vunpack.c.l.b16 %v5090
  %v5251 = vunpack.c.h.b16 %v5089
  %v5252 = vunpack.c.h.b16 %v5090
  %v5253 = vunpack.c.l.b16 %v5091
  %v5254 = vunpack.c.l.b16 %v5092
  %v5255 = vunpack.c.h.b16 %v5091
  %v5256 = vunpack.c.h.b16 %v5092
  %v5257 = vunpack.c.l.b16 %v5093
  %v5258 = vunpack.c.l.b16 %v5094
  %v5259 = vunpack.c.h.b16 %v5093
  %v5260 = vunpack.c.h.b16 %v5094
  %v5261 = vunpack.c.l.b16 %v5095
  %v5262 = vunpack.c.l.b16 %v5096
  %v5263 = vunpack.c.h.b16 %v5095
  %v5264 = vunpack.c.h.b16 %v5096
  %v5265 = vunpack.c.l.b16 %v5097
  %v5266 = vunpack.c.l.b16 %v5098
  %v5267 = vunpack.c.h.b16 %v5097
  %v5268 = vunpack.c.h.b16 %v5098
  %v5269 = vunpack.c.l.b16 %v5099
  %v5270 = vunpack.c.l.b16 %v5100
  %v5271 = vunpack.c.h.b16 %v5099
  %v5272 = vunpack.c.h.b16 %v5100
  %v5273 = vunpack.c.l.b16 %v5101
  %v5274 = vunpack.c.l.b16 %v5102
  %v5275 = vunpack.c.h.b16 %v5101
  %v5276 = vunpack.c.h.b16 %v5102
  %v5277 = vunpack.c.l.b16 %v5103
  %v5278 = vunpack.c.l.b16 %v5104
  %v5279 = vunpack.c.h.b16 %v5103
  %v5280 = vunpack.c.h.b16 %v5104
  %v5281 = vunpack.c.l.b16 %v5105
  %v5282 = vunpack.c.l.b16 %v5106
  %v5283 = vunpack.c.h.b16 %v5105
  %v5284 = vunpack.c.h.b16 %v5106
  %v5285 = vunpack.c.l.b16 %v5107
  %v5286 = vunpack.c.l.b16 %v5108
  %v5287 = vunpack.c.h.b16 %v5107
  %v5288 = vunpack.c.h.b16 %v5108
  %v5289 = vunpack.c.l.b16 %v5109
  %v5290 = vunpack.c.l.b16 %v5110
  %v5291 = vunpack.c.h.b16 %v5109
  %v5292 = vunpack.c.h.b16 %v5110
  %v5293 = vunpack.c.l.b16 %v5111
  %v5294 = vunpack.c.l.b16 %v5112
  %v5295 = vunpack.c.h.b16 %v5111
  %v5296 = vunpack.c.h.b16 %v5112
  %v5297 = vunpack.c.l.b16 %v5113
  %v5298 = vunpack.c.l.b16 %v5114
  %v5299 = vunpack.c.h.b16 %v5113
  %v5300 = vunpack.c.h.b16 %v5114
  %v5301 = vunpack.c.l.b16 %v5115
  %v5302 = vunpack.c.l.b16 %v5116
  %v5303 = vunpack.c.h.b16 %v5115
  %v5304 = vunpack.c.h.b16 %v5116
  %v5305 = vunpack.c.l.b16 %v5117
  %v5306 = vunpack.c.l.b16 %v5118
  %v5307 = vunpack.c.h.b16 %v5117
  %v5308 = vunpack.c.h.b16 %v5118
  %v5309 = vunpack.c.l.b16 %v5119
  %v5310 = vunpack.c.l.b16 %v5120
  %v5311 = vunpack.c.h.b16 %v5119
  %v5312 = vunpack.c.h.b16 %v5120
  %v5313 = vunpack.c.l.b16 %v5121
  %v5314 = vunpack.c.l.b16 %v5122
  %v5315 = vunpack.c.h.b16 %v5121
  %v5316 = vunpack.c.h.b16 %v5122
  %v5317 = vunpack.c.l.b16 %v5123
  %v5318 = vunpack.c.l.b16 %v5124
  %v5319 = vunpack.c.h.b16 %v5123
  %v5320 = vunpack.c.h.b16 %v5124
  %v5321 = vunpack.c.l.b16 %v5125
  %v5322 = vunpack.c.l.b16 %v5126
  %v5323 = vunpack.c.h.b16 %v5125
  %v5324 = vunpack.c.h.b16 %v5126
  %v5325 = vunpack.c.l.b16 %v5127
  %v5326 = vunpack.c.l.b16 %v5128
  %v5327 = vunpack.c.h.b16 %v5127
  %v5328 = vunpack.c.h.b16 %v5128
  %v5329 = vunpack.c.l.b16 %v5129
  %v5330 = vunpack.c.l.b16 %v5130
  %v5331 = vunpack.c.h.b16 %v5129
  %v5332 = vunpack.c.h.b16 %v5130
  %v5333 = vunpack.c.l.b16 %v5131
  %v5334 = vunpack.c.l.b16 %v5132
  %v5335 = vunpack.c.h.b16 %v5131
  %v5336 = vunpack.c.h.b16 %v5132
  %v5337 = vunpack.c.l.b16 %v5133
  %v5338 = vunpack.c.l.b16 %v5134
  %v5339 = vunpack.c.h.b16 %v5133
  %v5340 = vunpack.c.h.b16 %v5134
  %v5341 = vunpack.c.l.b16 %v5135
  %v5342 = vunpack.c.l.b16 %v5136
  %v5343 = vunpack.c.h.b16 %v5135
  %v5344 = vunpack.c.h.b16 %v5136
  %v5345 = vunpack.c.l.b16 %v5137
  %v5346 = vunpack.c.l.b16 %v5138
  %v5347 = vunpack.c.h.b16 %v5137
  %v5348 = vunpack.c.h.b16 %v5138
  %v5349 = vunpack.c.l.b16 %v5139
  %v5350 = vunpack.c.l.b16 %v5140
  %v5351 = vunpack.c.h.b16 %v5139
  %v5352 = vunpack.c.h.b16 %v5140
  %v5353 = vunpack.c.l.b16 %v5141
  %v5354 = vunpack.c.l.b16 %v5142
  %v5355 = vunpack.c.h.b16 %v5141
  %v5356 = vunpack.c.h.b16 %v5142
  %v5357 = vunpack.c.l.b16 %v5143
  %v5358 = vunpack.c.l.b16 %v5144
  %v5359 = vunpack.c.h.b16 %v5143
  %v5360 = vunpack.c.h.b16 %v5144
  %v5361 = vpack.c.b16 %v5218, %v5217
  %v5362 = vpack.c.b16 %v5220, %v5219
  %v5363 = vpack.c.b16 %v5222, %v5221
  %v5364 = vpack.c.b16 %v5224, %v5223
  %v5365 = vpack.c.b16 %v5226, %v5225
  %v5366 = vpack.c.b16 %v5228, %v5227
  %v5367 = vpack.c.b16 %v5230, %v5229
  %v5368 = vpack.c.b16 %v5232, %v5231
  %v5369 = vpack.c.b16 %v5234, %v5233
  %v5370 = vpack.c.b16 %v5236, %v5235
  %v5371 = vpack.c.b16 %v5238, %v5237
  %v5372 = vpack.c.b16 %v5240, %v5239
  %v5373 = vpack.c.b16 %v5242, %v5241
  %v5374 = vpack.c.b16 %v5244, %v5243
  %v5375 = vpack.c.b16 %v5246, %v5245
  %v5376 = vpack.c.b16 %v5248, %v5247
  %v5377 = vpack.c.b16 %v5250, %v5249
  %v5378 = vpack.c.b16 %v5252, %v5251
  %v5379 = vpack.c.b16 %v5254, %v5253
  %v5380 = vpack.c.b16 %v5256, %v5255
  %v5381 = vpack.c.b16 %v5258, %v5257
  %v5382 = vpack.c.b16 %v5260, %v5259
  %v5383 = vpack.c.b16 %v5262, %v5261
  %v5384 = vpack.c.b16 %v5264, %v5263
  %v5385 = vpack.c.b16 %v5266, %v5265
  %v5386 = vpack.c.b16 %v5268, %v5267
  %v5387 = vpack.c.b16 %v5270, %v5269
  %v5388 = vpack.c.b16 %v5272, %v5271
  %v5389 = vpack.c.b16 %v5274, %v5273
  %v5390 = vpack.c.b16 %v5276, %v5275
  %v5391 = vpack.c.b16 %v5278, %v5277
  %v5392 = vpack.c.b16 %v5280, %v5279
  %v5393 = vpack.c.b16 %v5282, %v5281
  %v5394 = vpack.c.b16 %v5284, %v5283
  %v5395 = vpack.c.b16 %v5286, %v5285
  %v5396 = vpack.c.b16 %v5288, %v5287
  %v5397 = vpack.c.b16 %v5290, %v5289
  %v5398 = vpack.c.b16 %v5292, %v5291
  %v5399 = vpack.c.b16 %v5294, %v5293
  %v5400 = vpack.c.b16 %v5296, %v5295
  %v5401 = vpack.c.b16 %v5298, %v5297
  %v5402 = vpack.c.b16 %v5300, %v5299
  %v5403 = vpack.c.b16 %v5302, %v5301
  %v5404 = vpack.c.b16 %v5304, %v5303
  %v5405 = vpack.c.b16 %v5306, %v5305
  %v5406 = vpack.c.b16 %v5308, %v5307
  %v5407 = vpack.c.b16 %v5310, %v5309
  %v5408 = vpack.c.b16 %v5312, %v5311
  %v5409 = vpack.c.b16 %v5314, %v5313
  %v5410 = vpack.c.b16 %v5316, %v5315
  %v5411 = vpack.c.b16 %v5318, %v5317
  %v5412 = vpack.c.b16 %v5320, %v5319
  %v5413 = vpack.c.b16 %v5322, %v5321
  %v5414 = vpack.c.b16 %v5324, %v5323
  %v5415 = vpack.c.b16 %v5326, %v5325
  %v5416 = vpack.c.b16 %v5328, %v5327
  %v5417 = vpack.c.b16 %v5330, %v5329
  %v5418 = vpack.c.b16 %v5332, %v5331
  %v5419 = vpack.c.b16 %v5334, %v5333
  %v5420 = vpack.c.b16 %v5336, %v5335
  %v5421 = vpack.c.b16 %v5338, %v5337
  %v5422 = vpack.c.b16 %v5340, %v5339
  %v5423 = vpack.c.b16 %v5342, %v5341
  %v5424 = vpack.c.b16 %v5344, %v5343
  %v5425 = vpack.c.b16 %v5346, %v5345
  %v5426 = vpack.c.b16 %v5348, %v5347
  %v5427 = vpack.c.b16 %v5350, %v5349
  %v5428 = vpack.c.b16 %v5352, %v5351
  %v5429 = vpack.c.b16 %v5354, %v5353
  %v5430 = vpack.c.b16 %v5356, %v5355
  %v5431 = vpack.c.b16 %v5358, %v5357
  %v5432 = vpack.c.b16 %v5360, %v5359
  %vm5505 = vcmask 1043456
  %vm5506 = vcmask 556036
  %vm5507 = vmor %vm5506, %vm5505
  %5508 = vst.msk [vmem:[%s5] sm:$0xff] %vm5507, %v5361
  %5509 = vst.msk [vmem:[%s5 + $0x8] sm:$0xff] %vm5507, %v5362
  %5510 = vst.msk [vmem:[%s5 + $0x10] sm:$0xff] %vm5507, %v5363
  %5511 = vst.msk [vmem:[%s5 + $0x18] sm:$0xff] %vm5507, %v5364
  %5512 = vst.msk [vmem:[%s5 + $0x20] sm:$0xff] %vm5507, %v5365
  %5513 = vst.msk [vmem:[%s5 + $0x28] sm:$0xff] %vm5507, %v5366
  %5514 = vst.msk [vmem:[%s5 + $0x30] sm:$0xff] %vm5507, %v5367
  %5515 = vst.msk [vmem:[%s5 + $0x38] sm:$0xff] %vm5507, %v5368
  %5516 = vst.msk [vmem:[%s5 + $0x40] sm:$0xff] %vm5507, %v5369
  %5517 = vst.msk [vmem:[%s5 + $0x48] sm:$0xff] %vm5507, %v5370
  %5518 = vst.msk [vmem:[%s5 + $0x50] sm:$0xff] %vm5507, %v5371
  %5519 = vst.msk [vmem:[%s5 + $0x58] sm:$0xff] %vm5507, %v5372
  %5520 = vst.msk [vmem:[%s5 + $0x60] sm:$0xff] %vm5507, %v5373
  %5521 = vst.msk [vmem:[%s5 + $0x68] sm:$0xff] %vm5507, %v5374
  %5522 = vst.msk [vmem:[%s5 + $0x70] sm:$0xff] %vm5507, %v5375
  %5523 = vst.msk [vmem:[%s5 + $0x78] sm:$0xff] %vm5507, %v5376
  %5524 = vst.msk [vmem:[%s5 + $0x80] sm:$0xff] %vm5507, %v5377
  %5525 = vst.msk [vmem:[%s5 + $0x88] sm:$0xff] %vm5507, %v5378
  %5526 = vst.msk [vmem:[%s5 + $0x90] sm:$0xff] %vm5507, %v5379
  %5527 = vst.msk [vmem:[%s5 + $0x98] sm:$0xff] %vm5507, %v5380
  %5528 = vst.msk [vmem:[%s5 + $0xa0] sm:$0xff] %vm5507, %v5381
  %5529 = vst.msk [vmem:[%s5 + $0xa8] sm:$0xff] %vm5507, %v5382
  %5530 = vst.msk [vmem:[%s5 + $0xb0] sm:$0xff] %vm5507, %v5383
  %5531 = vst.msk [vmem:[%s5 + $0xb8] sm:$0xff] %vm5507, %v5384
  %5532 = vst.msk [vmem:[%s5 + $0xc0] sm:$0xff] %vm5507, %v5385
  %5533 = vst.msk [vmem:[%s5 + $0xc8] sm:$0xff] %vm5507, %v5386
  %5534 = vst.msk [vmem:[%s5 + $0xd0] sm:$0xff] %vm5507, %v5387
  %5535 = vst.msk [vmem:[%s5 + $0xd8] sm:$0xff] %vm5507, %v5388
  %5536 = vst.msk [vmem:[%s5 + $0xe0] sm:$0xff] %vm5507, %v5389
  %5537 = vst.msk [vmem:[%s5 + $0xe8] sm:$0xff] %vm5507, %v5390
  %5538 = vst.msk [vmem:[%s5 + $0xf0] sm:$0xff] %vm5507, %v5391
  %5539 = vst.msk [vmem:[%s5 + $0xf8] sm:$0xff] %vm5507, %v5392
  %5540 = vst.msk [vmem:[%s5 + $0x100] sm:$0xff] %vm5507, %v5393
  %5541 = vst.msk [vmem:[%s5 + $0x108] sm:$0xff] %vm5507, %v5394
  %5542 = vst.msk [vmem:[%s5 + $0x110] sm:$0xff] %vm5507, %v5395
  %5543 = vst.msk [vmem:[%s5 + $0x118] sm:$0xff] %vm5507, %v5396
  %5544 = vst.msk [vmem:[%s5 + $0x120] sm:$0xff] %vm5507, %v5397
  %5545 = vst.msk [vmem:[%s5 + $0x128] sm:$0xff] %vm5507, %v5398
  %5546 = vst.msk [vmem:[%s5 + $0x130] sm:$0xff] %vm5507, %v5399
  %5547 = vst.msk [vmem:[%s5 + $0x138] sm:$0xff] %vm5507, %v5400
  %5548 = vst.msk [vmem:[%s5 + $0x140] sm:$0xff] %vm5507, %v5401
  %5549 = vst.msk [vmem:[%s5 + $0x148] sm:$0xff] %vm5507, %v5402
  %5550 = vst.msk [vmem:[%s5 + $0x150] sm:$0xff] %vm5507, %v5403
  %5551 = vst.msk [vmem:[%s5 + $0x158] sm:$0xff] %vm5507, %v5404
  %5552 = vst.msk [vmem:[%s5 + $0x160] sm:$0xff] %vm5507, %v5405
  %5553 = vst.msk [vmem:[%s5 + $0x168] sm:$0xff] %vm5507, %v5406
  %5554 = vst.msk [vmem:[%s5 + $0x170] sm:$0xff] %vm5507, %v5407
  %5555 = vst.msk [vmem:[%s5 + $0x178] sm:$0xff] %vm5507, %v5408
  %5556 = vst.msk [vmem:[%s5 + $0x180] sm:$0xff] %vm5507, %v5409
  %5557 = vst.msk [vmem:[%s5 + $0x188] sm:$0xff] %vm5507, %v5410
  %5558 = vst.msk [vmem:[%s5 + $0x190] sm:$0xff] %vm5507, %v5411
  %5559 = vst.msk [vmem:[%s5 + $0x198] sm:$0xff] %vm5507, %v5412
  %5560 = vst.msk [vmem:[%s5 + $0x1a0] sm:$0xff] %vm5507, %v5413
  %5561 = vst.msk [vmem:[%s5 + $0x1a8] sm:$0xff] %vm5507, %v5414
  %5562 = vst.msk [vmem:[%s5 + $0x1b0] sm:$0xff] %vm5507, %v5415
  %5563 = vst.msk [vmem:[%s5 + $0x1b8] sm:$0xff] %vm5507, %v5416
  %5564 = vst.msk [vmem:[%s5 + $0x1c0] sm:$0xff] %vm5507, %v5417
  %5565 = vst.msk [vmem:[%s5 + $0x1c8] sm:$0xff] %vm5507, %v5418
  %5566 = vst.msk [vmem:[%s5 + $0x1d0] sm:$0xff] %vm5507, %v5419
  %5567 = vst.msk [vmem:[%s5 + $0x1d8] sm:$0xff] %vm5507, %v5420
  %5568 = vst.msk [vmem:[%s5 + $0x1e0] sm:$0xff] %vm5507, %v5421
  %5569 = vst.msk [vmem:[%s5 + $0x1e8] sm:$0xff] %vm5507, %v5422
  %5570 = vst.msk [vmem:[%s5 + $0x1f0] sm:$0xff] %vm5507, %v5423
  %5571 = vst.msk [vmem:[%s5 + $0x1f8] sm:$0xff] %vm5507, %v5424
  %5572 = vst.msk [vmem:[%s5 + $0x200] sm:$0xff] %vm5507, %v5425
  %5573 = vst.msk [vmem:[%s5 + $0x208] sm:$0xff] %vm5507, %v5426
  %5574 = vst.msk [vmem:[%s5 + $0x210] sm:$0xff] %vm5507, %v5427
  %5575 = vst.msk [vmem:[%s5 + $0x218] sm:$0xff] %vm5507, %v5428
  %5576 = vst.msk [vmem:[%s5 + $0x220] sm:$0xff] %vm5507, %v5429
  %5577 = vst.msk [vmem:[%s5 + $0x228] sm:$0xff] %vm5507, %v5430
  %5578 = vst.msk [vmem:[%s5 + $0x230] sm:$0xff] %vm5507, %v5431
  %5579 = vst.msk [vmem:[%s5 + $0x238] sm:$0xff] %vm5507, %v5432
  %s5580 = scalar_lea.vmem %s3, 576
  %v5581 = vld [vmem:[%s5580] sm:$0xff]
  %v5582 = vld [vmem:[%s5580 + $0x8] sm:$0xff]
  %v5583 = vld [vmem:[%s5580 + $0x10] sm:$0xff]
  %v5584 = vld [vmem:[%s5580 + $0x18] sm:$0xff]
  %v5585 = vld [vmem:[%s5580 + $0x20] sm:$0xff]
  %v5586 = vld [vmem:[%s5580 + $0x28] sm:$0xff]
  %v5587 = vld [vmem:[%s5580 + $0x30] sm:$0xff]
  %v5588 = vld [vmem:[%s5580 + $0x38] sm:$0xff]
  %v5589 = vld [vmem:[%s5580 + $0x40] sm:$0xff]
  %v5590 = vld [vmem:[%s5580 + $0x48] sm:$0xff]
  %v5591 = vld [vmem:[%s5580 + $0x50] sm:$0xff]
  %v5592 = vld [vmem:[%s5580 + $0x58] sm:$0xff]
  %v5593 = vld [vmem:[%s5580 + $0x60] sm:$0xff]
  %v5594 = vld [vmem:[%s5580 + $0x68] sm:$0xff]
  %v5595 = vld [vmem:[%s5580 + $0x70] sm:$0xff]
  %v5596 = vld [vmem:[%s5580 + $0x78] sm:$0xff]
  %v5597 = vld [vmem:[%s5580 + $0x80] sm:$0xff]
  %v5598 = vld [vmem:[%s5580 + $0x88] sm:$0xff]
  %v5599 = vld [vmem:[%s5580 + $0x90] sm:$0xff]
  %v5600 = vld [vmem:[%s5580 + $0x98] sm:$0xff]
  %v5601 = vld [vmem:[%s5580 + $0xa0] sm:$0xff]
  %v5602 = vld [vmem:[%s5580 + $0xa8] sm:$0xff]
  %v5603 = vld [vmem:[%s5580 + $0xb0] sm:$0xff]
  %v5604 = vld [vmem:[%s5580 + $0xb8] sm:$0xff]
  %v5605 = vld [vmem:[%s5580 + $0xc0] sm:$0xff]
  %v5606 = vld [vmem:[%s5580 + $0xc8] sm:$0xff]
  %v5607 = vld [vmem:[%s5580 + $0xd0] sm:$0xff]
  %v5608 = vld [vmem:[%s5580 + $0xd8] sm:$0xff]
  %v5609 = vld [vmem:[%s5580 + $0xe0] sm:$0xff]
  %v5610 = vld [vmem:[%s5580 + $0xe8] sm:$0xff]
  %v5611 = vld [vmem:[%s5580 + $0xf0] sm:$0xff]
  %v5612 = vld [vmem:[%s5580 + $0xf8] sm:$0xff]
  %v5613 = vld [vmem:[%s5580 + $0x100] sm:$0xff]
  %v5614 = vld [vmem:[%s5580 + $0x108] sm:$0xff]
  %v5615 = vld [vmem:[%s5580 + $0x110] sm:$0xff]
  %v5616 = vld [vmem:[%s5580 + $0x118] sm:$0xff]
  %v5617 = vld [vmem:[%s5580 + $0x120] sm:$0xff]
  %v5618 = vld [vmem:[%s5580 + $0x128] sm:$0xff]
  %v5619 = vld [vmem:[%s5580 + $0x130] sm:$0xff]
  %v5620 = vld [vmem:[%s5580 + $0x138] sm:$0xff]
  %v5621 = vld [vmem:[%s5580 + $0x140] sm:$0xff]
  %v5622 = vld [vmem:[%s5580 + $0x148] sm:$0xff]
  %v5623 = vld [vmem:[%s5580 + $0x150] sm:$0xff]
  %v5624 = vld [vmem:[%s5580 + $0x158] sm:$0xff]
  %v5625 = vld [vmem:[%s5580 + $0x160] sm:$0xff]
  %v5626 = vld [vmem:[%s5580 + $0x168] sm:$0xff]
  %v5627 = vld [vmem:[%s5580 + $0x170] sm:$0xff]
  %v5628 = vld [vmem:[%s5580 + $0x178] sm:$0xff]
  %v5629 = vld [vmem:[%s5580 + $0x180] sm:$0xff]
  %v5630 = vld [vmem:[%s5580 + $0x188] sm:$0xff]
  %v5631 = vld [vmem:[%s5580 + $0x190] sm:$0xff]
  %v5632 = vld [vmem:[%s5580 + $0x198] sm:$0xff]
  %v5633 = vld [vmem:[%s5580 + $0x1a0] sm:$0xff]
  %v5634 = vld [vmem:[%s5580 + $0x1a8] sm:$0xff]
  %v5635 = vld [vmem:[%s5580 + $0x1b0] sm:$0xff]
  %v5636 = vld [vmem:[%s5580 + $0x1b8] sm:$0xff]
  %v5637 = vld [vmem:[%s5580 + $0x1c0] sm:$0xff]
  %v5638 = vld [vmem:[%s5580 + $0x1c8] sm:$0xff]
  %v5639 = vld [vmem:[%s5580 + $0x1d0] sm:$0xff]
  %v5640 = vld [vmem:[%s5580 + $0x1d8] sm:$0xff]
  %v5641 = vld [vmem:[%s5580 + $0x1e0] sm:$0xff]
  %v5642 = vld [vmem:[%s5580 + $0x1e8] sm:$0xff]
  %v5643 = vld [vmem:[%s5580 + $0x1f0] sm:$0xff]
  %v5644 = vld [vmem:[%s5580 + $0x1f8] sm:$0xff]
  %v5645 = vld [vmem:[%s5580 + $0x200] sm:$0xff]
  %v5646 = vld [vmem:[%s5580 + $0x208] sm:$0xff]
  %v5647 = vld [vmem:[%s5580 + $0x210] sm:$0xff]
  %v5648 = vld [vmem:[%s5580 + $0x218] sm:$0xff]
  %v5649 = vld [vmem:[%s5580 + $0x220] sm:$0xff]
  %v5650 = vld [vmem:[%s5580 + $0x228] sm:$0xff]
  %v5651 = vld [vmem:[%s5580 + $0x230] sm:$0xff]
  %v5652 = vld [vmem:[%s5580 + $0x238] sm:$0xff]
  %v5653 = vld [vmem:[#allocation2] sm:$0xff]
  %v5654 = vld [vmem:[#allocation2 + $0x8] sm:$0xff]
  %v5655 = vld [vmem:[#allocation2 + $0x10] sm:$0xff]
  %v5656 = vld [vmem:[#allocation2 + $0x18] sm:$0xff]
  %v5657 = vld [vmem:[#allocation2 + $0x20] sm:$0xff]
  %v5658 = vld [vmem:[#allocation2 + $0x28] sm:$0xff]
  %v5659 = vld [vmem:[#allocation2 + $0x30] sm:$0xff]
  %v5660 = vld [vmem:[#allocation2 + $0x38] sm:$0xff]
  %v5661 = vld [vmem:[#allocation2 + $0x40] sm:$0xff]
  %v5662 = vld [vmem:[#allocation2 + $0x48] sm:$0xff]
  %v5663 = vld [vmem:[#allocation2 + $0x50] sm:$0xff]
  %v5664 = vld [vmem:[#allocation2 + $0x58] sm:$0xff]
  %v5665 = vld [vmem:[#allocation2 + $0x60] sm:$0xff]
  %v5666 = vld [vmem:[#allocation2 + $0x68] sm:$0xff]
  %v5667 = vld [vmem:[#allocation2 + $0x70] sm:$0xff]
  %v5668 = vld [vmem:[#allocation2 + $0x78] sm:$0xff]
  %v5669 = vld [vmem:[#allocation2 + $0x80] sm:$0xff]
  %v5670 = vld [vmem:[#allocation2 + $0x88] sm:$0xff]
  %v5671 = vld [vmem:[#allocation2 + $0x90] sm:$0xff]
  %v5672 = vld [vmem:[#allocation2 + $0x98] sm:$0xff]
  %v5673 = vld [vmem:[#allocation2 + $0xa0] sm:$0xff]
  %v5674 = vld [vmem:[#allocation2 + $0xa8] sm:$0xff]
  %v5675 = vld [vmem:[#allocation2 + $0xb0] sm:$0xff]
  %v5676 = vld [vmem:[#allocation2 + $0xb8] sm:$0xff]
  %v5677 = vld [vmem:[#allocation2 + $0xc0] sm:$0xff]
  %v5678 = vld [vmem:[#allocation2 + $0xc8] sm:$0xff]
  %v5679 = vld [vmem:[#allocation2 + $0xd0] sm:$0xff]
  %v5680 = vld [vmem:[#allocation2 + $0xd8] sm:$0xff]
  %v5681 = vld [vmem:[#allocation2 + $0xe0] sm:$0xff]
  %v5682 = vld [vmem:[#allocation2 + $0xe8] sm:$0xff]
  %v5683 = vld [vmem:[#allocation2 + $0xf0] sm:$0xff]
  %v5684 = vld [vmem:[#allocation2 + $0xf8] sm:$0xff]
  %v5685 = vld [vmem:[#allocation2 + $0x100] sm:$0xff]
  %v5686 = vld [vmem:[#allocation2 + $0x108] sm:$0xff]
  %v5687 = vld [vmem:[#allocation2 + $0x110] sm:$0xff]
  %v5688 = vld [vmem:[#allocation2 + $0x118] sm:$0xff]
  %v5689 = vld [vmem:[#allocation2 + $0x120] sm:$0xff]
  %v5690 = vld [vmem:[#allocation2 + $0x128] sm:$0xff]
  %v5691 = vld [vmem:[#allocation2 + $0x130] sm:$0xff]
  %v5692 = vld [vmem:[#allocation2 + $0x138] sm:$0xff]
  %v5693 = vld [vmem:[#allocation2 + $0x140] sm:$0xff]
  %v5694 = vld [vmem:[#allocation2 + $0x148] sm:$0xff]
  %v5695 = vld [vmem:[#allocation2 + $0x150] sm:$0xff]
  %v5696 = vld [vmem:[#allocation2 + $0x158] sm:$0xff]
  %v5697 = vld [vmem:[#allocation2 + $0x160] sm:$0xff]
  %v5698 = vld [vmem:[#allocation2 + $0x168] sm:$0xff]
  %v5699 = vld [vmem:[#allocation2 + $0x170] sm:$0xff]
  %v5700 = vld [vmem:[#allocation2 + $0x178] sm:$0xff]
  %v5701 = vld [vmem:[#allocation2 + $0x180] sm:$0xff]
  %v5702 = vld [vmem:[#allocation2 + $0x188] sm:$0xff]
  %v5703 = vld [vmem:[#allocation2 + $0x190] sm:$0xff]
  %v5704 = vld [vmem:[#allocation2 + $0x198] sm:$0xff]
  %v5705 = vld [vmem:[#allocation2 + $0x1a0] sm:$0xff]
  %v5706 = vld [vmem:[#allocation2 + $0x1a8] sm:$0xff]
  %v5707 = vld [vmem:[#allocation2 + $0x1b0] sm:$0xff]
  %v5708 = vld [vmem:[#allocation2 + $0x1b8] sm:$0xff]
  %v5709 = vld [vmem:[#allocation2 + $0x1c0] sm:$0xff]
  %v5710 = vld [vmem:[#allocation2 + $0x1c8] sm:$0xff]
  %v5711 = vld [vmem:[#allocation2 + $0x1d0] sm:$0xff]
  %v5712 = vld [vmem:[#allocation2 + $0x1d8] sm:$0xff]
  %v5713 = vld [vmem:[#allocation2 + $0x1e0] sm:$0xff]
  %v5714 = vld [vmem:[#allocation2 + $0x1e8] sm:$0xff]
  %v5715 = vld [vmem:[#allocation2 + $0x1f0] sm:$0xff]
  %v5716 = vld [vmem:[#allocation2 + $0x1f8] sm:$0xff]
  %v5717 = vld [vmem:[#allocation2 + $0x200] sm:$0xff]
  %v5718 = vld [vmem:[#allocation2 + $0x208] sm:$0xff]
  %v5719 = vld [vmem:[#allocation2 + $0x210] sm:$0xff]
  %v5720 = vld [vmem:[#allocation2 + $0x218] sm:$0xff]
  %v5721 = vld [vmem:[#allocation2 + $0x220] sm:$0xff]
  %v5722 = vld [vmem:[#allocation2 + $0x228] sm:$0xff]
  %v5723 = vld [vmem:[#allocation2 + $0x230] sm:$0xff]
  %v5724 = vld [vmem:[#allocation2 + $0x238] sm:$0xff]
  %v5725 = vunpack.c.l.bf16 %v5581
  %v5726 = vunpack.c.h.bf16 %v5581
  %v5727 = vunpack.c.l.bf16 %v5582
  %v5728 = vunpack.c.h.bf16 %v5582
  %v5729 = vunpack.c.l.bf16 %v5583
  %v5730 = vunpack.c.h.bf16 %v5583
  %v5731 = vunpack.c.l.bf16 %v5584
  %v5732 = vunpack.c.h.bf16 %v5584
  %v5733 = vunpack.c.l.bf16 %v5585
  %v5734 = vunpack.c.h.bf16 %v5585
  %v5735 = vunpack.c.l.bf16 %v5586
  %v5736 = vunpack.c.h.bf16 %v5586
  %v5737 = vunpack.c.l.bf16 %v5587
  %v5738 = vunpack.c.h.bf16 %v5587
  %v5739 = vunpack.c.l.bf16 %v5588
  %v5740 = vunpack.c.h.bf16 %v5588
  %v5741 = vunpack.c.l.bf16 %v5589
  %v5742 = vunpack.c.h.bf16 %v5589
  %v5743 = vunpack.c.l.bf16 %v5590
  %v5744 = vunpack.c.h.bf16 %v5590
  %v5745 = vunpack.c.l.bf16 %v5591
  %v5746 = vunpack.c.h.bf16 %v5591
  %v5747 = vunpack.c.l.bf16 %v5592
  %v5748 = vunpack.c.h.bf16 %v5592
  %v5749 = vunpack.c.l.bf16 %v5593
  %v5750 = vunpack.c.h.bf16 %v5593
  %v5751 = vunpack.c.l.bf16 %v5594
  %v5752 = vunpack.c.h.bf16 %v5594
  %v5753 = vunpack.c.l.bf16 %v5595
  %v5754 = vunpack.c.h.bf16 %v5595
  %v5755 = vunpack.c.l.bf16 %v5596
  %v5756 = vunpack.c.h.bf16 %v5596
  %v5757 = vunpack.c.l.bf16 %v5597
  %v5758 = vunpack.c.h.bf16 %v5597
  %v5759 = vunpack.c.l.bf16 %v5598
  %v5760 = vunpack.c.h.bf16 %v5598
  %v5761 = vunpack.c.l.bf16 %v5599
  %v5762 = vunpack.c.h.bf16 %v5599
  %v5763 = vunpack.c.l.bf16 %v5600
  %v5764 = vunpack.c.h.bf16 %v5600
  %v5765 = vunpack.c.l.bf16 %v5601
  %v5766 = vunpack.c.h.bf16 %v5601
  %v5767 = vunpack.c.l.bf16 %v5602
  %v5768 = vunpack.c.h.bf16 %v5602
  %v5769 = vunpack.c.l.bf16 %v5603
  %v5770 = vunpack.c.h.bf16 %v5603
  %v5771 = vunpack.c.l.bf16 %v5604
  %v5772 = vunpack.c.h.bf16 %v5604
  %v5773 = vunpack.c.l.bf16 %v5605
  %v5774 = vunpack.c.h.bf16 %v5605
  %v5775 = vunpack.c.l.bf16 %v5606
  %v5776 = vunpack.c.h.bf16 %v5606
  %v5777 = vunpack.c.l.bf16 %v5607
  %v5778 = vunpack.c.h.bf16 %v5607
  %v5779 = vunpack.c.l.bf16 %v5608
  %v5780 = vunpack.c.h.bf16 %v5608
  %v5781 = vunpack.c.l.bf16 %v5609
  %v5782 = vunpack.c.h.bf16 %v5609
  %v5783 = vunpack.c.l.bf16 %v5610
  %v5784 = vunpack.c.h.bf16 %v5610
  %v5785 = vunpack.c.l.bf16 %v5611
  %v5786 = vunpack.c.h.bf16 %v5611
  %v5787 = vunpack.c.l.bf16 %v5612
  %v5788 = vunpack.c.h.bf16 %v5612
  %v5789 = vunpack.c.l.bf16 %v5613
  %v5790 = vunpack.c.h.bf16 %v5613
  %v5791 = vunpack.c.l.bf16 %v5614
  %v5792 = vunpack.c.h.bf16 %v5614
  %v5793 = vunpack.c.l.bf16 %v5615
  %v5794 = vunpack.c.h.bf16 %v5615
  %v5795 = vunpack.c.l.bf16 %v5616
  %v5796 = vunpack.c.h.bf16 %v5616
  %v5797 = vunpack.c.l.bf16 %v5617
  %v5798 = vunpack.c.h.bf16 %v5617
  %v5799 = vunpack.c.l.bf16 %v5618
  %v5800 = vunpack.c.h.bf16 %v5618
  %v5801 = vunpack.c.l.bf16 %v5619
  %v5802 = vunpack.c.h.bf16 %v5619
  %v5803 = vunpack.c.l.bf16 %v5620
  %v5804 = vunpack.c.h.bf16 %v5620
  %v5805 = vunpack.c.l.bf16 %v5621
  %v5806 = vunpack.c.h.bf16 %v5621
  %v5807 = vunpack.c.l.bf16 %v5622
  %v5808 = vunpack.c.h.bf16 %v5622
  %v5809 = vunpack.c.l.bf16 %v5623
  %v5810 = vunpack.c.h.bf16 %v5623
  %v5811 = vunpack.c.l.bf16 %v5624
  %v5812 = vunpack.c.h.bf16 %v5624
  %v5813 = vunpack.c.l.bf16 %v5625
  %v5814 = vunpack.c.h.bf16 %v5625
  %v5815 = vunpack.c.l.bf16 %v5626
  %v5816 = vunpack.c.h.bf16 %v5626
  %v5817 = vunpack.c.l.bf16 %v5627
  %v5818 = vunpack.c.h.bf16 %v5627
  %v5819 = vunpack.c.l.bf16 %v5628
  %v5820 = vunpack.c.h.bf16 %v5628
  %v5821 = vunpack.c.l.bf16 %v5629
  %v5822 = vunpack.c.h.bf16 %v5629
  %v5823 = vunpack.c.l.bf16 %v5630
  %v5824 = vunpack.c.h.bf16 %v5630
  %v5825 = vunpack.c.l.bf16 %v5631
  %v5826 = vunpack.c.h.bf16 %v5631
  %v5827 = vunpack.c.l.bf16 %v5632
  %v5828 = vunpack.c.h.bf16 %v5632
  %v5829 = vunpack.c.l.bf16 %v5633
  %v5830 = vunpack.c.h.bf16 %v5633
  %v5831 = vunpack.c.l.bf16 %v5634
  %v5832 = vunpack.c.h.bf16 %v5634
  %v5833 = vunpack.c.l.bf16 %v5635
  %v5834 = vunpack.c.h.bf16 %v5635
  %v5835 = vunpack.c.l.bf16 %v5636
  %v5836 = vunpack.c.h.bf16 %v5636
  %v5837 = vunpack.c.l.bf16 %v5637
  %v5838 = vunpack.c.h.bf16 %v5637
  %v5839 = vunpack.c.l.bf16 %v5638
  %v5840 = vunpack.c.h.bf16 %v5638
  %v5841 = vunpack.c.l.bf16 %v5639
  %v5842 = vunpack.c.h.bf16 %v5639
  %v5843 = vunpack.c.l.bf16 %v5640
  %v5844 = vunpack.c.h.bf16 %v5640
  %v5845 = vunpack.c.l.bf16 %v5641
  %v5846 = vunpack.c.h.bf16 %v5641
  %v5847 = vunpack.c.l.bf16 %v5642
  %v5848 = vunpack.c.h.bf16 %v5642
  %v5849 = vunpack.c.l.bf16 %v5643
  %v5850 = vunpack.c.h.bf16 %v5643
  %v5851 = vunpack.c.l.bf16 %v5644
  %v5852 = vunpack.c.h.bf16 %v5644
  %v5853 = vunpack.c.l.bf16 %v5645
  %v5854 = vunpack.c.h.bf16 %v5645
  %v5855 = vunpack.c.l.bf16 %v5646
  %v5856 = vunpack.c.h.bf16 %v5646
  %v5857 = vunpack.c.l.bf16 %v5647
  %v5858 = vunpack.c.h.bf16 %v5647
  %v5859 = vunpack.c.l.bf16 %v5648
  %v5860 = vunpack.c.h.bf16 %v5648
  %v5861 = vunpack.c.l.bf16 %v5649
  %v5862 = vunpack.c.h.bf16 %v5649
  %v5863 = vunpack.c.l.bf16 %v5650
  %v5864 = vunpack.c.h.bf16 %v5650
  %v5865 = vunpack.c.l.bf16 %v5651
  %v5866 = vunpack.c.h.bf16 %v5651
  %v5867 = vunpack.c.l.bf16 %v5652
  %v5868 = vunpack.c.h.bf16 %v5652
  %5870 = vset.pattern.permute.xlu0 1
  %5871 = vperm.xlu0 %5870, %v5653
  %v5872 = vpop.permute.xlu0 %5871
  %5875 = vset.pattern.permute.xlu0 1
  %5876 = vperm.xlu0 %5875, %v5654
  %v5877 = vpop.permute.xlu0 %5876
  %5880 = vset.pattern.permute.xlu0 1
  %5881 = vperm.xlu0 %5880, %v5655
  %v5882 = vpop.permute.xlu0 %5881
  %5885 = vset.pattern.permute.xlu0 1
  %5886 = vperm.xlu0 %5885, %v5656
  %v5887 = vpop.permute.xlu0 %5886
  %5890 = vset.pattern.permute.xlu0 1
  %5891 = vperm.xlu0 %5890, %v5657
  %v5892 = vpop.permute.xlu0 %5891
  %5895 = vset.pattern.permute.xlu0 1
  %5896 = vperm.xlu0 %5895, %v5658
  %v5897 = vpop.permute.xlu0 %5896
  %5900 = vset.pattern.permute.xlu0 1
  %5901 = vperm.xlu0 %5900, %v5659
  %v5902 = vpop.permute.xlu0 %5901
  %5905 = vset.pattern.permute.xlu0 1
  %5906 = vperm.xlu0 %5905, %v5660
  %v5907 = vpop.permute.xlu0 %5906
  %5910 = vset.pattern.permute.xlu0 1
  %5911 = vperm.xlu0 %5910, %v5661
  %v5912 = vpop.permute.xlu0 %5911
  %5915 = vset.pattern.permute.xlu0 1
  %5916 = vperm.xlu0 %5915, %v5662
  %v5917 = vpop.permute.xlu0 %5916
  %5920 = vset.pattern.permute.xlu0 1
  %5921 = vperm.xlu0 %5920, %v5663
  %v5922 = vpop.permute.xlu0 %5921
  %5925 = vset.pattern.permute.xlu0 1
  %5926 = vperm.xlu0 %5925, %v5664
  %v5927 = vpop.permute.xlu0 %5926
  %5930 = vset.pattern.permute.xlu0 1
  %5931 = vperm.xlu0 %5930, %v5665
  %v5932 = vpop.permute.xlu0 %5931
  %5935 = vset.pattern.permute.xlu0 1
  %5936 = vperm.xlu0 %5935, %v5666
  %v5937 = vpop.permute.xlu0 %5936
  %5940 = vset.pattern.permute.xlu0 1
  %5941 = vperm.xlu0 %5940, %v5667
  %v5942 = vpop.permute.xlu0 %5941
  %5945 = vset.pattern.permute.xlu0 1
  %5946 = vperm.xlu0 %5945, %v5668
  %v5947 = vpop.permute.xlu0 %5946
  %5950 = vset.pattern.permute.xlu0 1
  %5951 = vperm.xlu0 %5950, %v5669
  %v5952 = vpop.permute.xlu0 %5951
  %5955 = vset.pattern.permute.xlu0 1
  %5956 = vperm.xlu0 %5955, %v5670
  %v5957 = vpop.permute.xlu0 %5956
  %5960 = vset.pattern.permute.xlu0 1
  %5961 = vperm.xlu0 %5960, %v5671
  %v5962 = vpop.permute.xlu0 %5961
  %5965 = vset.pattern.permute.xlu0 1
  %5966 = vperm.xlu0 %5965, %v5672
  %v5967 = vpop.permute.xlu0 %5966
  %5970 = vset.pattern.permute.xlu0 1
  %5971 = vperm.xlu0 %5970, %v5673
  %v5972 = vpop.permute.xlu0 %5971
  %5975 = vset.pattern.permute.xlu0 1
  %5976 = vperm.xlu0 %5975, %v5674
  %v5977 = vpop.permute.xlu0 %5976
  %5980 = vset.pattern.permute.xlu0 1
  %5981 = vperm.xlu0 %5980, %v5675
  %v5982 = vpop.permute.xlu0 %5981
  %5985 = vset.pattern.permute.xlu0 1
  %5986 = vperm.xlu0 %5985, %v5676
  %v5987 = vpop.permute.xlu0 %5986
  %5990 = vset.pattern.permute.xlu0 1
  %5991 = vperm.xlu0 %5990, %v5677
  %v5992 = vpop.permute.xlu0 %5991
  %5995 = vset.pattern.permute.xlu0 1
  %5996 = vperm.xlu0 %5995, %v5678
  %v5997 = vpop.permute.xlu0 %5996
  %6000 = vset.pattern.permute.xlu0 1
  %6001 = vperm.xlu0 %6000, %v5679
  %v6002 = vpop.permute.xlu0 %6001
  %6005 = vset.pattern.permute.xlu0 1
  %6006 = vperm.xlu0 %6005, %v5680
  %v6007 = vpop.permute.xlu0 %6006
  %6010 = vset.pattern.permute.xlu0 1
  %6011 = vperm.xlu0 %6010, %v5681
  %v6012 = vpop.permute.xlu0 %6011
  %6015 = vset.pattern.permute.xlu0 1
  %6016 = vperm.xlu0 %6015, %v5682
  %v6017 = vpop.permute.xlu0 %6016
  %6020 = vset.pattern.permute.xlu0 1
  %6021 = vperm.xlu0 %6020, %v5683
  %v6022 = vpop.permute.xlu0 %6021
  %6025 = vset.pattern.permute.xlu0 1
  %6026 = vperm.xlu0 %6025, %v5684
  %v6027 = vpop.permute.xlu0 %6026
  %6030 = vset.pattern.permute.xlu0 1
  %6031 = vperm.xlu0 %6030, %v5685
  %v6032 = vpop.permute.xlu0 %6031
  %6035 = vset.pattern.permute.xlu0 1
  %6036 = vperm.xlu0 %6035, %v5686
  %v6037 = vpop.permute.xlu0 %6036
  %6040 = vset.pattern.permute.xlu0 1
  %6041 = vperm.xlu0 %6040, %v5687
  %v6042 = vpop.permute.xlu0 %6041
  %6045 = vset.pattern.permute.xlu0 1
  %6046 = vperm.xlu0 %6045, %v5688
  %v6047 = vpop.permute.xlu0 %6046
  %6050 = vset.pattern.permute.xlu0 1
  %6051 = vperm.xlu0 %6050, %v5689
  %v6052 = vpop.permute.xlu0 %6051
  %6055 = vset.pattern.permute.xlu0 1
  %6056 = vperm.xlu0 %6055, %v5690
  %v6057 = vpop.permute.xlu0 %6056
  %6060 = vset.pattern.permute.xlu0 1
  %6061 = vperm.xlu0 %6060, %v5691
  %v6062 = vpop.permute.xlu0 %6061
  %6065 = vset.pattern.permute.xlu0 1
  %6066 = vperm.xlu0 %6065, %v5692
  %v6067 = vpop.permute.xlu0 %6066
  %6070 = vset.pattern.permute.xlu0 1
  %6071 = vperm.xlu0 %6070, %v5693
  %v6072 = vpop.permute.xlu0 %6071
  %6075 = vset.pattern.permute.xlu0 1
  %6076 = vperm.xlu0 %6075, %v5694
  %v6077 = vpop.permute.xlu0 %6076
  %6080 = vset.pattern.permute.xlu0 1
  %6081 = vperm.xlu0 %6080, %v5695
  %v6082 = vpop.permute.xlu0 %6081
  %6085 = vset.pattern.permute.xlu0 1
  %6086 = vperm.xlu0 %6085, %v5696
  %v6087 = vpop.permute.xlu0 %6086
  %6090 = vset.pattern.permute.xlu0 1
  %6091 = vperm.xlu0 %6090, %v5697
  %v6092 = vpop.permute.xlu0 %6091
  %6095 = vset.pattern.permute.xlu0 1
  %6096 = vperm.xlu0 %6095, %v5698
  %v6097 = vpop.permute.xlu0 %6096
  %6100 = vset.pattern.permute.xlu0 1
  %6101 = vperm.xlu0 %6100, %v5699
  %v6102 = vpop.permute.xlu0 %6101
  %6105 = vset.pattern.permute.xlu0 1
  %6106 = vperm.xlu0 %6105, %v5700
  %v6107 = vpop.permute.xlu0 %6106
  %6110 = vset.pattern.permute.xlu0 1
  %6111 = vperm.xlu0 %6110, %v5701
  %v6112 = vpop.permute.xlu0 %6111
  %6115 = vset.pattern.permute.xlu0 1
  %6116 = vperm.xlu0 %6115, %v5702
  %v6117 = vpop.permute.xlu0 %6116
  %6120 = vset.pattern.permute.xlu0 1
  %6121 = vperm.xlu0 %6120, %v5703
  %v6122 = vpop.permute.xlu0 %6121
  %6125 = vset.pattern.permute.xlu0 1
  %6126 = vperm.xlu0 %6125, %v5704
  %v6127 = vpop.permute.xlu0 %6126
  %6130 = vset.pattern.permute.xlu0 1
  %6131 = vperm.xlu0 %6130, %v5705
  %v6132 = vpop.permute.xlu0 %6131
  %6135 = vset.pattern.permute.xlu0 1
  %6136 = vperm.xlu0 %6135, %v5706
  %v6137 = vpop.permute.xlu0 %6136
  %6140 = vset.pattern.permute.xlu0 1
  %6141 = vperm.xlu0 %6140, %v5707
  %v6142 = vpop.permute.xlu0 %6141
  %6145 = vset.pattern.permute.xlu0 1
  %6146 = vperm.xlu0 %6145, %v5708
  %v6147 = vpop.permute.xlu0 %6146
  %6150 = vset.pattern.permute.xlu0 1
  %6151 = vperm.xlu0 %6150, %v5709
  %v6152 = vpop.permute.xlu0 %6151
  %6155 = vset.pattern.permute.xlu0 1
  %6156 = vperm.xlu0 %6155, %v5710
  %v6157 = vpop.permute.xlu0 %6156
  %6160 = vset.pattern.permute.xlu0 1
  %6161 = vperm.xlu0 %6160, %v5711
  %v6162 = vpop.permute.xlu0 %6161
  %6165 = vset.pattern.permute.xlu0 1
  %6166 = vperm.xlu0 %6165, %v5712
  %v6167 = vpop.permute.xlu0 %6166
  %6170 = vset.pattern.permute.xlu0 1
  %6171 = vperm.xlu0 %6170, %v5713
  %v6172 = vpop.permute.xlu0 %6171
  %6175 = vset.pattern.permute.xlu0 1
  %6176 = vperm.xlu0 %6175, %v5714
  %v6177 = vpop.permute.xlu0 %6176
  %6180 = vset.pattern.permute.xlu0 1
  %6181 = vperm.xlu0 %6180, %v5715
  %v6182 = vpop.permute.xlu0 %6181
  %6185 = vset.pattern.permute.xlu0 1
  %6186 = vperm.xlu0 %6185, %v5716
  %v6187 = vpop.permute.xlu0 %6186
  %6190 = vset.pattern.permute.xlu0 1
  %6191 = vperm.xlu0 %6190, %v5717
  %v6192 = vpop.permute.xlu0 %6191
  %6195 = vset.pattern.permute.xlu0 1
  %6196 = vperm.xlu0 %6195, %v5718
  %v6197 = vpop.permute.xlu0 %6196
  %6200 = vset.pattern.permute.xlu0 1
  %6201 = vperm.xlu0 %6200, %v5719
  %v6202 = vpop.permute.xlu0 %6201
  %6205 = vset.pattern.permute.xlu0 1
  %6206 = vperm.xlu0 %6205, %v5720
  %v6207 = vpop.permute.xlu0 %6206
  %6210 = vset.pattern.permute.xlu0 1
  %6211 = vperm.xlu0 %6210, %v5721
  %v6212 = vpop.permute.xlu0 %6211
  %6215 = vset.pattern.permute.xlu0 1
  %6216 = vperm.xlu0 %6215, %v5722
  %v6217 = vpop.permute.xlu0 %6216
  %6220 = vset.pattern.permute.xlu0 1
  %6221 = vperm.xlu0 %6220, %v5723
  %v6222 = vpop.permute.xlu0 %6221
  %6225 = vset.pattern.permute.xlu0 1
  %6226 = vperm.xlu0 %6225, %v5724
  %v6227 = vpop.permute.xlu0 %6226
  %v6229 = vmul.f32 %v5725, %v5872
  %v6230 = vmul.f32 %v5726, %v5872
  %v6231 = vmul.f32 %v5727, %v5877
  %v6232 = vmul.f32 %v5728, %v5877
  %v6233 = vmul.f32 %v5729, %v5882
  %v6234 = vmul.f32 %v5730, %v5882
  %v6235 = vmul.f32 %v5731, %v5887
  %v6236 = vmul.f32 %v5732, %v5887
  %v6237 = vmul.f32 %v5733, %v5892
  %v6238 = vmul.f32 %v5734, %v5892
  %v6239 = vmul.f32 %v5735, %v5897
  %v6240 = vmul.f32 %v5736, %v5897
  %v6241 = vmul.f32 %v5737, %v5902
  %v6242 = vmul.f32 %v5738, %v5902
  %v6243 = vmul.f32 %v5739, %v5907
  %v6244 = vmul.f32 %v5740, %v5907
  %v6245 = vmul.f32 %v5741, %v5912
  %v6246 = vmul.f32 %v5742, %v5912
  %v6247 = vmul.f32 %v5743, %v5917
  %v6248 = vmul.f32 %v5744, %v5917
  %v6249 = vmul.f32 %v5745, %v5922
  %v6250 = vmul.f32 %v5746, %v5922
  %v6251 = vmul.f32 %v5747, %v5927
  %v6252 = vmul.f32 %v5748, %v5927
  %v6253 = vmul.f32 %v5749, %v5932
  %v6254 = vmul.f32 %v5750, %v5932
  %v6255 = vmul.f32 %v5751, %v5937
  %v6256 = vmul.f32 %v5752, %v5937
  %v6257 = vmul.f32 %v5753, %v5942
  %v6258 = vmul.f32 %v5754, %v5942
  %v6259 = vmul.f32 %v5755, %v5947
  %v6260 = vmul.f32 %v5756, %v5947
  %v6261 = vmul.f32 %v5757, %v5952
  %v6262 = vmul.f32 %v5758, %v5952
  %v6263 = vmul.f32 %v5759, %v5957
  %v6264 = vmul.f32 %v5760, %v5957
  %v6265 = vmul.f32 %v5761, %v5962
  %v6266 = vmul.f32 %v5762, %v5962
  %v6267 = vmul.f32 %v5763, %v5967
  %v6268 = vmul.f32 %v5764, %v5967
  %v6269 = vmul.f32 %v5765, %v5972
  %v6270 = vmul.f32 %v5766, %v5972
  %v6271 = vmul.f32 %v5767, %v5977
  %v6272 = vmul.f32 %v5768, %v5977
  %v6273 = vmul.f32 %v5769, %v5982
  %v6274 = vmul.f32 %v5770, %v5982
  %v6275 = vmul.f32 %v5771, %v5987
  %v6276 = vmul.f32 %v5772, %v5987
  %v6277 = vmul.f32 %v5773, %v5992
  %v6278 = vmul.f32 %v5774, %v5992
  %v6279 = vmul.f32 %v5775, %v5997
  %v6280 = vmul.f32 %v5776, %v5997
  %v6281 = vmul.f32 %v5777, %v6002
  %v6282 = vmul.f32 %v5778, %v6002
  %v6283 = vmul.f32 %v5779, %v6007
  %v6284 = vmul.f32 %v5780, %v6007
  %v6285 = vmul.f32 %v5781, %v6012
  %v6286 = vmul.f32 %v5782, %v6012
  %v6287 = vmul.f32 %v5783, %v6017
  %v6288 = vmul.f32 %v5784, %v6017
  %v6289 = vmul.f32 %v5785, %v6022
  %v6290 = vmul.f32 %v5786, %v6022
  %v6291 = vmul.f32 %v5787, %v6027
  %v6292 = vmul.f32 %v5788, %v6027
  %v6293 = vmul.f32 %v5789, %v6032
  %v6294 = vmul.f32 %v5790, %v6032
  %v6295 = vmul.f32 %v5791, %v6037
  %v6296 = vmul.f32 %v5792, %v6037
  %v6297 = vmul.f32 %v5793, %v6042
  %v6298 = vmul.f32 %v5794, %v6042
  %v6299 = vmul.f32 %v5795, %v6047
  %v6300 = vmul.f32 %v5796, %v6047
  %v6301 = vmul.f32 %v5797, %v6052
  %v6302 = vmul.f32 %v5798, %v6052
  %v6303 = vmul.f32 %v5799, %v6057
  %v6304 = vmul.f32 %v5800, %v6057
  %v6305 = vmul.f32 %v5801, %v6062
  %v6306 = vmul.f32 %v5802, %v6062
  %v6307 = vmul.f32 %v5803, %v6067
  %v6308 = vmul.f32 %v5804, %v6067
  %v6309 = vmul.f32 %v5805, %v6072
  %v6310 = vmul.f32 %v5806, %v6072
  %v6311 = vmul.f32 %v5807, %v6077
  %v6312 = vmul.f32 %v5808, %v6077
  %v6313 = vmul.f32 %v5809, %v6082
  %v6314 = vmul.f32 %v5810, %v6082
  %v6315 = vmul.f32 %v5811, %v6087
  %v6316 = vmul.f32 %v5812, %v6087
  %v6317 = vmul.f32 %v5813, %v6092
  %v6318 = vmul.f32 %v5814, %v6092
  %v6319 = vmul.f32 %v5815, %v6097
  %v6320 = vmul.f32 %v5816, %v6097
  %v6321 = vmul.f32 %v5817, %v6102
  %v6322 = vmul.f32 %v5818, %v6102
  %v6323 = vmul.f32 %v5819, %v6107
  %v6324 = vmul.f32 %v5820, %v6107
  %v6325 = vmul.f32 %v5821, %v6112
  %v6326 = vmul.f32 %v5822, %v6112
  %v6327 = vmul.f32 %v5823, %v6117
  %v6328 = vmul.f32 %v5824, %v6117
  %v6329 = vmul.f32 %v5825, %v6122
  %v6330 = vmul.f32 %v5826, %v6122
  %v6331 = vmul.f32 %v5827, %v6127
  %v6332 = vmul.f32 %v5828, %v6127
  %v6333 = vmul.f32 %v5829, %v6132
  %v6334 = vmul.f32 %v5830, %v6132
  %v6335 = vmul.f32 %v5831, %v6137
  %v6336 = vmul.f32 %v5832, %v6137
  %v6337 = vmul.f32 %v5833, %v6142
  %v6338 = vmul.f32 %v5834, %v6142
  %v6339 = vmul.f32 %v5835, %v6147
  %v6340 = vmul.f32 %v5836, %v6147
  %v6341 = vmul.f32 %v5837, %v6152
  %v6342 = vmul.f32 %v5838, %v6152
  %v6343 = vmul.f32 %v5839, %v6157
  %v6344 = vmul.f32 %v5840, %v6157
  %v6345 = vmul.f32 %v5841, %v6162
  %v6346 = vmul.f32 %v5842, %v6162
  %v6347 = vmul.f32 %v5843, %v6167
  %v6348 = vmul.f32 %v5844, %v6167
  %v6349 = vmul.f32 %v5845, %v6172
  %v6350 = vmul.f32 %v5846, %v6172
  %v6351 = vmul.f32 %v5847, %v6177
  %v6352 = vmul.f32 %v5848, %v6177
  %v6353 = vmul.f32 %v5849, %v6182
  %v6354 = vmul.f32 %v5850, %v6182
  %v6355 = vmul.f32 %v5851, %v6187
  %v6356 = vmul.f32 %v5852, %v6187
  %v6357 = vmul.f32 %v5853, %v6192
  %v6358 = vmul.f32 %v5854, %v6192
  %v6359 = vmul.f32 %v5855, %v6197
  %v6360 = vmul.f32 %v5856, %v6197
  %v6361 = vmul.f32 %v5857, %v6202
  %v6362 = vmul.f32 %v5858, %v6202
  %v6363 = vmul.f32 %v5859, %v6207
  %v6364 = vmul.f32 %v5860, %v6207
  %v6365 = vmul.f32 %v5861, %v6212
  %v6366 = vmul.f32 %v5862, %v6212
  %v6367 = vmul.f32 %v5863, %v6217
  %v6368 = vmul.f32 %v5864, %v6217
  %v6369 = vmul.f32 %v5865, %v6222
  %v6370 = vmul.f32 %v5866, %v6222
  %v6371 = vmul.f32 %v5867, %v6227
  %v6372 = vmul.f32 %v5868, %v6227
  %v6373 = vpack.c.bf16 %v6231, %v6229
  %v6374 = vpack.c.bf16 %v6232, %v6230
  %v6375 = vpack.c.bf16 %v6235, %v6233
  %v6376 = vpack.c.bf16 %v6236, %v6234
  %v6377 = vpack.c.bf16 %v6239, %v6237
  %v6378 = vpack.c.bf16 %v6240, %v6238
  %v6379 = vpack.c.bf16 %v6243, %v6241
  %v6380 = vpack.c.bf16 %v6244, %v6242
  %v6381 = vpack.c.bf16 %v6247, %v6245
  %v6382 = vpack.c.bf16 %v6248, %v6246
  %v6383 = vpack.c.bf16 %v6251, %v6249
  %v6384 = vpack.c.bf16 %v6252, %v6250
  %v6385 = vpack.c.bf16 %v6255, %v6253
  %v6386 = vpack.c.bf16 %v6256, %v6254
  %v6387 = vpack.c.bf16 %v6259, %v6257
  %v6388 = vpack.c.bf16 %v6260, %v6258
  %v6389 = vpack.c.bf16 %v6263, %v6261
  %v6390 = vpack.c.bf16 %v6264, %v6262
  %v6391 = vpack.c.bf16 %v6267, %v6265
  %v6392 = vpack.c.bf16 %v6268, %v6266
  %v6393 = vpack.c.bf16 %v6271, %v6269
  %v6394 = vpack.c.bf16 %v6272, %v6270
  %v6395 = vpack.c.bf16 %v6275, %v6273
  %v6396 = vpack.c.bf16 %v6276, %v6274
  %v6397 = vpack.c.bf16 %v6279, %v6277
  %v6398 = vpack.c.bf16 %v6280, %v6278
  %v6399 = vpack.c.bf16 %v6283, %v6281
  %v6400 = vpack.c.bf16 %v6284, %v6282
  %v6401 = vpack.c.bf16 %v6287, %v6285
  %v6402 = vpack.c.bf16 %v6288, %v6286
  %v6403 = vpack.c.bf16 %v6291, %v6289
  %v6404 = vpack.c.bf16 %v6292, %v6290
  %v6405 = vpack.c.bf16 %v6295, %v6293
  %v6406 = vpack.c.bf16 %v6296, %v6294
  %v6407 = vpack.c.bf16 %v6299, %v6297
  %v6408 = vpack.c.bf16 %v6300, %v6298
  %v6409 = vpack.c.bf16 %v6303, %v6301
  %v6410 = vpack.c.bf16 %v6304, %v6302
  %v6411 = vpack.c.bf16 %v6307, %v6305
  %v6412 = vpack.c.bf16 %v6308, %v6306
  %v6413 = vpack.c.bf16 %v6311, %v6309
  %v6414 = vpack.c.bf16 %v6312, %v6310
  %v6415 = vpack.c.bf16 %v6315, %v6313
  %v6416 = vpack.c.bf16 %v6316, %v6314
  %v6417 = vpack.c.bf16 %v6319, %v6317
  %v6418 = vpack.c.bf16 %v6320, %v6318
  %v6419 = vpack.c.bf16 %v6323, %v6321
  %v6420 = vpack.c.bf16 %v6324, %v6322
  %v6421 = vpack.c.bf16 %v6327, %v6325
  %v6422 = vpack.c.bf16 %v6328, %v6326
  %v6423 = vpack.c.bf16 %v6331, %v6329
  %v6424 = vpack.c.bf16 %v6332, %v6330
  %v6425 = vpack.c.bf16 %v6335, %v6333
  %v6426 = vpack.c.bf16 %v6336, %v6334
  %v6427 = vpack.c.bf16 %v6339, %v6337
  %v6428 = vpack.c.bf16 %v6340, %v6338
  %v6429 = vpack.c.bf16 %v6343, %v6341
  %v6430 = vpack.c.bf16 %v6344, %v6342
  %v6431 = vpack.c.bf16 %v6347, %v6345
  %v6432 = vpack.c.bf16 %v6348, %v6346
  %v6433 = vpack.c.bf16 %v6351, %v6349
  %v6434 = vpack.c.bf16 %v6352, %v6350
  %v6435 = vpack.c.bf16 %v6355, %v6353
  %v6436 = vpack.c.bf16 %v6356, %v6354
  %v6437 = vpack.c.bf16 %v6359, %v6357
  %v6438 = vpack.c.bf16 %v6360, %v6358
  %v6439 = vpack.c.bf16 %v6363, %v6361
  %v6440 = vpack.c.bf16 %v6364, %v6362
  %v6441 = vpack.c.bf16 %v6367, %v6365
  %v6442 = vpack.c.bf16 %v6368, %v6366
  %v6443 = vpack.c.bf16 %v6371, %v6369
  %v6444 = vpack.c.bf16 %v6372, %v6370
  %6445 = vmatprep.subr.bf16.mxu0 %v6374
  %6446 = vmatpush1.bf16.msra.mxu0 %v6373
  %6447 = vmatprep.subr.bf16.mxu0 %v6376
  %6448 = vmatpush1.bf16.msra.mxu0 %v6375
  %6449 = vmatprep.subr.bf16.mxu0 %v6378
  %6450 = vmatpush1.bf16.msra.mxu0 %v6377
  %6451 = vmatprep.subr.bf16.mxu0 %v6380
  %6452 = vmatpush1.bf16.msra.mxu0 %v6379
  %6453 = vmatprep.subr.bf16.mxu0 %v6382
  %6454 = vmatpush1.bf16.msra.mxu0 %v6381
  %6455 = vmatprep.subr.bf16.mxu0 %v6384
  %6456 = vmatpush1.bf16.msra.mxu0 %v6383
  %6457 = vmatprep.subr.bf16.mxu0 %v6386
  %6458 = vmatpush1.bf16.msra.mxu0 %v6385
  %6459 = vmatprep.subr.bf16.mxu0 %v6388
  %6460 = vmatpush1.bf16.msra.mxu0 %v6387
  %6461 = vmatprep.subr.bf16.mxu0 %v6390
  %6462 = vmatpush1.bf16.msra.mxu0 %v6389
  %6463 = vmatprep.subr.bf16.mxu0 %v6392
  %6464 = vmatpush1.bf16.msra.mxu0 %v6391
  %6465 = vmatprep.subr.bf16.mxu0 %v6394
  %6466 = vmatpush1.bf16.msra.mxu0 %v6393
  %6467 = vmatprep.subr.bf16.mxu0 %v6396
  %6468 = vmatpush1.bf16.msra.mxu0 %v6395
  %6469 = vmatprep.subr.bf16.mxu0 %v6398
  %6470 = vmatpush1.bf16.msra.mxu0 %v6397
  %6471 = vmatprep.subr.bf16.mxu0 %v6400
  %6472 = vmatpush1.bf16.msra.mxu0 %v6399
  %6473 = vmatprep.subr.bf16.mxu0 %v6402
  %6474 = vmatpush1.bf16.msra.mxu0 %v6401
  %6475 = vmatprep.subr.bf16.mxu0 %v6404
  %6476 = vmatpush1.bf16.msra.mxu0 %v6403
  %6477 = vmatprep.mubr.bf16.mxu0 %v3462
  %6478 = vmatmul.mubr.bf16.gmra.mrb[0].mxu0 %v3461
  %v6479 = vpop.f32.mrb[0].mxu0
  %v6480 = vadd.f32 0.0, %v6479
  %v6481 = vpop.f32.mrb[0].mxu0
  %v6482 = vadd.f32 0.0, %v6481
  %v6483 = vpop.f32.mrb[0].mxu0
  %v6484 = vadd.f32 0.0, %v6483
  %v6485 = vpop.f32.mrb[0].mxu0
  %v6486 = vadd.f32 0.0, %v6485
  %6487 = vmatprep.mubr.bf16.mxu0 %v3467
  %6488 = vmatmul.mubr.bf16.gmra.mrb[0].mxu0 %v3466
  %v6489 = vpop.f32.mrb[0].mxu0
  %v6490 = vadd.f32 0.0, %v6489
  %v6491 = vpop.f32.mrb[0].mxu0
  %v6492 = vadd.f32 0.0, %v6491
  %v6493 = vpop.f32.mrb[0].mxu0
  %v6494 = vadd.f32 0.0, %v6493
  %v6495 = vpop.f32.mrb[0].mxu0
  %v6496 = vadd.f32 0.0, %v6495
  %6497 = vmatprep.mubr.bf16.mxu0 %v3472
  %6498 = vmatmul.mubr.bf16.gmra.mrb[0].mxu0 %v3471
  %v6499 = vpop.f32.mrb[0].mxu0
  %v6500 = vadd.f32 0.0, %v6499
  %v6501 = vpop.f32.mrb[0].mxu0
  %v6502 = vadd.f32 0.0, %v6501
  %v6503 = vpop.f32.mrb[0].mxu0
  %v6504 = vadd.f32 0.0, %v6503
  %v6505 = vpop.f32.mrb[0].mxu0
  %v6506 = vadd.f32 0.0, %v6505
  %6507 = vmatprep.mubr.bf16.mxu0 %v3477
  %6508 = vmatmul.mubr.bf16.gmra.mrb[0].mxu0 %v3476
  %v6509 = vpop.f32.mrb[0].mxu0
  %v6510 = vadd.f32 0.0, %v6509
  %v6511 = vpop.f32.mrb[0].mxu0
  %v6512 = vadd.f32 0.0, %v6511
  %v6513 = vpop.f32.mrb[0].mxu0
  %v6514 = vadd.f32 0.0, %v6513
  %v6515 = vpop.f32.mrb[0].mxu0
  %v6516 = vadd.f32 0.0, %v6515
  %6517 = vmatprep.mubr.bf16.mxu0 %v3482
  %6518 = vmatmul.mubr.bf16.gmra.mrb[0].mxu0 %v3481
  %v6519 = vpop.f32.mrb[0].mxu0
  %v6520 = vadd.f32 0.0, %v6519
  %v6521 = vpop.f32.mrb[0].mxu0
  %v6522 = vadd.f32 0.0, %v6521
  %v6523 = vpop.f32.mrb[0].mxu0
  %v6524 = vadd.f32 0.0, %v6523
  %v6525 = vpop.f32.mrb[0].mxu0
  %v6526 = vadd.f32 0.0, %v6525
  %6527 = vmatprep.mubr.bf16.mxu0 %v3487
  %6528 = vmatmul.mubr.bf16.gmra.mrb[0].mxu0 %v3486
  %v6529 = vpop.f32.mrb[0].mxu0
  %v6530 = vadd.f32 0.0, %v6529
  %v6531 = vpop.f32.mrb[0].mxu0
  %v6532 = vadd.f32 0.0, %v6531
  %v6533 = vpop.f32.mrb[0].mxu0
  %v6534 = vadd.f32 0.0, %v6533
  %v6535 = vpop.f32.mrb[0].mxu0
  %v6536 = vadd.f32 0.0, %v6535
  %6537 = vmatprep.mubr.bf16.mxu0 %v3492
  %6538 = vmatmul.mubr.bf16.gmra.mrb[0].mxu0 %v3491
  %v6539 = vpop.f32.mrb[0].mxu0
  %v6540 = vadd.f32 0.0, %v6539
  %v6541 = vpop.f32.mrb[0].mxu0
  %v6542 = vadd.f32 0.0, %v6541
  %v6543 = vpop.f32.mrb[0].mxu0
  %v6544 = vadd.f32 0.0, %v6543
  %v6545 = vpop.f32.mrb[0].mxu0
  %v6546 = vadd.f32 0.0, %v6545
  %6547 = vmatprep.mubr.bf16.mxu0 %v3497
  %6548 = vmatmul.mubr.bf16.gmra.mrb[0].mxu0 %v3496
  %v6549 = vpop.f32.mrb[0].mxu0
  %v6550 = vadd.f32 0.0, %v6549
  %v6551 = vpop.f32.mrb[0].mxu0
  %v6552 = vadd.f32 0.0, %v6551
  %v6553 = vpop.f32.mrb[0].mxu0
  %v6554 = vadd.f32 0.0, %v6553
  %v6555 = vpop.f32.mrb[0].mxu0
  %v6556 = vadd.f32 0.0, %v6555
  %6557 = vmatprep.mubr.bf16.mxu0 %v3502
  %6558 = vmatmul.mubr.bf16.gmra.mrb[0].mxu0 %v3501
  %v6559 = vpop.f32.mrb[0].mxu0
  %v6560 = vadd.f32 0.0, %v6559
  %v6561 = vpop.f32.mrb[0].mxu0
  %v6562 = vadd.f32 0.0, %v6561
  %v6563 = vpop.f32.mrb[0].mxu0
  %v6564 = vadd.f32 0.0, %v6563
  %v6565 = vpop.f32.mrb[0].mxu0
  %v6566 = vadd.f32 0.0, %v6565
  %6567 = vmatprep.mubr.bf16.mxu0 %v3507
  %6568 = vmatmul.mubr.bf16.gmra.mrb[0].mxu0 %v3506
  %v6569 = vpop.f32.mrb[0].mxu0
  %v6570 = vadd.f32 0.0, %v6569
  %v6571 = vpop.f32.mrb[0].mxu0
  %v6572 = vadd.f32 0.0, %v6571
  %v6573 = vpop.f32.mrb[0].mxu0
  %v6574 = vadd.f32 0.0, %v6573
  %v6575 = vpop.f32.mrb[0].mxu0
  %v6576 = vadd.f32 0.0, %v6575
  %6577 = vmatprep.mubr.bf16.mxu0 %v3512
  %6578 = vmatmul.mubr.bf16.gmra.mrb[0].mxu0 %v3511
  %v6579 = vpop.f32.mrb[0].mxu0
  %v6580 = vadd.f32 0.0, %v6579
  %v6581 = vpop.f32.mrb[0].mxu0
  %v6582 = vadd.f32 0.0, %v6581
  %v6583 = vpop.f32.mrb[0].mxu0
  %v6584 = vadd.f32 0.0, %v6583
  %v6585 = vpop.f32.mrb[0].mxu0
  %v6586 = vadd.f32 0.0, %v6585
  %6587 = vmatprep.mubr.bf16.mxu0 %v3517
  %6588 = vmatmul.mubr.bf16.gmra.mrb[0].mxu0 %v3516
  %v6589 = vpop.f32.mrb[0].mxu0
  %v6590 = vadd.f32 0.0, %v6589
  %v6591 = vpop.f32.mrb[0].mxu0
  %v6592 = vadd.f32 0.0, %v6591
  %v6593 = vpop.f32.mrb[0].mxu0
  %v6594 = vadd.f32 0.0, %v6593
  %v6595 = vpop.f32.mrb[0].mxu0
  %v6596 = vadd.f32 0.0, %v6595
  %6597 = vmatprep.mubr.bf16.mxu0 %v3522
  %6598 = vmatmul.mubr.bf16.gmra.mrb[0].mxu0 %v3521
  %v6599 = vpop.f32.mrb[0].mxu0
  %v6600 = vadd.f32 0.0, %v6599
  %v6601 = vpop.f32.mrb[0].mxu0
  %v6602 = vadd.f32 0.0, %v6601
  %v6603 = vpop.f32.mrb[0].mxu0
  %v6604 = vadd.f32 0.0, %v6603
  %v6605 = vpop.f32.mrb[0].mxu0
  %v6606 = vadd.f32 0.0, %v6605
  %6607 = vmatprep.mubr.bf16.mxu0 %v3527
  %6608 = vmatmul.mubr.bf16.gmra.mrb[0].mxu0 %v3526
  %v6609 = vpop.f32.mrb[0].mxu0
  %v6610 = vadd.f32 0.0, %v6609
  %v6611 = vpop.f32.mrb[0].mxu0
  %v6612 = vadd.f32 0.0, %v6611
  %v6613 = vpop.f32.mrb[0].mxu0
  %v6614 = vadd.f32 0.0, %v6613
  %v6615 = vpop.f32.mrb[0].mxu0
  %v6616 = vadd.f32 0.0, %v6615
  %6617 = vmatprep.mubr.bf16.mxu0 %v3532
  %6618 = vmatmul.mubr.bf16.gmra.mrb[0].mxu0 %v3531
  %v6619 = vpop.f32.mrb[0].mxu0
  %v6620 = vadd.f32 0.0, %v6619
  %v6621 = vpop.f32.mrb[0].mxu0
  %v6622 = vadd.f32 0.0, %v6621
  %v6623 = vpop.f32.mrb[0].mxu0
  %v6624 = vadd.f32 0.0, %v6623
  %v6625 = vpop.f32.mrb[0].mxu0
  %v6626 = vadd.f32 0.0, %v6625
  %6627 = vmatprep.mubr.bf16.mxu0 %v3537
  %6628 = vmatmul.mubr.bf16.gmra.mrb[0].mxu0 %v3536
  %v6629 = vpop.f32.mrb[0].mxu0
  %v6630 = vadd.f32 0.0, %v6629
  %v6631 = vpop.f32.mrb[0].mxu0
  %v6632 = vadd.f32 0.0, %v6631
  %v6633 = vpop.f32.mrb[0].mxu0
  %v6634 = vadd.f32 0.0, %v6633
  %v6635 = vpop.f32.mrb[0].mxu0
  %v6636 = vadd.f32 0.0, %v6635
  %6637 = vmatprep.mubr.bf16.mxu0 %v3542
  %6638 = vmatmul.mubr.bf16.gmra.mrb[0].mxu0 %v3541
  %v6639 = vpop.f32.mrb[0].mxu0
  %v6640 = vadd.f32 0.0, %v6639
  %v6641 = vpop.f32.mrb[0].mxu0
  %v6642 = vadd.f32 0.0, %v6641
  %v6643 = vpop.f32.mrb[0].mxu0
  %v6644 = vadd.f32 0.0, %v6643
  %v6645 = vpop.f32.mrb[0].mxu0
  %v6646 = vadd.f32 0.0, %v6645
  %6647 = vmatprep.mubr.bf16.mxu0 %v3547
  %6648 = vmatmul.mubr.bf16.gmra.mrb[0].mxu0 %v3546
  %v6649 = vpop.f32.mrb[0].mxu0
  %v6650 = vadd.f32 0.0, %v6649
  %v6651 = vpop.f32.mrb[0].mxu0
  %v6652 = vadd.f32 0.0, %v6651
  %v6653 = vpop.f32.mrb[0].mxu0
  %v6654 = vadd.f32 0.0, %v6653
  %v6655 = vpop.f32.mrb[0].mxu0
  %v6656 = vadd.f32 0.0, %v6655
  %6657 = vmatprep.mubr.bf16.mxu0 %v3552
  %6658 = vmatmul.mubr.bf16.gmra.mrb[0].mxu0 %v3551
  %v6659 = vpop.f32.mrb[0].mxu0
  %v6660 = vadd.f32 0.0, %v6659
  %v6661 = vpop.f32.mrb[0].mxu0
  %v6662 = vadd.f32 0.0, %v6661
  %v6663 = vpop.f32.mrb[0].mxu0
  %v6664 = vadd.f32 0.0, %v6663
  %v6665 = vpop.f32.mrb[0].mxu0
  %v6666 = vadd.f32 0.0, %v6665
  %6667 = vmatprep.mubr.bf16.mxu0 %v3557
  %6668 = vmatmul.mubr.bf16.gmra.mrb[0].mxu0 %v3556
  %v6669 = vpop.f32.mrb[0].mxu0
  %v6670 = vadd.f32 0.0, %v6669
  %v6671 = vpop.f32.mrb[0].mxu0
  %v6672 = vadd.f32 0.0, %v6671
  %v6673 = vpop.f32.mrb[0].mxu0
  %v6674 = vadd.f32 0.0, %v6673
  %v6675 = vpop.f32.mrb[0].mxu0
  %v6676 = vadd.f32 0.0, %v6675
  %6677 = vmatprep.mubr.bf16.mxu0 %v3562
  %6678 = vmatmul.mubr.bf16.gmra.mrb[0].mxu0 %v3561
  %v6679 = vpop.f32.mrb[0].mxu0
  %v6680 = vadd.f32 0.0, %v6679
  %v6681 = vpop.f32.mrb[0].mxu0
  %v6682 = vadd.f32 0.0, %v6681
  %v6683 = vpop.f32.mrb[0].mxu0
  %v6684 = vadd.f32 0.0, %v6683
  %v6685 = vpop.f32.mrb[0].mxu0
  %v6686 = vadd.f32 0.0, %v6685
  %6687 = vmatprep.mubr.bf16.mxu0 %v3567
  %6688 = vmatmul.mubr.bf16.gmra.mrb[0].mxu0 %v3566
  %v6689 = vpop.f32.mrb[0].mxu0
  %v6690 = vadd.f32 0.0, %v6689
  %v6691 = vpop.f32.mrb[0].mxu0
  %v6692 = vadd.f32 0.0, %v6691
  %v6693 = vpop.f32.mrb[0].mxu0
  %v6694 = vadd.f32 0.0, %v6693
  %v6695 = vpop.f32.mrb[0].mxu0
  %v6696 = vadd.f32 0.0, %v6695
  %6697 = vmatprep.mubr.bf16.mxu0 %v3572
  %6698 = vmatmul.mubr.bf16.gmra.mrb[0].mxu0 %v3571
  %v6699 = vpop.f32.mrb[0].mxu0
  %v6700 = vadd.f32 0.0, %v6699
  %v6701 = vpop.f32.mrb[0].mxu0
  %v6702 = vadd.f32 0.0, %v6701
  %v6703 = vpop.f32.mrb[0].mxu0
  %v6704 = vadd.f32 0.0, %v6703
  %v6705 = vpop.f32.mrb[0].mxu0
  %v6706 = vadd.f32 0.0, %v6705
  %6707 = vmatprep.mubr.bf16.mxu0 %v3577
  %6708 = vmatmul.mubr.bf16.gmra.mrb[0].mxu0 %v3576
  %v6709 = vpop.f32.mrb[0].mxu0
  %v6710 = vadd.f32 0.0, %v6709
  %v6711 = vpop.f32.mrb[0].mxu0
  %v6712 = vadd.f32 0.0, %v6711
  %v6713 = vpop.f32.mrb[0].mxu0
  %v6714 = vadd.f32 0.0, %v6713
  %v6715 = vpop.f32.mrb[0].mxu0
  %v6716 = vadd.f32 0.0, %v6715
  %6717 = vmatprep.mubr.bf16.mxu0 %v3582
  %6718 = vmatmul.mubr.bf16.gmra.mrb[0].mxu0 %v3581
  %v6719 = vpop.f32.mrb[0].mxu0
  %v6720 = vadd.f32 0.0, %v6719
  %v6721 = vpop.f32.mrb[0].mxu0
  %v6722 = vadd.f32 0.0, %v6721
  %v6723 = vpop.f32.mrb[0].mxu0
  %v6724 = vadd.f32 0.0, %v6723
  %v6725 = vpop.f32.mrb[0].mxu0
  %v6726 = vadd.f32 0.0, %v6725
  %6727 = vmatprep.mubr.bf16.mxu0 %v3587
  %6728 = vmatmul.mubr.bf16.gmra.mrb[0].mxu0 %v3586
  %v6729 = vpop.f32.mrb[0].mxu0
  %v6730 = vadd.f32 0.0, %v6729
  %v6731 = vpop.f32.mrb[0].mxu0
  %v6732 = vadd.f32 0.0, %v6731
  %v6733 = vpop.f32.mrb[0].mxu0
  %v6734 = vadd.f32 0.0, %v6733
  %v6735 = vpop.f32.mrb[0].mxu0
  %v6736 = vadd.f32 0.0, %v6735
  %6737 = vmatprep.mubr.bf16.mxu0 %v3592
  %6738 = vmatmul.mubr.bf16.gmra.mrb[0].mxu0 %v3591
  %v6739 = vpop.f32.mrb[0].mxu0
  %v6740 = vadd.f32 0.0, %v6739
  %v6741 = vpop.f32.mrb[0].mxu0
  %v6742 = vadd.f32 0.0, %v6741
  %v6743 = vpop.f32.mrb[0].mxu0
  %v6744 = vadd.f32 0.0, %v6743
  %v6745 = vpop.f32.mrb[0].mxu0
  %v6746 = vadd.f32 0.0, %v6745
  %6747 = vmatprep.mubr.bf16.mxu0 %v3597
  %6748 = vmatmul.mubr.bf16.gmra.mrb[0].mxu0 %v3596
  %v6749 = vpop.f32.mrb[0].mxu0
  %v6750 = vadd.f32 0.0, %v6749
  %v6751 = vpop.f32.mrb[0].mxu0
  %v6752 = vadd.f32 0.0, %v6751
  %v6753 = vpop.f32.mrb[0].mxu0
  %v6754 = vadd.f32 0.0, %v6753
  %v6755 = vpop.f32.mrb[0].mxu0
  %v6756 = vadd.f32 0.0, %v6755
  %6757 = vmatprep.mubr.bf16.mxu0 %v3602
  %6758 = vmatmul.mubr.bf16.gmra.mrb[0].mxu0 %v3601
  %v6759 = vpop.f32.mrb[0].mxu0
  %v6760 = vadd.f32 0.0, %v6759
  %v6761 = vpop.f32.mrb[0].mxu0
  %v6762 = vadd.f32 0.0, %v6761
  %v6763 = vpop.f32.mrb[0].mxu0
  %v6764 = vadd.f32 0.0, %v6763
  %v6765 = vpop.f32.mrb[0].mxu0
  %v6766 = vadd.f32 0.0, %v6765
  %6767 = vmatprep.mubr.bf16.mxu0 %v3607
  %6768 = vmatmul.mubr.bf16.gmra.mrb[0].mxu0 %v3606
  %v6769 = vpop.f32.mrb[0].mxu0
  %v6770 = vadd.f32 0.0, %v6769
  %v6771 = vpop.f32.mrb[0].mxu0
  %v6772 = vadd.f32 0.0, %v6771
  %v6773 = vpop.f32.mrb[0].mxu0
  %v6774 = vadd.f32 0.0, %v6773
  %v6775 = vpop.f32.mrb[0].mxu0
  %v6776 = vadd.f32 0.0, %v6775
  %6777 = vmatprep.mubr.bf16.mxu0 %v3612
  %6778 = vmatmul.mubr.bf16.gmra.mrb[0].mxu0 %v3611
  %v6779 = vpop.f32.mrb[0].mxu0
  %v6780 = vadd.f32 0.0, %v6779
  %v6781 = vpop.f32.mrb[0].mxu0
  %v6782 = vadd.f32 0.0, %v6781
  %v6783 = vpop.f32.mrb[0].mxu0
  %v6784 = vadd.f32 0.0, %v6783
  %v6785 = vpop.f32.mrb[0].mxu0
  %v6786 = vadd.f32 0.0, %v6785
  %6787 = vmatprep.mubr.bf16.mxu0 %v3617
  %6788 = vmatmul.mubr.bf16.gmra.mrb[0].mxu0 %v3616
  %v6789 = vpop.f32.mrb[0].mxu0
  %v6790 = vadd.f32 0.0, %v6789
  %v6791 = vpop.f32.mrb[0].mxu0
  %v6792 = vadd.f32 0.0, %v6791
  %v6793 = vpop.f32.mrb[0].mxu0
  %v6794 = vadd.f32 0.0, %v6793
  %v6795 = vpop.f32.mrb[0].mxu0
  %v6796 = vadd.f32 0.0, %v6795
  %6797 = vmatprep.mubr.bf16.mxu0 %v3622
  %6798 = vmatmul.mubr.bf16.gmra.mrb[0].mxu0 %v3621
  %v6799 = vpop.f32.mrb[0].mxu0
  %v6800 = vadd.f32 0.0, %v6799
  %v6801 = vpop.f32.mrb[0].mxu0
  %v6802 = vadd.f32 0.0, %v6801
  %v6803 = vpop.f32.mrb[0].mxu0
  %v6804 = vadd.f32 0.0, %v6803
  %v6805 = vpop.f32.mrb[0].mxu0
  %v6806 = vadd.f32 0.0, %v6805
  %6807 = vmatprep.mubr.bf16.mxu0 %v3627
  %6808 = vmatmul.mubr.bf16.gmra.mrb[0].mxu0 %v3626
  %v6809 = vpop.f32.mrb[0].mxu0
  %v6810 = vadd.f32 0.0, %v6809
  %v6811 = vpop.f32.mrb[0].mxu0
  %v6812 = vadd.f32 0.0, %v6811
  %v6813 = vpop.f32.mrb[0].mxu0
  %v6814 = vadd.f32 0.0, %v6813
  %v6815 = vpop.f32.mrb[0].mxu0
  %v6816 = vadd.f32 0.0, %v6815
  %6817 = vmatprep.mubr.bf16.mxu0 %v3632
  %6818 = vmatmul.mubr.bf16.gmra.mrb[0].mxu0 %v3631
  %v6819 = vpop.f32.mrb[0].mxu0
  %v6820 = vadd.f32 0.0, %v6819
  %v6821 = vpop.f32.mrb[0].mxu0
  %v6822 = vadd.f32 0.0, %v6821
  %v6823 = vpop.f32.mrb[0].mxu0
  %v6824 = vadd.f32 0.0, %v6823
  %v6825 = vpop.f32.mrb[0].mxu0
  %v6826 = vadd.f32 0.0, %v6825
  %6827 = vmatprep.mubr.bf16.mxu0 %v3637
  %6828 = vmatmul.mubr.bf16.gmra.mrb[0].mxu0 %v3636
  %v6829 = vpop.f32.mrb[0].mxu0
  %v6830 = vadd.f32 0.0, %v6829
  %v6831 = vpop.f32.mrb[0].mxu0
  %v6832 = vadd.f32 0.0, %v6831
  %v6833 = vpop.f32.mrb[0].mxu0
  %v6834 = vadd.f32 0.0, %v6833
  %v6835 = vpop.f32.mrb[0].mxu0
  %v6836 = vadd.f32 0.0, %v6835
  %6837 = vdwg.mxu0
  %6838 = vmatprep.subr.bf16.mxu0 %v6406
  %6839 = vmatpush1.bf16.msra.mxu0 %v6405
  %6840 = vmatprep.subr.bf16.mxu0 %v6408
  %6841 = vmatpush1.bf16.msra.mxu0 %v6407
  %6842 = vmatprep.subr.bf16.mxu0 %v6410
  %6843 = vmatpush1.bf16.msra.mxu0 %v6409
  %6844 = vmatprep.subr.bf16.mxu0 %v6412
  %6845 = vmatpush1.bf16.msra.mxu0 %v6411
  %6846 = vmatprep.subr.bf16.mxu0 %v6414
  %6847 = vmatpush1.bf16.msra.mxu0 %v6413
  %6848 = vmatprep.subr.bf16.mxu0 %v6416
  %6849 = vmatpush1.bf16.msra.mxu0 %v6415
  %6850 = vmatprep.subr.bf16.mxu0 %v6418
  %6851 = vmatpush1.bf16.msra.mxu0 %v6417
  %6852 = vmatprep.subr.bf16.mxu0 %v6420
  %6853 = vmatpush1.bf16.msra.mxu0 %v6419
  %6854 = vmatprep.subr.bf16.mxu0 %v6422
  %6855 = vmatpush1.bf16.msra.mxu0 %v6421
  %6856 = vmatprep.subr.bf16.mxu0 %v6424
  %6857 = vmatpush1.bf16.msra.mxu0 %v6423
  %6858 = vmatprep.subr.bf16.mxu0 %v6426
  %6859 = vmatpush1.bf16.msra.mxu0 %v6425
  %6860 = vmatprep.subr.bf16.mxu0 %v6428
  %6861 = vmatpush1.bf16.msra.mxu0 %v6427
  %6862 = vmatprep.subr.bf16.mxu0 %v6430
  %6863 = vmatpush1.bf16.msra.mxu0 %v6429
  %6864 = vmatprep.subr.bf16.mxu0 %v6432
  %6865 = vmatpush1.bf16.msra.mxu0 %v6431
  %6866 = vmatprep.subr.bf16.mxu0 %v6434
  %6867 = vmatpush1.bf16.msra.mxu0 %v6433
  %6868 = vmatprep.subr.bf16.mxu0 %v6436
  %6869 = vmatpush1.bf16.msra.mxu0 %v6435
  %6870 = vmatprep.mubr.bf16.mxu0 %v3464
  %6871 = vmatmul.mubr.bf16.gmra.mrb[0].mxu0 %v3463
  %v6872 = vpop.f32.mrb[0].mxu0
  %v6873 = vadd.f32 %v6480, %v6872
  %v6874 = vpop.f32.mrb[0].mxu0
  %v6875 = vadd.f32 %v6482, %v6874
  %v6876 = vpop.f32.mrb[0].mxu0
  %v6877 = vadd.f32 %v6484, %v6876
  %v6878 = vpop.f32.mrb[0].mxu0
  %v6879 = vadd.f32 %v6486, %v6878
  %6880 = vmatprep.mubr.bf16.mxu0 %v3469
  %6881 = vmatmul.mubr.bf16.gmra.mrb[0].mxu0 %v3468
  %v6882 = vpop.f32.mrb[0].mxu0
  %v6883 = vadd.f32 %v6490, %v6882
  %v6884 = vpop.f32.mrb[0].mxu0
  %v6885 = vadd.f32 %v6492, %v6884
  %v6886 = vpop.f32.mrb[0].mxu0
  %v6887 = vadd.f32 %v6494, %v6886
  %v6888 = vpop.f32.mrb[0].mxu0
  %v6889 = vadd.f32 %v6496, %v6888
  %6890 = vmatprep.mubr.bf16.mxu0 %v3474
  %6891 = vmatmul.mubr.bf16.gmra.mrb[0].mxu0 %v3473
  %v6892 = vpop.f32.mrb[0].mxu0
  %v6893 = vadd.f32 %v6500, %v6892
  %v6894 = vpop.f32.mrb[0].mxu0
  %v6895 = vadd.f32 %v6502, %v6894
  %v6896 = vpop.f32.mrb[0].mxu0
  %v6897 = vadd.f32 %v6504, %v6896
  %v6898 = vpop.f32.mrb[0].mxu0
  %v6899 = vadd.f32 %v6506, %v6898
  %6900 = vmatprep.mubr.bf16.mxu0 %v3479
  %6901 = vmatmul.mubr.bf16.gmra.mrb[0].mxu0 %v3478
  %v6902 = vpop.f32.mrb[0].mxu0
  %v6903 = vadd.f32 %v6510, %v6902
  %v6904 = vpop.f32.mrb[0].mxu0
  %v6905 = vadd.f32 %v6512, %v6904
  %v6906 = vpop.f32.mrb[0].mxu0
  %v6907 = vadd.f32 %v6514, %v6906
  %v6908 = vpop.f32.mrb[0].mxu0
  %v6909 = vadd.f32 %v6516, %v6908
  %6910 = vmatprep.mubr.bf16.mxu0 %v3484
  %6911 = vmatmul.mubr.bf16.gmra.mrb[0].mxu0 %v3483
  %v6912 = vpop.f32.mrb[0].mxu0
  %v6913 = vadd.f32 %v6520, %v6912
  %v6914 = vpop.f32.mrb[0].mxu0
  %v6915 = vadd.f32 %v6522, %v6914
  %v6916 = vpop.f32.mrb[0].mxu0
  %v6917 = vadd.f32 %v6524, %v6916
  %v6918 = vpop.f32.mrb[0].mxu0
  %v6919 = vadd.f32 %v6526, %v6918
  %6920 = vmatprep.mubr.bf16.mxu0 %v3489
  %6921 = vmatmul.mubr.bf16.gmra.mrb[0].mxu0 %v3488
  %v6922 = vpop.f32.mrb[0].mxu0
  %v6923 = vadd.f32 %v6530, %v6922
  %v6924 = vpop.f32.mrb[0].mxu0
  %v6925 = vadd.f32 %v6532, %v6924
  %v6926 = vpop.f32.mrb[0].mxu0
  %v6927 = vadd.f32 %v6534, %v6926
  %v6928 = vpop.f32.mrb[0].mxu0
  %v6929 = vadd.f32 %v6536, %v6928
  %6930 = vmatprep.mubr.bf16.mxu0 %v3494
  %6931 = vmatmul.mubr.bf16.gmra.mrb[0].mxu0 %v3493
  %v6932 = vpop.f32.mrb[0].mxu0
  %v6933 = vadd.f32 %v6540, %v6932
  %v6934 = vpop.f32.mrb[0].mxu0
  %v6935 = vadd.f32 %v6542, %v6934
  %v6936 = vpop.f32.mrb[0].mxu0
  %v6937 = vadd.f32 %v6544, %v6936
  %v6938 = vpop.f32.mrb[0].mxu0
  %v6939 = vadd.f32 %v6546, %v6938
  %6940 = vmatprep.mubr.bf16.mxu0 %v3499
  %6941 = vmatmul.mubr.bf16.gmra.mrb[0].mxu0 %v3498
  %v6942 = vpop.f32.mrb[0].mxu0
  %v6943 = vadd.f32 %v6550, %v6942
  %v6944 = vpop.f32.mrb[0].mxu0
  %v6945 = vadd.f32 %v6552, %v6944
  %v6946 = vpop.f32.mrb[0].mxu0
  %v6947 = vadd.f32 %v6554, %v6946
  %v6948 = vpop.f32.mrb[0].mxu0
  %v6949 = vadd.f32 %v6556, %v6948
  %6950 = vmatprep.mubr.bf16.mxu0 %v3504
  %6951 = vmatmul.mubr.bf16.gmra.mrb[0].mxu0 %v3503
  %v6952 = vpop.f32.mrb[0].mxu0
  %v6953 = vadd.f32 %v6560, %v6952
  %v6954 = vpop.f32.mrb[0].mxu0
  %v6955 = vadd.f32 %v6562, %v6954
  %v6956 = vpop.f32.mrb[0].mxu0
  %v6957 = vadd.f32 %v6564, %v6956
  %v6958 = vpop.f32.mrb[0].mxu0
  %v6959 = vadd.f32 %v6566, %v6958
  %6960 = vmatprep.mubr.bf16.mxu0 %v3509
  %6961 = vmatmul.mubr.bf16.gmra.mrb[0].mxu0 %v3508
  %v6962 = vpop.f32.mrb[0].mxu0
  %v6963 = vadd.f32 %v6570, %v6962
  %v6964 = vpop.f32.mrb[0].mxu0
  %v6965 = vadd.f32 %v6572, %v6964
  %v6966 = vpop.f32.mrb[0].mxu0
  %v6967 = vadd.f32 %v6574, %v6966
  %v6968 = vpop.f32.mrb[0].mxu0
  %v6969 = vadd.f32 %v6576, %v6968
  %6970 = vmatprep.mubr.bf16.mxu0 %v3514
  %6971 = vmatmul.mubr.bf16.gmra.mrb[0].mxu0 %v3513
  %v6972 = vpop.f32.mrb[0].mxu0
  %v6973 = vadd.f32 %v6580, %v6972
  %v6974 = vpop.f32.mrb[0].mxu0
  %v6975 = vadd.f32 %v6582, %v6974
  %v6976 = vpop.f32.mrb[0].mxu0
  %v6977 = vadd.f32 %v6584, %v6976
  %v6978 = vpop.f32.mrb[0].mxu0
  %v6979 = vadd.f32 %v6586, %v6978
  %6980 = vmatprep.mubr.bf16.mxu0 %v3519
  %6981 = vmatmul.mubr.bf16.gmra.mrb[0].mxu0 %v3518
  %v6982 = vpop.f32.mrb[0].mxu0
  %v6983 = vadd.f32 %v6590, %v6982
  %v6984 = vpop.f32.mrb[0].mxu0
  %v6985 = vadd.f32 %v6592, %v6984
  %v6986 = vpop.f32.mrb[0].mxu0
  %v6987 = vadd.f32 %v6594, %v6986
  %v6988 = vpop.f32.mrb[0].mxu0
  %v6989 = vadd.f32 %v6596, %v6988
  %6990 = vmatprep.mubr.bf16.mxu0 %v3524
  %6991 = vmatmul.mubr.bf16.gmra.mrb[0].mxu0 %v3523
  %v6992 = vpop.f32.mrb[0].mxu0
  %v6993 = vadd.f32 %v6600, %v6992
  %v6994 = vpop.f32.mrb[0].mxu0
  %v6995 = vadd.f32 %v6602, %v6994
  %v6996 = vpop.f32.mrb[0].mxu0
  %v6997 = vadd.f32 %v6604, %v6996
  %v6998 = vpop.f32.mrb[0].mxu0
  %v6999 = vadd.f32 %v6606, %v6998
  %7000 = vmatprep.mubr.bf16.mxu0 %v3529
  %7001 = vmatmul.mubr.bf16.gmra.mrb[0].mxu0 %v3528
  %v7002 = vpop.f32.mrb[0].mxu0
  %v7003 = vadd.f32 %v6610, %v7002
  %v7004 = vpop.f32.mrb[0].mxu0
  %v7005 = vadd.f32 %v6612, %v7004
  %v7006 = vpop.f32.mrb[0].mxu0
  %v7007 = vadd.f32 %v6614, %v7006
  %v7008 = vpop.f32.mrb[0].mxu0
  %v7009 = vadd.f32 %v6616, %v7008
  %7010 = vmatprep.mubr.bf16.mxu0 %v3534
  %7011 = vmatmul.mubr.bf16.gmra.mrb[0].mxu0 %v3533
  %v7012 = vpop.f32.mrb[0].mxu0
  %v7013 = vadd.f32 %v6620, %v7012
  %v7014 = vpop.f32.mrb[0].mxu0
  %v7015 = vadd.f32 %v6622, %v7014
  %v7016 = vpop.f32.mrb[0].mxu0
  %v7017 = vadd.f32 %v6624, %v7016
  %v7018 = vpop.f32.mrb[0].mxu0
  %v7019 = vadd.f32 %v6626, %v7018
  %7020 = vmatprep.mubr.bf16.mxu0 %v3539
  %7021 = vmatmul.mubr.bf16.gmra.mrb[0].mxu0 %v3538
  %v7022 = vpop.f32.mrb[0].mxu0
  %v7023 = vadd.f32 %v6630, %v7022
  %v7024 = vpop.f32.mrb[0].mxu0
  %v7025 = vadd.f32 %v6632, %v7024
  %v7026 = vpop.f32.mrb[0].mxu0
  %v7027 = vadd.f32 %v6634, %v7026
  %v7028 = vpop.f32.mrb[0].mxu0
  %v7029 = vadd.f32 %v6636, %v7028
  %7030 = vmatprep.mubr.bf16.mxu0 %v3544
  %7031 = vmatmul.mubr.bf16.gmra.mrb[0].mxu0 %v3543
  %v7032 = vpop.f32.mrb[0].mxu0
  %v7033 = vadd.f32 %v6640, %v7032
  %v7034 = vpop.f32.mrb[0].mxu0
  %v7035 = vadd.f32 %v6642, %v7034
  %v7036 = vpop.f32.mrb[0].mxu0
  %v7037 = vadd.f32 %v6644, %v7036
  %v7038 = vpop.f32.mrb[0].mxu0
  %v7039 = vadd.f32 %v6646, %v7038
  %7040 = vmatprep.mubr.bf16.mxu0 %v3549
  %7041 = vmatmul.mubr.bf16.gmra.mrb[0].mxu0 %v3548
  %v7042 = vpop.f32.mrb[0].mxu0
  %v7043 = vadd.f32 %v6650, %v7042
  %v7044 = vpop.f32.mrb[0].mxu0
  %v7045 = vadd.f32 %v6652, %v7044
  %v7046 = vpop.f32.mrb[0].mxu0
  %v7047 = vadd.f32 %v6654, %v7046
  %v7048 = vpop.f32.mrb[0].mxu0
  %v7049 = vadd.f32 %v6656, %v7048
  %7050 = vmatprep.mubr.bf16.mxu0 %v3554
  %7051 = vmatmul.mubr.bf16.gmra.mrb[0].mxu0 %v3553
  %v7052 = vpop.f32.mrb[0].mxu0
  %v7053 = vadd.f32 %v6660, %v7052
  %v7054 = vpop.f32.mrb[0].mxu0
  %v7055 = vadd.f32 %v6662, %v7054
  %v7056 = vpop.f32.mrb[0].mxu0
  %v7057 = vadd.f32 %v6664, %v7056
  %v7058 = vpop.f32.mrb[0].mxu0
  %v7059 = vadd.f32 %v6666, %v7058
  %7060 = vmatprep.mubr.bf16.mxu0 %v3559
  %7061 = vmatmul.mubr.bf16.gmra.mrb[0].mxu0 %v3558
  %v7062 = vpop.f32.mrb[0].mxu0
  %v7063 = vadd.f32 %v6670, %v7062
  %v7064 = vpop.f32.mrb[0].mxu0
  %v7065 = vadd.f32 %v6672, %v7064
  %v7066 = vpop.f32.mrb[0].mxu0
  %v7067 = vadd.f32 %v6674, %v7066
  %v7068 = vpop.f32.mrb[0].mxu0
  %v7069 = vadd.f32 %v6676, %v7068
  %7070 = vmatprep.mubr.bf16.mxu0 %v3564
  %7071 = vmatmul.mubr.bf16.gmra.mrb[0].mxu0 %v3563
  %v7072 = vpop.f32.mrb[0].mxu0
  %v7073 = vadd.f32 %v6680, %v7072
  %v7074 = vpop.f32.mrb[0].mxu0
  %v7075 = vadd.f32 %v6682, %v7074
  %v7076 = vpop.f32.mrb[0].mxu0
  %v7077 = vadd.f32 %v6684, %v7076
  %v7078 = vpop.f32.mrb[0].mxu0
  %v7079 = vadd.f32 %v6686, %v7078
  %7080 = vmatprep.mubr.bf16.mxu0 %v3569
  %7081 = vmatmul.mubr.bf16.gmra.mrb[0].mxu0 %v3568
  %v7082 = vpop.f32.mrb[0].mxu0
  %v7083 = vadd.f32 %v6690, %v7082
  %v7084 = vpop.f32.mrb[0].mxu0
  %v7085 = vadd.f32 %v6692, %v7084
  %v7086 = vpop.f32.mrb[0].mxu0
  %v7087 = vadd.f32 %v6694, %v7086
  %v7088 = vpop.f32.mrb[0].mxu0
  %v7089 = vadd.f32 %v6696, %v7088
  %7090 = vmatprep.mubr.bf16.mxu0 %v3574
  %7091 = vmatmul.mubr.bf16.gmra.mrb[0].mxu0 %v3573
  %v7092 = vpop.f32.mrb[0].mxu0
  %v7093 = vadd.f32 %v6700, %v7092
  %v7094 = vpop.f32.mrb[0].mxu0
  %v7095 = vadd.f32 %v6702, %v7094
  %v7096 = vpop.f32.mrb[0].mxu0
  %v7097 = vadd.f32 %v6704, %v7096
  %v7098 = vpop.f32.mrb[0].mxu0
  %v7099 = vadd.f32 %v6706, %v7098
  %7100 = vmatprep.mubr.bf16.mxu0 %v3579
  %7101 = vmatmul.mubr.bf16.gmra.mrb[0].mxu0 %v3578
  %v7102 = vpop.f32.mrb[0].mxu0
  %v7103 = vadd.f32 %v6710, %v7102
  %v7104 = vpop.f32.mrb[0].mxu0
  %v7105 = vadd.f32 %v6712, %v7104
  %v7106 = vpop.f32.mrb[0].mxu0
  %v7107 = vadd.f32 %v6714, %v7106
  %v7108 = vpop.f32.mrb[0].mxu0
  %v7109 = vadd.f32 %v6716, %v7108
  %7110 = vmatprep.mubr.bf16.mxu0 %v3584
  %7111 = vmatmul.mubr.bf16.gmra.mrb[0].mxu0 %v3583
  %v7112 = vpop.f32.mrb[0].mxu0
  %v7113 = vadd.f32 %v6720, %v7112
  %v7114 = vpop.f32.mrb[0].mxu0
  %v7115 = vadd.f32 %v6722, %v7114
  %v7116 = vpop.f32.mrb[0].mxu0
  %v7117 = vadd.f32 %v6724, %v7116
  %v7118 = vpop.f32.mrb[0].mxu0
  %v7119 = vadd.f32 %v6726, %v7118
  %7120 = vmatprep.mubr.bf16.mxu0 %v3589
  %7121 = vmatmul.mubr.bf16.gmra.mrb[0].mxu0 %v3588
  %v7122 = vpop.f32.mrb[0].mxu0
  %v7123 = vadd.f32 %v6730, %v7122
  %v7124 = vpop.f32.mrb[0].mxu0
  %v7125 = vadd.f32 %v6732, %v7124
  %v7126 = vpop.f32.mrb[0].mxu0
  %v7127 = vadd.f32 %v6734, %v7126
  %v7128 = vpop.f32.mrb[0].mxu0
  %v7129 = vadd.f32 %v6736, %v7128
  %7130 = vmatprep.mubr.bf16.mxu0 %v3594
  %7131 = vmatmul.mubr.bf16.gmra.mrb[0].mxu0 %v3593
  %v7132 = vpop.f32.mrb[0].mxu0
  %v7133 = vadd.f32 %v6740, %v7132
  %v7134 = vpop.f32.mrb[0].mxu0
  %v7135 = vadd.f32 %v6742, %v7134
  %v7136 = vpop.f32.mrb[0].mxu0
  %v7137 = vadd.f32 %v6744, %v7136
  %v7138 = vpop.f32.mrb[0].mxu0
  %v7139 = vadd.f32 %v6746, %v7138
  %7140 = vmatprep.mubr.bf16.mxu0 %v3599
  %7141 = vmatmul.mubr.bf16.gmra.mrb[0].mxu0 %v3598
  %v7142 = vpop.f32.mrb[0].mxu0
  %v7143 = vadd.f32 %v6750, %v7142
  %v7144 = vpop.f32.mrb[0].mxu0
  %v7145 = vadd.f32 %v6752, %v7144
  %v7146 = vpop.f32.mrb[0].mxu0
  %v7147 = vadd.f32 %v6754, %v7146
  %v7148 = vpop.f32.mrb[0].mxu0
  %v7149 = vadd.f32 %v6756, %v7148
  %7150 = vmatprep.mubr.bf16.mxu0 %v3604
  %7151 = vmatmul.mubr.bf16.gmra.mrb[0].mxu0 %v3603
  %v7152 = vpop.f32.mrb[0].mxu0
  %v7153 = vadd.f32 %v6760, %v7152
  %v7154 = vpop.f32.mrb[0].mxu0
  %v7155 = vadd.f32 %v6762, %v7154
  %v7156 = vpop.f32.mrb[0].mxu0
  %v7157 = vadd.f32 %v6764, %v7156
  %v7158 = vpop.f32.mrb[0].mxu0
  %v7159 = vadd.f32 %v6766, %v7158
  %7160 = vmatprep.mubr.bf16.mxu0 %v3609
  %7161 = vmatmul.mubr.bf16.gmra.mrb[0].mxu0 %v3608
  %v7162 = vpop.f32.mrb[0].mxu0
  %v7163 = vadd.f32 %v6770, %v7162
  %v7164 = vpop.f32.mrb[0].mxu0
  %v7165 = vadd.f32 %v6772, %v7164
  %v7166 = vpop.f32.mrb[0].mxu0
  %v7167 = vadd.f32 %v6774, %v7166
  %v7168 = vpop.f32.mrb[0].mxu0
  %v7169 = vadd.f32 %v6776, %v7168
  %7170 = vmatprep.mubr.bf16.mxu0 %v3614
  %7171 = vmatmul.mubr.bf16.gmra.mrb[0].mxu0 %v3613
  %v7172 = vpop.f32.mrb[0].mxu0
  %v7173 = vadd.f32 %v6780, %v7172
  %v7174 = vpop.f32.mrb[0].mxu0
  %v7175 = vadd.f32 %v6782, %v7174
  %v7176 = vpop.f32.mrb[0].mxu0
  %v7177 = vadd.f32 %v6784, %v7176
  %v7178 = vpop.f32.mrb[0].mxu0
  %v7179 = vadd.f32 %v6786, %v7178
  %7180 = vmatprep.mubr.bf16.mxu0 %v3619
  %7181 = vmatmul.mubr.bf16.gmra.mrb[0].mxu0 %v3618
  %v7182 = vpop.f32.mrb[0].mxu0
  %v7183 = vadd.f32 %v6790, %v7182
  %v7184 = vpop.f32.mrb[0].mxu0
  %v7185 = vadd.f32 %v6792, %v7184
  %v7186 = vpop.f32.mrb[0].mxu0
  %v7187 = vadd.f32 %v6794, %v7186
  %v7188 = vpop.f32.mrb[0].mxu0
  %v7189 = vadd.f32 %v6796, %v7188
  %7190 = vmatprep.mubr.bf16.mxu0 %v3624
  %7191 = vmatmul.mubr.bf16.gmra.mrb[0].mxu0 %v3623
  %v7192 = vpop.f32.mrb[0].mxu0
  %v7193 = vadd.f32 %v6800, %v7192
  %v7194 = vpop.f32.mrb[0].mxu0
  %v7195 = vadd.f32 %v6802, %v7194
  %v7196 = vpop.f32.mrb[0].mxu0
  %v7197 = vadd.f32 %v6804, %v7196
  %v7198 = vpop.f32.mrb[0].mxu0
  %v7199 = vadd.f32 %v6806, %v7198
  %7200 = vmatprep.mubr.bf16.mxu0 %v3629
  %7201 = vmatmul.mubr.bf16.gmra.mrb[0].mxu0 %v3628
  %v7202 = vpop.f32.mrb[0].mxu0
  %v7203 = vadd.f32 %v6810, %v7202
  %v7204 = vpop.f32.mrb[0].mxu0
  %v7205 = vadd.f32 %v6812, %v7204
  %v7206 = vpop.f32.mrb[0].mxu0
  %v7207 = vadd.f32 %v6814, %v7206
  %v7208 = vpop.f32.mrb[0].mxu0
  %v7209 = vadd.f32 %v6816, %v7208
  %7210 = vmatprep.mubr.bf16.mxu0 %v3634
  %7211 = vmatmul.mubr.bf16.gmra.mrb[0].mxu0 %v3633
  %v7212 = vpop.f32.mrb[0].mxu0
  %v7213 = vadd.f32 %v6820, %v7212
  %v7214 = vpop.f32.mrb[0].mxu0
  %v7215 = vadd.f32 %v6822, %v7214
  %v7216 = vpop.f32.mrb[0].mxu0
  %v7217 = vadd.f32 %v6824, %v7216
  %v7218 = vpop.f32.mrb[0].mxu0
  %v7219 = vadd.f32 %v6826, %v7218
  %7220 = vmatprep.mubr.bf16.mxu0 %v3639
  %7221 = vmatmul.mubr.bf16.gmra.mrb[0].mxu0 %v3638
  %v7222 = vpop.f32.mrb[0].mxu0
  %v7223 = vadd.f32 %v6830, %v7222
  %v7224 = vpop.f32.mrb[0].mxu0
  %v7225 = vadd.f32 %v6832, %v7224
  %v7226 = vpop.f32.mrb[0].mxu0
  %v7227 = vadd.f32 %v6834, %v7226
  %v7228 = vpop.f32.mrb[0].mxu0
  %v7229 = vadd.f32 %v6836, %v7228
  %7230 = vdwg.mxu0
  %7231 = vmatprep.subr.bf16.mxu0 %v6438
  %7232 = vmatpush1.bf16.msra.mxu0 %v6437
  %7233 = vmatprep.subr.bf16.mxu0 %v6440
  %7234 = vmatpush1.bf16.msra.mxu0 %v6439
  %7235 = vmatprep.subr.bf16.mxu0 %v6442
  %7236 = vmatpush1.bf16.msra.mxu0 %v6441
  %7237 = vmatprep.subr.bf16.mxu0 %v6444
  %7238 = vmatpush1.bf16.msra.mxu0 %v6443
  %7239 = vmatprep.subr.bf16.mxu0 0
  %7240 = vmatpush1.bf16.msra.mxu0 0
  %7241 = vmatprep.subr.bf16.mxu0 0
  %7242 = vmatpush1.bf16.msra.mxu0 0
  %7243 = vmatprep.subr.bf16.mxu0 0
  %7244 = vmatpush1.bf16.msra.mxu0 0
  %7245 = vmatprep.subr.bf16.mxu0 0
  %7246 = vmatpush1.bf16.msra.mxu0 0
  %7247 = vmatprep.subr.bf16.mxu0 0
  %7248 = vmatpush1.bf16.msra.mxu0 0
  %7249 = vmatprep.subr.bf16.mxu0 0
  %7250 = vmatpush1.bf16.msra.mxu0 0
  %7251 = vmatprep.subr.bf16.mxu0 0
  %7252 = vmatpush1.bf16.msra.mxu0 0
  %7253 = vmatprep.subr.bf16.mxu0 0
  %7254 = vmatpush1.bf16.msra.mxu0 0
  %7255 = vmatprep.subr.bf16.mxu0 0
  %7256 = vmatpush1.bf16.msra.mxu0 0
  %7257 = vmatprep.subr.bf16.mxu0 0
  %7258 = vmatpush1.bf16.msra.mxu0 0
  %7259 = vmatprep.subr.bf16.mxu0 0
  %7260 = vmatpush1.bf16.msra.mxu0 0
  %7261 = vmatprep.subr.bf16.mxu0 0
  %7262 = vmatpush1.bf16.msra.mxu0 0
  %7263 = vmatprep.mubr.bf16.mxu0 0
  %7264 = vmatmul.mubr.bf16.gmra.mrb[0].mxu0 %v3787
  %v7265 = vpop.f32.mrb[0].mxu0
  %v7266 = vadd.f32 %v6873, %v7265
  %v7267 = vpop.f32.mrb[0].mxu0
  %v7268 = vadd.f32 %v6875, %v7267
  %v7269 = vpop.f32.mrb[0].mxu0
  %v7270 = vadd.f32 %v6877, %v7269
  %v7271 = vpop.f32.mrb[0].mxu0
  %v7272 = vadd.f32 %v6879, %v7271
  %7273 = vmatprep.mubr.bf16.mxu0 0
  %7274 = vmatmul.mubr.bf16.gmra.mrb[0].mxu0 %v3790
  %v7275 = vpop.f32.mrb[0].mxu0
  %v7276 = vadd.f32 %v6883, %v7275
  %v7277 = vpop.f32.mrb[0].mxu0
  %v7278 = vadd.f32 %v6885, %v7277
  %v7279 = vpop.f32.mrb[0].mxu0
  %v7280 = vadd.f32 %v6887, %v7279
  %v7281 = vpop.f32.mrb[0].mxu0
  %v7282 = vadd.f32 %v6889, %v7281
  %7283 = vmatprep.mubr.bf16.mxu0 0
  %7284 = vmatmul.mubr.bf16.gmra.mrb[0].mxu0 %v3793
  %v7285 = vpop.f32.mrb[0].mxu0
  %v7286 = vadd.f32 %v6893, %v7285
  %v7287 = vpop.f32.mrb[0].mxu0
  %v7288 = vadd.f32 %v6895, %v7287
  %v7289 = vpop.f32.mrb[0].mxu0
  %v7290 = vadd.f32 %v6897, %v7289
  %v7291 = vpop.f32.mrb[0].mxu0
  %v7292 = vadd.f32 %v6899, %v7291
  %7293 = vmatprep.mubr.bf16.mxu0 0
  %7294 = vmatmul.mubr.bf16.gmra.mrb[0].mxu0 %v3796
  %v7295 = vpop.f32.mrb[0].mxu0
  %v7296 = vadd.f32 %v6903, %v7295
  %v7297 = vpop.f32.mrb[0].mxu0
  %v7298 = vadd.f32 %v6905, %v7297
  %v7299 = vpop.f32.mrb[0].mxu0
  %v7300 = vadd.f32 %v6907, %v7299
  %v7301 = vpop.f32.mrb[0].mxu0
  %v7302 = vadd.f32 %v6909, %v7301
  %7303 = vmatprep.mubr.bf16.mxu0 0
  %7304 = vmatmul.mubr.bf16.gmra.mrb[0].mxu0 %v3799
  %v7305 = vpop.f32.mrb[0].mxu0
  %v7306 = vadd.f32 %v6913, %v7305
  %v7307 = vpop.f32.mrb[0].mxu0
  %v7308 = vadd.f32 %v6915, %v7307
  %v7309 = vpop.f32.mrb[0].mxu0
  %v7310 = vadd.f32 %v6917, %v7309
  %v7311 = vpop.f32.mrb[0].mxu0
  %v7312 = vadd.f32 %v6919, %v7311
  %7313 = vmatprep.mubr.bf16.mxu0 0
  %7314 = vmatmul.mubr.bf16.gmra.mrb[0].mxu0 %v3802
  %v7315 = vpop.f32.mrb[0].mxu0
  %v7316 = vadd.f32 %v6923, %v7315
  %v7317 = vpop.f32.mrb[0].mxu0
  %v7318 = vadd.f32 %v6925, %v7317
  %v7319 = vpop.f32.mrb[0].mxu0
  %v7320 = vadd.f32 %v6927, %v7319
  %v7321 = vpop.f32.mrb[0].mxu0
  %v7322 = vadd.f32 %v6929, %v7321
  %7323 = vmatprep.mubr.bf16.mxu0 0
  %7324 = vmatmul.mubr.bf16.gmra.mrb[0].mxu0 %v3805
  %v7325 = vpop.f32.mrb[0].mxu0
  %v7326 = vadd.f32 %v6933, %v7325
  %v7327 = vpop.f32.mrb[0].mxu0
  %v7328 = vadd.f32 %v6935, %v7327
  %v7329 = vpop.f32.mrb[0].mxu0
  %v7330 = vadd.f32 %v6937, %v7329
  %v7331 = vpop.f32.mrb[0].mxu0
  %v7332 = vadd.f32 %v6939, %v7331
  %7333 = vmatprep.mubr.bf16.mxu0 0
  %7334 = vmatmul.mubr.bf16.gmra.mrb[0].mxu0 %v3808
  %v7335 = vpop.f32.mrb[0].mxu0
  %v7336 = vadd.f32 %v6943, %v7335
  %v7337 = vpop.f32.mrb[0].mxu0
  %v7338 = vadd.f32 %v6945, %v7337
  %v7339 = vpop.f32.mrb[0].mxu0
  %v7340 = vadd.f32 %v6947, %v7339
  %v7341 = vpop.f32.mrb[0].mxu0
  %v7342 = vadd.f32 %v6949, %v7341
  %7343 = vmatprep.mubr.bf16.mxu0 0
  %7344 = vmatmul.mubr.bf16.gmra.mrb[0].mxu0 %v3811
  %v7345 = vpop.f32.mrb[0].mxu0
  %v7346 = vadd.f32 %v6953, %v7345
  %v7347 = vpop.f32.mrb[0].mxu0
  %v7348 = vadd.f32 %v6955, %v7347
  %v7349 = vpop.f32.mrb[0].mxu0
  %v7350 = vadd.f32 %v6957, %v7349
  %v7351 = vpop.f32.mrb[0].mxu0
  %v7352 = vadd.f32 %v6959, %v7351
  %7353 = vmatprep.mubr.bf16.mxu0 0
  %7354 = vmatmul.mubr.bf16.gmra.mrb[0].mxu0 %v3814
  %v7355 = vpop.f32.mrb[0].mxu0
  %v7356 = vadd.f32 %v6963, %v7355
  %v7357 = vpop.f32.mrb[0].mxu0
  %v7358 = vadd.f32 %v6965, %v7357
  %v7359 = vpop.f32.mrb[0].mxu0
  %v7360 = vadd.f32 %v6967, %v7359
  %v7361 = vpop.f32.mrb[0].mxu0
  %v7362 = vadd.f32 %v6969, %v7361
  %7363 = vmatprep.mubr.bf16.mxu0 0
  %7364 = vmatmul.mubr.bf16.gmra.mrb[0].mxu0 %v3817
  %v7365 = vpop.f32.mrb[0].mxu0
  %v7366 = vadd.f32 %v6973, %v7365
  %v7367 = vpop.f32.mrb[0].mxu0
  %v7368 = vadd.f32 %v6975, %v7367
  %v7369 = vpop.f32.mrb[0].mxu0
  %v7370 = vadd.f32 %v6977, %v7369
  %v7371 = vpop.f32.mrb[0].mxu0
  %v7372 = vadd.f32 %v6979, %v7371
  %7373 = vmatprep.mubr.bf16.mxu0 0
  %7374 = vmatmul.mubr.bf16.gmra.mrb[0].mxu0 %v3820
  %v7375 = vpop.f32.mrb[0].mxu0
  %v7376 = vadd.f32 %v6983, %v7375
  %v7377 = vpop.f32.mrb[0].mxu0
  %v7378 = vadd.f32 %v6985, %v7377
  %v7379 = vpop.f32.mrb[0].mxu0
  %v7380 = vadd.f32 %v6987, %v7379
  %v7381 = vpop.f32.mrb[0].mxu0
  %v7382 = vadd.f32 %v6989, %v7381
  %7383 = vmatprep.mubr.bf16.mxu0 0
  %7384 = vmatmul.mubr.bf16.gmra.mrb[0].mxu0 %v3823
  %v7385 = vpop.f32.mrb[0].mxu0
  %v7386 = vadd.f32 %v6993, %v7385
  %v7387 = vpop.f32.mrb[0].mxu0
  %v7388 = vadd.f32 %v6995, %v7387
  %v7389 = vpop.f32.mrb[0].mxu0
  %v7390 = vadd.f32 %v6997, %v7389
  %v7391 = vpop.f32.mrb[0].mxu0
  %v7392 = vadd.f32 %v6999, %v7391
  %7393 = vmatprep.mubr.bf16.mxu0 0
  %7394 = vmatmul.mubr.bf16.gmra.mrb[0].mxu0 %v3826
  %v7395 = vpop.f32.mrb[0].mxu0
  %v7396 = vadd.f32 %v7003, %v7395
  %v7397 = vpop.f32.mrb[0].mxu0
  %v7398 = vadd.f32 %v7005, %v7397
  %v7399 = vpop.f32.mrb[0].mxu0
  %v7400 = vadd.f32 %v7007, %v7399
  %v7401 = vpop.f32.mrb[0].mxu0
  %v7402 = vadd.f32 %v7009, %v7401
  %7403 = vmatprep.mubr.bf16.mxu0 0
  %7404 = vmatmul.mubr.bf16.gmra.mrb[0].mxu0 %v3829
  %v7405 = vpop.f32.mrb[0].mxu0
  %v7406 = vadd.f32 %v7013, %v7405
  %v7407 = vpop.f32.mrb[0].mxu0
  %v7408 = vadd.f32 %v7015, %v7407
  %v7409 = vpop.f32.mrb[0].mxu0
  %v7410 = vadd.f32 %v7017, %v7409
  %v7411 = vpop.f32.mrb[0].mxu0
  %v7412 = vadd.f32 %v7019, %v7411
  %7413 = vmatprep.mubr.bf16.mxu0 0
  %7414 = vmatmul.mubr.bf16.gmra.mrb[0].mxu0 %v3832
  %v7415 = vpop.f32.mrb[0].mxu0
  %v7416 = vadd.f32 %v7023, %v7415
  %v7417 = vpop.f32.mrb[0].mxu0
  %v7418 = vadd.f32 %v7025, %v7417
  %v7419 = vpop.f32.mrb[0].mxu0
  %v7420 = vadd.f32 %v7027, %v7419
  %v7421 = vpop.f32.mrb[0].mxu0
  %v7422 = vadd.f32 %v7029, %v7421
  %7423 = vmatprep.mubr.bf16.mxu0 0
  %7424 = vmatmul.mubr.bf16.gmra.mrb[0].mxu0 %v3835
  %v7425 = vpop.f32.mrb[0].mxu0
  %v7426 = vadd.f32 %v7033, %v7425
  %v7427 = vpop.f32.mrb[0].mxu0
  %v7428 = vadd.f32 %v7035, %v7427
  %v7429 = vpop.f32.mrb[0].mxu0
  %v7430 = vadd.f32 %v7037, %v7429
  %v7431 = vpop.f32.mrb[0].mxu0
  %v7432 = vadd.f32 %v7039, %v7431
  %7433 = vmatprep.mubr.bf16.mxu0 0
  %7434 = vmatmul.mubr.bf16.gmra.mrb[0].mxu0 %v3838
  %v7435 = vpop.f32.mrb[0].mxu0
  %v7436 = vadd.f32 %v7043, %v7435
  %v7437 = vpop.f32.mrb[0].mxu0
  %v7438 = vadd.f32 %v7045, %v7437
  %v7439 = vpop.f32.mrb[0].mxu0
  %v7440 = vadd.f32 %v7047, %v7439
  %v7441 = vpop.f32.mrb[0].mxu0
  %v7442 = vadd.f32 %v7049, %v7441
  %7443 = vmatprep.mubr.bf16.mxu0 0
  %7444 = vmatmul.mubr.bf16.gmra.mrb[0].mxu0 %v3841
  %v7445 = vpop.f32.mrb[0].mxu0
  %v7446 = vadd.f32 %v7053, %v7445
  %v7447 = vpop.f32.mrb[0].mxu0
  %v7448 = vadd.f32 %v7055, %v7447
  %v7449 = vpop.f32.mrb[0].mxu0
  %v7450 = vadd.f32 %v7057, %v7449
  %v7451 = vpop.f32.mrb[0].mxu0
  %v7452 = vadd.f32 %v7059, %v7451
  %7453 = vmatprep.mubr.bf16.mxu0 0
  %7454 = vmatmul.mubr.bf16.gmra.mrb[0].mxu0 %v3844
  %v7455 = vpop.f32.mrb[0].mxu0
  %v7456 = vadd.f32 %v7063, %v7455
  %v7457 = vpop.f32.mrb[0].mxu0
  %v7458 = vadd.f32 %v7065, %v7457
  %v7459 = vpop.f32.mrb[0].mxu0
  %v7460 = vadd.f32 %v7067, %v7459
  %v7461 = vpop.f32.mrb[0].mxu0
  %v7462 = vadd.f32 %v7069, %v7461
  %7463 = vmatprep.mubr.bf16.mxu0 0
  %7464 = vmatmul.mubr.bf16.gmra.mrb[0].mxu0 %v3847
  %v7465 = vpop.f32.mrb[0].mxu0
  %v7466 = vadd.f32 %v7073, %v7465
  %v7467 = vpop.f32.mrb[0].mxu0
  %v7468 = vadd.f32 %v7075, %v7467
  %v7469 = vpop.f32.mrb[0].mxu0
  %v7470 = vadd.f32 %v7077, %v7469
  %v7471 = vpop.f32.mrb[0].mxu0
  %v7472 = vadd.f32 %v7079, %v7471
  %7473 = vmatprep.mubr.bf16.mxu0 0
  %7474 = vmatmul.mubr.bf16.gmra.mrb[0].mxu0 %v3850
  %v7475 = vpop.f32.mrb[0].mxu0
  %v7476 = vadd.f32 %v7083, %v7475
  %v7477 = vpop.f32.mrb[0].mxu0
  %v7478 = vadd.f32 %v7085, %v7477
  %v7479 = vpop.f32.mrb[0].mxu0
  %v7480 = vadd.f32 %v7087, %v7479
  %v7481 = vpop.f32.mrb[0].mxu0
  %v7482 = vadd.f32 %v7089, %v7481
  %7483 = vmatprep.mubr.bf16.mxu0 0
  %7484 = vmatmul.mubr.bf16.gmra.mrb[0].mxu0 %v3853
  %v7485 = vpop.f32.mrb[0].mxu0
  %v7486 = vadd.f32 %v7093, %v7485
  %v7487 = vpop.f32.mrb[0].mxu0
  %v7488 = vadd.f32 %v7095, %v7487
  %v7489 = vpop.f32.mrb[0].mxu0
  %v7490 = vadd.f32 %v7097, %v7489
  %v7491 = vpop.f32.mrb[0].mxu0
  %v7492 = vadd.f32 %v7099, %v7491
  %7493 = vmatprep.mubr.bf16.mxu0 0
  %7494 = vmatmul.mubr.bf16.gmra.mrb[0].mxu0 %v3856
  %v7495 = vpop.f32.mrb[0].mxu0
  %v7496 = vadd.f32 %v7103, %v7495
  %v7497 = vpop.f32.mrb[0].mxu0
  %v7498 = vadd.f32 %v7105, %v7497
  %v7499 = vpop.f32.mrb[0].mxu0
  %v7500 = vadd.f32 %v7107, %v7499
  %v7501 = vpop.f32.mrb[0].mxu0
  %v7502 = vadd.f32 %v7109, %v7501
  %7503 = vmatprep.mubr.bf16.mxu0 0
  %7504 = vmatmul.mubr.bf16.gmra.mrb[0].mxu0 %v3859
  %v7505 = vpop.f32.mrb[0].mxu0
  %v7506 = vadd.f32 %v7113, %v7505
  %v7507 = vpop.f32.mrb[0].mxu0
  %v7508 = vadd.f32 %v7115, %v7507
  %v7509 = vpop.f32.mrb[0].mxu0
  %v7510 = vadd.f32 %v7117, %v7509
  %v7511 = vpop.f32.mrb[0].mxu0
  %v7512 = vadd.f32 %v7119, %v7511
  %7513 = vmatprep.mubr.bf16.mxu0 0
  %7514 = vmatmul.mubr.bf16.gmra.mrb[0].mxu0 %v3862
  %v7515 = vpop.f32.mrb[0].mxu0
  %v7516 = vadd.f32 %v7123, %v7515
  %v7517 = vpop.f32.mrb[0].mxu0
  %v7518 = vadd.f32 %v7125, %v7517
  %v7519 = vpop.f32.mrb[0].mxu0
  %v7520 = vadd.f32 %v7127, %v7519
  %v7521 = vpop.f32.mrb[0].mxu0
  %v7522 = vadd.f32 %v7129, %v7521
  %7523 = vmatprep.mubr.bf16.mxu0 0
  %7524 = vmatmul.mubr.bf16.gmra.mrb[0].mxu0 %v3865
  %v7525 = vpop.f32.mrb[0].mxu0
  %v7526 = vadd.f32 %v7133, %v7525
  %v7527 = vpop.f32.mrb[0].mxu0
  %v7528 = vadd.f32 %v7135, %v7527
  %v7529 = vpop.f32.mrb[0].mxu0
  %v7530 = vadd.f32 %v7137, %v7529
  %v7531 = vpop.f32.mrb[0].mxu0
  %v7532 = vadd.f32 %v7139, %v7531
  %7533 = vmatprep.mubr.bf16.mxu0 0
  %7534 = vmatmul.mubr.bf16.gmra.mrb[0].mxu0 %v3868
  %v7535 = vpop.f32.mrb[0].mxu0
  %v7536 = vadd.f32 %v7143, %v7535
  %v7537 = vpop.f32.mrb[0].mxu0
  %v7538 = vadd.f32 %v7145, %v7537
  %v7539 = vpop.f32.mrb[0].mxu0
  %v7540 = vadd.f32 %v7147, %v7539
  %v7541 = vpop.f32.mrb[0].mxu0
  %v7542 = vadd.f32 %v7149, %v7541
  %7543 = vmatprep.mubr.bf16.mxu0 0
  %7544 = vmatmul.mubr.bf16.gmra.mrb[0].mxu0 %v3871
  %v7545 = vpop.f32.mrb[0].mxu0
  %v7546 = vadd.f32 %v7153, %v7545
  %v7547 = vpop.f32.mrb[0].mxu0
  %v7548 = vadd.f32 %v7155, %v7547
  %v7549 = vpop.f32.mrb[0].mxu0
  %v7550 = vadd.f32 %v7157, %v7549
  %v7551 = vpop.f32.mrb[0].mxu0
  %v7552 = vadd.f32 %v7159, %v7551
  %7553 = vmatprep.mubr.bf16.mxu0 0
  %7554 = vmatmul.mubr.bf16.gmra.mrb[0].mxu0 %v3874
  %v7555 = vpop.f32.mrb[0].mxu0
  %v7556 = vadd.f32 %v7163, %v7555
  %v7557 = vpop.f32.mrb[0].mxu0
  %v7558 = vadd.f32 %v7165, %v7557
  %v7559 = vpop.f32.mrb[0].mxu0
  %v7560 = vadd.f32 %v7167, %v7559
  %v7561 = vpop.f32.mrb[0].mxu0
  %v7562 = vadd.f32 %v7169, %v7561
  %7563 = vmatprep.mubr.bf16.mxu0 0
  %7564 = vmatmul.mubr.bf16.gmra.mrb[0].mxu0 %v3877
  %v7565 = vpop.f32.mrb[0].mxu0
  %v7566 = vadd.f32 %v7173, %v7565
  %v7567 = vpop.f32.mrb[0].mxu0
  %v7568 = vadd.f32 %v7175, %v7567
  %v7569 = vpop.f32.mrb[0].mxu0
  %v7570 = vadd.f32 %v7177, %v7569
  %v7571 = vpop.f32.mrb[0].mxu0
  %v7572 = vadd.f32 %v7179, %v7571
  %7573 = vmatprep.mubr.bf16.mxu0 0
  %7574 = vmatmul.mubr.bf16.gmra.mrb[0].mxu0 %v3880
  %v7575 = vpop.f32.mrb[0].mxu0
  %v7576 = vadd.f32 %v7183, %v7575
  %v7577 = vpop.f32.mrb[0].mxu0
  %v7578 = vadd.f32 %v7185, %v7577
  %v7579 = vpop.f32.mrb[0].mxu0
  %v7580 = vadd.f32 %v7187, %v7579
  %v7581 = vpop.f32.mrb[0].mxu0
  %v7582 = vadd.f32 %v7189, %v7581
  %7583 = vmatprep.mubr.bf16.mxu0 0
  %7584 = vmatmul.mubr.bf16.gmra.mrb[0].mxu0 %v3883
  %v7585 = vpop.f32.mrb[0].mxu0
  %v7586 = vadd.f32 %v7193, %v7585
  %v7587 = vpop.f32.mrb[0].mxu0
  %v7588 = vadd.f32 %v7195, %v7587
  %v7589 = vpop.f32.mrb[0].mxu0
  %v7590 = vadd.f32 %v7197, %v7589
  %v7591 = vpop.f32.mrb[0].mxu0
  %v7592 = vadd.f32 %v7199, %v7591
  %7593 = vmatprep.mubr.bf16.mxu0 0
  %7594 = vmatmul.mubr.bf16.gmra.mrb[0].mxu0 %v3886
  %v7595 = vpop.f32.mrb[0].mxu0
  %v7596 = vadd.f32 %v7203, %v7595
  %v7597 = vpop.f32.mrb[0].mxu0
  %v7598 = vadd.f32 %v7205, %v7597
  %v7599 = vpop.f32.mrb[0].mxu0
  %v7600 = vadd.f32 %v7207, %v7599
  %v7601 = vpop.f32.mrb[0].mxu0
  %v7602 = vadd.f32 %v7209, %v7601
  %7603 = vmatprep.mubr.bf16.mxu0 0
  %7604 = vmatmul.mubr.bf16.gmra.mrb[0].mxu0 %v3889
  %v7605 = vpop.f32.mrb[0].mxu0
  %v7606 = vadd.f32 %v7213, %v7605
  %v7607 = vpop.f32.mrb[0].mxu0
  %v7608 = vadd.f32 %v7215, %v7607
  %v7609 = vpop.f32.mrb[0].mxu0
  %v7610 = vadd.f32 %v7217, %v7609
  %v7611 = vpop.f32.mrb[0].mxu0
  %v7612 = vadd.f32 %v7219, %v7611
  %7613 = vmatprep.mubr.bf16.mxu0 0
  %7614 = vmatmul.mubr.bf16.gmra.mrb[0].mxu0 %v3892
  %v7615 = vpop.f32.mrb[0].mxu0
  %v7616 = vadd.f32 %v7223, %v7615
  %v7617 = vpop.f32.mrb[0].mxu0
  %v7618 = vadd.f32 %v7225, %v7617
  %v7619 = vpop.f32.mrb[0].mxu0
  %v7620 = vadd.f32 %v7227, %v7619
  %v7621 = vpop.f32.mrb[0].mxu0
  %v7622 = vadd.f32 %v7229, %v7621
  %7623 = vdwg.mxu0
  %v7624 = vpack.c.bf16 %v7270, %v7266
  %v7625 = vpack.c.bf16 %v7272, %v7268
  %v7626 = vpack.c.bf16 %v7280, %v7276
  %v7627 = vpack.c.bf16 %v7282, %v7278
  %v7628 = vpack.c.bf16 %v7290, %v7286
  %v7629 = vpack.c.bf16 %v7292, %v7288
  %v7630 = vpack.c.bf16 %v7300, %v7296
  %v7631 = vpack.c.bf16 %v7302, %v7298
  %v7632 = vpack.c.bf16 %v7310, %v7306
  %v7633 = vpack.c.bf16 %v7312, %v7308
  %v7634 = vpack.c.bf16 %v7320, %v7316
  %v7635 = vpack.c.bf16 %v7322, %v7318
  %v7636 = vpack.c.bf16 %v7330, %v7326
  %v7637 = vpack.c.bf16 %v7332, %v7328
  %v7638 = vpack.c.bf16 %v7340, %v7336
  %v7639 = vpack.c.bf16 %v7342, %v7338
  %v7640 = vpack.c.bf16 %v7350, %v7346
  %v7641 = vpack.c.bf16 %v7352, %v7348
  %v7642 = vpack.c.bf16 %v7360, %v7356
  %v7643 = vpack.c.bf16 %v7362, %v7358
  %v7644 = vpack.c.bf16 %v7370, %v7366
  %v7645 = vpack.c.bf16 %v7372, %v7368
  %v7646 = vpack.c.bf16 %v7380, %v7376
  %v7647 = vpack.c.bf16 %v7382, %v7378
  %v7648 = vpack.c.bf16 %v7390, %v7386
  %v7649 = vpack.c.bf16 %v7392, %v7388
  %v7650 = vpack.c.bf16 %v7400, %v7396
  %v7651 = vpack.c.bf16 %v7402, %v7398
  %v7652 = vpack.c.bf16 %v7410, %v7406
  %v7653 = vpack.c.bf16 %v7412, %v7408
  %v7654 = vpack.c.bf16 %v7420, %v7416
  %v7655 = vpack.c.bf16 %v7422, %v7418
  %v7656 = vpack.c.bf16 %v7430, %v7426
  %v7657 = vpack.c.bf16 %v7432, %v7428
  %v7658 = vpack.c.bf16 %v7440, %v7436
  %v7659 = vpack.c.bf16 %v7442, %v7438
  %v7660 = vpack.c.bf16 %v7450, %v7446
  %v7661 = vpack.c.bf16 %v7452, %v7448
  %v7662 = vpack.c.bf16 %v7460, %v7456
  %v7663 = vpack.c.bf16 %v7462, %v7458
  %v7664 = vpack.c.bf16 %v7470, %v7466
  %v7665 = vpack.c.bf16 %v7472, %v7468
  %v7666 = vpack.c.bf16 %v7480, %v7476
  %v7667 = vpack.c.bf16 %v7482, %v7478
  %v7668 = vpack.c.bf16 %v7490, %v7486
  %v7669 = vpack.c.bf16 %v7492, %v7488
  %v7670 = vpack.c.bf16 %v7500, %v7496
  %v7671 = vpack.c.bf16 %v7502, %v7498
  %v7672 = vpack.c.bf16 %v7510, %v7506
  %v7673 = vpack.c.bf16 %v7512, %v7508
  %v7674 = vpack.c.bf16 %v7520, %v7516
  %v7675 = vpack.c.bf16 %v7522, %v7518
  %v7676 = vpack.c.bf16 %v7530, %v7526
  %v7677 = vpack.c.bf16 %v7532, %v7528
  %v7678 = vpack.c.bf16 %v7540, %v7536
  %v7679 = vpack.c.bf16 %v7542, %v7538
  %v7680 = vpack.c.bf16 %v7550, %v7546
  %v7681 = vpack.c.bf16 %v7552, %v7548
  %v7682 = vpack.c.bf16 %v7560, %v7556
  %v7683 = vpack.c.bf16 %v7562, %v7558
  %v7684 = vpack.c.bf16 %v7570, %v7566
  %v7685 = vpack.c.bf16 %v7572, %v7568
  %v7686 = vpack.c.bf16 %v7580, %v7576
  %v7687 = vpack.c.bf16 %v7582, %v7578
  %v7688 = vpack.c.bf16 %v7590, %v7586
  %v7689 = vpack.c.bf16 %v7592, %v7588
  %v7690 = vpack.c.bf16 %v7600, %v7596
  %v7691 = vpack.c.bf16 %v7602, %v7598
  %v7692 = vpack.c.bf16 %v7610, %v7606
  %v7693 = vpack.c.bf16 %v7612, %v7608
  %v7694 = vpack.c.bf16 %v7620, %v7616
  %v7695 = vpack.c.bf16 %v7622, %v7618
  %v7768 = vunpack.c.l.b16 %v7624
  %v7769 = vunpack.c.l.b16 %v7625
  %v7770 = vunpack.c.h.b16 %v7624
  %v7771 = vunpack.c.h.b16 %v7625
  %v7772 = vunpack.c.l.b16 %v7626
  %v7773 = vunpack.c.l.b16 %v7627
  %v7774 = vunpack.c.h.b16 %v7626
  %v7775 = vunpack.c.h.b16 %v7627
  %v7776 = vunpack.c.l.b16 %v7628
  %v7777 = vunpack.c.l.b16 %v7629
  %v7778 = vunpack.c.h.b16 %v7628
  %v7779 = vunpack.c.h.b16 %v7629
  %v7780 = vunpack.c.l.b16 %v7630
  %v7781 = vunpack.c.l.b16 %v7631
  %v7782 = vunpack.c.h.b16 %v7630
  %v7783 = vunpack.c.h.b16 %v7631
  %v7784 = vunpack.c.l.b16 %v7632
  %v7785 = vunpack.c.l.b16 %v7633
  %v7786 = vunpack.c.h.b16 %v7632
  %v7787 = vunpack.c.h.b16 %v7633
  %v7788 = vunpack.c.l.b16 %v7634
  %v7789 = vunpack.c.l.b16 %v7635
  %v7790 = vunpack.c.h.b16 %v7634
  %v7791 = vunpack.c.h.b16 %v7635
  %v7792 = vunpack.c.l.b16 %v7636
  %v7793 = vunpack.c.l.b16 %v7637
  %v7794 = vunpack.c.h.b16 %v7636
  %v7795 = vunpack.c.h.b16 %v7637
  %v7796 = vunpack.c.l.b16 %v7638
  %v7797 = vunpack.c.l.b16 %v7639
  %v7798 = vunpack.c.h.b16 %v7638
  %v7799 = vunpack.c.h.b16 %v7639
  %v7800 = vunpack.c.l.b16 %v7640
  %v7801 = vunpack.c.l.b16 %v7641
  %v7802 = vunpack.c.h.b16 %v7640
  %v7803 = vunpack.c.h.b16 %v7641
  %v7804 = vunpack.c.l.b16 %v7642
  %v7805 = vunpack.c.l.b16 %v7643
  %v7806 = vunpack.c.h.b16 %v7642
  %v7807 = vunpack.c.h.b16 %v7643
  %v7808 = vunpack.c.l.b16 %v7644
  %v7809 = vunpack.c.l.b16 %v7645
  %v7810 = vunpack.c.h.b16 %v7644
  %v7811 = vunpack.c.h.b16 %v7645
  %v7812 = vunpack.c.l.b16 %v7646
  %v7813 = vunpack.c.l.b16 %v7647
  %v7814 = vunpack.c.h.b16 %v7646
  %v7815 = vunpack.c.h.b16 %v7647
  %v7816 = vunpack.c.l.b16 %v7648
  %v7817 = vunpack.c.l.b16 %v7649
  %v7818 = vunpack.c.h.b16 %v7648
  %v7819 = vunpack.c.h.b16 %v7649
  %v7820 = vunpack.c.l.b16 %v7650
  %v7821 = vunpack.c.l.b16 %v7651
  %v7822 = vunpack.c.h.b16 %v7650
  %v7823 = vunpack.c.h.b16 %v7651
  %v7824 = vunpack.c.l.b16 %v7652
  %v7825 = vunpack.c.l.b16 %v7653
  %v7826 = vunpack.c.h.b16 %v7652
  %v7827 = vunpack.c.h.b16 %v7653
  %v7828 = vunpack.c.l.b16 %v7654
  %v7829 = vunpack.c.l.b16 %v7655
  %v7830 = vunpack.c.h.b16 %v7654
  %v7831 = vunpack.c.h.b16 %v7655
  %v7832 = vunpack.c.l.b16 %v7656
  %v7833 = vunpack.c.l.b16 %v7657
  %v7834 = vunpack.c.h.b16 %v7656
  %v7835 = vunpack.c.h.b16 %v7657
  %v7836 = vunpack.c.l.b16 %v7658
  %v7837 = vunpack.c.l.b16 %v7659
  %v7838 = vunpack.c.h.b16 %v7658
  %v7839 = vunpack.c.h.b16 %v7659
  %v7840 = vunpack.c.l.b16 %v7660
  %v7841 = vunpack.c.l.b16 %v7661
  %v7842 = vunpack.c.h.b16 %v7660
  %v7843 = vunpack.c.h.b16 %v7661
  %v7844 = vunpack.c.l.b16 %v7662
  %v7845 = vunpack.c.l.b16 %v7663
  %v7846 = vunpack.c.h.b16 %v7662
  %v7847 = vunpack.c.h.b16 %v7663
  %v7848 = vunpack.c.l.b16 %v7664
  %v7849 = vunpack.c.l.b16 %v7665
  %v7850 = vunpack.c.h.b16 %v7664
  %v7851 = vunpack.c.h.b16 %v7665
  %v7852 = vunpack.c.l.b16 %v7666
  %v7853 = vunpack.c.l.b16 %v7667
  %v7854 = vunpack.c.h.b16 %v7666
  %v7855 = vunpack.c.h.b16 %v7667
  %v7856 = vunpack.c.l.b16 %v7668
  %v7857 = vunpack.c.l.b16 %v7669
  %v7858 = vunpack.c.h.b16 %v7668
  %v7859 = vunpack.c.h.b16 %v7669
  %v7860 = vunpack.c.l.b16 %v7670
  %v7861 = vunpack.c.l.b16 %v7671
  %v7862 = vunpack.c.h.b16 %v7670
  %v7863 = vunpack.c.h.b16 %v7671
  %v7864 = vunpack.c.l.b16 %v7672
  %v7865 = vunpack.c.l.b16 %v7673
  %v7866 = vunpack.c.h.b16 %v7672
  %v7867 = vunpack.c.h.b16 %v7673
  %v7868 = vunpack.c.l.b16 %v7674
  %v7869 = vunpack.c.l.b16 %v7675
  %v7870 = vunpack.c.h.b16 %v7674
  %v7871 = vunpack.c.h.b16 %v7675
  %v7872 = vunpack.c.l.b16 %v7676
  %v7873 = vunpack.c.l.b16 %v7677
  %v7874 = vunpack.c.h.b16 %v7676
  %v7875 = vunpack.c.h.b16 %v7677
  %v7876 = vunpack.c.l.b16 %v7678
  %v7877 = vunpack.c.l.b16 %v7679
  %v7878 = vunpack.c.h.b16 %v7678
  %v7879 = vunpack.c.h.b16 %v7679
  %v7880 = vunpack.c.l.b16 %v7680
  %v7881 = vunpack.c.l.b16 %v7681
  %v7882 = vunpack.c.h.b16 %v7680
  %v7883 = vunpack.c.h.b16 %v7681
  %v7884 = vunpack.c.l.b16 %v7682
  %v7885 = vunpack.c.l.b16 %v7683
  %v7886 = vunpack.c.h.b16 %v7682
  %v7887 = vunpack.c.h.b16 %v7683
  %v7888 = vunpack.c.l.b16 %v7684
  %v7889 = vunpack.c.l.b16 %v7685
  %v7890 = vunpack.c.h.b16 %v7684
  %v7891 = vunpack.c.h.b16 %v7685
  %v7892 = vunpack.c.l.b16 %v7686
  %v7893 = vunpack.c.l.b16 %v7687
  %v7894 = vunpack.c.h.b16 %v7686
  %v7895 = vunpack.c.h.b16 %v7687
  %v7896 = vunpack.c.l.b16 %v7688
  %v7897 = vunpack.c.l.b16 %v7689
  %v7898 = vunpack.c.h.b16 %v7688
  %v7899 = vunpack.c.h.b16 %v7689
  %v7900 = vunpack.c.l.b16 %v7690
  %v7901 = vunpack.c.l.b16 %v7691
  %v7902 = vunpack.c.h.b16 %v7690
  %v7903 = vunpack.c.h.b16 %v7691
  %v7904 = vunpack.c.l.b16 %v7692
  %v7905 = vunpack.c.l.b16 %v7693
  %v7906 = vunpack.c.h.b16 %v7692
  %v7907 = vunpack.c.h.b16 %v7693
  %v7908 = vunpack.c.l.b16 %v7694
  %v7909 = vunpack.c.l.b16 %v7695
  %v7910 = vunpack.c.h.b16 %v7694
  %v7911 = vunpack.c.h.b16 %v7695
  %v7912 = vpack.c.b16 %v7769, %v7768
  %v7913 = vpack.c.b16 %v7771, %v7770
  %v7914 = vpack.c.b16 %v7773, %v7772
  %v7915 = vpack.c.b16 %v7775, %v7774
  %v7916 = vpack.c.b16 %v7777, %v7776
  %v7917 = vpack.c.b16 %v7779, %v7778
  %v7918 = vpack.c.b16 %v7781, %v7780
  %v7919 = vpack.c.b16 %v7783, %v7782
  %v7920 = vpack.c.b16 %v7785, %v7784
  %v7921 = vpack.c.b16 %v7787, %v7786
  %v7922 = vpack.c.b16 %v7789, %v7788
  %v7923 = vpack.c.b16 %v7791, %v7790
  %v7924 = vpack.c.b16 %v7793, %v7792
  %v7925 = vpack.c.b16 %v7795, %v7794
  %v7926 = vpack.c.b16 %v7797, %v7796
  %v7927 = vpack.c.b16 %v7799, %v7798
  %v7928 = vpack.c.b16 %v7801, %v7800
  %v7929 = vpack.c.b16 %v7803, %v7802
  %v7930 = vpack.c.b16 %v7805, %v7804
  %v7931 = vpack.c.b16 %v7807, %v7806
  %v7932 = vpack.c.b16 %v7809, %v7808
  %v7933 = vpack.c.b16 %v7811, %v7810
  %v7934 = vpack.c.b16 %v7813, %v7812
  %v7935 = vpack.c.b16 %v7815, %v7814
  %v7936 = vpack.c.b16 %v7817, %v7816
  %v7937 = vpack.c.b16 %v7819, %v7818
  %v7938 = vpack.c.b16 %v7821, %v7820
  %v7939 = vpack.c.b16 %v7823, %v7822
  %v7940 = vpack.c.b16 %v7825, %v7824
  %v7941 = vpack.c.b16 %v7827, %v7826
  %v7942 = vpack.c.b16 %v7829, %v7828
  %v7943 = vpack.c.b16 %v7831, %v7830
  %v7944 = vpack.c.b16 %v7833, %v7832
  %v7945 = vpack.c.b16 %v7835, %v7834
  %v7946 = vpack.c.b16 %v7837, %v7836
  %v7947 = vpack.c.b16 %v7839, %v7838
  %v7948 = vpack.c.b16 %v7841, %v7840
  %v7949 = vpack.c.b16 %v7843, %v7842
  %v7950 = vpack.c.b16 %v7845, %v7844
  %v7951 = vpack.c.b16 %v7847, %v7846
  %v7952 = vpack.c.b16 %v7849, %v7848
  %v7953 = vpack.c.b16 %v7851, %v7850
  %v7954 = vpack.c.b16 %v7853, %v7852
  %v7955 = vpack.c.b16 %v7855, %v7854
  %v7956 = vpack.c.b16 %v7857, %v7856
  %v7957 = vpack.c.b16 %v7859, %v7858
  %v7958 = vpack.c.b16 %v7861, %v7860
  %v7959 = vpack.c.b16 %v7863, %v7862
  %v7960 = vpack.c.b16 %v7865, %v7864
  %v7961 = vpack.c.b16 %v7867, %v7866
  %v7962 = vpack.c.b16 %v7869, %v7868
  %v7963 = vpack.c.b16 %v7871, %v7870
  %v7964 = vpack.c.b16 %v7873, %v7872
  %v7965 = vpack.c.b16 %v7875, %v7874
  %v7966 = vpack.c.b16 %v7877, %v7876
  %v7967 = vpack.c.b16 %v7879, %v7878
  %v7968 = vpack.c.b16 %v7881, %v7880
  %v7969 = vpack.c.b16 %v7883, %v7882
  %v7970 = vpack.c.b16 %v7885, %v7884
  %v7971 = vpack.c.b16 %v7887, %v7886
  %v7972 = vpack.c.b16 %v7889, %v7888
  %v7973 = vpack.c.b16 %v7891, %v7890
  %v7974 = vpack.c.b16 %v7893, %v7892
  %v7975 = vpack.c.b16 %v7895, %v7894
  %v7976 = vpack.c.b16 %v7897, %v7896
  %v7977 = vpack.c.b16 %v7899, %v7898
  %v7978 = vpack.c.b16 %v7901, %v7900
  %v7979 = vpack.c.b16 %v7903, %v7902
  %v7980 = vpack.c.b16 %v7905, %v7904
  %v7981 = vpack.c.b16 %v7907, %v7906
  %v7982 = vpack.c.b16 %v7909, %v7908
  %v7983 = vpack.c.b16 %v7911, %v7910
  %s8056 = scalar_lea.vmem %s5, 576
  %8057 = vst.msk [vmem:[%s8056] sm:$0xff] %vm5507, %v7912
  %8058 = vst.msk [vmem:[%s8056 + $0x8] sm:$0xff] %vm5507, %v7913
  %8059 = vst.msk [vmem:[%s8056 + $0x10] sm:$0xff] %vm5507, %v7914
  %8060 = vst.msk [vmem:[%s8056 + $0x18] sm:$0xff] %vm5507, %v7915
  %8061 = vst.msk [vmem:[%s8056 + $0x20] sm:$0xff] %vm5507, %v7916
  %8062 = vst.msk [vmem:[%s8056 + $0x28] sm:$0xff] %vm5507, %v7917
  %8063 = vst.msk [vmem:[%s8056 + $0x30] sm:$0xff] %vm5507, %v7918
  %8064 = vst.msk [vmem:[%s8056 + $0x38] sm:$0xff] %vm5507, %v7919
  %8065 = vst.msk [vmem:[%s8056 + $0x40] sm:$0xff] %vm5507, %v7920
  %8066 = vst.msk [vmem:[%s8056 + $0x48] sm:$0xff] %vm5507, %v7921
  %8067 = vst.msk [vmem:[%s8056 + $0x50] sm:$0xff] %vm5507, %v7922
  %8068 = vst.msk [vmem:[%s8056 + $0x58] sm:$0xff] %vm5507, %v7923
  %8069 = vst.msk [vmem:[%s8056 + $0x60] sm:$0xff] %vm5507, %v7924
  %8070 = vst.msk [vmem:[%s8056 + $0x68] sm:$0xff] %vm5507, %v7925
  %8071 = vst.msk [vmem:[%s8056 + $0x70] sm:$0xff] %vm5507, %v7926
  %8072 = vst.msk [vmem:[%s8056 + $0x78] sm:$0xff] %vm5507, %v7927
  %8073 = vst.msk [vmem:[%s8056 + $0x80] sm:$0xff] %vm5507, %v7928
  %8074 = vst.msk [vmem:[%s8056 + $0x88] sm:$0xff] %vm5507, %v7929
  %8075 = vst.msk [vmem:[%s8056 + $0x90] sm:$0xff] %vm5507, %v7930
  %8076 = vst.msk [vmem:[%s8056 + $0x98] sm:$0xff] %vm5507, %v7931
  %8077 = vst.msk [vmem:[%s8056 + $0xa0] sm:$0xff] %vm5507, %v7932
  %8078 = vst.msk [vmem:[%s8056 + $0xa8] sm:$0xff] %vm5507, %v7933
  %8079 = vst.msk [vmem:[%s8056 + $0xb0] sm:$0xff] %vm5507, %v7934
  %8080 = vst.msk [vmem:[%s8056 + $0xb8] sm:$0xff] %vm5507, %v7935
  %8081 = vst.msk [vmem:[%s8056 + $0xc0] sm:$0xff] %vm5507, %v7936
  %8082 = vst.msk [vmem:[%s8056 + $0xc8] sm:$0xff] %vm5507, %v7937
  %8083 = vst.msk [vmem:[%s8056 + $0xd0] sm:$0xff] %vm5507, %v7938
  %8084 = vst.msk [vmem:[%s8056 + $0xd8] sm:$0xff] %vm5507, %v7939
  %8085 = vst.msk [vmem:[%s8056 + $0xe0] sm:$0xff] %vm5507, %v7940
  %8086 = vst.msk [vmem:[%s8056 + $0xe8] sm:$0xff] %vm5507, %v7941
  %8087 = vst.msk [vmem:[%s8056 + $0xf0] sm:$0xff] %vm5507, %v7942
  %8088 = vst.msk [vmem:[%s8056 + $0xf8] sm:$0xff] %vm5507, %v7943
  %8089 = vst.msk [vmem:[%s8056 + $0x100] sm:$0xff] %vm5507, %v7944
  %8090 = vst.msk [vmem:[%s8056 + $0x108] sm:$0xff] %vm5507, %v7945
  %8091 = vst.msk [vmem:[%s8056 + $0x110] sm:$0xff] %vm5507, %v7946
  %8092 = vst.msk [vmem:[%s8056 + $0x118] sm:$0xff] %vm5507, %v7947
  %8093 = vst.msk [vmem:[%s8056 + $0x120] sm:$0xff] %vm5507, %v7948
  %8094 = vst.msk [vmem:[%s8056 + $0x128] sm:$0xff] %vm5507, %v7949
  %8095 = vst.msk [vmem:[%s8056 + $0x130] sm:$0xff] %vm5507, %v7950
  %8096 = vst.msk [vmem:[%s8056 + $0x138] sm:$0xff] %vm5507, %v7951
  %8097 = vst.msk [vmem:[%s8056 + $0x140] sm:$0xff] %vm5507, %v7952
  %8098 = vst.msk [vmem:[%s8056 + $0x148] sm:$0xff] %vm5507, %v7953
  %8099 = vst.msk [vmem:[%s8056 + $0x150] sm:$0xff] %vm5507, %v7954
  %8100 = vst.msk [vmem:[%s8056 + $0x158] sm:$0xff] %vm5507, %v7955
  %8101 = vst.msk [vmem:[%s8056 + $0x160] sm:$0xff] %vm5507, %v7956
  %8102 = vst.msk [vmem:[%s8056 + $0x168] sm:$0xff] %vm5507, %v7957
  %8103 = vst.msk [vmem:[%s8056 + $0x170] sm:$0xff] %vm5507, %v7958
  %8104 = vst.msk [vmem:[%s8056 + $0x178] sm:$0xff] %vm5507, %v7959
  %8105 = vst.msk [vmem:[%s8056 + $0x180] sm:$0xff] %vm5507, %v7960
  %8106 = vst.msk [vmem:[%s8056 + $0x188] sm:$0xff] %vm5507, %v7961
  %8107 = vst.msk [vmem:[%s8056 + $0x190] sm:$0xff] %vm5507, %v7962
  %8108 = vst.msk [vmem:[%s8056 + $0x198] sm:$0xff] %vm5507, %v7963
  %8109 = vst.msk [vmem:[%s8056 + $0x1a0] sm:$0xff] %vm5507, %v7964
  %8110 = vst.msk [vmem:[%s8056 + $0x1a8] sm:$0xff] %vm5507, %v7965
  %8111 = vst.msk [vmem:[%s8056 + $0x1b0] sm:$0xff] %vm5507, %v7966
  %8112 = vst.msk [vmem:[%s8056 + $0x1b8] sm:$0xff] %vm5507, %v7967
  %8113 = vst.msk [vmem:[%s8056 + $0x1c0] sm:$0xff] %vm5507, %v7968
  %8114 = vst.msk [vmem:[%s8056 + $0x1c8] sm:$0xff] %vm5507, %v7969
  %8115 = vst.msk [vmem:[%s8056 + $0x1d0] sm:$0xff] %vm5507, %v7970
  %8116 = vst.msk [vmem:[%s8056 + $0x1d8] sm:$0xff] %vm5507, %v7971
  %8117 = vst.msk [vmem:[%s8056 + $0x1e0] sm:$0xff] %vm5507, %v7972
  %8118 = vst.msk [vmem:[%s8056 + $0x1e8] sm:$0xff] %vm5507, %v7973
  %8119 = vst.msk [vmem:[%s8056 + $0x1f0] sm:$0xff] %vm5507, %v7974
  %8120 = vst.msk [vmem:[%s8056 + $0x1f8] sm:$0xff] %vm5507, %v7975
  %8121 = vst.msk [vmem:[%s8056 + $0x200] sm:$0xff] %vm5507, %v7976
  %8122 = vst.msk [vmem:[%s8056 + $0x208] sm:$0xff] %vm5507, %v7977
  %8123 = vst.msk [vmem:[%s8056 + $0x210] sm:$0xff] %vm5507, %v7978
  %8124 = vst.msk [vmem:[%s8056 + $0x218] sm:$0xff] %vm5507, %v7979
  %8125 = vst.msk [vmem:[%s8056 + $0x220] sm:$0xff] %vm5507, %v7980
  %8126 = vst.msk [vmem:[%s8056 + $0x228] sm:$0xff] %vm5507, %v7981
  %8127 = vst.msk [vmem:[%s8056 + $0x230] sm:$0xff] %vm5507, %v7982
  %8128 = vst.msk [vmem:[%s8056 + $0x238] sm:$0xff] %vm5507, %v7983
  %s8129 = scalar_lea.vmem %s3, 1152
  %v8130 = vld [vmem:[%s8129] sm:$0xff]
  %v8131 = vld [vmem:[%s8129 + $0x8] sm:$0xff]
  %v8132 = vld [vmem:[%s8129 + $0x10] sm:$0xff]
  %v8133 = vld [vmem:[%s8129 + $0x18] sm:$0xff]
  %v8134 = vld [vmem:[%s8129 + $0x20] sm:$0xff]
  %v8135 = vld [vmem:[%s8129 + $0x28] sm:$0xff]
  %v8136 = vld [vmem:[%s8129 + $0x30] sm:$0xff]
  %v8137 = vld [vmem:[%s8129 + $0x38] sm:$0xff]
  %v8138 = vld [vmem:[%s8129 + $0x40] sm:$0xff]
  %v8139 = vld [vmem:[%s8129 + $0x48] sm:$0xff]
  %v8140 = vld [vmem:[%s8129 + $0x50] sm:$0xff]
  %v8141 = vld [vmem:[%s8129 + $0x58] sm:$0xff]
  %v8142 = vld [vmem:[%s8129 + $0x60] sm:$0xff]
  %v8143 = vld [vmem:[%s8129 + $0x68] sm:$0xff]
  %v8144 = vld [vmem:[%s8129 + $0x70] sm:$0xff]
  %v8145 = vld [vmem:[%s8129 + $0x78] sm:$0xff]
  %v8146 = vld [vmem:[%s8129 + $0x80] sm:$0xff]
  %v8147 = vld [vmem:[%s8129 + $0x88] sm:$0xff]
  %v8148 = vld [vmem:[%s8129 + $0x90] sm:$0xff]
  %v8149 = vld [vmem:[%s8129 + $0x98] sm:$0xff]
  %v8150 = vld [vmem:[%s8129 + $0xa0] sm:$0xff]
  %v8151 = vld [vmem:[%s8129 + $0xa8] sm:$0xff]
  %v8152 = vld [vmem:[%s8129 + $0xb0] sm:$0xff]
  %v8153 = vld [vmem:[%s8129 + $0xb8] sm:$0xff]
  %v8154 = vld [vmem:[%s8129 + $0xc0] sm:$0xff]
  %v8155 = vld [vmem:[%s8129 + $0xc8] sm:$0xff]
  %v8156 = vld [vmem:[%s8129 + $0xd0] sm:$0xff]
  %v8157 = vld [vmem:[%s8129 + $0xd8] sm:$0xff]
  %v8158 = vld [vmem:[%s8129 + $0xe0] sm:$0xff]
  %v8159 = vld [vmem:[%s8129 + $0xe8] sm:$0xff]
  %v8160 = vld [vmem:[%s8129 + $0xf0] sm:$0xff]
  %v8161 = vld [vmem:[%s8129 + $0xf8] sm:$0xff]
  %v8162 = vld [vmem:[%s8129 + $0x100] sm:$0xff]
  %v8163 = vld [vmem:[%s8129 + $0x108] sm:$0xff]
  %v8164 = vld [vmem:[%s8129 + $0x110] sm:$0xff]
  %v8165 = vld [vmem:[%s8129 + $0x118] sm:$0xff]
  %v8166 = vld [vmem:[%s8129 + $0x120] sm:$0xff]
  %v8167 = vld [vmem:[%s8129 + $0x128] sm:$0xff]
  %v8168 = vld [vmem:[%s8129 + $0x130] sm:$0xff]
  %v8169 = vld [vmem:[%s8129 + $0x138] sm:$0xff]
  %v8170 = vld [vmem:[%s8129 + $0x140] sm:$0xff]
  %v8171 = vld [vmem:[%s8129 + $0x148] sm:$0xff]
  %v8172 = vld [vmem:[%s8129 + $0x150] sm:$0xff]
  %v8173 = vld [vmem:[%s8129 + $0x158] sm:$0xff]
  %v8174 = vld [vmem:[%s8129 + $0x160] sm:$0xff]
  %v8175 = vld [vmem:[%s8129 + $0x168] sm:$0xff]
  %v8176 = vld [vmem:[%s8129 + $0x170] sm:$0xff]
  %v8177 = vld [vmem:[%s8129 + $0x178] sm:$0xff]
  %v8178 = vld [vmem:[%s8129 + $0x180] sm:$0xff]
  %v8179 = vld [vmem:[%s8129 + $0x188] sm:$0xff]
  %v8180 = vld [vmem:[%s8129 + $0x190] sm:$0xff]
  %v8181 = vld [vmem:[%s8129 + $0x198] sm:$0xff]
  %v8182 = vld [vmem:[%s8129 + $0x1a0] sm:$0xff]
  %v8183 = vld [vmem:[%s8129 + $0x1a8] sm:$0xff]
  %v8184 = vld [vmem:[%s8129 + $0x1b0] sm:$0xff]
  %v8185 = vld [vmem:[%s8129 + $0x1b8] sm:$0xff]
  %v8186 = vld [vmem:[%s8129 + $0x1c0] sm:$0xff]
  %v8187 = vld [vmem:[%s8129 + $0x1c8] sm:$0xff]
  %v8188 = vld [vmem:[%s8129 + $0x1d0] sm:$0xff]
  %v8189 = vld [vmem:[%s8129 + $0x1d8] sm:$0xff]
  %v8190 = vld [vmem:[%s8129 + $0x1e0] sm:$0xff]
  %v8191 = vld [vmem:[%s8129 + $0x1e8] sm:$0xff]
  %v8192 = vld [vmem:[%s8129 + $0x1f0] sm:$0xff]
  %v8193 = vld [vmem:[%s8129 + $0x1f8] sm:$0xff]
  %v8194 = vld [vmem:[%s8129 + $0x200] sm:$0xff]
  %v8195 = vld [vmem:[%s8129 + $0x208] sm:$0xff]
  %v8196 = vld [vmem:[%s8129 + $0x210] sm:$0xff]
  %v8197 = vld [vmem:[%s8129 + $0x218] sm:$0xff]
  %v8198 = vld [vmem:[%s8129 + $0x220] sm:$0xff]
  %v8199 = vld [vmem:[%s8129 + $0x228] sm:$0xff]
  %v8200 = vld [vmem:[%s8129 + $0x230] sm:$0xff]
  %v8201 = vld [vmem:[%s8129 + $0x238] sm:$0xff]
  %v8202 = vld [vmem:[#allocation2] sm:$0xff]
  %v8203 = vld [vmem:[#allocation2 + $0x8] sm:$0xff]
  %v8204 = vld [vmem:[#allocation2 + $0x10] sm:$0xff]
  %v8205 = vld [vmem:[#allocation2 + $0x18] sm:$0xff]
  %v8206 = vld [vmem:[#allocation2 + $0x20] sm:$0xff]
  %v8207 = vld [vmem:[#allocation2 + $0x28] sm:$0xff]
  %v8208 = vld [vmem:[#allocation2 + $0x30] sm:$0xff]
  %v8209 = vld [vmem:[#allocation2 + $0x38] sm:$0xff]
  %v8210 = vld [vmem:[#allocation2 + $0x40] sm:$0xff]
  %v8211 = vld [vmem:[#allocation2 + $0x48] sm:$0xff]
  %v8212 = vld [vmem:[#allocation2 + $0x50] sm:$0xff]
  %v8213 = vld [vmem:[#allocation2 + $0x58] sm:$0xff]
  %v8214 = vld [vmem:[#allocation2 + $0x60] sm:$0xff]
  %v8215 = vld [vmem:[#allocation2 + $0x68] sm:$0xff]
  %v8216 = vld [vmem:[#allocation2 + $0x70] sm:$0xff]
  %v8217 = vld [vmem:[#allocation2 + $0x78] sm:$0xff]
  %v8218 = vld [vmem:[#allocation2 + $0x80] sm:$0xff]
  %v8219 = vld [vmem:[#allocation2 + $0x88] sm:$0xff]
  %v8220 = vld [vmem:[#allocation2 + $0x90] sm:$0xff]
  %v8221 = vld [vmem:[#allocation2 + $0x98] sm:$0xff]
  %v8222 = vld [vmem:[#allocation2 + $0xa0] sm:$0xff]
  %v8223 = vld [vmem:[#allocation2 + $0xa8] sm:$0xff]
  %v8224 = vld [vmem:[#allocation2 + $0xb0] sm:$0xff]
  %v8225 = vld [vmem:[#allocation2 + $0xb8] sm:$0xff]
  %v8226 = vld [vmem:[#allocation2 + $0xc0] sm:$0xff]
  %v8227 = vld [vmem:[#allocation2 + $0xc8] sm:$0xff]
  %v8228 = vld [vmem:[#allocation2 + $0xd0] sm:$0xff]
  %v8229 = vld [vmem:[#allocation2 + $0xd8] sm:$0xff]
  %v8230 = vld [vmem:[#allocation2 + $0xe0] sm:$0xff]
  %v8231 = vld [vmem:[#allocation2 + $0xe8] sm:$0xff]
  %v8232 = vld [vmem:[#allocation2 + $0xf0] sm:$0xff]
  %v8233 = vld [vmem:[#allocation2 + $0xf8] sm:$0xff]
  %v8234 = vld [vmem:[#allocation2 + $0x100] sm:$0xff]
  %v8235 = vld [vmem:[#allocation2 + $0x108] sm:$0xff]
  %v8236 = vld [vmem:[#allocation2 + $0x110] sm:$0xff]
  %v8237 = vld [vmem:[#allocation2 + $0x118] sm:$0xff]
  %v8238 = vld [vmem:[#allocation2 + $0x120] sm:$0xff]
  %v8239 = vld [vmem:[#allocation2 + $0x128] sm:$0xff]
  %v8240 = vld [vmem:[#allocation2 + $0x130] sm:$0xff]
  %v8241 = vld [vmem:[#allocation2 + $0x138] sm:$0xff]
  %v8242 = vld [vmem:[#allocation2 + $0x140] sm:$0xff]
  %v8243 = vld [vmem:[#allocation2 + $0x148] sm:$0xff]
  %v8244 = vld [vmem:[#allocation2 + $0x150] sm:$0xff]
  %v8245 = vld [vmem:[#allocation2 + $0x158] sm:$0xff]
  %v8246 = vld [vmem:[#allocation2 + $0x160] sm:$0xff]
  %v8247 = vld [vmem:[#allocation2 + $0x168] sm:$0xff]
  %v8248 = vld [vmem:[#allocation2 + $0x170] sm:$0xff]
  %v8249 = vld [vmem:[#allocation2 + $0x178] sm:$0xff]
  %v8250 = vld [vmem:[#allocation2 + $0x180] sm:$0xff]
  %v8251 = vld [vmem:[#allocation2 + $0x188] sm:$0xff]
  %v8252 = vld [vmem:[#allocation2 + $0x190] sm:$0xff]
  %v8253 = vld [vmem:[#allocation2 + $0x198] sm:$0xff]
  %v8254 = vld [vmem:[#allocation2 + $0x1a0] sm:$0xff]
  %v8255 = vld [vmem:[#allocation2 + $0x1a8] sm:$0xff]
  %v8256 = vld [vmem:[#allocation2 + $0x1b0] sm:$0xff]
  %v8257 = vld [vmem:[#allocation2 + $0x1b8] sm:$0xff]
  %v8258 = vld [vmem:[#allocation2 + $0x1c0] sm:$0xff]
  %v8259 = vld [vmem:[#allocation2 + $0x1c8] sm:$0xff]
  %v8260 = vld [vmem:[#allocation2 + $0x1d0] sm:$0xff]
  %v8261 = vld [vmem:[#allocation2 + $0x1d8] sm:$0xff]
  %v8262 = vld [vmem:[#allocation2 + $0x1e0] sm:$0xff]
  %v8263 = vld [vmem:[#allocation2 + $0x1e8] sm:$0xff]
  %v8264 = vld [vmem:[#allocation2 + $0x1f0] sm:$0xff]
  %v8265 = vld [vmem:[#allocation2 + $0x1f8] sm:$0xff]
  %v8266 = vld [vmem:[#allocation2 + $0x200] sm:$0xff]
  %v8267 = vld [vmem:[#allocation2 + $0x208] sm:$0xff]
  %v8268 = vld [vmem:[#allocation2 + $0x210] sm:$0xff]
  %v8269 = vld [vmem:[#allocation2 + $0x218] sm:$0xff]
  %v8270 = vld [vmem:[#allocation2 + $0x220] sm:$0xff]
  %v8271 = vld [vmem:[#allocation2 + $0x228] sm:$0xff]
  %v8272 = vld [vmem:[#allocation2 + $0x230] sm:$0xff]
  %v8273 = vld [vmem:[#allocation2 + $0x238] sm:$0xff]
  %v8274 = vunpack.c.l.bf16 %v8130
  %v8275 = vunpack.c.h.bf16 %v8130
  %v8276 = vunpack.c.l.bf16 %v8131
  %v8277 = vunpack.c.h.bf16 %v8131
  %v8278 = vunpack.c.l.bf16 %v8132
  %v8279 = vunpack.c.h.bf16 %v8132
  %v8280 = vunpack.c.l.bf16 %v8133
  %v8281 = vunpack.c.h.bf16 %v8133
  %v8282 = vunpack.c.l.bf16 %v8134
  %v8283 = vunpack.c.h.bf16 %v8134
  %v8284 = vunpack.c.l.bf16 %v8135
  %v8285 = vunpack.c.h.bf16 %v8135
  %v8286 = vunpack.c.l.bf16 %v8136
  %v8287 = vunpack.c.h.bf16 %v8136
  %v8288 = vunpack.c.l.bf16 %v8137
  %v8289 = vunpack.c.h.bf16 %v8137
  %v8290 = vunpack.c.l.bf16 %v8138
  %v8291 = vunpack.c.h.bf16 %v8138
  %v8292 = vunpack.c.l.bf16 %v8139
  %v8293 = vunpack.c.h.bf16 %v8139
  %v8294 = vunpack.c.l.bf16 %v8140
  %v8295 = vunpack.c.h.bf16 %v8140
  %v8296 = vunpack.c.l.bf16 %v8141
  %v8297 = vunpack.c.h.bf16 %v8141
  %v8298 = vunpack.c.l.bf16 %v8142
  %v8299 = vunpack.c.h.bf16 %v8142
  %v8300 = vunpack.c.l.bf16 %v8143
  %v8301 = vunpack.c.h.bf16 %v8143
  %v8302 = vunpack.c.l.bf16 %v8144
  %v8303 = vunpack.c.h.bf16 %v8144
  %v8304 = vunpack.c.l.bf16 %v8145
  %v8305 = vunpack.c.h.bf16 %v8145
  %v8306 = vunpack.c.l.bf16 %v8146
  %v8307 = vunpack.c.h.bf16 %v8146
  %v8308 = vunpack.c.l.bf16 %v8147
  %v8309 = vunpack.c.h.bf16 %v8147
  %v8310 = vunpack.c.l.bf16 %v8148
  %v8311 = vunpack.c.h.bf16 %v8148
  %v8312 = vunpack.c.l.bf16 %v8149
  %v8313 = vunpack.c.h.bf16 %v8149
  %v8314 = vunpack.c.l.bf16 %v8150
  %v8315 = vunpack.c.h.bf16 %v8150
  %v8316 = vunpack.c.l.bf16 %v8151
  %v8317 = vunpack.c.h.bf16 %v8151
  %v8318 = vunpack.c.l.bf16 %v8152
  %v8319 = vunpack.c.h.bf16 %v8152
  %v8320 = vunpack.c.l.bf16 %v8153
  %v8321 = vunpack.c.h.bf16 %v8153
  %v8322 = vunpack.c.l.bf16 %v8154
  %v8323 = vunpack.c.h.bf16 %v8154
  %v8324 = vunpack.c.l.bf16 %v8155
  %v8325 = vunpack.c.h.bf16 %v8155
  %v8326 = vunpack.c.l.bf16 %v8156
  %v8327 = vunpack.c.h.bf16 %v8156
  %v8328 = vunpack.c.l.bf16 %v8157
  %v8329 = vunpack.c.h.bf16 %v8157
  %v8330 = vunpack.c.l.bf16 %v8158
  %v8331 = vunpack.c.h.bf16 %v8158
  %v8332 = vunpack.c.l.bf16 %v8159
  %v8333 = vunpack.c.h.bf16 %v8159
  %v8334 = vunpack.c.l.bf16 %v8160
  %v8335 = vunpack.c.h.bf16 %v8160
  %v8336 = vunpack.c.l.bf16 %v8161
  %v8337 = vunpack.c.h.bf16 %v8161
  %v8338 = vunpack.c.l.bf16 %v8162
  %v8339 = vunpack.c.h.bf16 %v8162
  %v8340 = vunpack.c.l.bf16 %v8163
  %v8341 = vunpack.c.h.bf16 %v8163
  %v8342 = vunpack.c.l.bf16 %v8164
  %v8343 = vunpack.c.h.bf16 %v8164
  %v8344 = vunpack.c.l.bf16 %v8165
  %v8345 = vunpack.c.h.bf16 %v8165
  %v8346 = vunpack.c.l.bf16 %v8166
  %v8347 = vunpack.c.h.bf16 %v8166
  %v8348 = vunpack.c.l.bf16 %v8167
  %v8349 = vunpack.c.h.bf16 %v8167
  %v8350 = vunpack.c.l.bf16 %v8168
  %v8351 = vunpack.c.h.bf16 %v8168
  %v8352 = vunpack.c.l.bf16 %v8169
  %v8353 = vunpack.c.h.bf16 %v8169
  %v8354 = vunpack.c.l.bf16 %v8170
  %v8355 = vunpack.c.h.bf16 %v8170
  %v8356 = vunpack.c.l.bf16 %v8171
  %v8357 = vunpack.c.h.bf16 %v8171
  %v8358 = vunpack.c.l.bf16 %v8172
  %v8359 = vunpack.c.h.bf16 %v8172
  %v8360 = vunpack.c.l.bf16 %v8173
  %v8361 = vunpack.c.h.bf16 %v8173
  %v8362 = vunpack.c.l.bf16 %v8174
  %v8363 = vunpack.c.h.bf16 %v8174
  %v8364 = vunpack.c.l.bf16 %v8175
  %v8365 = vunpack.c.h.bf16 %v8175
  %v8366 = vunpack.c.l.bf16 %v8176
  %v8367 = vunpack.c.h.bf16 %v8176
  %v8368 = vunpack.c.l.bf16 %v8177
  %v8369 = vunpack.c.h.bf16 %v8177
  %v8370 = vunpack.c.l.bf16 %v8178
  %v8371 = vunpack.c.h.bf16 %v8178
  %v8372 = vunpack.c.l.bf16 %v8179
  %v8373 = vunpack.c.h.bf16 %v8179
  %v8374 = vunpack.c.l.bf16 %v8180
  %v8375 = vunpack.c.h.bf16 %v8180
  %v8376 = vunpack.c.l.bf16 %v8181
  %v8377 = vunpack.c.h.bf16 %v8181
  %v8378 = vunpack.c.l.bf16 %v8182
  %v8379 = vunpack.c.h.bf16 %v8182
  %v8380 = vunpack.c.l.bf16 %v8183
  %v8381 = vunpack.c.h.bf16 %v8183
  %v8382 = vunpack.c.l.bf16 %v8184
  %v8383 = vunpack.c.h.bf16 %v8184
  %v8384 = vunpack.c.l.bf16 %v8185
  %v8385 = vunpack.c.h.bf16 %v8185
  %v8386 = vunpack.c.l.bf16 %v8186
  %v8387 = vunpack.c.h.bf16 %v8186
  %v8388 = vunpack.c.l.bf16 %v8187
  %v8389 = vunpack.c.h.bf16 %v8187
  %v8390 = vunpack.c.l.bf16 %v8188
  %v8391 = vunpack.c.h.bf16 %v8188
  %v8392 = vunpack.c.l.bf16 %v8189
  %v8393 = vunpack.c.h.bf16 %v8189
  %v8394 = vunpack.c.l.bf16 %v8190
  %v8395 = vunpack.c.h.bf16 %v8190
  %v8396 = vunpack.c.l.bf16 %v8191
  %v8397 = vunpack.c.h.bf16 %v8191
  %v8398 = vunpack.c.l.bf16 %v8192
  %v8399 = vunpack.c.h.bf16 %v8192
  %v8400 = vunpack.c.l.bf16 %v8193
  %v8401 = vunpack.c.h.bf16 %v8193
  %v8402 = vunpack.c.l.bf16 %v8194
  %v8403 = vunpack.c.h.bf16 %v8194
  %v8404 = vunpack.c.l.bf16 %v8195
  %v8405 = vunpack.c.h.bf16 %v8195
  %v8406 = vunpack.c.l.bf16 %v8196
  %v8407 = vunpack.c.h.bf16 %v8196
  %v8408 = vunpack.c.l.bf16 %v8197
  %v8409 = vunpack.c.h.bf16 %v8197
  %v8410 = vunpack.c.l.bf16 %v8198
  %v8411 = vunpack.c.h.bf16 %v8198
  %v8412 = vunpack.c.l.bf16 %v8199
  %v8413 = vunpack.c.h.bf16 %v8199
  %v8414 = vunpack.c.l.bf16 %v8200
  %v8415 = vunpack.c.h.bf16 %v8200
  %v8416 = vunpack.c.l.bf16 %v8201
  %v8417 = vunpack.c.h.bf16 %v8201
  %8419 = vset.pattern.permute.xlu0 2
  %8420 = vperm.xlu0 %8419, %v8202
  %v8421 = vpop.permute.xlu0 %8420
  %8424 = vset.pattern.permute.xlu0 2
  %8425 = vperm.xlu0 %8424, %v8203
  %v8426 = vpop.permute.xlu0 %8425
  %8429 = vset.pattern.permute.xlu0 2
  %8430 = vperm.xlu0 %8429, %v8204
  %v8431 = vpop.permute.xlu0 %8430
  %8434 = vset.pattern.permute.xlu0 2
  %8435 = vperm.xlu0 %8434, %v8205
  %v8436 = vpop.permute.xlu0 %8435
  %8439 = vset.pattern.permute.xlu0 2
  %8440 = vperm.xlu0 %8439, %v8206
  %v8441 = vpop.permute.xlu0 %8440
  %8444 = vset.pattern.permute.xlu0 2
  %8445 = vperm.xlu0 %8444, %v8207
  %v8446 = vpop.permute.xlu0 %8445
  %8449 = vset.pattern.permute.xlu0 2
  %8450 = vperm.xlu0 %8449, %v8208
  %v8451 = vpop.permute.xlu0 %8450
  %8454 = vset.pattern.permute.xlu0 2
  %8455 = vperm.xlu0 %8454, %v8209
  %v8456 = vpop.permute.xlu0 %8455
  %8459 = vset.pattern.permute.xlu0 2
  %8460 = vperm.xlu0 %8459, %v8210
  %v8461 = vpop.permute.xlu0 %8460
  %8464 = vset.pattern.permute.xlu0 2
  %8465 = vperm.xlu0 %8464, %v8211
  %v8466 = vpop.permute.xlu0 %8465
  %8469 = vset.pattern.permute.xlu0 2
  %8470 = vperm.xlu0 %8469, %v8212
  %v8471 = vpop.permute.xlu0 %8470
  %8474 = vset.pattern.permute.xlu0 2
  %8475 = vperm.xlu0 %8474, %v8213
  %v8476 = vpop.permute.xlu0 %8475
  %8479 = vset.pattern.permute.xlu0 2
  %8480 = vperm.xlu0 %8479, %v8214
  %v8481 = vpop.permute.xlu0 %8480
  %8484 = vset.pattern.permute.xlu0 2
  %8485 = vperm.xlu0 %8484, %v8215
  %v8486 = vpop.permute.xlu0 %8485
  %8489 = vset.pattern.permute.xlu0 2
  %8490 = vperm.xlu0 %8489, %v8216
  %v8491 = vpop.permute.xlu0 %8490
  %8494 = vset.pattern.permute.xlu0 2
  %8495 = vperm.xlu0 %8494, %v8217
  %v8496 = vpop.permute.xlu0 %8495
  %8499 = vset.pattern.permute.xlu0 2
  %8500 = vperm.xlu0 %8499, %v8218
  %v8501 = vpop.permute.xlu0 %8500
  %8504 = vset.pattern.permute.xlu0 2
  %8505 = vperm.xlu0 %8504, %v8219
  %v8506 = vpop.permute.xlu0 %8505
  %8509 = vset.pattern.permute.xlu0 2
  %8510 = vperm.xlu0 %8509, %v8220
  %v8511 = vpop.permute.xlu0 %8510
  %8514 = vset.pattern.permute.xlu0 2
  %8515 = vperm.xlu0 %8514, %v8221
  %v8516 = vpop.permute.xlu0 %8515
  %8519 = vset.pattern.permute.xlu0 2
  %8520 = vperm.xlu0 %8519, %v8222
  %v8521 = vpop.permute.xlu0 %8520
  %8524 = vset.pattern.permute.xlu0 2
  %8525 = vperm.xlu0 %8524, %v8223
  %v8526 = vpop.permute.xlu0 %8525
  %8529 = vset.pattern.permute.xlu0 2
  %8530 = vperm.xlu0 %8529, %v8224
  %v8531 = vpop.permute.xlu0 %8530
  %8534 = vset.pattern.permute.xlu0 2
  %8535 = vperm.xlu0 %8534, %v8225
  %v8536 = vpop.permute.xlu0 %8535
  %8539 = vset.pattern.permute.xlu0 2
  %8540 = vperm.xlu0 %8539, %v8226
  %v8541 = vpop.permute.xlu0 %8540
  %8544 = vset.pattern.permute.xlu0 2
  %8545 = vperm.xlu0 %8544, %v8227
  %v8546 = vpop.permute.xlu0 %8545
  %8549 = vset.pattern.permute.xlu0 2
  %8550 = vperm.xlu0 %8549, %v8228
  %v8551 = vpop.permute.xlu0 %8550
  %8554 = vset.pattern.permute.xlu0 2
  %8555 = vperm.xlu0 %8554, %v8229
  %v8556 = vpop.permute.xlu0 %8555
  %8559 = vset.pattern.permute.xlu0 2
  %8560 = vperm.xlu0 %8559, %v8230
  %v8561 = vpop.permute.xlu0 %8560
  %8564 = vset.pattern.permute.xlu0 2
  %8565 = vperm.xlu0 %8564, %v8231
  %v8566 = vpop.permute.xlu0 %8565
  %8569 = vset.pattern.permute.xlu0 2
  %8570 = vperm.xlu0 %8569, %v8232
  %v8571 = vpop.permute.xlu0 %8570
  %8574 = vset.pattern.permute.xlu0 2
  %8575 = vperm.xlu0 %8574, %v8233
  %v8576 = vpop.permute.xlu0 %8575
  %8579 = vset.pattern.permute.xlu0 2
  %8580 = vperm.xlu0 %8579, %v8234
  %v8581 = vpop.permute.xlu0 %8580
  %8584 = vset.pattern.permute.xlu0 2
  %8585 = vperm.xlu0 %8584, %v8235
  %v8586 = vpop.permute.xlu0 %8585
  %8589 = vset.pattern.permute.xlu0 2
  %8590 = vperm.xlu0 %8589, %v8236
  %v8591 = vpop.permute.xlu0 %8590
  %8594 = vset.pattern.permute.xlu0 2
  %8595 = vperm.xlu0 %8594, %v8237
  %v8596 = vpop.permute.xlu0 %8595
  %8599 = vset.pattern.permute.xlu0 2
  %8600 = vperm.xlu0 %8599, %v8238
  %v8601 = vpop.permute.xlu0 %8600
  %8604 = vset.pattern.permute.xlu0 2
  %8605 = vperm.xlu0 %8604, %v8239
  %v8606 = vpop.permute.xlu0 %8605
  %8609 = vset.pattern.permute.xlu0 2
  %8610 = vperm.xlu0 %8609, %v8240
  %v8611 = vpop.permute.xlu0 %8610
  %8614 = vset.pattern.permute.xlu0 2
  %8615 = vperm.xlu0 %8614, %v8241
  %v8616 = vpop.permute.xlu0 %8615
  %8619 = vset.pattern.permute.xlu0 2
  %8620 = vperm.xlu0 %8619, %v8242
  %v8621 = vpop.permute.xlu0 %8620
  %8624 = vset.pattern.permute.xlu0 2
  %8625 = vperm.xlu0 %8624, %v8243
  %v8626 = vpop.permute.xlu0 %8625
  %8629 = vset.pattern.permute.xlu0 2
  %8630 = vperm.xlu0 %8629, %v8244
  %v8631 = vpop.permute.xlu0 %8630
  %8634 = vset.pattern.permute.xlu0 2
  %8635 = vperm.xlu0 %8634, %v8245
  %v8636 = vpop.permute.xlu0 %8635
  %8639 = vset.pattern.permute.xlu0 2
  %8640 = vperm.xlu0 %8639, %v8246
  %v8641 = vpop.permute.xlu0 %8640
  %8644 = vset.pattern.permute.xlu0 2
  %8645 = vperm.xlu0 %8644, %v8247
  %v8646 = vpop.permute.xlu0 %8645
  %8649 = vset.pattern.permute.xlu0 2
  %8650 = vperm.xlu0 %8649, %v8248
  %v8651 = vpop.permute.xlu0 %8650
  %8654 = vset.pattern.permute.xlu0 2
  %8655 = vperm.xlu0 %8654, %v8249
  %v8656 = vpop.permute.xlu0 %8655
  %8659 = vset.pattern.permute.xlu0 2
  %8660 = vperm.xlu0 %8659, %v8250
  %v8661 = vpop.permute.xlu0 %8660
  %8664 = vset.pattern.permute.xlu0 2
  %8665 = vperm.xlu0 %8664, %v8251
  %v8666 = vpop.permute.xlu0 %8665
  %8669 = vset.pattern.permute.xlu0 2
  %8670 = vperm.xlu0 %8669, %v8252
  %v8671 = vpop.permute.xlu0 %8670
  %8674 = vset.pattern.permute.xlu0 2
  %8675 = vperm.xlu0 %8674, %v8253
  %v8676 = vpop.permute.xlu0 %8675
  %8679 = vset.pattern.permute.xlu0 2
  %8680 = vperm.xlu0 %8679, %v8254
  %v8681 = vpop.permute.xlu0 %8680
  %8684 = vset.pattern.permute.xlu0 2
  %8685 = vperm.xlu0 %8684, %v8255
  %v8686 = vpop.permute.xlu0 %8685
  %8689 = vset.pattern.permute.xlu0 2
  %8690 = vperm.xlu0 %8689, %v8256
  %v8691 = vpop.permute.xlu0 %8690
  %8694 = vset.pattern.permute.xlu0 2
  %8695 = vperm.xlu0 %8694, %v8257
  %v8696 = vpop.permute.xlu0 %8695
  %8699 = vset.pattern.permute.xlu0 2
  %8700 = vperm.xlu0 %8699, %v8258
  %v8701 = vpop.permute.xlu0 %8700
  %8704 = vset.pattern.permute.xlu0 2
  %8705 = vperm.xlu0 %8704, %v8259
  %v8706 = vpop.permute.xlu0 %8705
  %8709 = vset.pattern.permute.xlu0 2
  %8710 = vperm.xlu0 %8709, %v8260
  %v8711 = vpop.permute.xlu0 %8710
  %8714 = vset.pattern.permute.xlu0 2
  %8715 = vperm.xlu0 %8714, %v8261
  %v8716 = vpop.permute.xlu0 %8715
  %8719 = vset.pattern.permute.xlu0 2
  %8720 = vperm.xlu0 %8719, %v8262
  %v8721 = vpop.permute.xlu0 %8720
  %8724 = vset.pattern.permute.xlu0 2
  %8725 = vperm.xlu0 %8724, %v8263
  %v8726 = vpop.permute.xlu0 %8725
  %8729 = vset.pattern.permute.xlu0 2
  %8730 = vperm.xlu0 %8729, %v8264
  %v8731 = vpop.permute.xlu0 %8730
  %8734 = vset.pattern.permute.xlu0 2
  %8735 = vperm.xlu0 %8734, %v8265
  %v8736 = vpop.permute.xlu0 %8735
  %8739 = vset.pattern.permute.xlu0 2
  %8740 = vperm.xlu0 %8739, %v8266
  %v8741 = vpop.permute.xlu0 %8740
  %8744 = vset.pattern.permute.xlu0 2
  %8745 = vperm.xlu0 %8744, %v8267
  %v8746 = vpop.permute.xlu0 %8745
  %8749 = vset.pattern.permute.xlu0 2
  %8750 = vperm.xlu0 %8749, %v8268
  %v8751 = vpop.permute.xlu0 %8750
  %8754 = vset.pattern.permute.xlu0 2
  %8755 = vperm.xlu0 %8754, %v8269
  %v8756 = vpop.permute.xlu0 %8755
  %8759 = vset.pattern.permute.xlu0 2
  %8760 = vperm.xlu0 %8759, %v8270
  %v8761 = vpop.permute.xlu0 %8760
  %8764 = vset.pattern.permute.xlu0 2
  %8765 = vperm.xlu0 %8764, %v8271
  %v8766 = vpop.permute.xlu0 %8765
  %8769 = vset.pattern.permute.xlu0 2
  %8770 = vperm.xlu0 %8769, %v8272
  %v8771 = vpop.permute.xlu0 %8770
  %8774 = vset.pattern.permute.xlu0 2
  %8775 = vperm.xlu0 %8774, %v8273
  %v8776 = vpop.permute.xlu0 %8775
  %v8778 = vmul.f32 %v8274, %v8421
  %v8779 = vmul.f32 %v8275, %v8421
  %v8780 = vmul.f32 %v8276, %v8426
  %v8781 = vmul.f32 %v8277, %v8426
  %v8782 = vmul.f32 %v8278, %v8431
  %v8783 = vmul.f32 %v8279, %v8431
  %v8784 = vmul.f32 %v8280, %v8436
  %v8785 = vmul.f32 %v8281, %v8436
  %v8786 = vmul.f32 %v8282, %v8441
  %v8787 = vmul.f32 %v8283, %v8441
  %v8788 = vmul.f32 %v8284, %v8446
  %v8789 = vmul.f32 %v8285, %v8446
  %v8790 = vmul.f32 %v8286, %v8451
  %v8791 = vmul.f32 %v8287, %v8451
  %v8792 = vmul.f32 %v8288, %v8456
  %v8793 = vmul.f32 %v8289, %v8456
  %v8794 = vmul.f32 %v8290, %v8461
  %v8795 = vmul.f32 %v8291, %v8461
  %v8796 = vmul.f32 %v8292, %v8466
  %v8797 = vmul.f32 %v8293, %v8466
  %v8798 = vmul.f32 %v8294, %v8471
  %v8799 = vmul.f32 %v8295, %v8471
  %v8800 = vmul.f32 %v8296, %v8476
  %v8801 = vmul.f32 %v8297, %v8476
  %v8802 = vmul.f32 %v8298, %v8481
  %v8803 = vmul.f32 %v8299, %v8481
  %v8804 = vmul.f32 %v8300, %v8486
  %v8805 = vmul.f32 %v8301, %v8486
  %v8806 = vmul.f32 %v8302, %v8491
  %v8807 = vmul.f32 %v8303, %v8491
  %v8808 = vmul.f32 %v8304, %v8496
  %v8809 = vmul.f32 %v8305, %v8496
  %v8810 = vmul.f32 %v8306, %v8501
  %v8811 = vmul.f32 %v8307, %v8501
  %v8812 = vmul.f32 %v8308, %v8506
  %v8813 = vmul.f32 %v8309, %v8506
  %v8814 = vmul.f32 %v8310, %v8511
  %v8815 = vmul.f32 %v8311, %v8511
  %v8816 = vmul.f32 %v8312, %v8516
  %v8817 = vmul.f32 %v8313, %v8516
  %v8818 = vmul.f32 %v8314, %v8521
  %v8819 = vmul.f32 %v8315, %v8521
  %v8820 = vmul.f32 %v8316, %v8526
  %v8821 = vmul.f32 %v8317, %v8526
  %v8822 = vmul.f32 %v8318, %v8531
  %v8823 = vmul.f32 %v8319, %v8531
  %v8824 = vmul.f32 %v8320, %v8536
  %v8825 = vmul.f32 %v8321, %v8536
  %v8826 = vmul.f32 %v8322, %v8541
  %v8827 = vmul.f32 %v8323, %v8541
  %v8828 = vmul.f32 %v8324, %v8546
  %v8829 = vmul.f32 %v8325, %v8546
  %v8830 = vmul.f32 %v8326, %v8551
  %v8831 = vmul.f32 %v8327, %v8551
  %v8832 = vmul.f32 %v8328, %v8556
  %v8833 = vmul.f32 %v8329, %v8556
  %v8834 = vmul.f32 %v8330, %v8561
  %v8835 = vmul.f32 %v8331, %v8561
  %v8836 = vmul.f32 %v8332, %v8566
  %v8837 = vmul.f32 %v8333, %v8566
  %v8838 = vmul.f32 %v8334, %v8571
  %v8839 = vmul.f32 %v8335, %v8571
  %v8840 = vmul.f32 %v8336, %v8576
  %v8841 = vmul.f32 %v8337, %v8576
  %v8842 = vmul.f32 %v8338, %v8581
  %v8843 = vmul.f32 %v8339, %v8581
  %v8844 = vmul.f32 %v8340, %v8586
  %v8845 = vmul.f32 %v8341, %v8586
  %v8846 = vmul.f32 %v8342, %v8591
  %v8847 = vmul.f32 %v8343, %v8591
  %v8848 = vmul.f32 %v8344, %v8596
  %v8849 = vmul.f32 %v8345, %v8596
  %v8850 = vmul.f32 %v8346, %v8601
  %v8851 = vmul.f32 %v8347, %v8601
  %v8852 = vmul.f32 %v8348, %v8606
  %v8853 = vmul.f32 %v8349, %v8606
  %v8854 = vmul.f32 %v8350, %v8611
  %v8855 = vmul.f32 %v8351, %v8611
  %v8856 = vmul.f32 %v8352, %v8616
  %v8857 = vmul.f32 %v8353, %v8616
  %v8858 = vmul.f32 %v8354, %v8621
  %v8859 = vmul.f32 %v8355, %v8621
  %v8860 = vmul.f32 %v8356, %v8626
  %v8861 = vmul.f32 %v8357, %v8626
  %v8862 = vmul.f32 %v8358, %v8631
  %v8863 = vmul.f32 %v8359, %v8631
  %v8864 = vmul.f32 %v8360, %v8636
  %v8865 = vmul.f32 %v8361, %v8636
  %v8866 = vmul.f32 %v8362, %v8641
  %v8867 = vmul.f32 %v8363, %v8641
  %v8868 = vmul.f32 %v8364, %v8646
  %v8869 = vmul.f32 %v8365, %v8646
  %v8870 = vmul.f32 %v8366, %v8651
  %v8871 = vmul.f32 %v8367, %v8651
  %v8872 = vmul.f32 %v8368, %v8656
  %v8873 = vmul.f32 %v8369, %v8656
  %v8874 = vmul.f32 %v8370, %v8661
  %v8875 = vmul.f32 %v8371, %v8661
  %v8876 = vmul.f32 %v8372, %v8666
  %v8877 = vmul.f32 %v8373, %v8666
  %v8878 = vmul.f32 %v8374, %v8671
  %v8879 = vmul.f32 %v8375, %v8671
  %v8880 = vmul.f32 %v8376, %v8676
  %v8881 = vmul.f32 %v8377, %v8676
  %v8882 = vmul.f32 %v8378, %v8681
  %v8883 = vmul.f32 %v8379, %v8681
  %v8884 = vmul.f32 %v8380, %v8686
  %v8885 = vmul.f32 %v8381, %v8686
  %v8886 = vmul.f32 %v8382, %v8691
  %v8887 = vmul.f32 %v8383, %v8691
  %v8888 = vmul.f32 %v8384, %v8696
  %v8889 = vmul.f32 %v8385, %v8696
  %v8890 = vmul.f32 %v8386, %v8701
  %v8891 = vmul.f32 %v8387, %v8701
  %v8892 = vmul.f32 %v8388, %v8706
  %v8893 = vmul.f32 %v8389, %v8706
  %v8894 = vmul.f32 %v8390, %v8711
  %v8895 = vmul.f32 %v8391, %v8711
  %v8896 = vmul.f32 %v8392, %v8716
  %v8897 = vmul.f32 %v8393, %v8716
  %v8898 = vmul.f32 %v8394, %v8721
  %v8899 = vmul.f32 %v8395, %v8721
  %v8900 = vmul.f32 %v8396, %v8726
  %v8901 = vmul.f32 %v8397, %v8726
  %v8902 = vmul.f32 %v8398, %v8731
  %v8903 = vmul.f32 %v8399, %v8731
  %v8904 = vmul.f32 %v8400, %v8736
  %v8905 = vmul.f32 %v8401, %v8736
  %v8906 = vmul.f32 %v8402, %v8741
  %v8907 = vmul.f32 %v8403, %v8741
  %v8908 = vmul.f32 %v8404, %v8746
  %v8909 = vmul.f32 %v8405, %v8746
  %v8910 = vmul.f32 %v8406, %v8751
  %v8911 = vmul.f32 %v8407, %v8751
  %v8912 = vmul.f32 %v8408, %v8756
  %v8913 = vmul.f32 %v8409, %v8756
  %v8914 = vmul.f32 %v8410, %v8761
  %v8915 = vmul.f32 %v8411, %v8761
  %v8916 = vmul.f32 %v8412, %v8766
  %v8917 = vmul.f32 %v8413, %v8766
  %v8918 = vmul.f32 %v8414, %v8771
  %v8919 = vmul.f32 %v8415, %v8771
  %v8920 = vmul.f32 %v8416, %v8776
  %v8921 = vmul.f32 %v8417, %v8776
  %v8922 = vpack.c.bf16 %v8780, %v8778
  %v8923 = vpack.c.bf16 %v8781, %v8779
  %v8924 = vpack.c.bf16 %v8784, %v8782
  %v8925 = vpack.c.bf16 %v8785, %v8783
  %v8926 = vpack.c.bf16 %v8788, %v8786
  %v8927 = vpack.c.bf16 %v8789, %v8787
  %v8928 = vpack.c.bf16 %v8792, %v8790
  %v8929 = vpack.c.bf16 %v8793, %v8791
  %v8930 = vpack.c.bf16 %v8796, %v8794
  %v8931 = vpack.c.bf16 %v8797, %v8795
  %v8932 = vpack.c.bf16 %v8800, %v8798
  %v8933 = vpack.c.bf16 %v8801, %v8799
  %v8934 = vpack.c.bf16 %v8804, %v8802
  %v8935 = vpack.c.bf16 %v8805, %v8803
  %v8936 = vpack.c.bf16 %v8808, %v8806
  %v8937 = vpack.c.bf16 %v8809, %v8807
  %v8938 = vpack.c.bf16 %v8812, %v8810
  %v8939 = vpack.c.bf16 %v8813, %v8811
  %v8940 = vpack.c.bf16 %v8816, %v8814
  %v8941 = vpack.c.bf16 %v8817, %v8815
  %v8942 = vpack.c.bf16 %v8820, %v8818
  %v8943 = vpack.c.bf16 %v8821, %v8819
  %v8944 = vpack.c.bf16 %v8824, %v8822
  %v8945 = vpack.c.bf16 %v8825, %v8823
  %v8946 = vpack.c.bf16 %v8828, %v8826
  %v8947 = vpack.c.bf16 %v8829, %v8827
  %v8948 = vpack.c.bf16 %v8832, %v8830
  %v8949 = vpack.c.bf16 %v8833, %v8831
  %v8950 = vpack.c.bf16 %v8836, %v8834
  %v8951 = vpack.c.bf16 %v8837, %v8835
  %v8952 = vpack.c.bf16 %v8840, %v8838
  %v8953 = vpack.c.bf16 %v8841, %v8839
  %v8954 = vpack.c.bf16 %v8844, %v8842
  %v8955 = vpack.c.bf16 %v8845, %v8843
  %v8956 = vpack.c.bf16 %v8848, %v8846
  %v8957 = vpack.c.bf16 %v8849, %v8847
  %v8958 = vpack.c.bf16 %v8852, %v8850
  %v8959 = vpack.c.bf16 %v8853, %v8851
  %v8960 = vpack.c.bf16 %v8856, %v8854
  %v8961 = vpack.c.bf16 %v8857, %v8855
  %v8962 = vpack.c.bf16 %v8860, %v8858
  %v8963 = vpack.c.bf16 %v8861, %v8859
  %v8964 = vpack.c.bf16 %v8864, %v8862
  %v8965 = vpack.c.bf16 %v8865, %v8863
  %v8966 = vpack.c.bf16 %v8868, %v8866
  %v8967 = vpack.c.bf16 %v8869, %v8867
  %v8968 = vpack.c.bf16 %v8872, %v8870
  %v8969 = vpack.c.bf16 %v8873, %v8871
  %v8970 = vpack.c.bf16 %v8876, %v8874
  %v8971 = vpack.c.bf16 %v8877, %v8875
  %v8972 = vpack.c.bf16 %v8880, %v8878
  %v8973 = vpack.c.bf16 %v8881, %v8879
  %v8974 = vpack.c.bf16 %v8884, %v8882
  %v8975 = vpack.c.bf16 %v8885, %v8883
  %v8976 = vpack.c.bf16 %v8888, %v8886
  %v8977 = vpack.c.bf16 %v8889, %v8887
  %v8978 = vpack.c.bf16 %v8892, %v8890
  %v8979 = vpack.c.bf16 %v8893, %v8891
  %v8980 = vpack.c.bf16 %v8896, %v8894
  %v8981 = vpack.c.bf16 %v8897, %v8895
  %v8982 = vpack.c.bf16 %v8900, %v8898
  %v8983 = vpack.c.bf16 %v8901, %v8899
  %v8984 = vpack.c.bf16 %v8904, %v8902
  %v8985 = vpack.c.bf16 %v8905, %v8903
  %v8986 = vpack.c.bf16 %v8908, %v8906
  %v8987 = vpack.c.bf16 %v8909, %v8907
  %v8988 = vpack.c.bf16 %v8912, %v8910
  %v8989 = vpack.c.bf16 %v8913, %v8911
  %v8990 = vpack.c.bf16 %v8916, %v8914
  %v8991 = vpack.c.bf16 %v8917, %v8915
  %v8992 = vpack.c.bf16 %v8920, %v8918
  %v8993 = vpack.c.bf16 %v8921, %v8919
  %8994 = vmatprep.subr.bf16.mxu0 %v8923
  %8995 = vmatpush1.bf16.msra.mxu0 %v8922
  %8996 = vmatprep.subr.bf16.mxu0 %v8925
  %8997 = vmatpush1.bf16.msra.mxu0 %v8924
  %8998 = vmatprep.subr.bf16.mxu0 %v8927
  %8999 = vmatpush1.bf16.msra.mxu0 %v8926
  %9000 = vmatprep.subr.bf16.mxu0 %v8929
  %9001 = vmatpush1.bf16.msra.mxu0 %v8928
  %9002 = vmatprep.subr.bf16.mxu0 %v8931
  %9003 = vmatpush1.bf16.msra.mxu0 %v8930
  %9004 = vmatprep.subr.bf16.mxu0 %v8933
  %9005 = vmatpush1.bf16.msra.mxu0 %v8932
  %9006 = vmatprep.subr.bf16.mxu0 %v8935
  %9007 = vmatpush1.bf16.msra.mxu0 %v8934
  %9008 = vmatprep.subr.bf16.mxu0 %v8937
  %9009 = vmatpush1.bf16.msra.mxu0 %v8936
  %9010 = vmatprep.subr.bf16.mxu0 %v8939
  %9011 = vmatpush1.bf16.msra.mxu0 %v8938
  %9012 = vmatprep.subr.bf16.mxu0 %v8941
  %9013 = vmatpush1.bf16.msra.mxu0 %v8940
  %9014 = vmatprep.subr.bf16.mxu0 %v8943
  %9015 = vmatpush1.bf16.msra.mxu0 %v8942
  %9016 = vmatprep.subr.bf16.mxu0 %v8945
  %9017 = vmatpush1.bf16.msra.mxu0 %v8944
  %9018 = vmatprep.subr.bf16.mxu0 %v8947
  %9019 = vmatpush1.bf16.msra.mxu0 %v8946
  %9020 = vmatprep.subr.bf16.mxu0 %v8949
  %9021 = vmatpush1.bf16.msra.mxu0 %v8948
  %9022 = vmatprep.subr.bf16.mxu0 %v8951
  %9023 = vmatpush1.bf16.msra.mxu0 %v8950
  %9024 = vmatprep.subr.bf16.mxu0 %v8953
  %9025 = vmatpush1.bf16.msra.mxu0 %v8952
  %9026 = vmatprep.mubr.bf16.mxu0 %v3462
  %9027 = vmatmul.mubr.bf16.gmra.mrb[0].mxu0 %v3461
  %v9028 = vpop.f32.mrb[0].mxu0
  %v9029 = vadd.f32 0.0, %v9028
  %v9030 = vpop.f32.mrb[0].mxu0
  %v9031 = vadd.f32 0.0, %v9030
  %v9032 = vpop.f32.mrb[0].mxu0
  %v9033 = vadd.f32 0.0, %v9032
  %v9034 = vpop.f32.mrb[0].mxu0
  %v9035 = vadd.f32 0.0, %v9034
  %9036 = vmatprep.mubr.bf16.mxu0 %v3467
  %9037 = vmatmul.mubr.bf16.gmra.mrb[0].mxu0 %v3466
  %v9038 = vpop.f32.mrb[0].mxu0
  %v9039 = vadd.f32 0.0, %v9038
  %v9040 = vpop.f32.mrb[0].mxu0
  %v9041 = vadd.f32 0.0, %v9040
  %v9042 = vpop.f32.mrb[0].mxu0
  %v9043 = vadd.f32 0.0, %v9042
  %v9044 = vpop.f32.mrb[0].mxu0
  %v9045 = vadd.f32 0.0, %v9044
  %9046 = vmatprep.mubr.bf16.mxu0 %v3472
  %9047 = vmatmul.mubr.bf16.gmra.mrb[0].mxu0 %v3471
  %v9048 = vpop.f32.mrb[0].mxu0
  %v9049 = vadd.f32 0.0, %v9048
  %v9050 = vpop.f32.mrb[0].mxu0
  %v9051 = vadd.f32 0.0, %v9050
  %v9052 = vpop.f32.mrb[0].mxu0
  %v9053 = vadd.f32 0.0, %v9052
  %v9054 = vpop.f32.mrb[0].mxu0
  %v9055 = vadd.f32 0.0, %v9054
  %9056 = vmatprep.mubr.bf16.mxu0 %v3477
  %9057 = vmatmul.mubr.bf16.gmra.mrb[0].mxu0 %v3476
  %v9058 = vpop.f32.mrb[0].mxu0
  %v9059 = vadd.f32 0.0, %v9058
  %v9060 = vpop.f32.mrb[0].mxu0
  %v9061 = vadd.f32 0.0, %v9060
  %v9062 = vpop.f32.mrb[0].mxu0
  %v9063 = vadd.f32 0.0, %v9062
  %v9064 = vpop.f32.mrb[0].mxu0
  %v9065 = vadd.f32 0.0, %v9064
  %9066 = vmatprep.mubr.bf16.mxu0 %v3482
  %9067 = vmatmul.mubr.bf16.gmra.mrb[0].mxu0 %v3481
  %v9068 = vpop.f32.mrb[0].mxu0
  %v9069 = vadd.f32 0.0, %v9068
  %v9070 = vpop.f32.mrb[0].mxu0
  %v9071 = vadd.f32 0.0, %v9070
  %v9072 = vpop.f32.mrb[0].mxu0
  %v9073 = vadd.f32 0.0, %v9072
  %v9074 = vpop.f32.mrb[0].mxu0
  %v9075 = vadd.f32 0.0, %v9074
  %9076 = vmatprep.mubr.bf16.mxu0 %v3487
  %9077 = vmatmul.mubr.bf16.gmra.mrb[0].mxu0 %v3486
  %v9078 = vpop.f32.mrb[0].mxu0
  %v9079 = vadd.f32 0.0, %v9078
  %v9080 = vpop.f32.mrb[0].mxu0
  %v9081 = vadd.f32 0.0, %v9080
  %v9082 = vpop.f32.mrb[0].mxu0
  %v9083 = vadd.f32 0.0, %v9082
  %v9084 = vpop.f32.mrb[0].mxu0
  %v9085 = vadd.f32 0.0, %v9084
  %9086 = vmatprep.mubr.bf16.mxu0 %v3492
  %9087 = vmatmul.mubr.bf16.gmra.mrb[0].mxu0 %v3491
  %v9088 = vpop.f32.mrb[0].mxu0
  %v9089 = vadd.f32 0.0, %v9088
  %v9090 = vpop.f32.mrb[0].mxu0
  %v9091 = vadd.f32 0.0, %v9090
  %v9092 = vpop.f32.mrb[0].mxu0
  %v9093 = vadd.f32 0.0, %v9092
  %v9094 = vpop.f32.mrb[0].mxu0
  %v9095 = vadd.f32 0.0, %v9094
  %9096 = vmatprep.mubr.bf16.mxu0 %v3497
  %9097 = vmatmul.mubr.bf16.gmra.mrb[0].mxu0 %v3496
  %v9098 = vpop.f32.mrb[0].mxu0
  %v9099 = vadd.f32 0.0, %v9098
  %v9100 = vpop.f32.mrb[0].mxu0
  %v9101 = vadd.f32 0.0, %v9100
  %v9102 = vpop.f32.mrb[0].mxu0
  %v9103 = vadd.f32 0.0, %v9102
  %v9104 = vpop.f32.mrb[0].mxu0
  %v9105 = vadd.f32 0.0, %v9104
  %9106 = vmatprep.mubr.bf16.mxu0 %v3502
  %9107 = vmatmul.mubr.bf16.gmra.mrb[0].mxu0 %v3501
  %v9108 = vpop.f32.mrb[0].mxu0
  %v9109 = vadd.f32 0.0, %v9108
  %v9110 = vpop.f32.mrb[0].mxu0
  %v9111 = vadd.f32 0.0, %v9110
  %v9112 = vpop.f32.mrb[0].mxu0
  %v9113 = vadd.f32 0.0, %v9112
  %v9114 = vpop.f32.mrb[0].mxu0
  %v9115 = vadd.f32 0.0, %v9114
  %9116 = vmatprep.mubr.bf16.mxu0 %v3507
  %9117 = vmatmul.mubr.bf16.gmra.mrb[0].mxu0 %v3506
  %v9118 = vpop.f32.mrb[0].mxu0
  %v9119 = vadd.f32 0.0, %v9118
  %v9120 = vpop.f32.mrb[0].mxu0
  %v9121 = vadd.f32 0.0, %v9120
  %v9122 = vpop.f32.mrb[0].mxu0
  %v9123 = vadd.f32 0.0, %v9122
  %v9124 = vpop.f32.mrb[0].mxu0
  %v9125 = vadd.f32 0.0, %v9124
  %9126 = vmatprep.mubr.bf16.mxu0 %v3512
  %9127 = vmatmul.mubr.bf16.gmra.mrb[0].mxu0 %v3511
  %v9128 = vpop.f32.mrb[0].mxu0
  %v9129 = vadd.f32 0.0, %v9128
  %v9130 = vpop.f32.mrb[0].mxu0
  %v9131 = vadd.f32 0.0, %v9130
  %v9132 = vpop.f32.mrb[0].mxu0
  %v9133 = vadd.f32 0.0, %v9132
  %v9134 = vpop.f32.mrb[0].mxu0
  %v9135 = vadd.f32 0.0, %v9134
  %9136 = vmatprep.mubr.bf16.mxu0 %v3517
  %9137 = vmatmul.mubr.bf16.gmra.mrb[0].mxu0 %v3516
  %v9138 = vpop.f32.mrb[0].mxu0
  %v9139 = vadd.f32 0.0, %v9138
  %v9140 = vpop.f32.mrb[0].mxu0
  %v9141 = vadd.f32 0.0, %v9140
  %v9142 = vpop.f32.mrb[0].mxu0
  %v9143 = vadd.f32 0.0, %v9142
  %v9144 = vpop.f32.mrb[0].mxu0
  %v9145 = vadd.f32 0.0, %v9144
  %9146 = vmatprep.mubr.bf16.mxu0 %v3522
  %9147 = vmatmul.mubr.bf16.gmra.mrb[0].mxu0 %v3521
  %v9148 = vpop.f32.mrb[0].mxu0
  %v9149 = vadd.f32 0.0, %v9148
  %v9150 = vpop.f32.mrb[0].mxu0
  %v9151 = vadd.f32 0.0, %v9150
  %v9152 = vpop.f32.mrb[0].mxu0
  %v9153 = vadd.f32 0.0, %v9152
  %v9154 = vpop.f32.mrb[0].mxu0
  %v9155 = vadd.f32 0.0, %v9154
  %9156 = vmatprep.mubr.bf16.mxu0 %v3527
  %9157 = vmatmul.mubr.bf16.gmra.mrb[0].mxu0 %v3526
  %v9158 = vpop.f32.mrb[0].mxu0
  %v9159 = vadd.f32 0.0, %v9158
  %v9160 = vpop.f32.mrb[0].mxu0
  %v9161 = vadd.f32 0.0, %v9160
  %v9162 = vpop.f32.mrb[0].mxu0
  %v9163 = vadd.f32 0.0, %v9162
  %v9164 = vpop.f32.mrb[0].mxu0
  %v9165 = vadd.f32 0.0, %v9164
  %9166 = vmatprep.mubr.bf16.mxu0 %v3532
  %9167 = vmatmul.mubr.bf16.gmra.mrb[0].mxu0 %v3531
  %v9168 = vpop.f32.mrb[0].mxu0
  %v9169 = vadd.f32 0.0, %v9168
  %v9170 = vpop.f32.mrb[0].mxu0
  %v9171 = vadd.f32 0.0, %v9170
  %v9172 = vpop.f32.mrb[0].mxu0
  %v9173 = vadd.f32 0.0, %v9172
  %v9174 = vpop.f32.mrb[0].mxu0
  %v9175 = vadd.f32 0.0, %v9174
  %9176 = vmatprep.mubr.bf16.mxu0 %v3537
  %9177 = vmatmul.mubr.bf16.gmra.mrb[0].mxu0 %v3536
  %v9178 = vpop.f32.mrb[0].mxu0
  %v9179 = vadd.f32 0.0, %v9178
  %v9180 = vpop.f32.mrb[0].mxu0
  %v9181 = vadd.f32 0.0, %v9180
  %v9182 = vpop.f32.mrb[0].mxu0
  %v9183 = vadd.f32 0.0, %v9182
  %v9184 = vpop.f32.mrb[0].mxu0
  %v9185 = vadd.f32 0.0, %v9184
  %9186 = vmatprep.mubr.bf16.mxu0 %v3542
  %9187 = vmatmul.mubr.bf16.gmra.mrb[0].mxu0 %v3541
  %v9188 = vpop.f32.mrb[0].mxu0
  %v9189 = vadd.f32 0.0, %v9188
  %v9190 = vpop.f32.mrb[0].mxu0
  %v9191 = vadd.f32 0.0, %v9190
  %v9192 = vpop.f32.mrb[0].mxu0
  %v9193 = vadd.f32 0.0, %v9192
  %v9194 = vpop.f32.mrb[0].mxu0
  %v9195 = vadd.f32 0.0, %v9194
  %9196 = vmatprep.mubr.bf16.mxu0 %v3547
  %9197 = vmatmul.mubr.bf16.gmra.mrb[0].mxu0 %v3546
  %v9198 = vpop.f32.mrb[0].mxu0
  %v9199 = vadd.f32 0.0, %v9198
  %v9200 = vpop.f32.mrb[0].mxu0
  %v9201 = vadd.f32 0.0, %v9200
  %v9202 = vpop.f32.mrb[0].mxu0
  %v9203 = vadd.f32 0.0, %v9202
  %v9204 = vpop.f32.mrb[0].mxu0
  %v9205 = vadd.f32 0.0, %v9204
  %9206 = vmatprep.mubr.bf16.mxu0 %v3552
  %9207 = vmatmul.mubr.bf16.gmra.mrb[0].mxu0 %v3551
  %v9208 = vpop.f32.mrb[0].mxu0
  %v9209 = vadd.f32 0.0, %v9208
  %v9210 = vpop.f32.mrb[0].mxu0
  %v9211 = vadd.f32 0.0, %v9210
  %v9212 = vpop.f32.mrb[0].mxu0
  %v9213 = vadd.f32 0.0, %v9212
  %v9214 = vpop.f32.mrb[0].mxu0
  %v9215 = vadd.f32 0.0, %v9214
  %9216 = vmatprep.mubr.bf16.mxu0 %v3557
  %9217 = vmatmul.mubr.bf16.gmra.mrb[0].mxu0 %v3556
  %v9218 = vpop.f32.mrb[0].mxu0
  %v9219 = vadd.f32 0.0, %v9218
  %v9220 = vpop.f32.mrb[0].mxu0
  %v9221 = vadd.f32 0.0, %v9220
  %v9222 = vpop.f32.mrb[0].mxu0
  %v9223 = vadd.f32 0.0, %v9222
  %v9224 = vpop.f32.mrb[0].mxu0
  %v9225 = vadd.f32 0.0, %v9224
  %9226 = vmatprep.mubr.bf16.mxu0 %v3562
  %9227 = vmatmul.mubr.bf16.gmra.mrb[0].mxu0 %v3561
  %v9228 = vpop.f32.mrb[0].mxu0
  %v9229 = vadd.f32 0.0, %v9228
  %v9230 = vpop.f32.mrb[0].mxu0
  %v9231 = vadd.f32 0.0, %v9230
  %v9232 = vpop.f32.mrb[0].mxu0
  %v9233 = vadd.f32 0.0, %v9232
  %v9234 = vpop.f32.mrb[0].mxu0
  %v9235 = vadd.f32 0.0, %v9234
  %9236 = vmatprep.mubr.bf16.mxu0 %v3567
  %9237 = vmatmul.mubr.bf16.gmra.mrb[0].mxu0 %v3566
  %v9238 = vpop.f32.mrb[0].mxu0
  %v9239 = vadd.f32 0.0, %v9238
  %v9240 = vpop.f32.mrb[0].mxu0
  %v9241 = vadd.f32 0.0, %v9240
  %v9242 = vpop.f32.mrb[0].mxu0
  %v9243 = vadd.f32 0.0, %v9242
  %v9244 = vpop.f32.mrb[0].mxu0
  %v9245 = vadd.f32 0.0, %v9244
  %9246 = vmatprep.mubr.bf16.mxu0 %v3572
  %9247 = vmatmul.mubr.bf16.gmra.mrb[0].mxu0 %v3571
  %v9248 = vpop.f32.mrb[0].mxu0
  %v9249 = vadd.f32 0.0, %v9248
  %v9250 = vpop.f32.mrb[0].mxu0
  %v9251 = vadd.f32 0.0, %v9250
  %v9252 = vpop.f32.mrb[0].mxu0
  %v9253 = vadd.f32 0.0, %v9252
  %v9254 = vpop.f32.mrb[0].mxu0
  %v9255 = vadd.f32 0.0, %v9254
  %9256 = vmatprep.mubr.bf16.mxu0 %v3577
  %9257 = vmatmul.mubr.bf16.gmra.mrb[0].mxu0 %v3576
  %v9258 = vpop.f32.mrb[0].mxu0
  %v9259 = vadd.f32 0.0, %v9258
  %v9260 = vpop.f32.mrb[0].mxu0
  %v9261 = vadd.f32 0.0, %v9260
  %v9262 = vpop.f32.mrb[0].mxu0
  %v9263 = vadd.f32 0.0, %v9262
  %v9264 = vpop.f32.mrb[0].mxu0
  %v9265 = vadd.f32 0.0, %v9264
  %9266 = vmatprep.mubr.bf16.mxu0 %v3582
  %9267 = vmatmul.mubr.bf16.gmra.mrb[0].mxu0 %v3581
  %v9268 = vpop.f32.mrb[0].mxu0
  %v9269 = vadd.f32 0.0, %v9268
  %v9270 = vpop.f32.mrb[0].mxu0
  %v9271 = vadd.f32 0.0, %v9270
  %v9272 = vpop.f32.mrb[0].mxu0
  %v9273 = vadd.f32 0.0, %v9272
  %v9274 = vpop.f32.mrb[0].mxu0
  %v9275 = vadd.f32 0.0, %v9274
  %9276 = vmatprep.mubr.bf16.mxu0 %v3587
  %9277 = vmatmul.mubr.bf16.gmra.mrb[0].mxu0 %v3586
  %v9278 = vpop.f32.mrb[0].mxu0
  %v9279 = vadd.f32 0.0, %v9278
  %v9280 = vpop.f32.mrb[0].mxu0
  %v9281 = vadd.f32 0.0, %v9280
  %v9282 = vpop.f32.mrb[0].mxu0
  %v9283 = vadd.f32 0.0, %v9282
  %v9284 = vpop.f32.mrb[0].mxu0
  %v9285 = vadd.f32 0.0, %v9284
  %9286 = vmatprep.mubr.bf16.mxu0 %v3592
  %9287 = vmatmul.mubr.bf16.gmra.mrb[0].mxu0 %v3591
  %v9288 = vpop.f32.mrb[0].mxu0
  %v9289 = vadd.f32 0.0, %v9288
  %v9290 = vpop.f32.mrb[0].mxu0
  %v9291 = vadd.f32 0.0, %v9290
  %v9292 = vpop.f32.mrb[0].mxu0
  %v9293 = vadd.f32 0.0, %v9292
  %v9294 = vpop.f32.mrb[0].mxu0
  %v9295 = vadd.f32 0.0, %v9294
  %9296 = vmatprep.mubr.bf16.mxu0 %v3597
  %9297 = vmatmul.mubr.bf16.gmra.mrb[0].mxu0 %v3596
  %v9298 = vpop.f32.mrb[0].mxu0
  %v9299 = vadd.f32 0.0, %v9298
  %v9300 = vpop.f32.mrb[0].mxu0
  %v9301 = vadd.f32 0.0, %v9300
  %v9302 = vpop.f32.mrb[0].mxu0
  %v9303 = vadd.f32 0.0, %v9302
  %v9304 = vpop.f32.mrb[0].mxu0
  %v9305 = vadd.f32 0.0, %v9304
  %9306 = vmatprep.mubr.bf16.mxu0 %v3602
  %9307 = vmatmul.mubr.bf16.gmra.mrb[0].mxu0 %v3601
  %v9308 = vpop.f32.mrb[0].mxu0
  %v9309 = vadd.f32 0.0, %v9308
  %v9310 = vpop.f32.mrb[0].mxu0
  %v9311 = vadd.f32 0.0, %v9310
  %v9312 = vpop.f32.mrb[0].mxu0
  %v9313 = vadd.f32 0.0, %v9312
  %v9314 = vpop.f32.mrb[0].mxu0
  %v9315 = vadd.f32 0.0, %v9314
  %9316 = vmatprep.mubr.bf16.mxu0 %v3607
  %9317 = vmatmul.mubr.bf16.gmra.mrb[0].mxu0 %v3606
  %v9318 = vpop.f32.mrb[0].mxu0
  %v9319 = vadd.f32 0.0, %v9318
  %v9320 = vpop.f32.mrb[0].mxu0
  %v9321 = vadd.f32 0.0, %v9320
  %v9322 = vpop.f32.mrb[0].mxu0
  %v9323 = vadd.f32 0.0, %v9322
  %v9324 = vpop.f32.mrb[0].mxu0
  %v9325 = vadd.f32 0.0, %v9324
  %9326 = vmatprep.mubr.bf16.mxu0 %v3612
  %9327 = vmatmul.mubr.bf16.gmra.mrb[0].mxu0 %v3611
  %v9328 = vpop.f32.mrb[0].mxu0
  %v9329 = vadd.f32 0.0, %v9328
  %v9330 = vpop.f32.mrb[0].mxu0
  %v9331 = vadd.f32 0.0, %v9330
  %v9332 = vpop.f32.mrb[0].mxu0
  %v9333 = vadd.f32 0.0, %v9332
  %v9334 = vpop.f32.mrb[0].mxu0
  %v9335 = vadd.f32 0.0, %v9334
  %9336 = vmatprep.mubr.bf16.mxu0 %v3617
  %9337 = vmatmul.mubr.bf16.gmra.mrb[0].mxu0 %v3616
  %v9338 = vpop.f32.mrb[0].mxu0
  %v9339 = vadd.f32 0.0, %v9338
  %v9340 = vpop.f32.mrb[0].mxu0
  %v9341 = vadd.f32 0.0, %v9340
  %v9342 = vpop.f32.mrb[0].mxu0
  %v9343 = vadd.f32 0.0, %v9342
  %v9344 = vpop.f32.mrb[0].mxu0
  %v9345 = vadd.f32 0.0, %v9344
  %9346 = vmatprep.mubr.bf16.mxu0 %v3622
  %9347 = vmatmul.mubr.bf16.gmra.mrb[0].mxu0 %v3621
  %v9348 = vpop.f32.mrb[0].mxu0
  %v9349 = vadd.f32 0.0, %v9348
  %v9350 = vpop.f32.mrb[0].mxu0
  %v9351 = vadd.f32 0.0, %v9350
  %v9352 = vpop.f32.mrb[0].mxu0
  %v9353 = vadd.f32 0.0, %v9352
  %v9354 = vpop.f32.mrb[0].mxu0
  %v9355 = vadd.f32 0.0, %v9354
  %9356 = vmatprep.mubr.bf16.mxu0 %v3627
  %9357 = vmatmul.mubr.bf16.gmra.mrb[0].mxu0 %v3626
  %v9358 = vpop.f32.mrb[0].mxu0
  %v9359 = vadd.f32 0.0, %v9358
  %v9360 = vpop.f32.mrb[0].mxu0
  %v9361 = vadd.f32 0.0, %v9360
  %v9362 = vpop.f32.mrb[0].mxu0
  %v9363 = vadd.f32 0.0, %v9362
  %v9364 = vpop.f32.mrb[0].mxu0
  %v9365 = vadd.f32 0.0, %v9364
  %9366 = vmatprep.mubr.bf16.mxu0 %v3632
  %9367 = vmatmul.mubr.bf16.gmra.mrb[0].mxu0 %v3631
  %v9368 = vpop.f32.mrb[0].mxu0
  %v9369 = vadd.f32 0.0, %v9368
  %v9370 = vpop.f32.mrb[0].mxu0
  %v9371 = vadd.f32 0.0, %v9370
  %v9372 = vpop.f32.mrb[0].mxu0
  %v9373 = vadd.f32 0.0, %v9372
  %v9374 = vpop.f32.mrb[0].mxu0
  %v9375 = vadd.f32 0.0, %v9374
  %9376 = vmatprep.mubr.bf16.mxu0 %v3637
  %9377 = vmatmul.mubr.bf16.gmra.mrb[0].mxu0 %v3636
  %v9378 = vpop.f32.mrb[0].mxu0
  %v9379 = vadd.f32 0.0, %v9378
  %v9380 = vpop.f32.mrb[0].mxu0
  %v9381 = vadd.f32 0.0, %v9380
  %v9382 = vpop.f32.mrb[0].mxu0
  %v9383 = vadd.f32 0.0, %v9382
  %v9384 = vpop.f32.mrb[0].mxu0
  %v9385 = vadd.f32 0.0, %v9384
  %9386 = vdwg.mxu0
  %9387 = vmatprep.subr.bf16.mxu0 %v8955
  %9388 = vmatpush1.bf16.msra.mxu0 %v8954
  %9389 = vmatprep.subr.bf16.mxu0 %v8957
  %9390 = vmatpush1.bf16.msra.mxu0 %v8956
  %9391 = vmatprep.subr.bf16.mxu0 %v8959
  %9392 = vmatpush1.bf16.msra.mxu0 %v8958
  %9393 = vmatprep.subr.bf16.mxu0 %v8961
  %9394 = vmatpush1.bf16.msra.mxu0 %v8960
  %9395 = vmatprep.subr.bf16.mxu0 %v8963
  %9396 = vmatpush1.bf16.msra.mxu0 %v8962
  %9397 = vmatprep.subr.bf16.mxu0 %v8965
  %9398 = vmatpush1.bf16.msra.mxu0 %v8964
  %9399 = vmatprep.subr.bf16.mxu0 %v8967
  %9400 = vmatpush1.bf16.msra.mxu0 %v8966
  %9401 = vmatprep.subr.bf16.mxu0 %v8969
  %9402 = vmatpush1.bf16.msra.mxu0 %v8968
  %9403 = vmatprep.subr.bf16.mxu0 %v8971
  %9404 = vmatpush1.bf16.msra.mxu0 %v8970
  %9405 = vmatprep.subr.bf16.mxu0 %v8973
  %9406 = vmatpush1.bf16.msra.mxu0 %v8972
  %9407 = vmatprep.subr.bf16.mxu0 %v8975
  %9408 = vmatpush1.bf16.msra.mxu0 %v8974
  %9409 = vmatprep.subr.bf16.mxu0 %v8977
  %9410 = vmatpush1.bf16.msra.mxu0 %v8976
  %9411 = vmatprep.subr.bf16.mxu0 %v8979
  %9412 = vmatpush1.bf16.msra.mxu0 %v8978
  %9413 = vmatprep.subr.bf16.mxu0 %v8981
  %9414 = vmatpush1.bf16.msra.mxu0 %v8980
  %9415 = vmatprep.subr.bf16.mxu0 %v8983
  %9416 = vmatpush1.bf16.msra.mxu0 %v8982
  %9417 = vmatprep.subr.bf16.mxu0 %v8985
  %9418 = vmatpush1.bf16.msra.mxu0 %v8984
  %9419 = vmatprep.mubr.bf16.mxu0 %v3464
  %9420 = vmatmul.mubr.bf16.gmra.mrb[0].mxu0 %v3463
  %v9421 = vpop.f32.mrb[0].mxu0
  %v9422 = vadd.f32 %v9029, %v9421
  %v9423 = vpop.f32.mrb[0].mxu0
  %v9424 = vadd.f32 %v9031, %v9423
  %v9425 = vpop.f32.mrb[0].mxu0
  %v9426 = vadd.f32 %v9033, %v9425
  %v9427 = vpop.f32.mrb[0].mxu0
  %v9428 = vadd.f32 %v9035, %v9427
  %9429 = vmatprep.mubr.bf16.mxu0 %v3469
  %9430 = vmatmul.mubr.bf16.gmra.mrb[0].mxu0 %v3468
  %v9431 = vpop.f32.mrb[0].mxu0
  %v9432 = vadd.f32 %v9039, %v9431
  %v9433 = vpop.f32.mrb[0].mxu0
  %v9434 = vadd.f32 %v9041, %v9433
  %v9435 = vpop.f32.mrb[0].mxu0
  %v9436 = vadd.f32 %v9043, %v9435
  %v9437 = vpop.f32.mrb[0].mxu0
  %v9438 = vadd.f32 %v9045, %v9437
  %9439 = vmatprep.mubr.bf16.mxu0 %v3474
  %9440 = vmatmul.mubr.bf16.gmra.mrb[0].mxu0 %v3473
  %v9441 = vpop.f32.mrb[0].mxu0
  %v9442 = vadd.f32 %v9049, %v9441
  %v9443 = vpop.f32.mrb[0].mxu0
  %v9444 = vadd.f32 %v9051, %v9443
  %v9445 = vpop.f32.mrb[0].mxu0
  %v9446 = vadd.f32 %v9053, %v9445
  %v9447 = vpop.f32.mrb[0].mxu0
  %v9448 = vadd.f32 %v9055, %v9447
  %9449 = vmatprep.mubr.bf16.mxu0 %v3479
  %9450 = vmatmul.mubr.bf16.gmra.mrb[0].mxu0 %v3478
  %v9451 = vpop.f32.mrb[0].mxu0
  %v9452 = vadd.f32 %v9059, %v9451
  %v9453 = vpop.f32.mrb[0].mxu0
  %v9454 = vadd.f32 %v9061, %v9453
  %v9455 = vpop.f32.mrb[0].mxu0
  %v9456 = vadd.f32 %v9063, %v9455
  %v9457 = vpop.f32.mrb[0].mxu0
  %v9458 = vadd.f32 %v9065, %v9457
  %9459 = vmatprep.mubr.bf16.mxu0 %v3484
  %9460 = vmatmul.mubr.bf16.gmra.mrb[0].mxu0 %v3483
  %v9461 = vpop.f32.mrb[0].mxu0
  %v9462 = vadd.f32 %v9069, %v9461
  %v9463 = vpop.f32.mrb[0].mxu0
  %v9464 = vadd.f32 %v9071, %v9463
  %v9465 = vpop.f32.mrb[0].mxu0
  %v9466 = vadd.f32 %v9073, %v9465
  %v9467 = vpop.f32.mrb[0].mxu0
  %v9468 = vadd.f32 %v9075, %v9467
  %9469 = vmatprep.mubr.bf16.mxu0 %v3489
  %9470 = vmatmul.mubr.bf16.gmra.mrb[0].mxu0 %v3488
  %v9471 = vpop.f32.mrb[0].mxu0
  %v9472 = vadd.f32 %v9079, %v9471
  %v9473 = vpop.f32.mrb[0].mxu0
  %v9474 = vadd.f32 %v9081, %v9473
  %v9475 = vpop.f32.mrb[0].mxu0
  %v9476 = vadd.f32 %v9083, %v9475
  %v9477 = vpop.f32.mrb[0].mxu0
  %v9478 = vadd.f32 %v9085, %v9477
  %9479 = vmatprep.mubr.bf16.mxu0 %v3494
  %9480 = vmatmul.mubr.bf16.gmra.mrb[0].mxu0 %v3493
  %v9481 = vpop.f32.mrb[0].mxu0
  %v9482 = vadd.f32 %v9089, %v9481
  %v9483 = vpop.f32.mrb[0].mxu0
  %v9484 = vadd.f32 %v9091, %v9483
  %v9485 = vpop.f32.mrb[0].mxu0
  %v9486 = vadd.f32 %v9093, %v9485
  %v9487 = vpop.f32.mrb[0].mxu0
  %v9488 = vadd.f32 %v9095, %v9487
  %9489 = vmatprep.mubr.bf16.mxu0 %v3499
  %9490 = vmatmul.mubr.bf16.gmra.mrb[0].mxu0 %v3498
  %v9491 = vpop.f32.mrb[0].mxu0
  %v9492 = vadd.f32 %v9099, %v9491
  %v9493 = vpop.f32.mrb[0].mxu0
  %v9494 = vadd.f32 %v9101, %v9493
  %v9495 = vpop.f32.mrb[0].mxu0
  %v9496 = vadd.f32 %v9103, %v9495
  %v9497 = vpop.f32.mrb[0].mxu0
  %v9498 = vadd.f32 %v9105, %v9497
  %9499 = vmatprep.mubr.bf16.mxu0 %v3504
  %9500 = vmatmul.mubr.bf16.gmra.mrb[0].mxu0 %v3503
  %v9501 = vpop.f32.mrb[0].mxu0
  %v9502 = vadd.f32 %v9109, %v9501
  %v9503 = vpop.f32.mrb[0].mxu0
  %v9504 = vadd.f32 %v9111, %v9503
  %v9505 = vpop.f32.mrb[0].mxu0
  %v9506 = vadd.f32 %v9113, %v9505
  %v9507 = vpop.f32.mrb[0].mxu0
  %v9508 = vadd.f32 %v9115, %v9507
  %9509 = vmatprep.mubr.bf16.mxu0 %v3509
  %9510 = vmatmul.mubr.bf16.gmra.mrb[0].mxu0 %v3508
  %v9511 = vpop.f32.mrb[0].mxu0
  %v9512 = vadd.f32 %v9119, %v9511
  %v9513 = vpop.f32.mrb[0].mxu0
  %v9514 = vadd.f32 %v9121, %v9513
  %v9515 = vpop.f32.mrb[0].mxu0
  %v9516 = vadd.f32 %v9123, %v9515
  %v9517 = vpop.f32.mrb[0].mxu0
  %v9518 = vadd.f32 %v9125, %v9517
  %9519 = vmatprep.mubr.bf16.mxu0 %v3514
  %9520 = vmatmul.mubr.bf16.gmra.mrb[0].mxu0 %v3513
  %v9521 = vpop.f32.mrb[0].mxu0
  %v9522 = vadd.f32 %v9129, %v9521
  %v9523 = vpop.f32.mrb[0].mxu0
  %v9524 = vadd.f32 %v9131, %v9523
  %v9525 = vpop.f32.mrb[0].mxu0
  %v9526 = vadd.f32 %v9133, %v9525
  %v9527 = vpop.f32.mrb[0].mxu0
  %v9528 = vadd.f32 %v9135, %v9527
  %9529 = vmatprep.mubr.bf16.mxu0 %v3519
  %9530 = vmatmul.mubr.bf16.gmra.mrb[0].mxu0 %v3518
  %v9531 = vpop.f32.mrb[0].mxu0
  %v9532 = vadd.f32 %v9139, %v9531
  %v9533 = vpop.f32.mrb[0].mxu0
  %v9534 = vadd.f32 %v9141, %v9533
  %v9535 = vpop.f32.mrb[0].mxu0
  %v9536 = vadd.f32 %v9143, %v9535
  %v9537 = vpop.f32.mrb[0].mxu0
  %v9538 = vadd.f32 %v9145, %v9537
  %9539 = vmatprep.mubr.bf16.mxu0 %v3524
  %9540 = vmatmul.mubr.bf16.gmra.mrb[0].mxu0 %v3523
  %v9541 = vpop.f32.mrb[0].mxu0
  %v9542 = vadd.f32 %v9149, %v9541
  %v9543 = vpop.f32.mrb[0].mxu0
  %v9544 = vadd.f32 %v9151, %v9543
  %v9545 = vpop.f32.mrb[0].mxu0
  %v9546 = vadd.f32 %v9153, %v9545
  %v9547 = vpop.f32.mrb[0].mxu0
  %v9548 = vadd.f32 %v9155, %v9547
  %9549 = vmatprep.mubr.bf16.mxu0 %v3529
  %9550 = vmatmul.mubr.bf16.gmra.mrb[0].mxu0 %v3528
  %v9551 = vpop.f32.mrb[0].mxu0
  %v9552 = vadd.f32 %v9159, %v9551
  %v9553 = vpop.f32.mrb[0].mxu0
  %v9554 = vadd.f32 %v9161, %v9553
  %v9555 = vpop.f32.mrb[0].mxu0
  %v9556 = vadd.f32 %v9163, %v9555
  %v9557 = vpop.f32.mrb[0].mxu0
  %v9558 = vadd.f32 %v9165, %v9557
  %9559 = vmatprep.mubr.bf16.mxu0 %v3534
  %9560 = vmatmul.mubr.bf16.gmra.mrb[0].mxu0 %v3533
  %v9561 = vpop.f32.mrb[0].mxu0
  %v9562 = vadd.f32 %v9169, %v9561
  %v9563 = vpop.f32.mrb[0].mxu0
  %v9564 = vadd.f32 %v9171, %v9563
  %v9565 = vpop.f32.mrb[0].mxu0
  %v9566 = vadd.f32 %v9173, %v9565
  %v9567 = vpop.f32.mrb[0].mxu0
  %v9568 = vadd.f32 %v9175, %v9567
  %9569 = vmatprep.mubr.bf16.mxu0 %v3539
  %9570 = vmatmul.mubr.bf16.gmra.mrb[0].mxu0 %v3538
  %v9571 = vpop.f32.mrb[0].mxu0
  %v9572 = vadd.f32 %v9179, %v9571
  %v9573 = vpop.f32.mrb[0].mxu0
  %v9574 = vadd.f32 %v9181, %v9573
  %v9575 = vpop.f32.mrb[0].mxu0
  %v9576 = vadd.f32 %v9183, %v9575
  %v9577 = vpop.f32.mrb[0].mxu0
  %v9578 = vadd.f32 %v9185, %v9577
  %9579 = vmatprep.mubr.bf16.mxu0 %v3544
  %9580 = vmatmul.mubr.bf16.gmra.mrb[0].mxu0 %v3543
  %v9581 = vpop.f32.mrb[0].mxu0
  %v9582 = vadd.f32 %v9189, %v9581
  %v9583 = vpop.f32.mrb[0].mxu0
  %v9584 = vadd.f32 %v9191, %v9583
  %v9585 = vpop.f32.mrb[0].mxu0
  %v9586 = vadd.f32 %v9193, %v9585
  %v9587 = vpop.f32.mrb[0].mxu0
  %v9588 = vadd.f32 %v9195, %v9587
  %9589 = vmatprep.mubr.bf16.mxu0 %v3549
  %9590 = vmatmul.mubr.bf16.gmra.mrb[0].mxu0 %v3548
  %v9591 = vpop.f32.mrb[0].mxu0
  %v9592 = vadd.f32 %v9199, %v9591
  %v9593 = vpop.f32.mrb[0].mxu0
  %v9594 = vadd.f32 %v9201, %v9593
  %v9595 = vpop.f32.mrb[0].mxu0
  %v9596 = vadd.f32 %v9203, %v9595
  %v9597 = vpop.f32.mrb[0].mxu0
  %v9598 = vadd.f32 %v9205, %v9597
  %9599 = vmatprep.mubr.bf16.mxu0 %v3554
  %9600 = vmatmul.mubr.bf16.gmra.mrb[0].mxu0 %v3553
  %v9601 = vpop.f32.mrb[0].mxu0
  %v9602 = vadd.f32 %v9209, %v9601
  %v9603 = vpop.f32.mrb[0].mxu0
  %v9604 = vadd.f32 %v9211, %v9603
  %v9605 = vpop.f32.mrb[0].mxu0
  %v9606 = vadd.f32 %v9213, %v9605
  %v9607 = vpop.f32.mrb[0].mxu0
  %v9608 = vadd.f32 %v9215, %v9607
  %9609 = vmatprep.mubr.bf16.mxu0 %v3559
  %9610 = vmatmul.mubr.bf16.gmra.mrb[0].mxu0 %v3558
  %v9611 = vpop.f32.mrb[0].mxu0
  %v9612 = vadd.f32 %v9219, %v9611
  %v9613 = vpop.f32.mrb[0].mxu0
  %v9614 = vadd.f32 %v9221, %v9613
  %v9615 = vpop.f32.mrb[0].mxu0
  %v9616 = vadd.f32 %v9223, %v9615
  %v9617 = vpop.f32.mrb[0].mxu0
  %v9618 = vadd.f32 %v9225, %v9617
  %9619 = vmatprep.mubr.bf16.mxu0 %v3564
  %9620 = vmatmul.mubr.bf16.gmra.mrb[0].mxu0 %v3563
  %v9621 = vpop.f32.mrb[0].mxu0
  %v9622 = vadd.f32 %v9229, %v9621
  %v9623 = vpop.f32.mrb[0].mxu0
  %v9624 = vadd.f32 %v9231, %v9623
  %v9625 = vpop.f32.mrb[0].mxu0
  %v9626 = vadd.f32 %v9233, %v9625
  %v9627 = vpop.f32.mrb[0].mxu0
  %v9628 = vadd.f32 %v9235, %v9627
  %9629 = vmatprep.mubr.bf16.mxu0 %v3569
  %9630 = vmatmul.mubr.bf16.gmra.mrb[0].mxu0 %v3568
  %v9631 = vpop.f32.mrb[0].mxu0
  %v9632 = vadd.f32 %v9239, %v9631
  %v9633 = vpop.f32.mrb[0].mxu0
  %v9634 = vadd.f32 %v9241, %v9633
  %v9635 = vpop.f32.mrb[0].mxu0
  %v9636 = vadd.f32 %v9243, %v9635
  %v9637 = vpop.f32.mrb[0].mxu0
  %v9638 = vadd.f32 %v9245, %v9637
  %9639 = vmatprep.mubr.bf16.mxu0 %v3574
  %9640 = vmatmul.mubr.bf16.gmra.mrb[0].mxu0 %v3573
  %v9641 = vpop.f32.mrb[0].mxu0
  %v9642 = vadd.f32 %v9249, %v9641
  %v9643 = vpop.f32.mrb[0].mxu0
  %v9644 = vadd.f32 %v9251, %v9643
  %v9645 = vpop.f32.mrb[0].mxu0
  %v9646 = vadd.f32 %v9253, %v9645
  %v9647 = vpop.f32.mrb[0].mxu0
  %v9648 = vadd.f32 %v9255, %v9647
  %9649 = vmatprep.mubr.bf16.mxu0 %v3579
  %9650 = vmatmul.mubr.bf16.gmra.mrb[0].mxu0 %v3578
  %v9651 = vpop.f32.mrb[0].mxu0
  %v9652 = vadd.f32 %v9259, %v9651
  %v9653 = vpop.f32.mrb[0].mxu0
  %v9654 = vadd.f32 %v9261, %v9653
  %v9655 = vpop.f32.mrb[0].mxu0
  %v9656 = vadd.f32 %v9263, %v9655
  %v9657 = vpop.f32.mrb[0].mxu0
  %v9658 = vadd.f32 %v9265, %v9657
  %9659 = vmatprep.mubr.bf16.mxu0 %v3584
  %9660 = vmatmul.mubr.bf16.gmra.mrb[0].mxu0 %v3583
  %v9661 = vpop.f32.mrb[0].mxu0
  %v9662 = vadd.f32 %v9269, %v9661
  %v9663 = vpop.f32.mrb[0].mxu0
  %v9664 = vadd.f32 %v9271, %v9663
  %v9665 = vpop.f32.mrb[0].mxu0
  %v9666 = vadd.f32 %v9273, %v9665
  %v9667 = vpop.f32.mrb[0].mxu0
  %v9668 = vadd.f32 %v9275, %v9667
  %9669 = vmatprep.mubr.bf16.mxu0 %v3589
  %9670 = vmatmul.mubr.bf16.gmra.mrb[0].mxu0 %v3588
  %v9671 = vpop.f32.mrb[0].mxu0
  %v9672 = vadd.f32 %v9279, %v9671
  %v9673 = vpop.f32.mrb[0].mxu0
  %v9674 = vadd.f32 %v9281, %v9673
  %v9675 = vpop.f32.mrb[0].mxu0
  %v9676 = vadd.f32 %v9283, %v9675
  %v9677 = vpop.f32.mrb[0].mxu0
  %v9678 = vadd.f32 %v9285, %v9677
  %9679 = vmatprep.mubr.bf16.mxu0 %v3594
  %9680 = vmatmul.mubr.bf16.gmra.mrb[0].mxu0 %v3593
  %v9681 = vpop.f32.mrb[0].mxu0
  %v9682 = vadd.f32 %v9289, %v9681
  %v9683 = vpop.f32.mrb[0].mxu0
  %v9684 = vadd.f32 %v9291, %v9683
  %v9685 = vpop.f32.mrb[0].mxu0
  %v9686 = vadd.f32 %v9293, %v9685
  %v9687 = vpop.f32.mrb[0].mxu0
  %v9688 = vadd.f32 %v9295, %v9687
  %9689 = vmatprep.mubr.bf16.mxu0 %v3599
  %9690 = vmatmul.mubr.bf16.gmra.mrb[0].mxu0 %v3598
  %v9691 = vpop.f32.mrb[0].mxu0
  %v9692 = vadd.f32 %v9299, %v9691
  %v9693 = vpop.f32.mrb[0].mxu0
  %v9694 = vadd.f32 %v9301, %v9693
  %v9695 = vpop.f32.mrb[0].mxu0
  %v9696 = vadd.f32 %v9303, %v9695
  %v9697 = vpop.f32.mrb[0].mxu0
  %v9698 = vadd.f32 %v9305, %v9697
  %9699 = vmatprep.mubr.bf16.mxu0 %v3604
  %9700 = vmatmul.mubr.bf16.gmra.mrb[0].mxu0 %v3603
  %v9701 = vpop.f32.mrb[0].mxu0
  %v9702 = vadd.f32 %v9309, %v9701
  %v9703 = vpop.f32.mrb[0].mxu0
  %v9704 = vadd.f32 %v9311, %v9703
  %v9705 = vpop.f32.mrb[0].mxu0
  %v9706 = vadd.f32 %v9313, %v9705
  %v9707 = vpop.f32.mrb[0].mxu0
  %v9708 = vadd.f32 %v9315, %v9707
  %9709 = vmatprep.mubr.bf16.mxu0 %v3609
  %9710 = vmatmul.mubr.bf16.gmra.mrb[0].mxu0 %v3608
  %v9711 = vpop.f32.mrb[0].mxu0
  %v9712 = vadd.f32 %v9319, %v9711
  %v9713 = vpop.f32.mrb[0].mxu0
  %v9714 = vadd.f32 %v9321, %v9713
  %v9715 = vpop.f32.mrb[0].mxu0
  %v9716 = vadd.f32 %v9323, %v9715
  %v9717 = vpop.f32.mrb[0].mxu0
  %v9718 = vadd.f32 %v9325, %v9717
  %9719 = vmatprep.mubr.bf16.mxu0 %v3614
  %9720 = vmatmul.mubr.bf16.gmra.mrb[0].mxu0 %v3613
  %v9721 = vpop.f32.mrb[0].mxu0
  %v9722 = vadd.f32 %v9329, %v9721
  %v9723 = vpop.f32.mrb[0].mxu0
  %v9724 = vadd.f32 %v9331, %v9723
  %v9725 = vpop.f32.mrb[0].mxu0
  %v9726 = vadd.f32 %v9333, %v9725
  %v9727 = vpop.f32.mrb[0].mxu0
  %v9728 = vadd.f32 %v9335, %v9727
  %9729 = vmatprep.mubr.bf16.mxu0 %v3619
  %9730 = vmatmul.mubr.bf16.gmra.mrb[0].mxu0 %v3618
  %v9731 = vpop.f32.mrb[0].mxu0
  %v9732 = vadd.f32 %v9339, %v9731
  %v9733 = vpop.f32.mrb[0].mxu0
  %v9734 = vadd.f32 %v9341, %v9733
  %v9735 = vpop.f32.mrb[0].mxu0
  %v9736 = vadd.f32 %v9343, %v9735
  %v9737 = vpop.f32.mrb[0].mxu0
  %v9738 = vadd.f32 %v9345, %v9737
  %9739 = vmatprep.mubr.bf16.mxu0 %v3624
  %9740 = vmatmul.mubr.bf16.gmra.mrb[0].mxu0 %v3623
  %v9741 = vpop.f32.mrb[0].mxu0
  %v9742 = vadd.f32 %v9349, %v9741
  %v9743 = vpop.f32.mrb[0].mxu0
  %v9744 = vadd.f32 %v9351, %v9743
  %v9745 = vpop.f32.mrb[0].mxu0
  %v9746 = vadd.f32 %v9353, %v9745
  %v9747 = vpop.f32.mrb[0].mxu0
  %v9748 = vadd.f32 %v9355, %v9747
  %9749 = vmatprep.mubr.bf16.mxu0 %v3629
  %9750 = vmatmul.mubr.bf16.gmra.mrb[0].mxu0 %v3628
  %v9751 = vpop.f32.mrb[0].mxu0
  %v9752 = vadd.f32 %v9359, %v9751
  %v9753 = vpop.f32.mrb[0].mxu0
  %v9754 = vadd.f32 %v9361, %v9753
  %v9755 = vpop.f32.mrb[0].mxu0
  %v9756 = vadd.f32 %v9363, %v9755
  %v9757 = vpop.f32.mrb[0].mxu0
  %v9758 = vadd.f32 %v9365, %v9757
  %9759 = vmatprep.mubr.bf16.mxu0 %v3634
  %9760 = vmatmul.mubr.bf16.gmra.mrb[0].mxu0 %v3633
  %v9761 = vpop.f32.mrb[0].mxu0
  %v9762 = vadd.f32 %v9369, %v9761
  %v9763 = vpop.f32.mrb[0].mxu0
  %v9764 = vadd.f32 %v9371, %v9763
  %v9765 = vpop.f32.mrb[0].mxu0
  %v9766 = vadd.f32 %v9373, %v9765
  %v9767 = vpop.f32.mrb[0].mxu0
  %v9768 = vadd.f32 %v9375, %v9767
  %9769 = vmatprep.mubr.bf16.mxu0 %v3639
  %9770 = vmatmul.mubr.bf16.gmra.mrb[0].mxu0 %v3638
  %v9771 = vpop.f32.mrb[0].mxu0
  %v9772 = vadd.f32 %v9379, %v9771
  %v9773 = vpop.f32.mrb[0].mxu0
  %v9774 = vadd.f32 %v9381, %v9773
  %v9775 = vpop.f32.mrb[0].mxu0
  %v9776 = vadd.f32 %v9383, %v9775
  %v9777 = vpop.f32.mrb[0].mxu0
  %v9778 = vadd.f32 %v9385, %v9777
  %9779 = vdwg.mxu0
  %9780 = vmatprep.subr.bf16.mxu0 %v8987
  %9781 = vmatpush1.bf16.msra.mxu0 %v8986
  %9782 = vmatprep.subr.bf16.mxu0 %v8989
  %9783 = vmatpush1.bf16.msra.mxu0 %v8988
  %9784 = vmatprep.subr.bf16.mxu0 %v8991
  %9785 = vmatpush1.bf16.msra.mxu0 %v8990
  %9786 = vmatprep.subr.bf16.mxu0 %v8993
  %9787 = vmatpush1.bf16.msra.mxu0 %v8992
  %9788 = vmatprep.subr.bf16.mxu0 0
  %9789 = vmatpush1.bf16.msra.mxu0 0
  %9790 = vmatprep.subr.bf16.mxu0 0
  %9791 = vmatpush1.bf16.msra.mxu0 0
  %9792 = vmatprep.subr.bf16.mxu0 0
  %9793 = vmatpush1.bf16.msra.mxu0 0
  %9794 = vmatprep.subr.bf16.mxu0 0
  %9795 = vmatpush1.bf16.msra.mxu0 0
  %9796 = vmatprep.subr.bf16.mxu0 0
  %9797 = vmatpush1.bf16.msra.mxu0 0
  %9798 = vmatprep.subr.bf16.mxu0 0
  %9799 = vmatpush1.bf16.msra.mxu0 0
  %9800 = vmatprep.subr.bf16.mxu0 0
  %9801 = vmatpush1.bf16.msra.mxu0 0
  %9802 = vmatprep.subr.bf16.mxu0 0
  %9803 = vmatpush1.bf16.msra.mxu0 0
  %9804 = vmatprep.subr.bf16.mxu0 0
  %9805 = vmatpush1.bf16.msra.mxu0 0
  %9806 = vmatprep.subr.bf16.mxu0 0
  %9807 = vmatpush1.bf16.msra.mxu0 0
  %9808 = vmatprep.subr.bf16.mxu0 0
  %9809 = vmatpush1.bf16.msra.mxu0 0
  %9810 = vmatprep.subr.bf16.mxu0 0
  %9811 = vmatpush1.bf16.msra.mxu0 0
  %9812 = vmatprep.mubr.bf16.mxu0 0
  %9813 = vmatmul.mubr.bf16.gmra.mrb[0].mxu0 %v3787
  %v9814 = vpop.f32.mrb[0].mxu0
  %v9815 = vadd.f32 %v9422, %v9814
  %v9816 = vpop.f32.mrb[0].mxu0
  %v9817 = vadd.f32 %v9424, %v9816
  %v9818 = vpop.f32.mrb[0].mxu0
  %v9819 = vadd.f32 %v9426, %v9818
  %v9820 = vpop.f32.mrb[0].mxu0
  %v9821 = vadd.f32 %v9428, %v9820
  %9822 = vmatprep.mubr.bf16.mxu0 0
  %9823 = vmatmul.mubr.bf16.gmra.mrb[0].mxu0 %v3790
  %v9824 = vpop.f32.mrb[0].mxu0
  %v9825 = vadd.f32 %v9432, %v9824
  %v9826 = vpop.f32.mrb[0].mxu0
  %v9827 = vadd.f32 %v9434, %v9826
  %v9828 = vpop.f32.mrb[0].mxu0
  %v9829 = vadd.f32 %v9436, %v9828
  %v9830 = vpop.f32.mrb[0].mxu0
  %v9831 = vadd.f32 %v9438, %v9830
  %9832 = vmatprep.mubr.bf16.mxu0 0
  %9833 = vmatmul.mubr.bf16.gmra.mrb[0].mxu0 %v3793
  %v9834 = vpop.f32.mrb[0].mxu0
  %v9835 = vadd.f32 %v9442, %v9834
  %v9836 = vpop.f32.mrb[0].mxu0
  %v9837 = vadd.f32 %v9444, %v9836
  %v9838 = vpop.f32.mrb[0].mxu0
  %v9839 = vadd.f32 %v9446, %v9838
  %v9840 = vpop.f32.mrb[0].mxu0
  %v9841 = vadd.f32 %v9448, %v9840
  %9842 = vmatprep.mubr.bf16.mxu0 0
  %9843 = vmatmul.mubr.bf16.gmra.mrb[0].mxu0 %v3796
  %v9844 = vpop.f32.mrb[0].mxu0
  %v9845 = vadd.f32 %v9452, %v9844
  %v9846 = vpop.f32.mrb[0].mxu0
  %v9847 = vadd.f32 %v9454, %v9846
  %v9848 = vpop.f32.mrb[0].mxu0
  %v9849 = vadd.f32 %v9456, %v9848
  %v9850 = vpop.f32.mrb[0].mxu0
  %v9851 = vadd.f32 %v9458, %v9850
  %9852 = vmatprep.mubr.bf16.mxu0 0
  %9853 = vmatmul.mubr.bf16.gmra.mrb[0].mxu0 %v3799
  %v9854 = vpop.f32.mrb[0].mxu0
  %v9855 = vadd.f32 %v9462, %v9854
  %v9856 = vpop.f32.mrb[0].mxu0
  %v9857 = vadd.f32 %v9464, %v9856
  %v9858 = vpop.f32.mrb[0].mxu0
  %v9859 = vadd.f32 %v9466, %v9858
  %v9860 = vpop.f32.mrb[0].mxu0
  %v9861 = vadd.f32 %v9468, %v9860
  %9862 = vmatprep.mubr.bf16.mxu0 0
  %9863 = vmatmul.mubr.bf16.gmra.mrb[0].mxu0 %v3802
  %v9864 = vpop.f32.mrb[0].mxu0
  %v9865 = vadd.f32 %v9472, %v9864
  %v9866 = vpop.f32.mrb[0].mxu0
  %v9867 = vadd.f32 %v9474, %v9866
  %v9868 = vpop.f32.mrb[0].mxu0
  %v9869 = vadd.f32 %v9476, %v9868
  %v9870 = vpop.f32.mrb[0].mxu0
  %v9871 = vadd.f32 %v9478, %v9870
  %9872 = vmatprep.mubr.bf16.mxu0 0
  %9873 = vmatmul.mubr.bf16.gmra.mrb[0].mxu0 %v3805
  %v9874 = vpop.f32.mrb[0].mxu0
  %v9875 = vadd.f32 %v9482, %v9874
  %v9876 = vpop.f32.mrb[0].mxu0
  %v9877 = vadd.f32 %v9484, %v9876
  %v9878 = vpop.f32.mrb[0].mxu0
  %v9879 = vadd.f32 %v9486, %v9878
  %v9880 = vpop.f32.mrb[0].mxu0
  %v9881 = vadd.f32 %v9488, %v9880
  %9882 = vmatprep.mubr.bf16.mxu0 0
  %9883 = vmatmul.mubr.bf16.gmra.mrb[0].mxu0 %v3808
  %v9884 = vpop.f32.mrb[0].mxu0
  %v9885 = vadd.f32 %v9492, %v9884
  %v9886 = vpop.f32.mrb[0].mxu0
  %v9887 = vadd.f32 %v9494, %v9886
  %v9888 = vpop.f32.mrb[0].mxu0
  %v9889 = vadd.f32 %v9496, %v9888
  %v9890 = vpop.f32.mrb[0].mxu0
  %v9891 = vadd.f32 %v9498, %v9890
  %9892 = vmatprep.mubr.bf16.mxu0 0
  %9893 = vmatmul.mubr.bf16.gmra.mrb[0].mxu0 %v3811
  %v9894 = vpop.f32.mrb[0].mxu0
  %v9895 = vadd.f32 %v9502, %v9894
  %v9896 = vpop.f32.mrb[0].mxu0
  %v9897 = vadd.f32 %v9504, %v9896
  %v9898 = vpop.f32.mrb[0].mxu0
  %v9899 = vadd.f32 %v9506, %v9898
  %v9900 = vpop.f32.mrb[0].mxu0
  %v9901 = vadd.f32 %v9508, %v9900
  %9902 = vmatprep.mubr.bf16.mxu0 0
  %9903 = vmatmul.mubr.bf16.gmra.mrb[0].mxu0 %v3814
  %v9904 = vpop.f32.mrb[0].mxu0
  %v9905 = vadd.f32 %v9512, %v9904
  %v9906 = vpop.f32.mrb[0].mxu0
  %v9907 = vadd.f32 %v9514, %v9906
  %v9908 = vpop.f32.mrb[0].mxu0
  %v9909 = vadd.f32 %v9516, %v9908
  %v9910 = vpop.f32.mrb[0].mxu0
  %v9911 = vadd.f32 %v9518, %v9910
  %9912 = vmatprep.mubr.bf16.mxu0 0
  %9913 = vmatmul.mubr.bf16.gmra.mrb[0].mxu0 %v3817
  %v9914 = vpop.f32.mrb[0].mxu0
  %v9915 = vadd.f32 %v9522, %v9914
  %v9916 = vpop.f32.mrb[0].mxu0
  %v9917 = vadd.f32 %v9524, %v9916
  %v9918 = vpop.f32.mrb[0].mxu0
  %v9919 = vadd.f32 %v9526, %v9918
  %v9920 = vpop.f32.mrb[0].mxu0
  %v9921 = vadd.f32 %v9528, %v9920
  %9922 = vmatprep.mubr.bf16.mxu0 0
  %9923 = vmatmul.mubr.bf16.gmra.mrb[0].mxu0 %v3820
  %v9924 = vpop.f32.mrb[0].mxu0
  %v9925 = vadd.f32 %v9532, %v9924
  %v9926 = vpop.f32.mrb[0].mxu0
  %v9927 = vadd.f32 %v9534, %v9926
  %v9928 = vpop.f32.mrb[0].mxu0
  %v9929 = vadd.f32 %v9536, %v9928
  %v9930 = vpop.f32.mrb[0].mxu0
  %v9931 = vadd.f32 %v9538, %v9930
  %9932 = vmatprep.mubr.bf16.mxu0 0
  %9933 = vmatmul.mubr.bf16.gmra.mrb[0].mxu0 %v3823
  %v9934 = vpop.f32.mrb[0].mxu0
  %v9935 = vadd.f32 %v9542, %v9934
  %v9936 = vpop.f32.mrb[0].mxu0
  %v9937 = vadd.f32 %v9544, %v9936
  %v9938 = vpop.f32.mrb[0].mxu0
  %v9939 = vadd.f32 %v9546, %v9938
  %v9940 = vpop.f32.mrb[0].mxu0
  %v9941 = vadd.f32 %v9548, %v9940
  %9942 = vmatprep.mubr.bf16.mxu0 0
  %9943 = vmatmul.mubr.bf16.gmra.mrb[0].mxu0 %v3826
  %v9944 = vpop.f32.mrb[0].mxu0
  %v9945 = vadd.f32 %v9552, %v9944
  %v9946 = vpop.f32.mrb[0].mxu0
  %v9947 = vadd.f32 %v9554, %v9946
  %v9948 = vpop.f32.mrb[0].mxu0
  %v9949 = vadd.f32 %v9556, %v9948
  %v9950 = vpop.f32.mrb[0].mxu0
  %v9951 = vadd.f32 %v9558, %v9950
  %9952 = vmatprep.mubr.bf16.mxu0 0
  %9953 = vmatmul.mubr.bf16.gmra.mrb[0].mxu0 %v3829
  %v9954 = vpop.f32.mrb[0].mxu0
  %v9955 = vadd.f32 %v9562, %v9954
  %v9956 = vpop.f32.mrb[0].mxu0
  %v9957 = vadd.f32 %v9564, %v9956
  %v9958 = vpop.f32.mrb[0].mxu0
  %v9959 = vadd.f32 %v9566, %v9958
  %v9960 = vpop.f32.mrb[0].mxu0
  %v9961 = vadd.f32 %v9568, %v9960
  %9962 = vmatprep.mubr.bf16.mxu0 0
  %9963 = vmatmul.mubr.bf16.gmra.mrb[0].mxu0 %v3832
  %v9964 = vpop.f32.mrb[0].mxu0
  %v9965 = vadd.f32 %v9572, %v9964
  %v9966 = vpop.f32.mrb[0].mxu0
  %v9967 = vadd.f32 %v9574, %v9966
  %v9968 = vpop.f32.mrb[0].mxu0
  %v9969 = vadd.f32 %v9576, %v9968
  %v9970 = vpop.f32.mrb[0].mxu0
  %v9971 = vadd.f32 %v9578, %v9970
  %9972 = vmatprep.mubr.bf16.mxu0 0
  %9973 = vmatmul.mubr.bf16.gmra.mrb[0].mxu0 %v3835
  %v9974 = vpop.f32.mrb[0].mxu0
  %v9975 = vadd.f32 %v9582, %v9974
  %v9976 = vpop.f32.mrb[0].mxu0
  %v9977 = vadd.f32 %v9584, %v9976
  %v9978 = vpop.f32.mrb[0].mxu0
  %v9979 = vadd.f32 %v9586, %v9978
  %v9980 = vpop.f32.mrb[0].mxu0
  %v9981 = vadd.f32 %v9588, %v9980
  %9982 = vmatprep.mubr.bf16.mxu0 0
  %9983 = vmatmul.mubr.bf16.gmra.mrb[0].mxu0 %v3838
  %v9984 = vpop.f32.mrb[0].mxu0
  %v9985 = vadd.f32 %v9592, %v9984
  %v9986 = vpop.f32.mrb[0].mxu0
  %v9987 = vadd.f32 %v9594, %v9986
  %v9988 = vpop.f32.mrb[0].mxu0
  %v9989 = vadd.f32 %v9596, %v9988
  %v9990 = vpop.f32.mrb[0].mxu0
  %v9991 = vadd.f32 %v9598, %v9990
  %9992 = vmatprep.mubr.bf16.mxu0 0
  %9993 = vmatmul.mubr.bf16.gmra.mrb[0].mxu0 %v3841
  %v9994 = vpop.f32.mrb[0].mxu0
  %v9995 = vadd.f32 %v9602, %v9994
  %v9996 = vpop.f32.mrb[0].mxu0
  %v9997 = vadd.f32 %v9604, %v9996
  %v9998 = vpop.f32.mrb[0].mxu0
  %v9999 = vadd.f32 %v9606, %v9998
  %v10000 = vpop.f32.mrb[0].mxu0
  %v10001 = vadd.f32 %v9608, %v10000
  %10002 = vmatprep.mubr.bf16.mxu0 0
  %10003 = vmatmul.mubr.bf16.gmra.mrb[0].mxu0 %v3844
  %v10004 = vpop.f32.mrb[0].mxu0
  %v10005 = vadd.f32 %v9612, %v10004
  %v10006 = vpop.f32.mrb[0].mxu0
  %v10007 = vadd.f32 %v9614, %v10006
  %v10008 = vpop.f32.mrb[0].mxu0
  %v10009 = vadd.f32 %v9616, %v10008
  %v10010 = vpop.f32.mrb[0].mxu0
  %v10011 = vadd.f32 %v9618, %v10010
  %10012 = vmatprep.mubr.bf16.mxu0 0
  %10013 = vmatmul.mubr.bf16.gmra.mrb[0].mxu0 %v3847
  %v10014 = vpop.f32.mrb[0].mxu0
  %v10015 = vadd.f32 %v9622, %v10014
  %v10016 = vpop.f32.mrb[0].mxu0
  %v10017 = vadd.f32 %v9624, %v10016
  %v10018 = vpop.f32.mrb[0].mxu0
  %v10019 = vadd.f32 %v9626, %v10018
  %v10020 = vpop.f32.mrb[0].mxu0
  %v10021 = vadd.f32 %v9628, %v10020
  %10022 = vmatprep.mubr.bf16.mxu0 0
  %10023 = vmatmul.mubr.bf16.gmra.mrb[0].mxu0 %v3850
  %v10024 = vpop.f32.mrb[0].mxu0
  %v10025 = vadd.f32 %v9632, %v10024
  %v10026 = vpop.f32.mrb[0].mxu0
  %v10027 = vadd.f32 %v9634, %v10026
  %v10028 = vpop.f32.mrb[0].mxu0
  %v10029 = vadd.f32 %v9636, %v10028
  %v10030 = vpop.f32.mrb[0].mxu0
  %v10031 = vadd.f32 %v9638, %v10030
  %10032 = vmatprep.mubr.bf16.mxu0 0
  %10033 = vmatmul.mubr.bf16.gmra.mrb[0].mxu0 %v3853
  %v10034 = vpop.f32.mrb[0].mxu0
  %v10035 = vadd.f32 %v9642, %v10034
  %v10036 = vpop.f32.mrb[0].mxu0
  %v10037 = vadd.f32 %v9644, %v10036
  %v10038 = vpop.f32.mrb[0].mxu0
  %v10039 = vadd.f32 %v9646, %v10038
  %v10040 = vpop.f32.mrb[0].mxu0
  %v10041 = vadd.f32 %v9648, %v10040
  %10042 = vmatprep.mubr.bf16.mxu0 0
  %10043 = vmatmul.mubr.bf16.gmra.mrb[0].mxu0 %v3856
  %v10044 = vpop.f32.mrb[0].mxu0
  %v10045 = vadd.f32 %v9652, %v10044
  %v10046 = vpop.f32.mrb[0].mxu0
  %v10047 = vadd.f32 %v9654, %v10046
  %v10048 = vpop.f32.mrb[0].mxu0
  %v10049 = vadd.f32 %v9656, %v10048
  %v10050 = vpop.f32.mrb[0].mxu0
  %v10051 = vadd.f32 %v9658, %v10050
  %10052 = vmatprep.mubr.bf16.mxu0 0
  %10053 = vmatmul.mubr.bf16.gmra.mrb[0].mxu0 %v3859
  %v10054 = vpop.f32.mrb[0].mxu0
  %v10055 = vadd.f32 %v9662, %v10054
  %v10056 = vpop.f32.mrb[0].mxu0
  %v10057 = vadd.f32 %v9664, %v10056
  %v10058 = vpop.f32.mrb[0].mxu0
  %v10059 = vadd.f32 %v9666, %v10058
  %v10060 = vpop.f32.mrb[0].mxu0
  %v10061 = vadd.f32 %v9668, %v10060
  %10062 = vmatprep.mubr.bf16.mxu0 0
  %10063 = vmatmul.mubr.bf16.gmra.mrb[0].mxu0 %v3862
  %v10064 = vpop.f32.mrb[0].mxu0
  %v10065 = vadd.f32 %v9672, %v10064
  %v10066 = vpop.f32.mrb[0].mxu0
  %v10067 = vadd.f32 %v9674, %v10066
  %v10068 = vpop.f32.mrb[0].mxu0
  %v10069 = vadd.f32 %v9676, %v10068
  %v10070 = vpop.f32.mrb[0].mxu0
  %v10071 = vadd.f32 %v9678, %v10070
  %10072 = vmatprep.mubr.bf16.mxu0 0
  %10073 = vmatmul.mubr.bf16.gmra.mrb[0].mxu0 %v3865
  %v10074 = vpop.f32.mrb[0].mxu0
  %v10075 = vadd.f32 %v9682, %v10074
  %v10076 = vpop.f32.mrb[0].mxu0
  %v10077 = vadd.f32 %v9684, %v10076
  %v10078 = vpop.f32.mrb[0].mxu0
  %v10079 = vadd.f32 %v9686, %v10078
  %v10080 = vpop.f32.mrb[0].mxu0
  %v10081 = vadd.f32 %v9688, %v10080
  %10082 = vmatprep.mubr.bf16.mxu0 0
  %10083 = vmatmul.mubr.bf16.gmra.mrb[0].mxu0 %v3868
  %v10084 = vpop.f32.mrb[0].mxu0
  %v10085 = vadd.f32 %v9692, %v10084
  %v10086 = vpop.f32.mrb[0].mxu0
  %v10087 = vadd.f32 %v9694, %v10086
  %v10088 = vpop.f32.mrb[0].mxu0
  %v10089 = vadd.f32 %v9696, %v10088
  %v10090 = vpop.f32.mrb[0].mxu0
  %v10091 = vadd.f32 %v9698, %v10090
  %10092 = vmatprep.mubr.bf16.mxu0 0
  %10093 = vmatmul.mubr.bf16.gmra.mrb[0].mxu0 %v3871
  %v10094 = vpop.f32.mrb[0].mxu0
  %v10095 = vadd.f32 %v9702, %v10094
  %v10096 = vpop.f32.mrb[0].mxu0
  %v10097 = vadd.f32 %v9704, %v10096
  %v10098 = vpop.f32.mrb[0].mxu0
  %v10099 = vadd.f32 %v9706, %v10098
  %v10100 = vpop.f32.mrb[0].mxu0
  %v10101 = vadd.f32 %v9708, %v10100
  %10102 = vmatprep.mubr.bf16.mxu0 0
  %10103 = vmatmul.mubr.bf16.gmra.mrb[0].mxu0 %v3874
  %v10104 = vpop.f32.mrb[0].mxu0
  %v10105 = vadd.f32 %v9712, %v10104
  %v10106 = vpop.f32.mrb[0].mxu0
  %v10107 = vadd.f32 %v9714, %v10106
  %v10108 = vpop.f32.mrb[0].mxu0
  %v10109 = vadd.f32 %v9716, %v10108
  %v10110 = vpop.f32.mrb[0].mxu0
  %v10111 = vadd.f32 %v9718, %v10110
  %10112 = vmatprep.mubr.bf16.mxu0 0
  %10113 = vmatmul.mubr.bf16.gmra.mrb[0].mxu0 %v3877
  %v10114 = vpop.f32.mrb[0].mxu0
  %v10115 = vadd.f32 %v9722, %v10114
  %v10116 = vpop.f32.mrb[0].mxu0
  %v10117 = vadd.f32 %v9724, %v10116
  %v10118 = vpop.f32.mrb[0].mxu0
  %v10119 = vadd.f32 %v9726, %v10118
  %v10120 = vpop.f32.mrb[0].mxu0
  %v10121 = vadd.f32 %v9728, %v10120
  %10122 = vmatprep.mubr.bf16.mxu0 0
  %10123 = vmatmul.mubr.bf16.gmra.mrb[0].mxu0 %v3880
  %v10124 = vpop.f32.mrb[0].mxu0
  %v10125 = vadd.f32 %v9732, %v10124
  %v10126 = vpop.f32.mrb[0].mxu0
  %v10127 = vadd.f32 %v9734, %v10126
  %v10128 = vpop.f32.mrb[0].mxu0
  %v10129 = vadd.f32 %v9736, %v10128
  %v10130 = vpop.f32.mrb[0].mxu0
  %v10131 = vadd.f32 %v9738, %v10130
  %10132 = vmatprep.mubr.bf16.mxu0 0
  %10133 = vmatmul.mubr.bf16.gmra.mrb[0].mxu0 %v3883
  %v10134 = vpop.f32.mrb[0].mxu0
  %v10135 = vadd.f32 %v9742, %v10134
  %v10136 = vpop.f32.mrb[0].mxu0
  %v10137 = vadd.f32 %v9744, %v10136
  %v10138 = vpop.f32.mrb[0].mxu0
  %v10139 = vadd.f32 %v9746, %v10138
  %v10140 = vpop.f32.mrb[0].mxu0
  %v10141 = vadd.f32 %v9748, %v10140
  %10142 = vmatprep.mubr.bf16.mxu0 0
  %10143 = vmatmul.mubr.bf16.gmra.mrb[0].mxu0 %v3886
  %v10144 = vpop.f32.mrb[0].mxu0
  %v10145 = vadd.f32 %v9752, %v10144
  %v10146 = vpop.f32.mrb[0].mxu0
  %v10147 = vadd.f32 %v9754, %v10146
  %v10148 = vpop.f32.mrb[0].mxu0
  %v10149 = vadd.f32 %v9756, %v10148
  %v10150 = vpop.f32.mrb[0].mxu0
  %v10151 = vadd.f32 %v9758, %v10150
  %10152 = vmatprep.mubr.bf16.mxu0 0
  %10153 = vmatmul.mubr.bf16.gmra.mrb[0].mxu0 %v3889
  %v10154 = vpop.f32.mrb[0].mxu0
  %v10155 = vadd.f32 %v9762, %v10154
  %v10156 = vpop.f32.mrb[0].mxu0
  %v10157 = vadd.f32 %v9764, %v10156
  %v10158 = vpop.f32.mrb[0].mxu0
  %v10159 = vadd.f32 %v9766, %v10158
  %v10160 = vpop.f32.mrb[0].mxu0
  %v10161 = vadd.f32 %v9768, %v10160
  %10162 = vmatprep.mubr.bf16.mxu0 0
  %10163 = vmatmul.mubr.bf16.gmra.mrb[0].mxu0 %v3892
  %v10164 = vpop.f32.mrb[0].mxu0
  %v10165 = vadd.f32 %v9772, %v10164
  %v10166 = vpop.f32.mrb[0].mxu0
  %v10167 = vadd.f32 %v9774, %v10166
  %v10168 = vpop.f32.mrb[0].mxu0
  %v10169 = vadd.f32 %v9776, %v10168
  %v10170 = vpop.f32.mrb[0].mxu0
  %v10171 = vadd.f32 %v9778, %v10170
  %10172 = vdwg.mxu0
  %v10173 = vpack.c.bf16 %v9819, %v9815
  %v10174 = vpack.c.bf16 %v9821, %v9817
  %v10175 = vpack.c.bf16 %v9829, %v9825
  %v10176 = vpack.c.bf16 %v9831, %v9827
  %v10177 = vpack.c.bf16 %v9839, %v9835
  %v10178 = vpack.c.bf16 %v9841, %v9837
  %v10179 = vpack.c.bf16 %v9849, %v9845
  %v10180 = vpack.c.bf16 %v9851, %v9847
  %v10181 = vpack.c.bf16 %v9859, %v9855
  %v10182 = vpack.c.bf16 %v9861, %v9857
  %v10183 = vpack.c.bf16 %v9869, %v9865
  %v10184 = vpack.c.bf16 %v9871, %v9867
  %v10185 = vpack.c.bf16 %v9879, %v9875
  %v10186 = vpack.c.bf16 %v9881, %v9877
  %v10187 = vpack.c.bf16 %v9889, %v9885
  %v10188 = vpack.c.bf16 %v9891, %v9887
  %v10189 = vpack.c.bf16 %v9899, %v9895
  %v10190 = vpack.c.bf16 %v9901, %v9897
  %v10191 = vpack.c.bf16 %v9909, %v9905
  %v10192 = vpack.c.bf16 %v9911, %v9907
  %v10193 = vpack.c.bf16 %v9919, %v9915
  %v10194 = vpack.c.bf16 %v9921, %v9917
  %v10195 = vpack.c.bf16 %v9929, %v9925
  %v10196 = vpack.c.bf16 %v9931, %v9927
  %v10197 = vpack.c.bf16 %v9939, %v9935
  %v10198 = vpack.c.bf16 %v9941, %v9937
  %v10199 = vpack.c.bf16 %v9949, %v9945
  %v10200 = vpack.c.bf16 %v9951, %v9947
  %v10201 = vpack.c.bf16 %v9959, %v9955
  %v10202 = vpack.c.bf16 %v9961, %v9957
  %v10203 = vpack.c.bf16 %v9969, %v9965
  %v10204 = vpack.c.bf16 %v9971, %v9967
  %v10205 = vpack.c.bf16 %v9979, %v9975
  %v10206 = vpack.c.bf16 %v9981, %v9977
  %v10207 = vpack.c.bf16 %v9989, %v9985
  %v10208 = vpack.c.bf16 %v9991, %v9987
  %v10209 = vpack.c.bf16 %v9999, %v9995
  %v10210 = vpack.c.bf16 %v10001, %v9997
  %v10211 = vpack.c.bf16 %v10009, %v10005
  %v10212 = vpack.c.bf16 %v10011, %v10007
  %v10213 = vpack.c.bf16 %v10019, %v10015
  %v10214 = vpack.c.bf16 %v10021, %v10017
  %v10215 = vpack.c.bf16 %v10029, %v10025
  %v10216 = vpack.c.bf16 %v10031, %v10027
  %v10217 = vpack.c.bf16 %v10039, %v10035
  %v10218 = vpack.c.bf16 %v10041, %v10037
  %v10219 = vpack.c.bf16 %v10049, %v10045
  %v10220 = vpack.c.bf16 %v10051, %v10047
  %v10221 = vpack.c.bf16 %v10059, %v10055
  %v10222 = vpack.c.bf16 %v10061, %v10057
  %v10223 = vpack.c.bf16 %v10069, %v10065
  %v10224 = vpack.c.bf16 %v10071, %v10067
  %v10225 = vpack.c.bf16 %v10079, %v10075
  %v10226 = vpack.c.bf16 %v10081, %v10077
  %v10227 = vpack.c.bf16 %v10089, %v10085
  %v10228 = vpack.c.bf16 %v10091, %v10087
  %v10229 = vpack.c.bf16 %v10099, %v10095
  %v10230 = vpack.c.bf16 %v10101, %v10097
  %v10231 = vpack.c.bf16 %v10109, %v10105
  %v10232 = vpack.c.bf16 %v10111, %v10107
  %v10233 = vpack.c.bf16 %v10119, %v10115
  %v10234 = vpack.c.bf16 %v10121, %v10117
  %v10235 = vpack.c.bf16 %v10129, %v10125
  %v10236 = vpack.c.bf16 %v10131, %v10127
  %v10237 = vpack.c.bf16 %v10139, %v10135
  %v10238 = vpack.c.bf16 %v10141, %v10137
  %v10239 = vpack.c.bf16 %v10149, %v10145
  %v10240 = vpack.c.bf16 %v10151, %v10147
  %v10241 = vpack.c.bf16 %v10159, %v10155
  %v10242 = vpack.c.bf16 %v10161, %v10157
  %v10243 = vpack.c.bf16 %v10169, %v10165
  %v10244 = vpack.c.bf16 %v10171, %v10167
  %v10317 = vunpack.c.l.b16 %v10173
  %v10318 = vunpack.c.l.b16 %v10174
  %v10319 = vunpack.c.h.b16 %v10173
  %v10320 = vunpack.c.h.b16 %v10174
  %v10321 = vunpack.c.l.b16 %v10175
  %v10322 = vunpack.c.l.b16 %v10176
  %v10323 = vunpack.c.h.b16 %v10175
  %v10324 = vunpack.c.h.b16 %v10176
  %v10325 = vunpack.c.l.b16 %v10177
  %v10326 = vunpack.c.l.b16 %v10178
  %v10327 = vunpack.c.h.b16 %v10177
  %v10328 = vunpack.c.h.b16 %v10178
  %v10329 = vunpack.c.l.b16 %v10179
  %v10330 = vunpack.c.l.b16 %v10180
  %v10331 = vunpack.c.h.b16 %v10179
  %v10332 = vunpack.c.h.b16 %v10180
  %v10333 = vunpack.c.l.b16 %v10181
  %v10334 = vunpack.c.l.b16 %v10182
  %v10335 = vunpack.c.h.b16 %v10181
  %v10336 = vunpack.c.h.b16 %v10182
  %v10337 = vunpack.c.l.b16 %v10183
  %v10338 = vunpack.c.l.b16 %v10184
  %v10339 = vunpack.c.h.b16 %v10183
  %v10340 = vunpack.c.h.b16 %v10184
  %v10341 = vunpack.c.l.b16 %v10185
  %v10342 = vunpack.c.l.b16 %v10186
  %v10343 = vunpack.c.h.b16 %v10185
  %v10344 = vunpack.c.h.b16 %v10186
  %v10345 = vunpack.c.l.b16 %v10187
  %v10346 = vunpack.c.l.b16 %v10188
  %v10347 = vunpack.c.h.b16 %v10187
  %v10348 = vunpack.c.h.b16 %v10188
  %v10349 = vunpack.c.l.b16 %v10189
  %v10350 = vunpack.c.l.b16 %v10190
  %v10351 = vunpack.c.h.b16 %v10189
  %v10352 = vunpack.c.h.b16 %v10190
  %v10353 = vunpack.c.l.b16 %v10191
  %v10354 = vunpack.c.l.b16 %v10192
  %v10355 = vunpack.c.h.b16 %v10191
  %v10356 = vunpack.c.h.b16 %v10192
  %v10357 = vunpack.c.l.b16 %v10193
  %v10358 = vunpack.c.l.b16 %v10194
  %v10359 = vunpack.c.h.b16 %v10193
  %v10360 = vunpack.c.h.b16 %v10194
  %v10361 = vunpack.c.l.b16 %v10195
  %v10362 = vunpack.c.l.b16 %v10196
  %v10363 = vunpack.c.h.b16 %v10195
  %v10364 = vunpack.c.h.b16 %v10196
  %v10365 = vunpack.c.l.b16 %v10197
  %v10366 = vunpack.c.l.b16 %v10198
  %v10367 = vunpack.c.h.b16 %v10197
  %v10368 = vunpack.c.h.b16 %v10198
  %v10369 = vunpack.c.l.b16 %v10199
  %v10370 = vunpack.c.l.b16 %v10200
  %v10371 = vunpack.c.h.b16 %v10199
  %v10372 = vunpack.c.h.b16 %v10200
  %v10373 = vunpack.c.l.b16 %v10201
  %v10374 = vunpack.c.l.b16 %v10202
  %v10375 = vunpack.c.h.b16 %v10201
  %v10376 = vunpack.c.h.b16 %v10202
  %v10377 = vunpack.c.l.b16 %v10203
  %v10378 = vunpack.c.l.b16 %v10204
  %v10379 = vunpack.c.h.b16 %v10203
  %v10380 = vunpack.c.h.b16 %v10204
  %v10381 = vunpack.c.l.b16 %v10205
  %v10382 = vunpack.c.l.b16 %v10206
  %v10383 = vunpack.c.h.b16 %v10205
  %v10384 = vunpack.c.h.b16 %v10206
  %v10385 = vunpack.c.l.b16 %v10207
  %v10386 = vunpack.c.l.b16 %v10208
  %v10387 = vunpack.c.h.b16 %v10207
  %v10388 = vunpack.c.h.b16 %v10208
  %v10389 = vunpack.c.l.b16 %v10209
  %v10390 = vunpack.c.l.b16 %v10210
  %v10391 = vunpack.c.h.b16 %v10209
  %v10392 = vunpack.c.h.b16 %v10210
  %v10393 = vunpack.c.l.b16 %v10211
  %v10394 = vunpack.c.l.b16 %v10212
  %v10395 = vunpack.c.h.b16 %v10211
  %v10396 = vunpack.c.h.b16 %v10212
  %v10397 = vunpack.c.l.b16 %v10213
  %v10398 = vunpack.c.l.b16 %v10214
  %v10399 = vunpack.c.h.b16 %v10213
  %v10400 = vunpack.c.h.b16 %v10214
  %v10401 = vunpack.c.l.b16 %v10215
  %v10402 = vunpack.c.l.b16 %v10216
  %v10403 = vunpack.c.h.b16 %v10215
  %v10404 = vunpack.c.h.b16 %v10216
  %v10405 = vunpack.c.l.b16 %v10217
  %v10406 = vunpack.c.l.b16 %v10218
  %v10407 = vunpack.c.h.b16 %v10217
  %v10408 = vunpack.c.h.b16 %v10218
  %v10409 = vunpack.c.l.b16 %v10219
  %v10410 = vunpack.c.l.b16 %v10220
  %v10411 = vunpack.c.h.b16 %v10219
  %v10412 = vunpack.c.h.b16 %v10220
  %v10413 = vunpack.c.l.b16 %v10221
  %v10414 = vunpack.c.l.b16 %v10222
  %v10415 = vunpack.c.h.b16 %v10221
  %v10416 = vunpack.c.h.b16 %v10222
  %v10417 = vunpack.c.l.b16 %v10223
  %v10418 = vunpack.c.l.b16 %v10224
  %v10419 = vunpack.c.h.b16 %v10223
  %v10420 = vunpack.c.h.b16 %v10224
  %v10421 = vunpack.c.l.b16 %v10225
  %v10422 = vunpack.c.l.b16 %v10226
  %v10423 = vunpack.c.h.b16 %v10225
  %v10424 = vunpack.c.h.b16 %v10226
  %v10425 = vunpack.c.l.b16 %v10227
  %v10426 = vunpack.c.l.b16 %v10228
  %v10427 = vunpack.c.h.b16 %v10227
  %v10428 = vunpack.c.h.b16 %v10228
  %v10429 = vunpack.c.l.b16 %v10229
  %v10430 = vunpack.c.l.b16 %v10230
  %v10431 = vunpack.c.h.b16 %v10229
  %v10432 = vunpack.c.h.b16 %v10230
  %v10433 = vunpack.c.l.b16 %v10231
  %v10434 = vunpack.c.l.b16 %v10232
  %v10435 = vunpack.c.h.b16 %v10231
  %v10436 = vunpack.c.h.b16 %v10232
  %v10437 = vunpack.c.l.b16 %v10233
  %v10438 = vunpack.c.l.b16 %v10234
  %v10439 = vunpack.c.h.b16 %v10233
  %v10440 = vunpack.c.h.b16 %v10234
  %v10441 = vunpack.c.l.b16 %v10235
  %v10442 = vunpack.c.l.b16 %v10236
  %v10443 = vunpack.c.h.b16 %v10235
  %v10444 = vunpack.c.h.b16 %v10236
  %v10445 = vunpack.c.l.b16 %v10237
  %v10446 = vunpack.c.l.b16 %v10238
  %v10447 = vunpack.c.h.b16 %v10237
  %v10448 = vunpack.c.h.b16 %v10238
  %v10449 = vunpack.c.l.b16 %v10239
  %v10450 = vunpack.c.l.b16 %v10240
  %v10451 = vunpack.c.h.b16 %v10239
  %v10452 = vunpack.c.h.b16 %v10240
  %v10453 = vunpack.c.l.b16 %v10241
  %v10454 = vunpack.c.l.b16 %v10242
  %v10455 = vunpack.c.h.b16 %v10241
  %v10456 = vunpack.c.h.b16 %v10242
  %v10457 = vunpack.c.l.b16 %v10243
  %v10458 = vunpack.c.l.b16 %v10244
  %v10459 = vunpack.c.h.b16 %v10243
  %v10460 = vunpack.c.h.b16 %v10244
  %v10461 = vpack.c.b16 %v10318, %v10317
  %v10462 = vpack.c.b16 %v10320, %v10319
  %v10463 = vpack.c.b16 %v10322, %v10321
  %v10464 = vpack.c.b16 %v10324, %v10323
  %v10465 = vpack.c.b16 %v10326, %v10325
  %v10466 = vpack.c.b16 %v10328, %v10327
  %v10467 = vpack.c.b16 %v10330, %v10329
  %v10468 = vpack.c.b16 %v10332, %v10331
  %v10469 = vpack.c.b16 %v10334, %v10333
  %v10470 = vpack.c.b16 %v10336, %v10335
  %v10471 = vpack.c.b16 %v10338, %v10337
  %v10472 = vpack.c.b16 %v10340, %v10339
  %v10473 = vpack.c.b16 %v10342, %v10341
  %v10474 = vpack.c.b16 %v10344, %v10343
  %v10475 = vpack.c.b16 %v10346, %v10345
  %v10476 = vpack.c.b16 %v10348, %v10347
  %v10477 = vpack.c.b16 %v10350, %v10349
  %v10478 = vpack.c.b16 %v10352, %v10351
  %v10479 = vpack.c.b16 %v10354, %v10353
  %v10480 = vpack.c.b16 %v10356, %v10355
  %v10481 = vpack.c.b16 %v10358, %v10357
  %v10482 = vpack.c.b16 %v10360, %v10359
  %v10483 = vpack.c.b16 %v10362, %v10361
  %v10484 = vpack.c.b16 %v10364, %v10363
  %v10485 = vpack.c.b16 %v10366, %v10365
  %v10486 = vpack.c.b16 %v10368, %v10367
  %v10487 = vpack.c.b16 %v10370, %v10369
  %v10488 = vpack.c.b16 %v10372, %v10371
  %v10489 = vpack.c.b16 %v10374, %v10373
  %v10490 = vpack.c.b16 %v10376, %v10375
  %v10491 = vpack.c.b16 %v10378, %v10377
  %v10492 = vpack.c.b16 %v10380, %v10379
  %v10493 = vpack.c.b16 %v10382, %v10381
  %v10494 = vpack.c.b16 %v10384, %v10383
  %v10495 = vpack.c.b16 %v10386, %v10385
  %v10496 = vpack.c.b16 %v10388, %v10387
  %v10497 = vpack.c.b16 %v10390, %v10389
  %v10498 = vpack.c.b16 %v10392, %v10391
  %v10499 = vpack.c.b16 %v10394, %v10393
  %v10500 = vpack.c.b16 %v10396, %v10395
  %v10501 = vpack.c.b16 %v10398, %v10397
  %v10502 = vpack.c.b16 %v10400, %v10399
  %v10503 = vpack.c.b16 %v10402, %v10401
  %v10504 = vpack.c.b16 %v10404, %v10403
  %v10505 = vpack.c.b16 %v10406, %v10405
  %v10506 = vpack.c.b16 %v10408, %v10407
  %v10507 = vpack.c.b16 %v10410, %v10409
  %v10508 = vpack.c.b16 %v10412, %v10411
  %v10509 = vpack.c.b16 %v10414, %v10413
  %v10510 = vpack.c.b16 %v10416, %v10415
  %v10511 = vpack.c.b16 %v10418, %v10417
  %v10512 = vpack.c.b16 %v10420, %v10419
  %v10513 = vpack.c.b16 %v10422, %v10421
  %v10514 = vpack.c.b16 %v10424, %v10423
  %v10515 = vpack.c.b16 %v10426, %v10425
  %v10516 = vpack.c.b16 %v10428, %v10427
  %v10517 = vpack.c.b16 %v10430, %v10429
  %v10518 = vpack.c.b16 %v10432, %v10431
  %v10519 = vpack.c.b16 %v10434, %v10433
  %v10520 = vpack.c.b16 %v10436, %v10435
  %v10521 = vpack.c.b16 %v10438, %v10437
  %v10522 = vpack.c.b16 %v10440, %v10439
  %v10523 = vpack.c.b16 %v10442, %v10441
  %v10524 = vpack.c.b16 %v10444, %v10443
  %v10525 = vpack.c.b16 %v10446, %v10445
  %v10526 = vpack.c.b16 %v10448, %v10447
  %v10527 = vpack.c.b16 %v10450, %v10449
  %v10528 = vpack.c.b16 %v10452, %v10451
  %v10529 = vpack.c.b16 %v10454, %v10453
  %v10530 = vpack.c.b16 %v10456, %v10455
  %v10531 = vpack.c.b16 %v10458, %v10457
  %v10532 = vpack.c.b16 %v10460, %v10459
  %s10605 = scalar_lea.vmem %s5, 1152
  %10606 = vst.msk [vmem:[%s10605] sm:$0xff] %vm5507, %v10461
  %10607 = vst.msk [vmem:[%s10605 + $0x8] sm:$0xff] %vm5507, %v10462
  %10608 = vst.msk [vmem:[%s10605 + $0x10] sm:$0xff] %vm5507, %v10463
  %10609 = vst.msk [vmem:[%s10605 + $0x18] sm:$0xff] %vm5507, %v10464
  %10610 = vst.msk [vmem:[%s10605 + $0x20] sm:$0xff] %vm5507, %v10465
  %10611 = vst.msk [vmem:[%s10605 + $0x28] sm:$0xff] %vm5507, %v10466
  %10612 = vst.msk [vmem:[%s10605 + $0x30] sm:$0xff] %vm5507, %v10467
  %10613 = vst.msk [vmem:[%s10605 + $0x38] sm:$0xff] %vm5507, %v10468
  %10614 = vst.msk [vmem:[%s10605 + $0x40] sm:$0xff] %vm5507, %v10469
  %10615 = vst.msk [vmem:[%s10605 + $0x48] sm:$0xff] %vm5507, %v10470
  %10616 = vst.msk [vmem:[%s10605 + $0x50] sm:$0xff] %vm5507, %v10471
  %10617 = vst.msk [vmem:[%s10605 + $0x58] sm:$0xff] %vm5507, %v10472
  %10618 = vst.msk [vmem:[%s10605 + $0x60] sm:$0xff] %vm5507, %v10473
  %10619 = vst.msk [vmem:[%s10605 + $0x68] sm:$0xff] %vm5507, %v10474
  %10620 = vst.msk [vmem:[%s10605 + $0x70] sm:$0xff] %vm5507, %v10475
  %10621 = vst.msk [vmem:[%s10605 + $0x78] sm:$0xff] %vm5507, %v10476
  %10622 = vst.msk [vmem:[%s10605 + $0x80] sm:$0xff] %vm5507, %v10477
  %10623 = vst.msk [vmem:[%s10605 + $0x88] sm:$0xff] %vm5507, %v10478
  %10624 = vst.msk [vmem:[%s10605 + $0x90] sm:$0xff] %vm5507, %v10479
  %10625 = vst.msk [vmem:[%s10605 + $0x98] sm:$0xff] %vm5507, %v10480
  %10626 = vst.msk [vmem:[%s10605 + $0xa0] sm:$0xff] %vm5507, %v10481
  %10627 = vst.msk [vmem:[%s10605 + $0xa8] sm:$0xff] %vm5507, %v10482
  %10628 = vst.msk [vmem:[%s10605 + $0xb0] sm:$0xff] %vm5507, %v10483
  %10629 = vst.msk [vmem:[%s10605 + $0xb8] sm:$0xff] %vm5507, %v10484
  %10630 = vst.msk [vmem:[%s10605 + $0xc0] sm:$0xff] %vm5507, %v10485
  %10631 = vst.msk [vmem:[%s10605 + $0xc8] sm:$0xff] %vm5507, %v10486
  %10632 = vst.msk [vmem:[%s10605 + $0xd0] sm:$0xff] %vm5507, %v10487
  %10633 = vst.msk [vmem:[%s10605 + $0xd8] sm:$0xff] %vm5507, %v10488
  %10634 = vst.msk [vmem:[%s10605 + $0xe0] sm:$0xff] %vm5507, %v10489
  %10635 = vst.msk [vmem:[%s10605 + $0xe8] sm:$0xff] %vm5507, %v10490
  %10636 = vst.msk [vmem:[%s10605 + $0xf0] sm:$0xff] %vm5507, %v10491
  %10637 = vst.msk [vmem:[%s10605 + $0xf8] sm:$0xff] %vm5507, %v10492
  %10638 = vst.msk [vmem:[%s10605 + $0x100] sm:$0xff] %vm5507, %v10493
  %10639 = vst.msk [vmem:[%s10605 + $0x108] sm:$0xff] %vm5507, %v10494
  %10640 = vst.msk [vmem:[%s10605 + $0x110] sm:$0xff] %vm5507, %v10495
  %10641 = vst.msk [vmem:[%s10605 + $0x118] sm:$0xff] %vm5507, %v10496
  %10642 = vst.msk [vmem:[%s10605 + $0x120] sm:$0xff] %vm5507, %v10497
  %10643 = vst.msk [vmem:[%s10605 + $0x128] sm:$0xff] %vm5507, %v10498
  %10644 = vst.msk [vmem:[%s10605 + $0x130] sm:$0xff] %vm5507, %v10499
  %10645 = vst.msk [vmem:[%s10605 + $0x138] sm:$0xff] %vm5507, %v10500
  %10646 = vst.msk [vmem:[%s10605 + $0x140] sm:$0xff] %vm5507, %v10501
  %10647 = vst.msk [vmem:[%s10605 + $0x148] sm:$0xff] %vm5507, %v10502
  %10648 = vst.msk [vmem:[%s10605 + $0x150] sm:$0xff] %vm5507, %v10503
  %10649 = vst.msk [vmem:[%s10605 + $0x158] sm:$0xff] %vm5507, %v10504
  %10650 = vst.msk [vmem:[%s10605 + $0x160] sm:$0xff] %vm5507, %v10505
  %10651 = vst.msk [vmem:[%s10605 + $0x168] sm:$0xff] %vm5507, %v10506
  %10652 = vst.msk [vmem:[%s10605 + $0x170] sm:$0xff] %vm5507, %v10507
  %10653 = vst.msk [vmem:[%s10605 + $0x178] sm:$0xff] %vm5507, %v10508
  %10654 = vst.msk [vmem:[%s10605 + $0x180] sm:$0xff] %vm5507, %v10509
  %10655 = vst.msk [vmem:[%s10605 + $0x188] sm:$0xff] %vm5507, %v10510
  %10656 = vst.msk [vmem:[%s10605 + $0x190] sm:$0xff] %vm5507, %v10511
  %10657 = vst.msk [vmem:[%s10605 + $0x198] sm:$0xff] %vm5507, %v10512
  %10658 = vst.msk [vmem:[%s10605 + $0x1a0] sm:$0xff] %vm5507, %v10513
  %10659 = vst.msk [vmem:[%s10605 + $0x1a8] sm:$0xff] %vm5507, %v10514
  %10660 = vst.msk [vmem:[%s10605 + $0x1b0] sm:$0xff] %vm5507, %v10515
  %10661 = vst.msk [vmem:[%s10605 + $0x1b8] sm:$0xff] %vm5507, %v10516
  %10662 = vst.msk [vmem:[%s10605 + $0x1c0] sm:$0xff] %vm5507, %v10517
  %10663 = vst.msk [vmem:[%s10605 + $0x1c8] sm:$0xff] %vm5507, %v10518
  %10664 = vst.msk [vmem:[%s10605 + $0x1d0] sm:$0xff] %vm5507, %v10519
  %10665 = vst.msk [vmem:[%s10605 + $0x1d8] sm:$0xff] %vm5507, %v10520
  %10666 = vst.msk [vmem:[%s10605 + $0x1e0] sm:$0xff] %vm5507, %v10521
  %10667 = vst.msk [vmem:[%s10605 + $0x1e8] sm:$0xff] %vm5507, %v10522
  %10668 = vst.msk [vmem:[%s10605 + $0x1f0] sm:$0xff] %vm5507, %v10523
  %10669 = vst.msk [vmem:[%s10605 + $0x1f8] sm:$0xff] %vm5507, %v10524
  %10670 = vst.msk [vmem:[%s10605 + $0x200] sm:$0xff] %vm5507, %v10525
  %10671 = vst.msk [vmem:[%s10605 + $0x208] sm:$0xff] %vm5507, %v10526
  %10672 = vst.msk [vmem:[%s10605 + $0x210] sm:$0xff] %vm5507, %v10527
  %10673 = vst.msk [vmem:[%s10605 + $0x218] sm:$0xff] %vm5507, %v10528
  %10674 = vst.msk [vmem:[%s10605 + $0x220] sm:$0xff] %vm5507, %v10529
  %10675 = vst.msk [vmem:[%s10605 + $0x228] sm:$0xff] %vm5507, %v10530
  %10676 = vst.msk [vmem:[%s10605 + $0x230] sm:$0xff] %vm5507, %v10531
  %10677 = vst.msk [vmem:[%s10605 + $0x238] sm:$0xff] %vm5507, %v10532
  %s10678 = scalar_lea.vmem %s3, 1728
  %v10679 = vld [vmem:[%s10678] sm:$0xff]
  %v10680 = vld [vmem:[%s10678 + $0x8] sm:$0xff]
  %v10681 = vld [vmem:[%s10678 + $0x10] sm:$0xff]
  %v10682 = vld [vmem:[%s10678 + $0x18] sm:$0xff]
  %v10683 = vld [vmem:[%s10678 + $0x20] sm:$0xff]
  %v10684 = vld [vmem:[%s10678 + $0x28] sm:$0xff]
  %v10685 = vld [vmem:[%s10678 + $0x30] sm:$0xff]
  %v10686 = vld [vmem:[%s10678 + $0x38] sm:$0xff]
  %v10687 = vld [vmem:[%s10678 + $0x40] sm:$0xff]
  %v10688 = vld [vmem:[%s10678 + $0x48] sm:$0xff]
  %v10689 = vld [vmem:[%s10678 + $0x50] sm:$0xff]
  %v10690 = vld [vmem:[%s10678 + $0x58] sm:$0xff]
  %v10691 = vld [vmem:[%s10678 + $0x60] sm:$0xff]
  %v10692 = vld [vmem:[%s10678 + $0x68] sm:$0xff]
  %v10693 = vld [vmem:[%s10678 + $0x70] sm:$0xff]
  %v10694 = vld [vmem:[%s10678 + $0x78] sm:$0xff]
  %v10695 = vld [vmem:[%s10678 + $0x80] sm:$0xff]
  %v10696 = vld [vmem:[%s10678 + $0x88] sm:$0xff]
  %v10697 = vld [vmem:[%s10678 + $0x90] sm:$0xff]
  %v10698 = vld [vmem:[%s10678 + $0x98] sm:$0xff]
  %v10699 = vld [vmem:[%s10678 + $0xa0] sm:$0xff]
  %v10700 = vld [vmem:[%s10678 + $0xa8] sm:$0xff]
  %v10701 = vld [vmem:[%s10678 + $0xb0] sm:$0xff]
  %v10702 = vld [vmem:[%s10678 + $0xb8] sm:$0xff]
  %v10703 = vld [vmem:[%s10678 + $0xc0] sm:$0xff]
  %v10704 = vld [vmem:[%s10678 + $0xc8] sm:$0xff]
  %v10705 = vld [vmem:[%s10678 + $0xd0] sm:$0xff]
  %v10706 = vld [vmem:[%s10678 + $0xd8] sm:$0xff]
  %v10707 = vld [vmem:[%s10678 + $0xe0] sm:$0xff]
  %v10708 = vld [vmem:[%s10678 + $0xe8] sm:$0xff]
  %v10709 = vld [vmem:[%s10678 + $0xf0] sm:$0xff]
  %v10710 = vld [vmem:[%s10678 + $0xf8] sm:$0xff]
  %v10711 = vld [vmem:[%s10678 + $0x100] sm:$0xff]
  %v10712 = vld [vmem:[%s10678 + $0x108] sm:$0xff]
  %v10713 = vld [vmem:[%s10678 + $0x110] sm:$0xff]
  %v10714 = vld [vmem:[%s10678 + $0x118] sm:$0xff]
  %v10715 = vld [vmem:[%s10678 + $0x120] sm:$0xff]
  %v10716 = vld [vmem:[%s10678 + $0x128] sm:$0xff]
  %v10717 = vld [vmem:[%s10678 + $0x130] sm:$0xff]
  %v10718 = vld [vmem:[%s10678 + $0x138] sm:$0xff]
  %v10719 = vld [vmem:[%s10678 + $0x140] sm:$0xff]
  %v10720 = vld [vmem:[%s10678 + $0x148] sm:$0xff]
  %v10721 = vld [vmem:[%s10678 + $0x150] sm:$0xff]
  %v10722 = vld [vmem:[%s10678 + $0x158] sm:$0xff]
  %v10723 = vld [vmem:[%s10678 + $0x160] sm:$0xff]
  %v10724 = vld [vmem:[%s10678 + $0x168] sm:$0xff]
  %v10725 = vld [vmem:[%s10678 + $0x170] sm:$0xff]
  %v10726 = vld [vmem:[%s10678 + $0x178] sm:$0xff]
  %v10727 = vld [vmem:[%s10678 + $0x180] sm:$0xff]
  %v10728 = vld [vmem:[%s10678 + $0x188] sm:$0xff]
  %v10729 = vld [vmem:[%s10678 + $0x190] sm:$0xff]
  %v10730 = vld [vmem:[%s10678 + $0x198] sm:$0xff]
  %v10731 = vld [vmem:[%s10678 + $0x1a0] sm:$0xff]
  %v10732 = vld [vmem:[%s10678 + $0x1a8] sm:$0xff]
  %v10733 = vld [vmem:[%s10678 + $0x1b0] sm:$0xff]
  %v10734 = vld [vmem:[%s10678 + $0x1b8] sm:$0xff]
  %v10735 = vld [vmem:[%s10678 + $0x1c0] sm:$0xff]
  %v10736 = vld [vmem:[%s10678 + $0x1c8] sm:$0xff]
  %v10737 = vld [vmem:[%s10678 + $0x1d0] sm:$0xff]
  %v10738 = vld [vmem:[%s10678 + $0x1d8] sm:$0xff]
  %v10739 = vld [vmem:[%s10678 + $0x1e0] sm:$0xff]
  %v10740 = vld [vmem:[%s10678 + $0x1e8] sm:$0xff]
  %v10741 = vld [vmem:[%s10678 + $0x1f0] sm:$0xff]
  %v10742 = vld [vmem:[%s10678 + $0x1f8] sm:$0xff]
  %v10743 = vld [vmem:[%s10678 + $0x200] sm:$0xff]
  %v10744 = vld [vmem:[%s10678 + $0x208] sm:$0xff]
  %v10745 = vld [vmem:[%s10678 + $0x210] sm:$0xff]
  %v10746 = vld [vmem:[%s10678 + $0x218] sm:$0xff]
  %v10747 = vld [vmem:[%s10678 + $0x220] sm:$0xff]
  %v10748 = vld [vmem:[%s10678 + $0x228] sm:$0xff]
  %v10749 = vld [vmem:[%s10678 + $0x230] sm:$0xff]
  %v10750 = vld [vmem:[%s10678 + $0x238] sm:$0xff]
  %v10751 = vld [vmem:[#allocation2] sm:$0xff]
  %v10752 = vld [vmem:[#allocation2 + $0x8] sm:$0xff]
  %v10753 = vld [vmem:[#allocation2 + $0x10] sm:$0xff]
  %v10754 = vld [vmem:[#allocation2 + $0x18] sm:$0xff]
  %v10755 = vld [vmem:[#allocation2 + $0x20] sm:$0xff]
  %v10756 = vld [vmem:[#allocation2 + $0x28] sm:$0xff]
  %v10757 = vld [vmem:[#allocation2 + $0x30] sm:$0xff]
  %v10758 = vld [vmem:[#allocation2 + $0x38] sm:$0xff]
  %v10759 = vld [vmem:[#allocation2 + $0x40] sm:$0xff]
  %v10760 = vld [vmem:[#allocation2 + $0x48] sm:$0xff]
  %v10761 = vld [vmem:[#allocation2 + $0x50] sm:$0xff]
  %v10762 = vld [vmem:[#allocation2 + $0x58] sm:$0xff]
  %v10763 = vld [vmem:[#allocation2 + $0x60] sm:$0xff]
  %v10764 = vld [vmem:[#allocation2 + $0x68] sm:$0xff]
  %v10765 = vld [vmem:[#allocation2 + $0x70] sm:$0xff]
  %v10766 = vld [vmem:[#allocation2 + $0x78] sm:$0xff]
  %v10767 = vld [vmem:[#allocation2 + $0x80] sm:$0xff]
  %v10768 = vld [vmem:[#allocation2 + $0x88] sm:$0xff]
  %v10769 = vld [vmem:[#allocation2 + $0x90] sm:$0xff]
  %v10770 = vld [vmem:[#allocation2 + $0x98] sm:$0xff]
  %v10771 = vld [vmem:[#allocation2 + $0xa0] sm:$0xff]
  %v10772 = vld [vmem:[#allocation2 + $0xa8] sm:$0xff]
  %v10773 = vld [vmem:[#allocation2 + $0xb0] sm:$0xff]
  %v10774 = vld [vmem:[#allocation2 + $0xb8] sm:$0xff]
  %v10775 = vld [vmem:[#allocation2 + $0xc0] sm:$0xff]
  %v10776 = vld [vmem:[#allocation2 + $0xc8] sm:$0xff]
  %v10777 = vld [vmem:[#allocation2 + $0xd0] sm:$0xff]
  %v10778 = vld [vmem:[#allocation2 + $0xd8] sm:$0xff]
  %v10779 = vld [vmem:[#allocation2 + $0xe0] sm:$0xff]
  %v10780 = vld [vmem:[#allocation2 + $0xe8] sm:$0xff]
  %v10781 = vld [vmem:[#allocation2 + $0xf0] sm:$0xff]
  %v10782 = vld [vmem:[#allocation2 + $0xf8] sm:$0xff]
  %v10783 = vld [vmem:[#allocation2 + $0x100] sm:$0xff]
  %v10784 = vld [vmem:[#allocation2 + $0x108] sm:$0xff]
  %v10785 = vld [vmem:[#allocation2 + $0x110] sm:$0xff]
  %v10786 = vld [vmem:[#allocation2 + $0x118] sm:$0xff]
  %v10787 = vld [vmem:[#allocation2 + $0x120] sm:$0xff]
  %v10788 = vld [vmem:[#allocation2 + $0x128] sm:$0xff]
  %v10789 = vld [vmem:[#allocation2 + $0x130] sm:$0xff]
  %v10790 = vld [vmem:[#allocation2 + $0x138] sm:$0xff]
  %v10791 = vld [vmem:[#allocation2 + $0x140] sm:$0xff]
  %v10792 = vld [vmem:[#allocation2 + $0x148] sm:$0xff]
  %v10793 = vld [vmem:[#allocation2 + $0x150] sm:$0xff]
  %v10794 = vld [vmem:[#allocation2 + $0x158] sm:$0xff]
  %v10795 = vld [vmem:[#allocation2 + $0x160] sm:$0xff]
  %v10796 = vld [vmem:[#allocation2 + $0x168] sm:$0xff]
  %v10797 = vld [vmem:[#allocation2 + $0x170] sm:$0xff]
  %v10798 = vld [vmem:[#allocation2 + $0x178] sm:$0xff]
  %v10799 = vld [vmem:[#allocation2 + $0x180] sm:$0xff]
  %v10800 = vld [vmem:[#allocation2 + $0x188] sm:$0xff]
  %v10801 = vld [vmem:[#allocation2 + $0x190] sm:$0xff]
  %v10802 = vld [vmem:[#allocation2 + $0x198] sm:$0xff]
  %v10803 = vld [vmem:[#allocation2 + $0x1a0] sm:$0xff]
  %v10804 = vld [vmem:[#allocation2 + $0x1a8] sm:$0xff]
  %v10805 = vld [vmem:[#allocation2 + $0x1b0] sm:$0xff]
  %v10806 = vld [vmem:[#allocation2 + $0x1b8] sm:$0xff]
  %v10807 = vld [vmem:[#allocation2 + $0x1c0] sm:$0xff]
  %v10808 = vld [vmem:[#allocation2 + $0x1c8] sm:$0xff]
  %v10809 = vld [vmem:[#allocation2 + $0x1d0] sm:$0xff]
  %v10810 = vld [vmem:[#allocation2 + $0x1d8] sm:$0xff]
  %v10811 = vld [vmem:[#allocation2 + $0x1e0] sm:$0xff]
  %v10812 = vld [vmem:[#allocation2 + $0x1e8] sm:$0xff]
  %v10813 = vld [vmem:[#allocation2 + $0x1f0] sm:$0xff]
  %v10814 = vld [vmem:[#allocation2 + $0x1f8] sm:$0xff]
  %v10815 = vld [vmem:[#allocation2 + $0x200] sm:$0xff]
  %v10816 = vld [vmem:[#allocation2 + $0x208] sm:$0xff]
  %v10817 = vld [vmem:[#allocation2 + $0x210] sm:$0xff]
  %v10818 = vld [vmem:[#allocation2 + $0x218] sm:$0xff]
  %v10819 = vld [vmem:[#allocation2 + $0x220] sm:$0xff]
  %v10820 = vld [vmem:[#allocation2 + $0x228] sm:$0xff]
  %v10821 = vld [vmem:[#allocation2 + $0x230] sm:$0xff]
  %v10822 = vld [vmem:[#allocation2 + $0x238] sm:$0xff]
  %v10823 = vunpack.c.l.bf16 %v10679
  %v10824 = vunpack.c.h.bf16 %v10679
  %v10825 = vunpack.c.l.bf16 %v10680
  %v10826 = vunpack.c.h.bf16 %v10680
  %v10827 = vunpack.c.l.bf16 %v10681
  %v10828 = vunpack.c.h.bf16 %v10681
  %v10829 = vunpack.c.l.bf16 %v10682
  %v10830 = vunpack.c.h.bf16 %v10682
  %v10831 = vunpack.c.l.bf16 %v10683
  %v10832 = vunpack.c.h.bf16 %v10683
  %v10833 = vunpack.c.l.bf16 %v10684
  %v10834 = vunpack.c.h.bf16 %v10684
  %v10835 = vunpack.c.l.bf16 %v10685
  %v10836 = vunpack.c.h.bf16 %v10685
  %v10837 = vunpack.c.l.bf16 %v10686
  %v10838 = vunpack.c.h.bf16 %v10686
  %v10839 = vunpack.c.l.bf16 %v10687
  %v10840 = vunpack.c.h.bf16 %v10687
  %v10841 = vunpack.c.l.bf16 %v10688
  %v10842 = vunpack.c.h.bf16 %v10688
  %v10843 = vunpack.c.l.bf16 %v10689
  %v10844 = vunpack.c.h.bf16 %v10689
  %v10845 = vunpack.c.l.bf16 %v10690
  %v10846 = vunpack.c.h.bf16 %v10690
  %v10847 = vunpack.c.l.bf16 %v10691
  %v10848 = vunpack.c.h.bf16 %v10691
  %v10849 = vunpack.c.l.bf16 %v10692
  %v10850 = vunpack.c.h.bf16 %v10692
  %v10851 = vunpack.c.l.bf16 %v10693
  %v10852 = vunpack.c.h.bf16 %v10693
  %v10853 = vunpack.c.l.bf16 %v10694
  %v10854 = vunpack.c.h.bf16 %v10694
  %v10855 = vunpack.c.l.bf16 %v10695
  %v10856 = vunpack.c.h.bf16 %v10695
  %v10857 = vunpack.c.l.bf16 %v10696
  %v10858 = vunpack.c.h.bf16 %v10696
  %v10859 = vunpack.c.l.bf16 %v10697
  %v10860 = vunpack.c.h.bf16 %v10697
  %v10861 = vunpack.c.l.bf16 %v10698
  %v10862 = vunpack.c.h.bf16 %v10698
  %v10863 = vunpack.c.l.bf16 %v10699
  %v10864 = vunpack.c.h.bf16 %v10699
  %v10865 = vunpack.c.l.bf16 %v10700
  %v10866 = vunpack.c.h.bf16 %v10700
  %v10867 = vunpack.c.l.bf16 %v10701
  %v10868 = vunpack.c.h.bf16 %v10701
  %v10869 = vunpack.c.l.bf16 %v10702
  %v10870 = vunpack.c.h.bf16 %v10702
  %v10871 = vunpack.c.l.bf16 %v10703
  %v10872 = vunpack.c.h.bf16 %v10703
  %v10873 = vunpack.c.l.bf16 %v10704
  %v10874 = vunpack.c.h.bf16 %v10704
  %v10875 = vunpack.c.l.bf16 %v10705
  %v10876 = vunpack.c.h.bf16 %v10705
  %v10877 = vunpack.c.l.bf16 %v10706
  %v10878 = vunpack.c.h.bf16 %v10706
  %v10879 = vunpack.c.l.bf16 %v10707
  %v10880 = vunpack.c.h.bf16 %v10707
  %v10881 = vunpack.c.l.bf16 %v10708
  %v10882 = vunpack.c.h.bf16 %v10708
  %v10883 = vunpack.c.l.bf16 %v10709
  %v10884 = vunpack.c.h.bf16 %v10709
  %v10885 = vunpack.c.l.bf16 %v10710
  %v10886 = vunpack.c.h.bf16 %v10710
  %v10887 = vunpack.c.l.bf16 %v10711
  %v10888 = vunpack.c.h.bf16 %v10711
  %v10889 = vunpack.c.l.bf16 %v10712
  %v10890 = vunpack.c.h.bf16 %v10712
  %v10891 = vunpack.c.l.bf16 %v10713
  %v10892 = vunpack.c.h.bf16 %v10713
  %v10893 = vunpack.c.l.bf16 %v10714
  %v10894 = vunpack.c.h.bf16 %v10714
  %v10895 = vunpack.c.l.bf16 %v10715
  %v10896 = vunpack.c.h.bf16 %v10715
  %v10897 = vunpack.c.l.bf16 %v10716
  %v10898 = vunpack.c.h.bf16 %v10716
  %v10899 = vunpack.c.l.bf16 %v10717
  %v10900 = vunpack.c.h.bf16 %v10717
  %v10901 = vunpack.c.l.bf16 %v10718
  %v10902 = vunpack.c.h.bf16 %v10718
  %v10903 = vunpack.c.l.bf16 %v10719
  %v10904 = vunpack.c.h.bf16 %v10719
  %v10905 = vunpack.c.l.bf16 %v10720
  %v10906 = vunpack.c.h.bf16 %v10720
  %v10907 = vunpack.c.l.bf16 %v10721
  %v10908 = vunpack.c.h.bf16 %v10721
  %v10909 = vunpack.c.l.bf16 %v10722
  %v10910 = vunpack.c.h.bf16 %v10722
  %v10911 = vunpack.c.l.bf16 %v10723
  %v10912 = vunpack.c.h.bf16 %v10723
  %v10913 = vunpack.c.l.bf16 %v10724
  %v10914 = vunpack.c.h.bf16 %v10724
  %v10915 = vunpack.c.l.bf16 %v10725
  %v10916 = vunpack.c.h.bf16 %v10725
  %v10917 = vunpack.c.l.bf16 %v10726
  %v10918 = vunpack.c.h.bf16 %v10726
  %v10919 = vunpack.c.l.bf16 %v10727
  %v10920 = vunpack.c.h.bf16 %v10727
  %v10921 = vunpack.c.l.bf16 %v10728
  %v10922 = vunpack.c.h.bf16 %v10728
  %v10923 = vunpack.c.l.bf16 %v10729
  %v10924 = vunpack.c.h.bf16 %v10729
  %v10925 = vunpack.c.l.bf16 %v10730
  %v10926 = vunpack.c.h.bf16 %v10730
  %v10927 = vunpack.c.l.bf16 %v10731
  %v10928 = vunpack.c.h.bf16 %v10731
  %v10929 = vunpack.c.l.bf16 %v10732
  %v10930 = vunpack.c.h.bf16 %v10732
  %v10931 = vunpack.c.l.bf16 %v10733
  %v10932 = vunpack.c.h.bf16 %v10733
  %v10933 = vunpack.c.l.bf16 %v10734
  %v10934 = vunpack.c.h.bf16 %v10734
  %v10935 = vunpack.c.l.bf16 %v10735
  %v10936 = vunpack.c.h.bf16 %v10735
  %v10937 = vunpack.c.l.bf16 %v10736
  %v10938 = vunpack.c.h.bf16 %v10736
  %v10939 = vunpack.c.l.bf16 %v10737
  %v10940 = vunpack.c.h.bf16 %v10737
  %v10941 = vunpack.c.l.bf16 %v10738
  %v10942 = vunpack.c.h.bf16 %v10738
  %v10943 = vunpack.c.l.bf16 %v10739
  %v10944 = vunpack.c.h.bf16 %v10739
  %v10945 = vunpack.c.l.bf16 %v10740
  %v10946 = vunpack.c.h.bf16 %v10740
  %v10947 = vunpack.c.l.bf16 %v10741
  %v10948 = vunpack.c.h.bf16 %v10741
  %v10949 = vunpack.c.l.bf16 %v10742
  %v10950 = vunpack.c.h.bf16 %v10742
  %v10951 = vunpack.c.l.bf16 %v10743
  %v10952 = vunpack.c.h.bf16 %v10743
  %v10953 = vunpack.c.l.bf16 %v10744
  %v10954 = vunpack.c.h.bf16 %v10744
  %v10955 = vunpack.c.l.bf16 %v10745
  %v10956 = vunpack.c.h.bf16 %v10745
  %v10957 = vunpack.c.l.bf16 %v10746
  %v10958 = vunpack.c.h.bf16 %v10746
  %v10959 = vunpack.c.l.bf16 %v10747
  %v10960 = vunpack.c.h.bf16 %v10747
  %v10961 = vunpack.c.l.bf16 %v10748
  %v10962 = vunpack.c.h.bf16 %v10748
  %v10963 = vunpack.c.l.bf16 %v10749
  %v10964 = vunpack.c.h.bf16 %v10749
  %v10965 = vunpack.c.l.bf16 %v10750
  %v10966 = vunpack.c.h.bf16 %v10750
  %10968 = vset.pattern.permute.xlu0 3
  %10969 = vperm.xlu0 %10968, %v10751
  %v10970 = vpop.permute.xlu0 %10969
  %10973 = vset.pattern.permute.xlu0 3
  %10974 = vperm.xlu0 %10973, %v10752
  %v10975 = vpop.permute.xlu0 %10974
  %10978 = vset.pattern.permute.xlu0 3
  %10979 = vperm.xlu0 %10978, %v10753
  %v10980 = vpop.permute.xlu0 %10979
  %10983 = vset.pattern.permute.xlu0 3
  %10984 = vperm.xlu0 %10983, %v10754
  %v10985 = vpop.permute.xlu0 %10984
  %10988 = vset.pattern.permute.xlu0 3
  %10989 = vperm.xlu0 %10988, %v10755
  %v10990 = vpop.permute.xlu0 %10989
  %10993 = vset.pattern.permute.xlu0 3
  %10994 = vperm.xlu0 %10993, %v10756
  %v10995 = vpop.permute.xlu0 %10994
  %10998 = vset.pattern.permute.xlu0 3
  %10999 = vperm.xlu0 %10998, %v10757
  %v11000 = vpop.permute.xlu0 %10999
  %11003 = vset.pattern.permute.xlu0 3
  %11004 = vperm.xlu0 %11003, %v10758
  %v11005 = vpop.permute.xlu0 %11004
  %11008 = vset.pattern.permute.xlu0 3
  %11009 = vperm.xlu0 %11008, %v10759
  %v11010 = vpop.permute.xlu0 %11009
  %11013 = vset.pattern.permute.xlu0 3
  %11014 = vperm.xlu0 %11013, %v10760
  %v11015 = vpop.permute.xlu0 %11014
  %11018 = vset.pattern.permute.xlu0 3
  %11019 = vperm.xlu0 %11018, %v10761
  %v11020 = vpop.permute.xlu0 %11019
  %11023 = vset.pattern.permute.xlu0 3
  %11024 = vperm.xlu0 %11023, %v10762
  %v11025 = vpop.permute.xlu0 %11024
  %11028 = vset.pattern.permute.xlu0 3
  %11029 = vperm.xlu0 %11028, %v10763
  %v11030 = vpop.permute.xlu0 %11029
  %11033 = vset.pattern.permute.xlu0 3
  %11034 = vperm.xlu0 %11033, %v10764
  %v11035 = vpop.permute.xlu0 %11034
  %11038 = vset.pattern.permute.xlu0 3
  %11039 = vperm.xlu0 %11038, %v10765
  %v11040 = vpop.permute.xlu0 %11039
  %11043 = vset.pattern.permute.xlu0 3
  %11044 = vperm.xlu0 %11043, %v10766
  %v11045 = vpop.permute.xlu0 %11044
  %11048 = vset.pattern.permute.xlu0 3
  %11049 = vperm.xlu0 %11048, %v10767
  %v11050 = vpop.permute.xlu0 %11049
  %11053 = vset.pattern.permute.xlu0 3
  %11054 = vperm.xlu0 %11053, %v10768
  %v11055 = vpop.permute.xlu0 %11054
  %11058 = vset.pattern.permute.xlu0 3
  %11059 = vperm.xlu0 %11058, %v10769
  %v11060 = vpop.permute.xlu0 %11059
  %11063 = vset.pattern.permute.xlu0 3
  %11064 = vperm.xlu0 %11063, %v10770
  %v11065 = vpop.permute.xlu0 %11064
  %11068 = vset.pattern.permute.xlu0 3
  %11069 = vperm.xlu0 %11068, %v10771
  %v11070 = vpop.permute.xlu0 %11069
  %11073 = vset.pattern.permute.xlu0 3
  %11074 = vperm.xlu0 %11073, %v10772
  %v11075 = vpop.permute.xlu0 %11074
  %11078 = vset.pattern.permute.xlu0 3
  %11079 = vperm.xlu0 %11078, %v10773
  %v11080 = vpop.permute.xlu0 %11079
  %11083 = vset.pattern.permute.xlu0 3
  %11084 = vperm.xlu0 %11083, %v10774
  %v11085 = vpop.permute.xlu0 %11084
  %11088 = vset.pattern.permute.xlu0 3
  %11089 = vperm.xlu0 %11088, %v10775
  %v11090 = vpop.permute.xlu0 %11089
  %11093 = vset.pattern.permute.xlu0 3
  %11094 = vperm.xlu0 %11093, %v10776
  %v11095 = vpop.permute.xlu0 %11094
  %11098 = vset.pattern.permute.xlu0 3
  %11099 = vperm.xlu0 %11098, %v10777
  %v11100 = vpop.permute.xlu0 %11099
  %11103 = vset.pattern.permute.xlu0 3
  %11104 = vperm.xlu0 %11103, %v10778
  %v11105 = vpop.permute.xlu0 %11104
  %11108 = vset.pattern.permute.xlu0 3
  %11109 = vperm.xlu0 %11108, %v10779
  %v11110 = vpop.permute.xlu0 %11109
  %11113 = vset.pattern.permute.xlu0 3
  %11114 = vperm.xlu0 %11113, %v10780
  %v11115 = vpop.permute.xlu0 %11114
  %11118 = vset.pattern.permute.xlu0 3
  %11119 = vperm.xlu0 %11118, %v10781
  %v11120 = vpop.permute.xlu0 %11119
  %11123 = vset.pattern.permute.xlu0 3
  %11124 = vperm.xlu0 %11123, %v10782
  %v11125 = vpop.permute.xlu0 %11124
  %11128 = vset.pattern.permute.xlu0 3
  %11129 = vperm.xlu0 %11128, %v10783
  %v11130 = vpop.permute.xlu0 %11129
  %11133 = vset.pattern.permute.xlu0 3
  %11134 = vperm.xlu0 %11133, %v10784
  %v11135 = vpop.permute.xlu0 %11134
  %11138 = vset.pattern.permute.xlu0 3
  %11139 = vperm.xlu0 %11138, %v10785
  %v11140 = vpop.permute.xlu0 %11139
  %11143 = vset.pattern.permute.xlu0 3
  %11144 = vperm.xlu0 %11143, %v10786
  %v11145 = vpop.permute.xlu0 %11144
  %11148 = vset.pattern.permute.xlu0 3
  %11149 = vperm.xlu0 %11148, %v10787
  %v11150 = vpop.permute.xlu0 %11149
  %11153 = vset.pattern.permute.xlu0 3
  %11154 = vperm.xlu0 %11153, %v10788
  %v11155 = vpop.permute.xlu0 %11154
  %11158 = vset.pattern.permute.xlu0 3
  %11159 = vperm.xlu0 %11158, %v10789
  %v11160 = vpop.permute.xlu0 %11159
  %11163 = vset.pattern.permute.xlu0 3
  %11164 = vperm.xlu0 %11163, %v10790
  %v11165 = vpop.permute.xlu0 %11164
  %11168 = vset.pattern.permute.xlu0 3
  %11169 = vperm.xlu0 %11168, %v10791
  %v11170 = vpop.permute.xlu0 %11169
  %11173 = vset.pattern.permute.xlu0 3
  %11174 = vperm.xlu0 %11173, %v10792
  %v11175 = vpop.permute.xlu0 %11174
  %11178 = vset.pattern.permute.xlu0 3
  %11179 = vperm.xlu0 %11178, %v10793
  %v11180 = vpop.permute.xlu0 %11179
  %11183 = vset.pattern.permute.xlu0 3
  %11184 = vperm.xlu0 %11183, %v10794
  %v11185 = vpop.permute.xlu0 %11184
  %11188 = vset.pattern.permute.xlu0 3
  %11189 = vperm.xlu0 %11188, %v10795
  %v11190 = vpop.permute.xlu0 %11189
  %11193 = vset.pattern.permute.xlu0 3
  %11194 = vperm.xlu0 %11193, %v10796
  %v11195 = vpop.permute.xlu0 %11194
  %11198 = vset.pattern.permute.xlu0 3
  %11199 = vperm.xlu0 %11198, %v10797
  %v11200 = vpop.permute.xlu0 %11199
  %11203 = vset.pattern.permute.xlu0 3
  %11204 = vperm.xlu0 %11203, %v10798
  %v11205 = vpop.permute.xlu0 %11204
  %11208 = vset.pattern.permute.xlu0 3
  %11209 = vperm.xlu0 %11208, %v10799
  %v11210 = vpop.permute.xlu0 %11209
  %11213 = vset.pattern.permute.xlu0 3
  %11214 = vperm.xlu0 %11213, %v10800
  %v11215 = vpop.permute.xlu0 %11214
  %11218 = vset.pattern.permute.xlu0 3
  %11219 = vperm.xlu0 %11218, %v10801
  %v11220 = vpop.permute.xlu0 %11219
  %11223 = vset.pattern.permute.xlu0 3
  %11224 = vperm.xlu0 %11223, %v10802
  %v11225 = vpop.permute.xlu0 %11224
  %11228 = vset.pattern.permute.xlu0 3
  %11229 = vperm.xlu0 %11228, %v10803
  %v11230 = vpop.permute.xlu0 %11229
  %11233 = vset.pattern.permute.xlu0 3
  %11234 = vperm.xlu0 %11233, %v10804
  %v11235 = vpop.permute.xlu0 %11234
  %11238 = vset.pattern.permute.xlu0 3
  %11239 = vperm.xlu0 %11238, %v10805
  %v11240 = vpop.permute.xlu0 %11239
  %11243 = vset.pattern.permute.xlu0 3
  %11244 = vperm.xlu0 %11243, %v10806
  %v11245 = vpop.permute.xlu0 %11244
  %11248 = vset.pattern.permute.xlu0 3
  %11249 = vperm.xlu0 %11248, %v10807
  %v11250 = vpop.permute.xlu0 %11249
  %11253 = vset.pattern.permute.xlu0 3
  %11254 = vperm.xlu0 %11253, %v10808
  %v11255 = vpop.permute.xlu0 %11254
  %11258 = vset.pattern.permute.xlu0 3
  %11259 = vperm.xlu0 %11258, %v10809
  %v11260 = vpop.permute.xlu0 %11259
  %11263 = vset.pattern.permute.xlu0 3
  %11264 = vperm.xlu0 %11263, %v10810
  %v11265 = vpop.permute.xlu0 %11264
  %11268 = vset.pattern.permute.xlu0 3
  %11269 = vperm.xlu0 %11268, %v10811
  %v11270 = vpop.permute.xlu0 %11269
  %11273 = vset.pattern.permute.xlu0 3
  %11274 = vperm.xlu0 %11273, %v10812
  %v11275 = vpop.permute.xlu0 %11274
  %11278 = vset.pattern.permute.xlu0 3
  %11279 = vperm.xlu0 %11278, %v10813
  %v11280 = vpop.permute.xlu0 %11279
  %11283 = vset.pattern.permute.xlu0 3
  %11284 = vperm.xlu0 %11283, %v10814
  %v11285 = vpop.permute.xlu0 %11284
  %11288 = vset.pattern.permute.xlu0 3
  %11289 = vperm.xlu0 %11288, %v10815
  %v11290 = vpop.permute.xlu0 %11289
  %11293 = vset.pattern.permute.xlu0 3
  %11294 = vperm.xlu0 %11293, %v10816
  %v11295 = vpop.permute.xlu0 %11294
  %11298 = vset.pattern.permute.xlu0 3
  %11299 = vperm.xlu0 %11298, %v10817
  %v11300 = vpop.permute.xlu0 %11299
  %11303 = vset.pattern.permute.xlu0 3
  %11304 = vperm.xlu0 %11303, %v10818
  %v11305 = vpop.permute.xlu0 %11304
  %11308 = vset.pattern.permute.xlu0 3
  %11309 = vperm.xlu0 %11308, %v10819
  %v11310 = vpop.permute.xlu0 %11309
  %11313 = vset.pattern.permute.xlu0 3
  %11314 = vperm.xlu0 %11313, %v10820
  %v11315 = vpop.permute.xlu0 %11314
  %11318 = vset.pattern.permute.xlu0 3
  %11319 = vperm.xlu0 %11318, %v10821
  %v11320 = vpop.permute.xlu0 %11319
  %11323 = vset.pattern.permute.xlu0 3
  %11324 = vperm.xlu0 %11323, %v10822
  %v11325 = vpop.permute.xlu0 %11324
  %v11327 = vmul.f32 %v10823, %v10970
  %v11328 = vmul.f32 %v10824, %v10970
  %v11329 = vmul.f32 %v10825, %v10975
  %v11330 = vmul.f32 %v10826, %v10975
  %v11331 = vmul.f32 %v10827, %v10980
  %v11332 = vmul.f32 %v10828, %v10980
  %v11333 = vmul.f32 %v10829, %v10985
  %v11334 = vmul.f32 %v10830, %v10985
  %v11335 = vmul.f32 %v10831, %v10990
  %v11336 = vmul.f32 %v10832, %v10990
  %v11337 = vmul.f32 %v10833, %v10995
  %v11338 = vmul.f32 %v10834, %v10995
  %v11339 = vmul.f32 %v10835, %v11000
  %v11340 = vmul.f32 %v10836, %v11000
  %v11341 = vmul.f32 %v10837, %v11005
  %v11342 = vmul.f32 %v10838, %v11005
  %v11343 = vmul.f32 %v10839, %v11010
  %v11344 = vmul.f32 %v10840, %v11010
  %v11345 = vmul.f32 %v10841, %v11015
  %v11346 = vmul.f32 %v10842, %v11015
  %v11347 = vmul.f32 %v10843, %v11020
  %v11348 = vmul.f32 %v10844, %v11020
  %v11349 = vmul.f32 %v10845, %v11025
  %v11350 = vmul.f32 %v10846, %v11025
  %v11351 = vmul.f32 %v10847, %v11030
  %v11352 = vmul.f32 %v10848, %v11030
  %v11353 = vmul.f32 %v10849, %v11035
  %v11354 = vmul.f32 %v10850, %v11035
  %v11355 = vmul.f32 %v10851, %v11040
  %v11356 = vmul.f32 %v10852, %v11040
  %v11357 = vmul.f32 %v10853, %v11045
  %v11358 = vmul.f32 %v10854, %v11045
  %v11359 = vmul.f32 %v10855, %v11050
  %v11360 = vmul.f32 %v10856, %v11050
  %v11361 = vmul.f32 %v10857, %v11055
  %v11362 = vmul.f32 %v10858, %v11055
  %v11363 = vmul.f32 %v10859, %v11060
  %v11364 = vmul.f32 %v10860, %v11060
  %v11365 = vmul.f32 %v10861, %v11065
  %v11366 = vmul.f32 %v10862, %v11065
  %v11367 = vmul.f32 %v10863, %v11070
  %v11368 = vmul.f32 %v10864, %v11070
  %v11369 = vmul.f32 %v10865, %v11075
  %v11370 = vmul.f32 %v10866, %v11075
  %v11371 = vmul.f32 %v10867, %v11080
  %v11372 = vmul.f32 %v10868, %v11080
  %v11373 = vmul.f32 %v10869, %v11085
  %v11374 = vmul.f32 %v10870, %v11085
  %v11375 = vmul.f32 %v10871, %v11090
  %v11376 = vmul.f32 %v10872, %v11090
  %v11377 = vmul.f32 %v10873, %v11095
  %v11378 = vmul.f32 %v10874, %v11095
  %v11379 = vmul.f32 %v10875, %v11100
  %v11380 = vmul.f32 %v10876, %v11100
  %v11381 = vmul.f32 %v10877, %v11105
  %v11382 = vmul.f32 %v10878, %v11105
  %v11383 = vmul.f32 %v10879, %v11110
  %v11384 = vmul.f32 %v10880, %v11110
  %v11385 = vmul.f32 %v10881, %v11115
  %v11386 = vmul.f32 %v10882, %v11115
  %v11387 = vmul.f32 %v10883, %v11120
  %v11388 = vmul.f32 %v10884, %v11120
  %v11389 = vmul.f32 %v10885, %v11125
  %v11390 = vmul.f32 %v10886, %v11125
  %v11391 = vmul.f32 %v10887, %v11130
  %v11392 = vmul.f32 %v10888, %v11130
  %v11393 = vmul.f32 %v10889, %v11135
  %v11394 = vmul.f32 %v10890, %v11135
  %v11395 = vmul.f32 %v10891, %v11140
  %v11396 = vmul.f32 %v10892, %v11140
  %v11397 = vmul.f32 %v10893, %v11145
  %v11398 = vmul.f32 %v10894, %v11145
  %v11399 = vmul.f32 %v10895, %v11150
  %v11400 = vmul.f32 %v10896, %v11150
  %v11401 = vmul.f32 %v10897, %v11155
  %v11402 = vmul.f32 %v10898, %v11155
  %v11403 = vmul.f32 %v10899, %v11160
  %v11404 = vmul.f32 %v10900, %v11160
  %v11405 = vmul.f32 %v10901, %v11165
  %v11406 = vmul.f32 %v10902, %v11165
  %v11407 = vmul.f32 %v10903, %v11170
  %v11408 = vmul.f32 %v10904, %v11170
  %v11409 = vmul.f32 %v10905, %v11175
  %v11410 = vmul.f32 %v10906, %v11175
  %v11411 = vmul.f32 %v10907, %v11180
  %v11412 = vmul.f32 %v10908, %v11180
  %v11413 = vmul.f32 %v10909, %v11185
  %v11414 = vmul.f32 %v10910, %v11185
  %v11415 = vmul.f32 %v10911, %v11190
  %v11416 = vmul.f32 %v10912, %v11190
  %v11417 = vmul.f32 %v10913, %v11195
  %v11418 = vmul.f32 %v10914, %v11195
  %v11419 = vmul.f32 %v10915, %v11200
  %v11420 = vmul.f32 %v10916, %v11200
  %v11421 = vmul.f32 %v10917, %v11205
  %v11422 = vmul.f32 %v10918, %v11205
  %v11423 = vmul.f32 %v10919, %v11210
  %v11424 = vmul.f32 %v10920, %v11210
  %v11425 = vmul.f32 %v10921, %v11215
  %v11426 = vmul.f32 %v10922, %v11215
  %v11427 = vmul.f32 %v10923, %v11220
  %v11428 = vmul.f32 %v10924, %v11220
  %v11429 = vmul.f32 %v10925, %v11225
  %v11430 = vmul.f32 %v10926, %v11225
  %v11431 = vmul.f32 %v10927, %v11230
  %v11432 = vmul.f32 %v10928, %v11230
  %v11433 = vmul.f32 %v10929, %v11235
  %v11434 = vmul.f32 %v10930, %v11235
  %v11435 = vmul.f32 %v10931, %v11240
  %v11436 = vmul.f32 %v10932, %v11240
  %v11437 = vmul.f32 %v10933, %v11245
  %v11438 = vmul.f32 %v10934, %v11245
  %v11439 = vmul.f32 %v10935, %v11250
  %v11440 = vmul.f32 %v10936, %v11250
  %v11441 = vmul.f32 %v10937, %v11255
  %v11442 = vmul.f32 %v10938, %v11255
  %v11443 = vmul.f32 %v10939, %v11260
  %v11444 = vmul.f32 %v10940, %v11260
  %v11445 = vmul.f32 %v10941, %v11265
  %v11446 = vmul.f32 %v10942, %v11265
  %v11447 = vmul.f32 %v10943, %v11270
  %v11448 = vmul.f32 %v10944, %v11270
  %v11449 = vmul.f32 %v10945, %v11275
  %v11450 = vmul.f32 %v10946, %v11275
  %v11451 = vmul.f32 %v10947, %v11280
  %v11452 = vmul.f32 %v10948, %v11280
  %v11453 = vmul.f32 %v10949, %v11285
  %v11454 = vmul.f32 %v10950, %v11285
  %v11455 = vmul.f32 %v10951, %v11290
  %v11456 = vmul.f32 %v10952, %v11290
  %v11457 = vmul.f32 %v10953, %v11295
  %v11458 = vmul.f32 %v10954, %v11295
  %v11459 = vmul.f32 %v10955, %v11300
  %v11460 = vmul.f32 %v10956, %v11300
  %v11461 = vmul.f32 %v10957, %v11305
  %v11462 = vmul.f32 %v10958, %v11305
  %v11463 = vmul.f32 %v10959, %v11310
  %v11464 = vmul.f32 %v10960, %v11310
  %v11465 = vmul.f32 %v10961, %v11315
  %v11466 = vmul.f32 %v10962, %v11315
  %v11467 = vmul.f32 %v10963, %v11320
  %v11468 = vmul.f32 %v10964, %v11320
  %v11469 = vmul.f32 %v10965, %v11325
  %v11470 = vmul.f32 %v10966, %v11325
  %v11471 = vpack.c.bf16 %v11329, %v11327
  %v11472 = vpack.c.bf16 %v11330, %v11328
  %v11473 = vpack.c.bf16 %v11333, %v11331
  %v11474 = vpack.c.bf16 %v11334, %v11332
  %v11475 = vpack.c.bf16 %v11337, %v11335
  %v11476 = vpack.c.bf16 %v11338, %v11336
  %v11477 = vpack.c.bf16 %v11341, %v11339
  %v11478 = vpack.c.bf16 %v11342, %v11340
  %v11479 = vpack.c.bf16 %v11345, %v11343
  %v11480 = vpack.c.bf16 %v11346, %v11344
  %v11481 = vpack.c.bf16 %v11349, %v11347
  %v11482 = vpack.c.bf16 %v11350, %v11348
  %v11483 = vpack.c.bf16 %v11353, %v11351
  %v11484 = vpack.c.bf16 %v11354, %v11352
  %v11485 = vpack.c.bf16 %v11357, %v11355
  %v11486 = vpack.c.bf16 %v11358, %v11356
  %v11487 = vpack.c.bf16 %v11361, %v11359
  %v11488 = vpack.c.bf16 %v11362, %v11360
  %v11489 = vpack.c.bf16 %v11365, %v11363
  %v11490 = vpack.c.bf16 %v11366, %v11364
  %v11491 = vpack.c.bf16 %v11369, %v11367
  %v11492 = vpack.c.bf16 %v11370, %v11368
  %v11493 = vpack.c.bf16 %v11373, %v11371
  %v11494 = vpack.c.bf16 %v11374, %v11372
  %v11495 = vpack.c.bf16 %v11377, %v11375
  %v11496 = vpack.c.bf16 %v11378, %v11376
  %v11497 = vpack.c.bf16 %v11381, %v11379
  %v11498 = vpack.c.bf16 %v11382, %v11380
  %v11499 = vpack.c.bf16 %v11385, %v11383
  %v11500 = vpack.c.bf16 %v11386, %v11384
  %v11501 = vpack.c.bf16 %v11389, %v11387
  %v11502 = vpack.c.bf16 %v11390, %v11388
  %v11503 = vpack.c.bf16 %v11393, %v11391
  %v11504 = vpack.c.bf16 %v11394, %v11392
  %v11505 = vpack.c.bf16 %v11397, %v11395
  %v11506 = vpack.c.bf16 %v11398, %v11396
  %v11507 = vpack.c.bf16 %v11401, %v11399
  %v11508 = vpack.c.bf16 %v11402, %v11400
  %v11509 = vpack.c.bf16 %v11405, %v11403
  %v11510 = vpack.c.bf16 %v11406, %v11404
  %v11511 = vpack.c.bf16 %v11409, %v11407
  %v11512 = vpack.c.bf16 %v11410, %v11408
  %v11513 = vpack.c.bf16 %v11413, %v11411
  %v11514 = vpack.c.bf16 %v11414, %v11412
  %v11515 = vpack.c.bf16 %v11417, %v11415
  %v11516 = vpack.c.bf16 %v11418, %v11416
  %v11517 = vpack.c.bf16 %v11421, %v11419
  %v11518 = vpack.c.bf16 %v11422, %v11420
  %v11519 = vpack.c.bf16 %v11425, %v11423
  %v11520 = vpack.c.bf16 %v11426, %v11424
  %v11521 = vpack.c.bf16 %v11429, %v11427
  %v11522 = vpack.c.bf16 %v11430, %v11428
  %v11523 = vpack.c.bf16 %v11433, %v11431
  %v11524 = vpack.c.bf16 %v11434, %v11432
  %v11525 = vpack.c.bf16 %v11437, %v11435
  %v11526 = vpack.c.bf16 %v11438, %v11436
  %v11527 = vpack.c.bf16 %v11441, %v11439
  %v11528 = vpack.c.bf16 %v11442, %v11440
  %v11529 = vpack.c.bf16 %v11445, %v11443
  %v11530 = vpack.c.bf16 %v11446, %v11444
  %v11531 = vpack.c.bf16 %v11449, %v11447
  %v11532 = vpack.c.bf16 %v11450, %v11448
  %v11533 = vpack.c.bf16 %v11453, %v11451
  %v11534 = vpack.c.bf16 %v11454, %v11452
  %v11535 = vpack.c.bf16 %v11457, %v11455
  %v11536 = vpack.c.bf16 %v11458, %v11456
  %v11537 = vpack.c.bf16 %v11461, %v11459
  %v11538 = vpack.c.bf16 %v11462, %v11460
  %v11539 = vpack.c.bf16 %v11465, %v11463
  %v11540 = vpack.c.bf16 %v11466, %v11464
  %v11541 = vpack.c.bf16 %v11469, %v11467
  %v11542 = vpack.c.bf16 %v11470, %v11468
  %11543 = vmatprep.subr.bf16.mxu0 %v11472
  %11544 = vmatpush1.bf16.msra.mxu0 %v11471
  %11545 = vmatprep.subr.bf16.mxu0 %v11474
  %11546 = vmatpush1.bf16.msra.mxu0 %v11473
  %11547 = vmatprep.subr.bf16.mxu0 %v11476
  %11548 = vmatpush1.bf16.msra.mxu0 %v11475
  %11549 = vmatprep.subr.bf16.mxu0 %v11478
  %11550 = vmatpush1.bf16.msra.mxu0 %v11477
  %11551 = vmatprep.subr.bf16.mxu0 %v11480
  %11552 = vmatpush1.bf16.msra.mxu0 %v11479
  %11553 = vmatprep.subr.bf16.mxu0 %v11482
  %11554 = vmatpush1.bf16.msra.mxu0 %v11481
  %11555 = vmatprep.subr.bf16.mxu0 %v11484
  %11556 = vmatpush1.bf16.msra.mxu0 %v11483
  %11557 = vmatprep.subr.bf16.mxu0 %v11486
  %11558 = vmatpush1.bf16.msra.mxu0 %v11485
  %11559 = vmatprep.subr.bf16.mxu0 %v11488
  %11560 = vmatpush1.bf16.msra.mxu0 %v11487
  %11561 = vmatprep.subr.bf16.mxu0 %v11490
  %11562 = vmatpush1.bf16.msra.mxu0 %v11489
  %11563 = vmatprep.subr.bf16.mxu0 %v11492
  %11564 = vmatpush1.bf16.msra.mxu0 %v11491
  %11565 = vmatprep.subr.bf16.mxu0 %v11494
  %11566 = vmatpush1.bf16.msra.mxu0 %v11493
  %11567 = vmatprep.subr.bf16.mxu0 %v11496
  %11568 = vmatpush1.bf16.msra.mxu0 %v11495
  %11569 = vmatprep.subr.bf16.mxu0 %v11498
  %11570 = vmatpush1.bf16.msra.mxu0 %v11497
  %11571 = vmatprep.subr.bf16.mxu0 %v11500
  %11572 = vmatpush1.bf16.msra.mxu0 %v11499
  %11573 = vmatprep.subr.bf16.mxu0 %v11502
  %11574 = vmatpush1.bf16.msra.mxu0 %v11501
  %11575 = vmatprep.mubr.bf16.mxu0 %v3462
  %11576 = vmatmul.mubr.bf16.gmra.mrb[0].mxu0 %v3461
  %v11577 = vpop.f32.mrb[0].mxu0
  %v11578 = vadd.f32 0.0, %v11577
  %v11579 = vpop.f32.mrb[0].mxu0
  %v11580 = vadd.f32 0.0, %v11579
  %v11581 = vpop.f32.mrb[0].mxu0
  %v11582 = vadd.f32 0.0, %v11581
  %v11583 = vpop.f32.mrb[0].mxu0
  %v11584 = vadd.f32 0.0, %v11583
  %11585 = vmatprep.mubr.bf16.mxu0 %v3467
  %11586 = vmatmul.mubr.bf16.gmra.mrb[0].mxu0 %v3466
  %v11587 = vpop.f32.mrb[0].mxu0
  %v11588 = vadd.f32 0.0, %v11587
  %v11589 = vpop.f32.mrb[0].mxu0
  %v11590 = vadd.f32 0.0, %v11589
  %v11591 = vpop.f32.mrb[0].mxu0
  %v11592 = vadd.f32 0.0, %v11591
  %v11593 = vpop.f32.mrb[0].mxu0
  %v11594 = vadd.f32 0.0, %v11593
  %11595 = vmatprep.mubr.bf16.mxu0 %v3472
  %11596 = vmatmul.mubr.bf16.gmra.mrb[0].mxu0 %v3471
  %v11597 = vpop.f32.mrb[0].mxu0
  %v11598 = vadd.f32 0.0, %v11597
  %v11599 = vpop.f32.mrb[0].mxu0
  %v11600 = vadd.f32 0.0, %v11599
  %v11601 = vpop.f32.mrb[0].mxu0
  %v11602 = vadd.f32 0.0, %v11601
  %v11603 = vpop.f32.mrb[0].mxu0
  %v11604 = vadd.f32 0.0, %v11603
  %11605 = vmatprep.mubr.bf16.mxu0 %v3477
  %11606 = vmatmul.mubr.bf16.gmra.mrb[0].mxu0 %v3476
  %v11607 = vpop.f32.mrb[0].mxu0
  %v11608 = vadd.f32 0.0, %v11607
  %v11609 = vpop.f32.mrb[0].mxu0
  %v11610 = vadd.f32 0.0, %v11609
  %v11611 = vpop.f32.mrb[0].mxu0
  %v11612 = vadd.f32 0.0, %v11611
  %v11613 = vpop.f32.mrb[0].mxu0
  %v11614 = vadd.f32 0.0, %v11613
  %11615 = vmatprep.mubr.bf16.mxu0 %v3482
  %11616 = vmatmul.mubr.bf16.gmra.mrb[0].mxu0 %v3481
  %v11617 = vpop.f32.mrb[0].mxu0
  %v11618 = vadd.f32 0.0, %v11617
  %v11619 = vpop.f32.mrb[0].mxu0
  %v11620 = vadd.f32 0.0, %v11619
  %v11621 = vpop.f32.mrb[0].mxu0
  %v11622 = vadd.f32 0.0, %v11621
  %v11623 = vpop.f32.mrb[0].mxu0
  %v11624 = vadd.f32 0.0, %v11623
  %11625 = vmatprep.mubr.bf16.mxu0 %v3487
  %11626 = vmatmul.mubr.bf16.gmra.mrb[0].mxu0 %v3486
  %v11627 = vpop.f32.mrb[0].mxu0
  %v11628 = vadd.f32 0.0, %v11627
  %v11629 = vpop.f32.mrb[0].mxu0
  %v11630 = vadd.f32 0.0, %v11629
  %v11631 = vpop.f32.mrb[0].mxu0
  %v11632 = vadd.f32 0.0, %v11631
  %v11633 = vpop.f32.mrb[0].mxu0
  %v11634 = vadd.f32 0.0, %v11633
  %11635 = vmatprep.mubr.bf16.mxu0 %v3492
  %11636 = vmatmul.mubr.bf16.gmra.mrb[0].mxu0 %v3491
  %v11637 = vpop.f32.mrb[0].mxu0
  %v11638 = vadd.f32 0.0, %v11637
  %v11639 = vpop.f32.mrb[0].mxu0
  %v11640 = vadd.f32 0.0, %v11639
  %v11641 = vpop.f32.mrb[0].mxu0
  %v11642 = vadd.f32 0.0, %v11641
  %v11643 = vpop.f32.mrb[0].mxu0
  %v11644 = vadd.f32 0.0, %v11643
  %11645 = vmatprep.mubr.bf16.mxu0 %v3497
  %11646 = vmatmul.mubr.bf16.gmra.mrb[0].mxu0 %v3496
  %v11647 = vpop.f32.mrb[0].mxu0
  %v11648 = vadd.f32 0.0, %v11647
  %v11649 = vpop.f32.mrb[0].mxu0
  %v11650 = vadd.f32 0.0, %v11649
  %v11651 = vpop.f32.mrb[0].mxu0
  %v11652 = vadd.f32 0.0, %v11651
  %v11653 = vpop.f32.mrb[0].mxu0
  %v11654 = vadd.f32 0.0, %v11653
  %11655 = vmatprep.mubr.bf16.mxu0 %v3502
  %11656 = vmatmul.mubr.bf16.gmra.mrb[0].mxu0 %v3501
  %v11657 = vpop.f32.mrb[0].mxu0
  %v11658 = vadd.f32 0.0, %v11657
  %v11659 = vpop.f32.mrb[0].mxu0
  %v11660 = vadd.f32 0.0, %v11659
  %v11661 = vpop.f32.mrb[0].mxu0
  %v11662 = vadd.f32 0.0, %v11661
  %v11663 = vpop.f32.mrb[0].mxu0
  %v11664 = vadd.f32 0.0, %v11663
  %11665 = vmatprep.mubr.bf16.mxu0 %v3507
  %11666 = vmatmul.mubr.bf16.gmra.mrb[0].mxu0 %v3506
  %v11667 = vpop.f32.mrb[0].mxu0
  %v11668 = vadd.f32 0.0, %v11667
  %v11669 = vpop.f32.mrb[0].mxu0
  %v11670 = vadd.f32 0.0, %v11669
  %v11671 = vpop.f32.mrb[0].mxu0
  %v11672 = vadd.f32 0.0, %v11671
  %v11673 = vpop.f32.mrb[0].mxu0
  %v11674 = vadd.f32 0.0, %v11673
  %11675 = vmatprep.mubr.bf16.mxu0 %v3512
  %11676 = vmatmul.mubr.bf16.gmra.mrb[0].mxu0 %v3511
  %v11677 = vpop.f32.mrb[0].mxu0
  %v11678 = vadd.f32 0.0, %v11677
  %v11679 = vpop.f32.mrb[0].mxu0
  %v11680 = vadd.f32 0.0, %v11679
  %v11681 = vpop.f32.mrb[0].mxu0
  %v11682 = vadd.f32 0.0, %v11681
  %v11683 = vpop.f32.mrb[0].mxu0
  %v11684 = vadd.f32 0.0, %v11683
  %11685 = vmatprep.mubr.bf16.mxu0 %v3517
  %11686 = vmatmul.mubr.bf16.gmra.mrb[0].mxu0 %v3516
  %v11687 = vpop.f32.mrb[0].mxu0
  %v11688 = vadd.f32 0.0, %v11687
  %v11689 = vpop.f32.mrb[0].mxu0
  %v11690 = vadd.f32 0.0, %v11689
  %v11691 = vpop.f32.mrb[0].mxu0
  %v11692 = vadd.f32 0.0, %v11691
  %v11693 = vpop.f32.mrb[0].mxu0
  %v11694 = vadd.f32 0.0, %v11693
  %11695 = vmatprep.mubr.bf16.mxu0 %v3522
  %11696 = vmatmul.mubr.bf16.gmra.mrb[0].mxu0 %v3521
  %v11697 = vpop.f32.mrb[0].mxu0
  %v11698 = vadd.f32 0.0, %v11697
  %v11699 = vpop.f32.mrb[0].mxu0
  %v11700 = vadd.f32 0.0, %v11699
  %v11701 = vpop.f32.mrb[0].mxu0
  %v11702 = vadd.f32 0.0, %v11701
  %v11703 = vpop.f32.mrb[0].mxu0
  %v11704 = vadd.f32 0.0, %v11703
  %11705 = vmatprep.mubr.bf16.mxu0 %v3527
  %11706 = vmatmul.mubr.bf16.gmra.mrb[0].mxu0 %v3526
  %v11707 = vpop.f32.mrb[0].mxu0
  %v11708 = vadd.f32 0.0, %v11707
  %v11709 = vpop.f32.mrb[0].mxu0
  %v11710 = vadd.f32 0.0, %v11709
  %v11711 = vpop.f32.mrb[0].mxu0
  %v11712 = vadd.f32 0.0, %v11711
  %v11713 = vpop.f32.mrb[0].mxu0
  %v11714 = vadd.f32 0.0, %v11713
  %11715 = vmatprep.mubr.bf16.mxu0 %v3532
  %11716 = vmatmul.mubr.bf16.gmra.mrb[0].mxu0 %v3531
  %v11717 = vpop.f32.mrb[0].mxu0
  %v11718 = vadd.f32 0.0, %v11717
  %v11719 = vpop.f32.mrb[0].mxu0
  %v11720 = vadd.f32 0.0, %v11719
  %v11721 = vpop.f32.mrb[0].mxu0
  %v11722 = vadd.f32 0.0, %v11721
  %v11723 = vpop.f32.mrb[0].mxu0
  %v11724 = vadd.f32 0.0, %v11723
  %11725 = vmatprep.mubr.bf16.mxu0 %v3537
  %11726 = vmatmul.mubr.bf16.gmra.mrb[0].mxu0 %v3536
  %v11727 = vpop.f32.mrb[0].mxu0
  %v11728 = vadd.f32 0.0, %v11727
  %v11729 = vpop.f32.mrb[0].mxu0
  %v11730 = vadd.f32 0.0, %v11729
  %v11731 = vpop.f32.mrb[0].mxu0
  %v11732 = vadd.f32 0.0, %v11731
  %v11733 = vpop.f32.mrb[0].mxu0
  %v11734 = vadd.f32 0.0, %v11733
  %11735 = vmatprep.mubr.bf16.mxu0 %v3542
  %11736 = vmatmul.mubr.bf16.gmra.mrb[0].mxu0 %v3541
  %v11737 = vpop.f32.mrb[0].mxu0
  %v11738 = vadd.f32 0.0, %v11737
  %v11739 = vpop.f32.mrb[0].mxu0
  %v11740 = vadd.f32 0.0, %v11739
  %v11741 = vpop.f32.mrb[0].mxu0
  %v11742 = vadd.f32 0.0, %v11741
  %v11743 = vpop.f32.mrb[0].mxu0
  %v11744 = vadd.f32 0.0, %v11743
  %11745 = vmatprep.mubr.bf16.mxu0 %v3547
  %11746 = vmatmul.mubr.bf16.gmra.mrb[0].mxu0 %v3546
  %v11747 = vpop.f32.mrb[0].mxu0
  %v11748 = vadd.f32 0.0, %v11747
  %v11749 = vpop.f32.mrb[0].mxu0
  %v11750 = vadd.f32 0.0, %v11749
  %v11751 = vpop.f32.mrb[0].mxu0
  %v11752 = vadd.f32 0.0, %v11751
  %v11753 = vpop.f32.mrb[0].mxu0
  %v11754 = vadd.f32 0.0, %v11753
  %11755 = vmatprep.mubr.bf16.mxu0 %v3552
  %11756 = vmatmul.mubr.bf16.gmra.mrb[0].mxu0 %v3551
  %v11757 = vpop.f32.mrb[0].mxu0
  %v11758 = vadd.f32 0.0, %v11757
  %v11759 = vpop.f32.mrb[0].mxu0
  %v11760 = vadd.f32 0.0, %v11759
  %v11761 = vpop.f32.mrb[0].mxu0
  %v11762 = vadd.f32 0.0, %v11761
  %v11763 = vpop.f32.mrb[0].mxu0
  %v11764 = vadd.f32 0.0, %v11763
  %11765 = vmatprep.mubr.bf16.mxu0 %v3557
  %11766 = vmatmul.mubr.bf16.gmra.mrb[0].mxu0 %v3556
  %v11767 = vpop.f32.mrb[0].mxu0
  %v11768 = vadd.f32 0.0, %v11767
  %v11769 = vpop.f32.mrb[0].mxu0
  %v11770 = vadd.f32 0.0, %v11769
  %v11771 = vpop.f32.mrb[0].mxu0
  %v11772 = vadd.f32 0.0, %v11771
  %v11773 = vpop.f32.mrb[0].mxu0
  %v11774 = vadd.f32 0.0, %v11773
  %11775 = vmatprep.mubr.bf16.mxu0 %v3562
  %11776 = vmatmul.mubr.bf16.gmra.mrb[0].mxu0 %v3561
  %v11777 = vpop.f32.mrb[0].mxu0
  %v11778 = vadd.f32 0.0, %v11777
  %v11779 = vpop.f32.mrb[0].mxu0
  %v11780 = vadd.f32 0.0, %v11779
  %v11781 = vpop.f32.mrb[0].mxu0
  %v11782 = vadd.f32 0.0, %v11781
  %v11783 = vpop.f32.mrb[0].mxu0
  %v11784 = vadd.f32 0.0, %v11783
  %11785 = vmatprep.mubr.bf16.mxu0 %v3567
  %11786 = vmatmul.mubr.bf16.gmra.mrb[0].mxu0 %v3566
  %v11787 = vpop.f32.mrb[0].mxu0
  %v11788 = vadd.f32 0.0, %v11787
  %v11789 = vpop.f32.mrb[0].mxu0
  %v11790 = vadd.f32 0.0, %v11789
  %v11791 = vpop.f32.mrb[0].mxu0
  %v11792 = vadd.f32 0.0, %v11791
  %v11793 = vpop.f32.mrb[0].mxu0
  %v11794 = vadd.f32 0.0, %v11793
  %11795 = vmatprep.mubr.bf16.mxu0 %v3572
  %11796 = vmatmul.mubr.bf16.gmra.mrb[0].mxu0 %v3571
  %v11797 = vpop.f32.mrb[0].mxu0
  %v11798 = vadd.f32 0.0, %v11797
  %v11799 = vpop.f32.mrb[0].mxu0
  %v11800 = vadd.f32 0.0, %v11799
  %v11801 = vpop.f32.mrb[0].mxu0
  %v11802 = vadd.f32 0.0, %v11801
  %v11803 = vpop.f32.mrb[0].mxu0
  %v11804 = vadd.f32 0.0, %v11803
  %11805 = vmatprep.mubr.bf16.mxu0 %v3577
  %11806 = vmatmul.mubr.bf16.gmra.mrb[0].mxu0 %v3576
  %v11807 = vpop.f32.mrb[0].mxu0
  %v11808 = vadd.f32 0.0, %v11807
  %v11809 = vpop.f32.mrb[0].mxu0
  %v11810 = vadd.f32 0.0, %v11809
  %v11811 = vpop.f32.mrb[0].mxu0
  %v11812 = vadd.f32 0.0, %v11811
  %v11813 = vpop.f32.mrb[0].mxu0
  %v11814 = vadd.f32 0.0, %v11813
  %11815 = vmatprep.mubr.bf16.mxu0 %v3582
  %11816 = vmatmul.mubr.bf16.gmra.mrb[0].mxu0 %v3581
  %v11817 = vpop.f32.mrb[0].mxu0
  %v11818 = vadd.f32 0.0, %v11817
  %v11819 = vpop.f32.mrb[0].mxu0
  %v11820 = vadd.f32 0.0, %v11819
  %v11821 = vpop.f32.mrb[0].mxu0
  %v11822 = vadd.f32 0.0, %v11821
  %v11823 = vpop.f32.mrb[0].mxu0
  %v11824 = vadd.f32 0.0, %v11823
  %11825 = vmatprep.mubr.bf16.mxu0 %v3587
  %11826 = vmatmul.mubr.bf16.gmra.mrb[0].mxu0 %v3586
  %v11827 = vpop.f32.mrb[0].mxu0
  %v11828 = vadd.f32 0.0, %v11827
  %v11829 = vpop.f32.mrb[0].mxu0
  %v11830 = vadd.f32 0.0, %v11829
  %v11831 = vpop.f32.mrb[0].mxu0
  %v11832 = vadd.f32 0.0, %v11831
  %v11833 = vpop.f32.mrb[0].mxu0
  %v11834 = vadd.f32 0.0, %v11833
  %11835 = vmatprep.mubr.bf16.mxu0 %v3592
  %11836 = vmatmul.mubr.bf16.gmra.mrb[0].mxu0 %v3591
  %v11837 = vpop.f32.mrb[0].mxu0
  %v11838 = vadd.f32 0.0, %v11837
  %v11839 = vpop.f32.mrb[0].mxu0
  %v11840 = vadd.f32 0.0, %v11839
  %v11841 = vpop.f32.mrb[0].mxu0
  %v11842 = vadd.f32 0.0, %v11841
  %v11843 = vpop.f32.mrb[0].mxu0
  %v11844 = vadd.f32 0.0, %v11843
  %11845 = vmatprep.mubr.bf16.mxu0 %v3597
  %11846 = vmatmul.mubr.bf16.gmra.mrb[0].mxu0 %v3596
  %v11847 = vpop.f32.mrb[0].mxu0
  %v11848 = vadd.f32 0.0, %v11847
  %v11849 = vpop.f32.mrb[0].mxu0
  %v11850 = vadd.f32 0.0, %v11849
  %v11851 = vpop.f32.mrb[0].mxu0
  %v11852 = vadd.f32 0.0, %v11851
  %v11853 = vpop.f32.mrb[0].mxu0
  %v11854 = vadd.f32 0.0, %v11853
  %11855 = vmatprep.mubr.bf16.mxu0 %v3602
  %11856 = vmatmul.mubr.bf16.gmra.mrb[0].mxu0 %v3601
  %v11857 = vpop.f32.mrb[0].mxu0
  %v11858 = vadd.f32 0.0, %v11857
  %v11859 = vpop.f32.mrb[0].mxu0
  %v11860 = vadd.f32 0.0, %v11859
  %v11861 = vpop.f32.mrb[0].mxu0
  %v11862 = vadd.f32 0.0, %v11861
  %v11863 = vpop.f32.mrb[0].mxu0
  %v11864 = vadd.f32 0.0, %v11863
  %11865 = vmatprep.mubr.bf16.mxu0 %v3607
  %11866 = vmatmul.mubr.bf16.gmra.mrb[0].mxu0 %v3606
  %v11867 = vpop.f32.mrb[0].mxu0
  %v11868 = vadd.f32 0.0, %v11867
  %v11869 = vpop.f32.mrb[0].mxu0
  %v11870 = vadd.f32 0.0, %v11869
  %v11871 = vpop.f32.mrb[0].mxu0
  %v11872 = vadd.f32 0.0, %v11871
  %v11873 = vpop.f32.mrb[0].mxu0
  %v11874 = vadd.f32 0.0, %v11873
  %11875 = vmatprep.mubr.bf16.mxu0 %v3612
  %11876 = vmatmul.mubr.bf16.gmra.mrb[0].mxu0 %v3611
  %v11877 = vpop.f32.mrb[0].mxu0
  %v11878 = vadd.f32 0.0, %v11877
  %v11879 = vpop.f32.mrb[0].mxu0
  %v11880 = vadd.f32 0.0, %v11879
  %v11881 = vpop.f32.mrb[0].mxu0
  %v11882 = vadd.f32 0.0, %v11881
  %v11883 = vpop.f32.mrb[0].mxu0
  %v11884 = vadd.f32 0.0, %v11883
  %11885 = vmatprep.mubr.bf16.mxu0 %v3617
  %11886 = vmatmul.mubr.bf16.gmra.mrb[0].mxu0 %v3616
  %v11887 = vpop.f32.mrb[0].mxu0
  %v11888 = vadd.f32 0.0, %v11887
  %v11889 = vpop.f32.mrb[0].mxu0
  %v11890 = vadd.f32 0.0, %v11889
  %v11891 = vpop.f32.mrb[0].mxu0
  %v11892 = vadd.f32 0.0, %v11891
  %v11893 = vpop.f32.mrb[0].mxu0
  %v11894 = vadd.f32 0.0, %v11893
  %11895 = vmatprep.mubr.bf16.mxu0 %v3622
  %11896 = vmatmul.mubr.bf16.gmra.mrb[0].mxu0 %v3621
  %v11897 = vpop.f32.mrb[0].mxu0
  %v11898 = vadd.f32 0.0, %v11897
  %v11899 = vpop.f32.mrb[0].mxu0
  %v11900 = vadd.f32 0.0, %v11899
  %v11901 = vpop.f32.mrb[0].mxu0
  %v11902 = vadd.f32 0.0, %v11901
  %v11903 = vpop.f32.mrb[0].mxu0
  %v11904 = vadd.f32 0.0, %v11903
  %11905 = vmatprep.mubr.bf16.mxu0 %v3627
  %11906 = vmatmul.mubr.bf16.gmra.mrb[0].mxu0 %v3626
  %v11907 = vpop.f32.mrb[0].mxu0
  %v11908 = vadd.f32 0.0, %v11907
  %v11909 = vpop.f32.mrb[0].mxu0
  %v11910 = vadd.f32 0.0, %v11909
  %v11911 = vpop.f32.mrb[0].mxu0
  %v11912 = vadd.f32 0.0, %v11911
  %v11913 = vpop.f32.mrb[0].mxu0
  %v11914 = vadd.f32 0.0, %v11913
  %11915 = vmatprep.mubr.bf16.mxu0 %v3632
  %11916 = vmatmul.mubr.bf16.gmra.mrb[0].mxu0 %v3631
  %v11917 = vpop.f32.mrb[0].mxu0
  %v11918 = vadd.f32 0.0, %v11917
  %v11919 = vpop.f32.mrb[0].mxu0
  %v11920 = vadd.f32 0.0, %v11919
  %v11921 = vpop.f32.mrb[0].mxu0
  %v11922 = vadd.f32 0.0, %v11921
  %v11923 = vpop.f32.mrb[0].mxu0
  %v11924 = vadd.f32 0.0, %v11923
  %11925 = vmatprep.mubr.bf16.mxu0 %v3637
  %11926 = vmatmul.mubr.bf16.gmra.mrb[0].mxu0 %v3636
  %v11927 = vpop.f32.mrb[0].mxu0
  %v11928 = vadd.f32 0.0, %v11927
  %v11929 = vpop.f32.mrb[0].mxu0
  %v11930 = vadd.f32 0.0, %v11929
  %v11931 = vpop.f32.mrb[0].mxu0
  %v11932 = vadd.f32 0.0, %v11931
  %v11933 = vpop.f32.mrb[0].mxu0
  %v11934 = vadd.f32 0.0, %v11933
  %11935 = vdwg.mxu0
  %11936 = vmatprep.subr.bf16.mxu0 %v11504
  %11937 = vmatpush1.bf16.msra.mxu0 %v11503
  %11938 = vmatprep.subr.bf16.mxu0 %v11506
  %11939 = vmatpush1.bf16.msra.mxu0 %v11505
  %11940 = vmatprep.subr.bf16.mxu0 %v11508
  %11941 = vmatpush1.bf16.msra.mxu0 %v11507
  %11942 = vmatprep.subr.bf16.mxu0 %v11510
  %11943 = vmatpush1.bf16.msra.mxu0 %v11509
  %11944 = vmatprep.subr.bf16.mxu0 %v11512
  %11945 = vmatpush1.bf16.msra.mxu0 %v11511
  %11946 = vmatprep.subr.bf16.mxu0 %v11514
  %11947 = vmatpush1.bf16.msra.mxu0 %v11513
  %11948 = vmatprep.subr.bf16.mxu0 %v11516
  %11949 = vmatpush1.bf16.msra.mxu0 %v11515
  %11950 = vmatprep.subr.bf16.mxu0 %v11518
  %11951 = vmatpush1.bf16.msra.mxu0 %v11517
  %11952 = vmatprep.subr.bf16.mxu0 %v11520
  %11953 = vmatpush1.bf16.msra.mxu0 %v11519
  %11954 = vmatprep.subr.bf16.mxu0 %v11522
  %11955 = vmatpush1.bf16.msra.mxu0 %v11521
  %11956 = vmatprep.subr.bf16.mxu0 %v11524
  %11957 = vmatpush1.bf16.msra.mxu0 %v11523
  %11958 = vmatprep.subr.bf16.mxu0 %v11526
  %11959 = vmatpush1.bf16.msra.mxu0 %v11525
  %11960 = vmatprep.subr.bf16.mxu0 %v11528
  %11961 = vmatpush1.bf16.msra.mxu0 %v11527
  %11962 = vmatprep.subr.bf16.mxu0 %v11530
  %11963 = vmatpush1.bf16.msra.mxu0 %v11529
  %11964 = vmatprep.subr.bf16.mxu0 %v11532
  %11965 = vmatpush1.bf16.msra.mxu0 %v11531
  %11966 = vmatprep.subr.bf16.mxu0 %v11534
  %11967 = vmatpush1.bf16.msra.mxu0 %v11533
  %11968 = vmatprep.mubr.bf16.mxu0 %v3464
  %11969 = vmatmul.mubr.bf16.gmra.mrb[0].mxu0 %v3463
  %v11970 = vpop.f32.mrb[0].mxu0
  %v11971 = vadd.f32 %v11578, %v11970
  %v11972 = vpop.f32.mrb[0].mxu0
  %v11973 = vadd.f32 %v11580, %v11972
  %v11974 = vpop.f32.mrb[0].mxu0
  %v11975 = vadd.f32 %v11582, %v11974
  %v11976 = vpop.f32.mrb[0].mxu0
  %v11977 = vadd.f32 %v11584, %v11976
  %11978 = vmatprep.mubr.bf16.mxu0 %v3469
  %11979 = vmatmul.mubr.bf16.gmra.mrb[0].mxu0 %v3468
  %v11980 = vpop.f32.mrb[0].mxu0
  %v11981 = vadd.f32 %v11588, %v11980
  %v11982 = vpop.f32.mrb[0].mxu0
  %v11983 = vadd.f32 %v11590, %v11982
  %v11984 = vpop.f32.mrb[0].mxu0
  %v11985 = vadd.f32 %v11592, %v11984
  %v11986 = vpop.f32.mrb[0].mxu0
  %v11987 = vadd.f32 %v11594, %v11986
  %11988 = vmatprep.mubr.bf16.mxu0 %v3474
  %11989 = vmatmul.mubr.bf16.gmra.mrb[0].mxu0 %v3473
  %v11990 = vpop.f32.mrb[0].mxu0
  %v11991 = vadd.f32 %v11598, %v11990
  %v11992 = vpop.f32.mrb[0].mxu0
  %v11993 = vadd.f32 %v11600, %v11992
  %v11994 = vpop.f32.mrb[0].mxu0
  %v11995 = vadd.f32 %v11602, %v11994
  %v11996 = vpop.f32.mrb[0].mxu0
  %v11997 = vadd.f32 %v11604, %v11996
  %11998 = vmatprep.mubr.bf16.mxu0 %v3479
  %11999 = vmatmul.mubr.bf16.gmra.mrb[0].mxu0 %v3478
  %v12000 = vpop.f32.mrb[0].mxu0
  %v12001 = vadd.f32 %v11608, %v12000
  %v12002 = vpop.f32.mrb[0].mxu0
  %v12003 = vadd.f32 %v11610, %v12002
  %v12004 = vpop.f32.mrb[0].mxu0
  %v12005 = vadd.f32 %v11612, %v12004
  %v12006 = vpop.f32.mrb[0].mxu0
  %v12007 = vadd.f32 %v11614, %v12006
  %12008 = vmatprep.mubr.bf16.mxu0 %v3484
  %12009 = vmatmul.mubr.bf16.gmra.mrb[0].mxu0 %v3483
  %v12010 = vpop.f32.mrb[0].mxu0
  %v12011 = vadd.f32 %v11618, %v12010
  %v12012 = vpop.f32.mrb[0].mxu0
  %v12013 = vadd.f32 %v11620, %v12012
  %v12014 = vpop.f32.mrb[0].mxu0
  %v12015 = vadd.f32 %v11622, %v12014
  %v12016 = vpop.f32.mrb[0].mxu0
  %v12017 = vadd.f32 %v11624, %v12016
  %12018 = vmatprep.mubr.bf16.mxu0 %v3489
  %12019 = vmatmul.mubr.bf16.gmra.mrb[0].mxu0 %v3488
  %v12020 = vpop.f32.mrb[0].mxu0
  %v12021 = vadd.f32 %v11628, %v12020
  %v12022 = vpop.f32.mrb[0].mxu0
  %v12023 = vadd.f32 %v11630, %v12022
  %v12024 = vpop.f32.mrb[0].mxu0
  %v12025 = vadd.f32 %v11632, %v12024
  %v12026 = vpop.f32.mrb[0].mxu0
  %v12027 = vadd.f32 %v11634, %v12026
  %12028 = vmatprep.mubr.bf16.mxu0 %v3494
  %12029 = vmatmul.mubr.bf16.gmra.mrb[0].mxu0 %v3493
  %v12030 = vpop.f32.mrb[0].mxu0
  %v12031 = vadd.f32 %v11638, %v12030
  %v12032 = vpop.f32.mrb[0].mxu0
  %v12033 = vadd.f32 %v11640, %v12032
  %v12034 = vpop.f32.mrb[0].mxu0
  %v12035 = vadd.f32 %v11642, %v12034
  %v12036 = vpop.f32.mrb[0].mxu0
  %v12037 = vadd.f32 %v11644, %v12036
  %12038 = vmatprep.mubr.bf16.mxu0 %v3499
  %12039 = vmatmul.mubr.bf16.gmra.mrb[0].mxu0 %v3498
  %v12040 = vpop.f32.mrb[0].mxu0
  %v12041 = vadd.f32 %v11648, %v12040
  %v12042 = vpop.f32.mrb[0].mxu0
  %v12043 = vadd.f32 %v11650, %v12042
  %v12044 = vpop.f32.mrb[0].mxu0
  %v12045 = vadd.f32 %v11652, %v12044
  %v12046 = vpop.f32.mrb[0].mxu0
  %v12047 = vadd.f32 %v11654, %v12046
  %12048 = vmatprep.mubr.bf16.mxu0 %v3504
  %12049 = vmatmul.mubr.bf16.gmra.mrb[0].mxu0 %v3503
  %v12050 = vpop.f32.mrb[0].mxu0
  %v12051 = vadd.f32 %v11658, %v12050
  %v12052 = vpop.f32.mrb[0].mxu0
  %v12053 = vadd.f32 %v11660, %v12052
  %v12054 = vpop.f32.mrb[0].mxu0
  %v12055 = vadd.f32 %v11662, %v12054
  %v12056 = vpop.f32.mrb[0].mxu0
  %v12057 = vadd.f32 %v11664, %v12056
  %12058 = vmatprep.mubr.bf16.mxu0 %v3509
  %12059 = vmatmul.mubr.bf16.gmra.mrb[0].mxu0 %v3508
  %v12060 = vpop.f32.mrb[0].mxu0
  %v12061 = vadd.f32 %v11668, %v12060
  %v12062 = vpop.f32.mrb[0].mxu0
  %v12063 = vadd.f32 %v11670, %v12062
  %v12064 = vpop.f32.mrb[0].mxu0
  %v12065 = vadd.f32 %v11672, %v12064
  %v12066 = vpop.f32.mrb[0].mxu0
  %v12067 = vadd.f32 %v11674, %v12066
  %12068 = vmatprep.mubr.bf16.mxu0 %v3514
  %12069 = vmatmul.mubr.bf16.gmra.mrb[0].mxu0 %v3513
  %v12070 = vpop.f32.mrb[0].mxu0
  %v12071 = vadd.f32 %v11678, %v12070
  %v12072 = vpop.f32.mrb[0].mxu0
  %v12073 = vadd.f32 %v11680, %v12072
  %v12074 = vpop.f32.mrb[0].mxu0
  %v12075 = vadd.f32 %v11682, %v12074
  %v12076 = vpop.f32.mrb[0].mxu0
  %v12077 = vadd.f32 %v11684, %v12076
  %12078 = vmatprep.mubr.bf16.mxu0 %v3519
  %12079 = vmatmul.mubr.bf16.gmra.mrb[0].mxu0 %v3518
  %v12080 = vpop.f32.mrb[0].mxu0
  %v12081 = vadd.f32 %v11688, %v12080
  %v12082 = vpop.f32.mrb[0].mxu0
  %v12083 = vadd.f32 %v11690, %v12082
  %v12084 = vpop.f32.mrb[0].mxu0
  %v12085 = vadd.f32 %v11692, %v12084
  %v12086 = vpop.f32.mrb[0].mxu0
  %v12087 = vadd.f32 %v11694, %v12086
  %12088 = vmatprep.mubr.bf16.mxu0 %v3524
  %12089 = vmatmul.mubr.bf16.gmra.mrb[0].mxu0 %v3523
  %v12090 = vpop.f32.mrb[0].mxu0
  %v12091 = vadd.f32 %v11698, %v12090
  %v12092 = vpop.f32.mrb[0].mxu0
  %v12093 = vadd.f32 %v11700, %v12092
  %v12094 = vpop.f32.mrb[0].mxu0
  %v12095 = vadd.f32 %v11702, %v12094
  %v12096 = vpop.f32.mrb[0].mxu0
  %v12097 = vadd.f32 %v11704, %v12096
  %12098 = vmatprep.mubr.bf16.mxu0 %v3529
  %12099 = vmatmul.mubr.bf16.gmra.mrb[0].mxu0 %v3528
  %v12100 = vpop.f32.mrb[0].mxu0
  %v12101 = vadd.f32 %v11708, %v12100
  %v12102 = vpop.f32.mrb[0].mxu0
  %v12103 = vadd.f32 %v11710, %v12102
  %v12104 = vpop.f32.mrb[0].mxu0
  %v12105 = vadd.f32 %v11712, %v12104
  %v12106 = vpop.f32.mrb[0].mxu0
  %v12107 = vadd.f32 %v11714, %v12106
  %12108 = vmatprep.mubr.bf16.mxu0 %v3534
  %12109 = vmatmul.mubr.bf16.gmra.mrb[0].mxu0 %v3533
  %v12110 = vpop.f32.mrb[0].mxu0
  %v12111 = vadd.f32 %v11718, %v12110
  %v12112 = vpop.f32.mrb[0].mxu0
  %v12113 = vadd.f32 %v11720, %v12112
  %v12114 = vpop.f32.mrb[0].mxu0
  %v12115 = vadd.f32 %v11722, %v12114
  %v12116 = vpop.f32.mrb[0].mxu0
  %v12117 = vadd.f32 %v11724, %v12116
  %12118 = vmatprep.mubr.bf16.mxu0 %v3539
  %12119 = vmatmul.mubr.bf16.gmra.mrb[0].mxu0 %v3538
  %v12120 = vpop.f32.mrb[0].mxu0
  %v12121 = vadd.f32 %v11728, %v12120
  %v12122 = vpop.f32.mrb[0].mxu0
  %v12123 = vadd.f32 %v11730, %v12122
  %v12124 = vpop.f32.mrb[0].mxu0
  %v12125 = vadd.f32 %v11732, %v12124
  %v12126 = vpop.f32.mrb[0].mxu0
  %v12127 = vadd.f32 %v11734, %v12126
  %12128 = vmatprep.mubr.bf16.mxu0 %v3544
  %12129 = vmatmul.mubr.bf16.gmra.mrb[0].mxu0 %v3543
  %v12130 = vpop.f32.mrb[0].mxu0
  %v12131 = vadd.f32 %v11738, %v12130
  %v12132 = vpop.f32.mrb[0].mxu0
  %v12133 = vadd.f32 %v11740, %v12132
  %v12134 = vpop.f32.mrb[0].mxu0
  %v12135 = vadd.f32 %v11742, %v12134
  %v12136 = vpop.f32.mrb[0].mxu0
  %v12137 = vadd.f32 %v11744, %v12136
  %12138 = vmatprep.mubr.bf16.mxu0 %v3549
  %12139 = vmatmul.mubr.bf16.gmra.mrb[0].mxu0 %v3548
  %v12140 = vpop.f32.mrb[0].mxu0
  %v12141 = vadd.f32 %v11748, %v12140
  %v12142 = vpop.f32.mrb[0].mxu0
  %v12143 = vadd.f32 %v11750, %v12142
  %v12144 = vpop.f32.mrb[0].mxu0
  %v12145 = vadd.f32 %v11752, %v12144
  %v12146 = vpop.f32.mrb[0].mxu0
  %v12147 = vadd.f32 %v11754, %v12146
  %12148 = vmatprep.mubr.bf16.mxu0 %v3554
  %12149 = vmatmul.mubr.bf16.gmra.mrb[0].mxu0 %v3553
  %v12150 = vpop.f32.mrb[0].mxu0
  %v12151 = vadd.f32 %v11758, %v12150
  %v12152 = vpop.f32.mrb[0].mxu0
  %v12153 = vadd.f32 %v11760, %v12152
  %v12154 = vpop.f32.mrb[0].mxu0
  %v12155 = vadd.f32 %v11762, %v12154
  %v12156 = vpop.f32.mrb[0].mxu0
  %v12157 = vadd.f32 %v11764, %v12156
  %12158 = vmatprep.mubr.bf16.mxu0 %v3559
  %12159 = vmatmul.mubr.bf16.gmra.mrb[0].mxu0 %v3558
  %v12160 = vpop.f32.mrb[0].mxu0
  %v12161 = vadd.f32 %v11768, %v12160
  %v12162 = vpop.f32.mrb[0].mxu0
  %v12163 = vadd.f32 %v11770, %v12162
  %v12164 = vpop.f32.mrb[0].mxu0
  %v12165 = vadd.f32 %v11772, %v12164
  %v12166 = vpop.f32.mrb[0].mxu0
  %v12167 = vadd.f32 %v11774, %v12166
  %12168 = vmatprep.mubr.bf16.mxu0 %v3564
  %12169 = vmatmul.mubr.bf16.gmra.mrb[0].mxu0 %v3563
  %v12170 = vpop.f32.mrb[0].mxu0
  %v12171 = vadd.f32 %v11778, %v12170
  %v12172 = vpop.f32.mrb[0].mxu0
  %v12173 = vadd.f32 %v11780, %v12172
  %v12174 = vpop.f32.mrb[0].mxu0
  %v12175 = vadd.f32 %v11782, %v12174
  %v12176 = vpop.f32.mrb[0].mxu0
  %v12177 = vadd.f32 %v11784, %v12176
  %12178 = vmatprep.mubr.bf16.mxu0 %v3569
  %12179 = vmatmul.mubr.bf16.gmra.mrb[0].mxu0 %v3568
  %v12180 = vpop.f32.mrb[0].mxu0
  %v12181 = vadd.f32 %v11788, %v12180
  %v12182 = vpop.f32.mrb[0].mxu0
  %v12183 = vadd.f32 %v11790, %v12182
  %v12184 = vpop.f32.mrb[0].mxu0
  %v12185 = vadd.f32 %v11792, %v12184
  %v12186 = vpop.f32.mrb[0].mxu0
  %v12187 = vadd.f32 %v11794, %v12186
  %12188 = vmatprep.mubr.bf16.mxu0 %v3574
  %12189 = vmatmul.mubr.bf16.gmra.mrb[0].mxu0 %v3573
  %v12190 = vpop.f32.mrb[0].mxu0
  %v12191 = vadd.f32 %v11798, %v12190
  %v12192 = vpop.f32.mrb[0].mxu0
  %v12193 = vadd.f32 %v11800, %v12192
  %v12194 = vpop.f32.mrb[0].mxu0
  %v12195 = vadd.f32 %v11802, %v12194
  %v12196 = vpop.f32.mrb[0].mxu0
  %v12197 = vadd.f32 %v11804, %v12196
  %12198 = vmatprep.mubr.bf16.mxu0 %v3579
  %12199 = vmatmul.mubr.bf16.gmra.mrb[0].mxu0 %v3578
  %v12200 = vpop.f32.mrb[0].mxu0
  %v12201 = vadd.f32 %v11808, %v12200
  %v12202 = vpop.f32.mrb[0].mxu0
  %v12203 = vadd.f32 %v11810, %v12202
  %v12204 = vpop.f32.mrb[0].mxu0
  %v12205 = vadd.f32 %v11812, %v12204
  %v12206 = vpop.f32.mrb[0].mxu0
  %v12207 = vadd.f32 %v11814, %v12206
  %12208 = vmatprep.mubr.bf16.mxu0 %v3584
  %12209 = vmatmul.mubr.bf16.gmra.mrb[0].mxu0 %v3583
  %v12210 = vpop.f32.mrb[0].mxu0
  %v12211 = vadd.f32 %v11818, %v12210
  %v12212 = vpop.f32.mrb[0].mxu0
  %v12213 = vadd.f32 %v11820, %v12212
  %v12214 = vpop.f32.mrb[0].mxu0
  %v12215 = vadd.f32 %v11822, %v12214
  %v12216 = vpop.f32.mrb[0].mxu0
  %v12217 = vadd.f32 %v11824, %v12216
  %12218 = vmatprep.mubr.bf16.mxu0 %v3589
  %12219 = vmatmul.mubr.bf16.gmra.mrb[0].mxu0 %v3588
  %v12220 = vpop.f32.mrb[0].mxu0
  %v12221 = vadd.f32 %v11828, %v12220
  %v12222 = vpop.f32.mrb[0].mxu0
  %v12223 = vadd.f32 %v11830, %v12222
  %v12224 = vpop.f32.mrb[0].mxu0
  %v12225 = vadd.f32 %v11832, %v12224
  %v12226 = vpop.f32.mrb[0].mxu0
  %v12227 = vadd.f32 %v11834, %v12226
  %12228 = vmatprep.mubr.bf16.mxu0 %v3594
  %12229 = vmatmul.mubr.bf16.gmra.mrb[0].mxu0 %v3593
  %v12230 = vpop.f32.mrb[0].mxu0
  %v12231 = vadd.f32 %v11838, %v12230
  %v12232 = vpop.f32.mrb[0].mxu0
  %v12233 = vadd.f32 %v11840, %v12232
  %v12234 = vpop.f32.mrb[0].mxu0
  %v12235 = vadd.f32 %v11842, %v12234
  %v12236 = vpop.f32.mrb[0].mxu0
  %v12237 = vadd.f32 %v11844, %v12236
  %12238 = vmatprep.mubr.bf16.mxu0 %v3599
  %12239 = vmatmul.mubr.bf16.gmra.mrb[0].mxu0 %v3598
  %v12240 = vpop.f32.mrb[0].mxu0
  %v12241 = vadd.f32 %v11848, %v12240
  %v12242 = vpop.f32.mrb[0].mxu0
  %v12243 = vadd.f32 %v11850, %v12242
  %v12244 = vpop.f32.mrb[0].mxu0
  %v12245 = vadd.f32 %v11852, %v12244
  %v12246 = vpop.f32.mrb[0].mxu0
  %v12247 = vadd.f32 %v11854, %v12246
  %12248 = vmatprep.mubr.bf16.mxu0 %v3604
  %12249 = vmatmul.mubr.bf16.gmra.mrb[0].mxu0 %v3603
  %v12250 = vpop.f32.mrb[0].mxu0
  %v12251 = vadd.f32 %v11858, %v12250
  %v12252 = vpop.f32.mrb[0].mxu0
  %v12253 = vadd.f32 %v11860, %v12252
  %v12254 = vpop.f32.mrb[0].mxu0
  %v12255 = vadd.f32 %v11862, %v12254
  %v12256 = vpop.f32.mrb[0].mxu0
  %v12257 = vadd.f32 %v11864, %v12256
  %12258 = vmatprep.mubr.bf16.mxu0 %v3609
  %12259 = vmatmul.mubr.bf16.gmra.mrb[0].mxu0 %v3608
  %v12260 = vpop.f32.mrb[0].mxu0
  %v12261 = vadd.f32 %v11868, %v12260
  %v12262 = vpop.f32.mrb[0].mxu0
  %v12263 = vadd.f32 %v11870, %v12262
  %v12264 = vpop.f32.mrb[0].mxu0
  %v12265 = vadd.f32 %v11872, %v12264
  %v12266 = vpop.f32.mrb[0].mxu0
  %v12267 = vadd.f32 %v11874, %v12266
  %12268 = vmatprep.mubr.bf16.mxu0 %v3614
  %12269 = vmatmul.mubr.bf16.gmra.mrb[0].mxu0 %v3613
  %v12270 = vpop.f32.mrb[0].mxu0
  %v12271 = vadd.f32 %v11878, %v12270
  %v12272 = vpop.f32.mrb[0].mxu0
  %v12273 = vadd.f32 %v11880, %v12272
  %v12274 = vpop.f32.mrb[0].mxu0
  %v12275 = vadd.f32 %v11882, %v12274
  %v12276 = vpop.f32.mrb[0].mxu0
  %v12277 = vadd.f32 %v11884, %v12276
  %12278 = vmatprep.mubr.bf16.mxu0 %v3619
  %12279 = vmatmul.mubr.bf16.gmra.mrb[0].mxu0 %v3618
  %v12280 = vpop.f32.mrb[0].mxu0
  %v12281 = vadd.f32 %v11888, %v12280
  %v12282 = vpop.f32.mrb[0].mxu0
  %v12283 = vadd.f32 %v11890, %v12282
  %v12284 = vpop.f32.mrb[0].mxu0
  %v12285 = vadd.f32 %v11892, %v12284
  %v12286 = vpop.f32.mrb[0].mxu0
  %v12287 = vadd.f32 %v11894, %v12286
  %12288 = vmatprep.mubr.bf16.mxu0 %v3624
  %12289 = vmatmul.mubr.bf16.gmra.mrb[0].mxu0 %v3623
  %v12290 = vpop.f32.mrb[0].mxu0
  %v12291 = vadd.f32 %v11898, %v12290
  %v12292 = vpop.f32.mrb[0].mxu0
  %v12293 = vadd.f32 %v11900, %v12292
  %v12294 = vpop.f32.mrb[0].mxu0
  %v12295 = vadd.f32 %v11902, %v12294
  %v12296 = vpop.f32.mrb[0].mxu0
  %v12297 = vadd.f32 %v11904, %v12296
  %12298 = vmatprep.mubr.bf16.mxu0 %v3629
  %12299 = vmatmul.mubr.bf16.gmra.mrb[0].mxu0 %v3628
  %v12300 = vpop.f32.mrb[0].mxu0
  %v12301 = vadd.f32 %v11908, %v12300
  %v12302 = vpop.f32.mrb[0].mxu0
  %v12303 = vadd.f32 %v11910, %v12302
  %v12304 = vpop.f32.mrb[0].mxu0
  %v12305 = vadd.f32 %v11912, %v12304
  %v12306 = vpop.f32.mrb[0].mxu0
  %v12307 = vadd.f32 %v11914, %v12306
  %12308 = vmatprep.mubr.bf16.mxu0 %v3634
  %12309 = vmatmul.mubr.bf16.gmra.mrb[0].mxu0 %v3633
  %v12310 = vpop.f32.mrb[0].mxu0
  %v12311 = vadd.f32 %v11918, %v12310
  %v12312 = vpop.f32.mrb[0].mxu0
  %v12313 = vadd.f32 %v11920, %v12312
  %v12314 = vpop.f32.mrb[0].mxu0
  %v12315 = vadd.f32 %v11922, %v12314
  %v12316 = vpop.f32.mrb[0].mxu0
  %v12317 = vadd.f32 %v11924, %v12316
  %12318 = vmatprep.mubr.bf16.mxu0 %v3639
  %12319 = vmatmul.mubr.bf16.gmra.mrb[0].mxu0 %v3638
  %v12320 = vpop.f32.mrb[0].mxu0
  %v12321 = vadd.f32 %v11928, %v12320
  %v12322 = vpop.f32.mrb[0].mxu0
  %v12323 = vadd.f32 %v11930, %v12322
  %v12324 = vpop.f32.mrb[0].mxu0
  %v12325 = vadd.f32 %v11932, %v12324
  %v12326 = vpop.f32.mrb[0].mxu0
  %v12327 = vadd.f32 %v11934, %v12326
  %12328 = vdwg.mxu0
  %12329 = vmatprep.subr.bf16.mxu0 %v11536
  %12330 = vmatpush1.bf16.msra.mxu0 %v11535
  %12331 = vmatprep.subr.bf16.mxu0 %v11538
  %12332 = vmatpush1.bf16.msra.mxu0 %v11537
  %12333 = vmatprep.subr.bf16.mxu0 %v11540
  %12334 = vmatpush1.bf16.msra.mxu0 %v11539
  %12335 = vmatprep.subr.bf16.mxu0 %v11542
  %12336 = vmatpush1.bf16.msra.mxu0 %v11541
  %12337 = vmatprep.subr.bf16.mxu0 0
  %12338 = vmatpush1.bf16.msra.mxu0 0
  %12339 = vmatprep.subr.bf16.mxu0 0
  %12340 = vmatpush1.bf16.msra.mxu0 0
  %12341 = vmatprep.subr.bf16.mxu0 0
  %12342 = vmatpush1.bf16.msra.mxu0 0
  %12343 = vmatprep.subr.bf16.mxu0 0
  %12344 = vmatpush1.bf16.msra.mxu0 0
  %12345 = vmatprep.subr.bf16.mxu0 0
  %12346 = vmatpush1.bf16.msra.mxu0 0
  %12347 = vmatprep.subr.bf16.mxu0 0
  %12348 = vmatpush1.bf16.msra.mxu0 0
  %12349 = vmatprep.subr.bf16.mxu0 0
  %12350 = vmatpush1.bf16.msra.mxu0 0
  %12351 = vmatprep.subr.bf16.mxu0 0
  %12352 = vmatpush1.bf16.msra.mxu0 0
  %12353 = vmatprep.subr.bf16.mxu0 0
  %12354 = vmatpush1.bf16.msra.mxu0 0
  %12355 = vmatprep.subr.bf16.mxu0 0
  %12356 = vmatpush1.bf16.msra.mxu0 0
  %12357 = vmatprep.subr.bf16.mxu0 0
  %12358 = vmatpush1.bf16.msra.mxu0 0
  %12359 = vmatprep.subr.bf16.mxu0 0
  %12360 = vmatpush1.bf16.msra.mxu0 0
  %12361 = vmatprep.mubr.bf16.mxu0 0
  %12362 = vmatmul.mubr.bf16.gmra.mrb[0].mxu0 %v3787
  %v12363 = vpop.f32.mrb[0].mxu0
  %v12364 = vadd.f32 %v11971, %v12363
  %v12365 = vpop.f32.mrb[0].mxu0
  %v12366 = vadd.f32 %v11973, %v12365
  %v12367 = vpop.f32.mrb[0].mxu0
  %v12368 = vadd.f32 %v11975, %v12367
  %v12369 = vpop.f32.mrb[0].mxu0
  %v12370 = vadd.f32 %v11977, %v12369
  %12371 = vmatprep.mubr.bf16.mxu0 0
  %12372 = vmatmul.mubr.bf16.gmra.mrb[0].mxu0 %v3790
  %v12373 = vpop.f32.mrb[0].mxu0
  %v12374 = vadd.f32 %v11981, %v12373
  %v12375 = vpop.f32.mrb[0].mxu0
  %v12376 = vadd.f32 %v11983, %v12375
  %v12377 = vpop.f32.mrb[0].mxu0
  %v12378 = vadd.f32 %v11985, %v12377
  %v12379 = vpop.f32.mrb[0].mxu0
  %v12380 = vadd.f32 %v11987, %v12379
  %12381 = vmatprep.mubr.bf16.mxu0 0
  %12382 = vmatmul.mubr.bf16.gmra.mrb[0].mxu0 %v3793
  %v12383 = vpop.f32.mrb[0].mxu0
  %v12384 = vadd.f32 %v11991, %v12383
  %v12385 = vpop.f32.mrb[0].mxu0
  %v12386 = vadd.f32 %v11993, %v12385
  %v12387 = vpop.f32.mrb[0].mxu0
  %v12388 = vadd.f32 %v11995, %v12387
  %v12389 = vpop.f32.mrb[0].mxu0
  %v12390 = vadd.f32 %v11997, %v12389
  %12391 = vmatprep.mubr.bf16.mxu0 0
  %12392 = vmatmul.mubr.bf16.gmra.mrb[0].mxu0 %v3796
  %v12393 = vpop.f32.mrb[0].mxu0
  %v12394 = vadd.f32 %v12001, %v12393
  %v12395 = vpop.f32.mrb[0].mxu0
  %v12396 = vadd.f32 %v12003, %v12395
  %v12397 = vpop.f32.mrb[0].mxu0
  %v12398 = vadd.f32 %v12005, %v12397
  %v12399 = vpop.f32.mrb[0].mxu0
  %v12400 = vadd.f32 %v12007, %v12399
  %12401 = vmatprep.mubr.bf16.mxu0 0
  %12402 = vmatmul.mubr.bf16.gmra.mrb[0].mxu0 %v3799
  %v12403 = vpop.f32.mrb[0].mxu0
  %v12404 = vadd.f32 %v12011, %v12403
  %v12405 = vpop.f32.mrb[0].mxu0
  %v12406 = vadd.f32 %v12013, %v12405
  %v12407 = vpop.f32.mrb[0].mxu0
  %v12408 = vadd.f32 %v12015, %v12407
  %v12409 = vpop.f32.mrb[0].mxu0
  %v12410 = vadd.f32 %v12017, %v12409
  %12411 = vmatprep.mubr.bf16.mxu0 0
  %12412 = vmatmul.mubr.bf16.gmra.mrb[0].mxu0 %v3802
  %v12413 = vpop.f32.mrb[0].mxu0
  %v12414 = vadd.f32 %v12021, %v12413
  %v12415 = vpop.f32.mrb[0].mxu0
  %v12416 = vadd.f32 %v12023, %v12415
  %v12417 = vpop.f32.mrb[0].mxu0
  %v12418 = vadd.f32 %v12025, %v12417
  %v12419 = vpop.f32.mrb[0].mxu0
  %v12420 = vadd.f32 %v12027, %v12419
  %12421 = vmatprep.mubr.bf16.mxu0 0
  %12422 = vmatmul.mubr.bf16.gmra.mrb[0].mxu0 %v3805
  %v12423 = vpop.f32.mrb[0].mxu0
  %v12424 = vadd.f32 %v12031, %v12423
  %v12425 = vpop.f32.mrb[0].mxu0
  %v12426 = vadd.f32 %v12033, %v12425
  %v12427 = vpop.f32.mrb[0].mxu0
  %v12428 = vadd.f32 %v12035, %v12427
  %v12429 = vpop.f32.mrb[0].mxu0
  %v12430 = vadd.f32 %v12037, %v12429
  %12431 = vmatprep.mubr.bf16.mxu0 0
  %12432 = vmatmul.mubr.bf16.gmra.mrb[0].mxu0 %v3808
  %v12433 = vpop.f32.mrb[0].mxu0
  %v12434 = vadd.f32 %v12041, %v12433
  %v12435 = vpop.f32.mrb[0].mxu0
  %v12436 = vadd.f32 %v12043, %v12435
  %v12437 = vpop.f32.mrb[0].mxu0
  %v12438 = vadd.f32 %v12045, %v12437
  %v12439 = vpop.f32.mrb[0].mxu0
  %v12440 = vadd.f32 %v12047, %v12439
  %12441 = vmatprep.mubr.bf16.mxu0 0
  %12442 = vmatmul.mubr.bf16.gmra.mrb[0].mxu0 %v3811
  %v12443 = vpop.f32.mrb[0].mxu0
  %v12444 = vadd.f32 %v12051, %v12443
  %v12445 = vpop.f32.mrb[0].mxu0
  %v12446 = vadd.f32 %v12053, %v12445
  %v12447 = vpop.f32.mrb[0].mxu0
  %v12448 = vadd.f32 %v12055, %v12447
  %v12449 = vpop.f32.mrb[0].mxu0
  %v12450 = vadd.f32 %v12057, %v12449
  %12451 = vmatprep.mubr.bf16.mxu0 0
  %12452 = vmatmul.mubr.bf16.gmra.mrb[0].mxu0 %v3814
  %v12453 = vpop.f32.mrb[0].mxu0
  %v12454 = vadd.f32 %v12061, %v12453
  %v12455 = vpop.f32.mrb[0].mxu0
  %v12456 = vadd.f32 %v12063, %v12455
  %v12457 = vpop.f32.mrb[0].mxu0
  %v12458 = vadd.f32 %v12065, %v12457
  %v12459 = vpop.f32.mrb[0].mxu0
  %v12460 = vadd.f32 %v12067, %v12459
  %12461 = vmatprep.mubr.bf16.mxu0 0
  %12462 = vmatmul.mubr.bf16.gmra.mrb[0].mxu0 %v3817
  %v12463 = vpop.f32.mrb[0].mxu0
  %v12464 = vadd.f32 %v12071, %v12463
  %v12465 = vpop.f32.mrb[0].mxu0
  %v12466 = vadd.f32 %v12073, %v12465
  %v12467 = vpop.f32.mrb[0].mxu0
  %v12468 = vadd.f32 %v12075, %v12467
  %v12469 = vpop.f32.mrb[0].mxu0
  %v12470 = vadd.f32 %v12077, %v12469
  %12471 = vmatprep.mubr.bf16.mxu0 0
  %12472 = vmatmul.mubr.bf16.gmra.mrb[0].mxu0 %v3820
  %v12473 = vpop.f32.mrb[0].mxu0
  %v12474 = vadd.f32 %v12081, %v12473
  %v12475 = vpop.f32.mrb[0].mxu0
  %v12476 = vadd.f32 %v12083, %v12475
  %v12477 = vpop.f32.mrb[0].mxu0
  %v12478 = vadd.f32 %v12085, %v12477
  %v12479 = vpop.f32.mrb[0].mxu0
  %v12480 = vadd.f32 %v12087, %v12479
  %12481 = vmatprep.mubr.bf16.mxu0 0
  %12482 = vmatmul.mubr.bf16.gmra.mrb[0].mxu0 %v3823
  %v12483 = vpop.f32.mrb[0].mxu0
  %v12484 = vadd.f32 %v12091, %v12483
  %v12485 = vpop.f32.mrb[0].mxu0
  %v12486 = vadd.f32 %v12093, %v12485
  %v12487 = vpop.f32.mrb[0].mxu0
  %v12488 = vadd.f32 %v12095, %v12487
  %v12489 = vpop.f32.mrb[0].mxu0
  %v12490 = vadd.f32 %v12097, %v12489
  %12491 = vmatprep.mubr.bf16.mxu0 0
  %12492 = vmatmul.mubr.bf16.gmra.mrb[0].mxu0 %v3826
  %v12493 = vpop.f32.mrb[0].mxu0
  %v12494 = vadd.f32 %v12101, %v12493
  %v12495 = vpop.f32.mrb[0].mxu0
  %v12496 = vadd.f32 %v12103, %v12495
  %v12497 = vpop.f32.mrb[0].mxu0
  %v12498 = vadd.f32 %v12105, %v12497
  %v12499 = vpop.f32.mrb[0].mxu0
  %v12500 = vadd.f32 %v12107, %v12499
  %12501 = vmatprep.mubr.bf16.mxu0 0
  %12502 = vmatmul.mubr.bf16.gmra.mrb[0].mxu0 %v3829
  %v12503 = vpop.f32.mrb[0].mxu0
  %v12504 = vadd.f32 %v12111, %v12503
  %v12505 = vpop.f32.mrb[0].mxu0
  %v12506 = vadd.f32 %v12113, %v12505
  %v12507 = vpop.f32.mrb[0].mxu0
  %v12508 = vadd.f32 %v12115, %v12507
  %v12509 = vpop.f32.mrb[0].mxu0
  %v12510 = vadd.f32 %v12117, %v12509
  %12511 = vmatprep.mubr.bf16.mxu0 0
  %12512 = vmatmul.mubr.bf16.gmra.mrb[0].mxu0 %v3832
  %v12513 = vpop.f32.mrb[0].mxu0
  %v12514 = vadd.f32 %v12121, %v12513
  %v12515 = vpop.f32.mrb[0].mxu0
  %v12516 = vadd.f32 %v12123, %v12515
  %v12517 = vpop.f32.mrb[0].mxu0
  %v12518 = vadd.f32 %v12125, %v12517
  %v12519 = vpop.f32.mrb[0].mxu0
  %v12520 = vadd.f32 %v12127, %v12519
  %12521 = vmatprep.mubr.bf16.mxu0 0
  %12522 = vmatmul.mubr.bf16.gmra.mrb[0].mxu0 %v3835
  %v12523 = vpop.f32.mrb[0].mxu0
  %v12524 = vadd.f32 %v12131, %v12523
  %v12525 = vpop.f32.mrb[0].mxu0
  %v12526 = vadd.f32 %v12133, %v12525
  %v12527 = vpop.f32.mrb[0].mxu0
  %v12528 = vadd.f32 %v12135, %v12527
  %v12529 = vpop.f32.mrb[0].mxu0
  %v12530 = vadd.f32 %v12137, %v12529
  %12531 = vmatprep.mubr.bf16.mxu0 0
  %12532 = vmatmul.mubr.bf16.gmra.mrb[0].mxu0 %v3838
  %v12533 = vpop.f32.mrb[0].mxu0
  %v12534 = vadd.f32 %v12141, %v12533
  %v12535 = vpop.f32.mrb[0].mxu0
  %v12536 = vadd.f32 %v12143, %v12535
  %v12537 = vpop.f32.mrb[0].mxu0
  %v12538 = vadd.f32 %v12145, %v12537
  %v12539 = vpop.f32.mrb[0].mxu0
  %v12540 = vadd.f32 %v12147, %v12539
  %12541 = vmatprep.mubr.bf16.mxu0 0
  %12542 = vmatmul.mubr.bf16.gmra.mrb[0].mxu0 %v3841
  %v12543 = vpop.f32.mrb[0].mxu0
  %v12544 = vadd.f32 %v12151, %v12543
  %v12545 = vpop.f32.mrb[0].mxu0
  %v12546 = vadd.f32 %v12153, %v12545
  %v12547 = vpop.f32.mrb[0].mxu0
  %v12548 = vadd.f32 %v12155, %v12547
  %v12549 = vpop.f32.mrb[0].mxu0
  %v12550 = vadd.f32 %v12157, %v12549
  %12551 = vmatprep.mubr.bf16.mxu0 0
  %12552 = vmatmul.mubr.bf16.gmra.mrb[0].mxu0 %v3844
  %v12553 = vpop.f32.mrb[0].mxu0
  %v12554 = vadd.f32 %v12161, %v12553
  %v12555 = vpop.f32.mrb[0].mxu0
  %v12556 = vadd.f32 %v12163, %v12555
  %v12557 = vpop.f32.mrb[0].mxu0
  %v12558 = vadd.f32 %v12165, %v12557
  %v12559 = vpop.f32.mrb[0].mxu0
  %v12560 = vadd.f32 %v12167, %v12559
  %12561 = vmatprep.mubr.bf16.mxu0 0
  %12562 = vmatmul.mubr.bf16.gmra.mrb[0].mxu0 %v3847
  %v12563 = vpop.f32.mrb[0].mxu0
  %v12564 = vadd.f32 %v12171, %v12563
  %v12565 = vpop.f32.mrb[0].mxu0
  %v12566 = vadd.f32 %v12173, %v12565
  %v12567 = vpop.f32.mrb[0].mxu0
  %v12568 = vadd.f32 %v12175, %v12567
  %v12569 = vpop.f32.mrb[0].mxu0
  %v12570 = vadd.f32 %v12177, %v12569
  %12571 = vmatprep.mubr.bf16.mxu0 0
  %12572 = vmatmul.mubr.bf16.gmra.mrb[0].mxu0 %v3850
  %v12573 = vpop.f32.mrb[0].mxu0
  %v12574 = vadd.f32 %v12181, %v12573
  %v12575 = vpop.f32.mrb[0].mxu0
  %v12576 = vadd.f32 %v12183, %v12575
  %v12577 = vpop.f32.mrb[0].mxu0
  %v12578 = vadd.f32 %v12185, %v12577
  %v12579 = vpop.f32.mrb[0].mxu0
  %v12580 = vadd.f32 %v12187, %v12579
  %12581 = vmatprep.mubr.bf16.mxu0 0
  %12582 = vmatmul.mubr.bf16.gmra.mrb[0].mxu0 %v3853
  %v12583 = vpop.f32.mrb[0].mxu0
  %v12584 = vadd.f32 %v12191, %v12583
  %v12585 = vpop.f32.mrb[0].mxu0
  %v12586 = vadd.f32 %v12193, %v12585
  %v12587 = vpop.f32.mrb[0].mxu0
  %v12588 = vadd.f32 %v12195, %v12587
  %v12589 = vpop.f32.mrb[0].mxu0
  %v12590 = vadd.f32 %v12197, %v12589
  %12591 = vmatprep.mubr.bf16.mxu0 0
  %12592 = vmatmul.mubr.bf16.gmra.mrb[0].mxu0 %v3856
  %v12593 = vpop.f32.mrb[0].mxu0
  %v12594 = vadd.f32 %v12201, %v12593
  %v12595 = vpop.f32.mrb[0].mxu0
  %v12596 = vadd.f32 %v12203, %v12595
  %v12597 = vpop.f32.mrb[0].mxu0
  %v12598 = vadd.f32 %v12205, %v12597
  %v12599 = vpop.f32.mrb[0].mxu0
  %v12600 = vadd.f32 %v12207, %v12599
  %12601 = vmatprep.mubr.bf16.mxu0 0
  %12602 = vmatmul.mubr.bf16.gmra.mrb[0].mxu0 %v3859
  %v12603 = vpop.f32.mrb[0].mxu0
  %v12604 = vadd.f32 %v12211, %v12603
  %v12605 = vpop.f32.mrb[0].mxu0
  %v12606 = vadd.f32 %v12213, %v12605
  %v12607 = vpop.f32.mrb[0].mxu0
  %v12608 = vadd.f32 %v12215, %v12607
  %v12609 = vpop.f32.mrb[0].mxu0
  %v12610 = vadd.f32 %v12217, %v12609
  %12611 = vmatprep.mubr.bf16.mxu0 0
  %12612 = vmatmul.mubr.bf16.gmra.mrb[0].mxu0 %v3862
  %v12613 = vpop.f32.mrb[0].mxu0
  %v12614 = vadd.f32 %v12221, %v12613
  %v12615 = vpop.f32.mrb[0].mxu0
  %v12616 = vadd.f32 %v12223, %v12615
  %v12617 = vpop.f32.mrb[0].mxu0
  %v12618 = vadd.f32 %v12225, %v12617
  %v12619 = vpop.f32.mrb[0].mxu0
  %v12620 = vadd.f32 %v12227, %v12619
  %12621 = vmatprep.mubr.bf16.mxu0 0
  %12622 = vmatmul.mubr.bf16.gmra.mrb[0].mxu0 %v3865
  %v12623 = vpop.f32.mrb[0].mxu0
  %v12624 = vadd.f32 %v12231, %v12623
  %v12625 = vpop.f32.mrb[0].mxu0
  %v12626 = vadd.f32 %v12233, %v12625
  %v12627 = vpop.f32.mrb[0].mxu0
  %v12628 = vadd.f32 %v12235, %v12627
  %v12629 = vpop.f32.mrb[0].mxu0
  %v12630 = vadd.f32 %v12237, %v12629
  %12631 = vmatprep.mubr.bf16.mxu0 0
  %12632 = vmatmul.mubr.bf16.gmra.mrb[0].mxu0 %v3868
  %v12633 = vpop.f32.mrb[0].mxu0
  %v12634 = vadd.f32 %v12241, %v12633
  %v12635 = vpop.f32.mrb[0].mxu0
  %v12636 = vadd.f32 %v12243, %v12635
  %v12637 = vpop.f32.mrb[0].mxu0
  %v12638 = vadd.f32 %v12245, %v12637
  %v12639 = vpop.f32.mrb[0].mxu0
  %v12640 = vadd.f32 %v12247, %v12639
  %12641 = vmatprep.mubr.bf16.mxu0 0
  %12642 = vmatmul.mubr.bf16.gmra.mrb[0].mxu0 %v3871
  %v12643 = vpop.f32.mrb[0].mxu0
  %v12644 = vadd.f32 %v12251, %v12643
  %v12645 = vpop.f32.mrb[0].mxu0
  %v12646 = vadd.f32 %v12253, %v12645
  %v12647 = vpop.f32.mrb[0].mxu0
  %v12648 = vadd.f32 %v12255, %v12647
  %v12649 = vpop.f32.mrb[0].mxu0
  %v12650 = vadd.f32 %v12257, %v12649
  %12651 = vmatprep.mubr.bf16.mxu0 0
  %12652 = vmatmul.mubr.bf16.gmra.mrb[0].mxu0 %v3874
  %v12653 = vpop.f32.mrb[0].mxu0
  %v12654 = vadd.f32 %v12261, %v12653
  %v12655 = vpop.f32.mrb[0].mxu0
  %v12656 = vadd.f32 %v12263, %v12655
  %v12657 = vpop.f32.mrb[0].mxu0
  %v12658 = vadd.f32 %v12265, %v12657
  %v12659 = vpop.f32.mrb[0].mxu0
  %v12660 = vadd.f32 %v12267, %v12659
  %12661 = vmatprep.mubr.bf16.mxu0 0
  %12662 = vmatmul.mubr.bf16.gmra.mrb[0].mxu0 %v3877
  %v12663 = vpop.f32.mrb[0].mxu0
  %v12664 = vadd.f32 %v12271, %v12663
  %v12665 = vpop.f32.mrb[0].mxu0
  %v12666 = vadd.f32 %v12273, %v12665
  %v12667 = vpop.f32.mrb[0].mxu0
  %v12668 = vadd.f32 %v12275, %v12667
  %v12669 = vpop.f32.mrb[0].mxu0
  %v12670 = vadd.f32 %v12277, %v12669
  %12671 = vmatprep.mubr.bf16.mxu0 0
  %12672 = vmatmul.mubr.bf16.gmra.mrb[0].mxu0 %v3880
  %v12673 = vpop.f32.mrb[0].mxu0
  %v12674 = vadd.f32 %v12281, %v12673
  %v12675 = vpop.f32.mrb[0].mxu0
  %v12676 = vadd.f32 %v12283, %v12675
  %v12677 = vpop.f32.mrb[0].mxu0
  %v12678 = vadd.f32 %v12285, %v12677
  %v12679 = vpop.f32.mrb[0].mxu0
  %v12680 = vadd.f32 %v12287, %v12679
  %12681 = vmatprep.mubr.bf16.mxu0 0
  %12682 = vmatmul.mubr.bf16.gmra.mrb[0].mxu0 %v3883
  %v12683 = vpop.f32.mrb[0].mxu0
  %v12684 = vadd.f32 %v12291, %v12683
  %v12685 = vpop.f32.mrb[0].mxu0
  %v12686 = vadd.f32 %v12293, %v12685
  %v12687 = vpop.f32.mrb[0].mxu0
  %v12688 = vadd.f32 %v12295, %v12687
  %v12689 = vpop.f32.mrb[0].mxu0
  %v12690 = vadd.f32 %v12297, %v12689
  %12691 = vmatprep.mubr.bf16.mxu0 0
  %12692 = vmatmul.mubr.bf16.gmra.mrb[0].mxu0 %v3886
  %v12693 = vpop.f32.mrb[0].mxu0
  %v12694 = vadd.f32 %v12301, %v12693
  %v12695 = vpop.f32.mrb[0].mxu0
  %v12696 = vadd.f32 %v12303, %v12695
  %v12697 = vpop.f32.mrb[0].mxu0
  %v12698 = vadd.f32 %v12305, %v12697
  %v12699 = vpop.f32.mrb[0].mxu0
  %v12700 = vadd.f32 %v12307, %v12699
  %12701 = vmatprep.mubr.bf16.mxu0 0
  %12702 = vmatmul.mubr.bf16.gmra.mrb[0].mxu0 %v3889
  %v12703 = vpop.f32.mrb[0].mxu0
  %v12704 = vadd.f32 %v12311, %v12703
  %v12705 = vpop.f32.mrb[0].mxu0
  %v12706 = vadd.f32 %v12313, %v12705
  %v12707 = vpop.f32.mrb[0].mxu0
  %v12708 = vadd.f32 %v12315, %v12707
  %v12709 = vpop.f32.mrb[0].mxu0
  %v12710 = vadd.f32 %v12317, %v12709
  %12711 = vmatprep.mubr.bf16.mxu0 0
  %12712 = vmatmul.mubr.bf16.gmra.mrb[0].mxu0 %v3892
  %v12713 = vpop.f32.mrb[0].mxu0
  %v12714 = vadd.f32 %v12321, %v12713
  %v12715 = vpop.f32.mrb[0].mxu0
  %v12716 = vadd.f32 %v12323, %v12715
  %v12717 = vpop.f32.mrb[0].mxu0
  %v12718 = vadd.f32 %v12325, %v12717
  %v12719 = vpop.f32.mrb[0].mxu0
  %v12720 = vadd.f32 %v12327, %v12719
  %12721 = vdwg.mxu0
  %v12722 = vpack.c.bf16 %v12368, %v12364
  %v12723 = vpack.c.bf16 %v12370, %v12366
  %v12724 = vpack.c.bf16 %v12378, %v12374
  %v12725 = vpack.c.bf16 %v12380, %v12376
  %v12726 = vpack.c.bf16 %v12388, %v12384
  %v12727 = vpack.c.bf16 %v12390, %v12386
  %v12728 = vpack.c.bf16 %v12398, %v12394
  %v12729 = vpack.c.bf16 %v12400, %v12396
  %v12730 = vpack.c.bf16 %v12408, %v12404
  %v12731 = vpack.c.bf16 %v12410, %v12406
  %v12732 = vpack.c.bf16 %v12418, %v12414
  %v12733 = vpack.c.bf16 %v12420, %v12416
  %v12734 = vpack.c.bf16 %v12428, %v12424
  %v12735 = vpack.c.bf16 %v12430, %v12426
  %v12736 = vpack.c.bf16 %v12438, %v12434
  %v12737 = vpack.c.bf16 %v12440, %v12436
  %v12738 = vpack.c.bf16 %v12448, %v12444
  %v12739 = vpack.c.bf16 %v12450, %v12446
  %v12740 = vpack.c.bf16 %v12458, %v12454
  %v12741 = vpack.c.bf16 %v12460, %v12456
  %v12742 = vpack.c.bf16 %v12468, %v12464
  %v12743 = vpack.c.bf16 %v12470, %v12466
  %v12744 = vpack.c.bf16 %v12478, %v12474
  %v12745 = vpack.c.bf16 %v12480, %v12476
  %v12746 = vpack.c.bf16 %v12488, %v12484
  %v12747 = vpack.c.bf16 %v12490, %v12486
  %v12748 = vpack.c.bf16 %v12498, %v12494
  %v12749 = vpack.c.bf16 %v12500, %v12496
  %v12750 = vpack.c.bf16 %v12508, %v12504
  %v12751 = vpack.c.bf16 %v12510, %v12506
  %v12752 = vpack.c.bf16 %v12518, %v12514
  %v12753 = vpack.c.bf16 %v12520, %v12516
  %v12754 = vpack.c.bf16 %v12528, %v12524
  %v12755 = vpack.c.bf16 %v12530, %v12526
  %v12756 = vpack.c.bf16 %v12538, %v12534
  %v12757 = vpack.c.bf16 %v12540, %v12536
  %v12758 = vpack.c.bf16 %v12548, %v12544
  %v12759 = vpack.c.bf16 %v12550, %v12546
  %v12760 = vpack.c.bf16 %v12558, %v12554
  %v12761 = vpack.c.bf16 %v12560, %v12556
  %v12762 = vpack.c.bf16 %v12568, %v12564
  %v12763 = vpack.c.bf16 %v12570, %v12566
  %v12764 = vpack.c.bf16 %v12578, %v12574
  %v12765 = vpack.c.bf16 %v12580, %v12576
  %v12766 = vpack.c.bf16 %v12588, %v12584
  %v12767 = vpack.c.bf16 %v12590, %v12586
  %v12768 = vpack.c.bf16 %v12598, %v12594
  %v12769 = vpack.c.bf16 %v12600, %v12596
  %v12770 = vpack.c.bf16 %v12608, %v12604
  %v12771 = vpack.c.bf16 %v12610, %v12606
  %v12772 = vpack.c.bf16 %v12618, %v12614
  %v12773 = vpack.c.bf16 %v12620, %v12616
  %v12774 = vpack.c.bf16 %v12628, %v12624
  %v12775 = vpack.c.bf16 %v12630, %v12626
  %v12776 = vpack.c.bf16 %v12638, %v12634
  %v12777 = vpack.c.bf16 %v12640, %v12636
  %v12778 = vpack.c.bf16 %v12648, %v12644
  %v12779 = vpack.c.bf16 %v12650, %v12646
  %v12780 = vpack.c.bf16 %v12658, %v12654
  %v12781 = vpack.c.bf16 %v12660, %v12656
  %v12782 = vpack.c.bf16 %v12668, %v12664
  %v12783 = vpack.c.bf16 %v12670, %v12666
  %v12784 = vpack.c.bf16 %v12678, %v12674
  %v12785 = vpack.c.bf16 %v12680, %v12676
  %v12786 = vpack.c.bf16 %v12688, %v12684
  %v12787 = vpack.c.bf16 %v12690, %v12686
  %v12788 = vpack.c.bf16 %v12698, %v12694
  %v12789 = vpack.c.bf16 %v12700, %v12696
  %v12790 = vpack.c.bf16 %v12708, %v12704
  %v12791 = vpack.c.bf16 %v12710, %v12706
  %v12792 = vpack.c.bf16 %v12718, %v12714
  %v12793 = vpack.c.bf16 %v12720, %v12716
  %v12866 = vunpack.c.l.b16 %v12722
  %v12867 = vunpack.c.l.b16 %v12723
  %v12868 = vunpack.c.h.b16 %v12722
  %v12869 = vunpack.c.h.b16 %v12723
  %v12870 = vunpack.c.l.b16 %v12724
  %v12871 = vunpack.c.l.b16 %v12725
  %v12872 = vunpack.c.h.b16 %v12724
  %v12873 = vunpack.c.h.b16 %v12725
  %v12874 = vunpack.c.l.b16 %v12726
  %v12875 = vunpack.c.l.b16 %v12727
  %v12876 = vunpack.c.h.b16 %v12726
  %v12877 = vunpack.c.h.b16 %v12727
  %v12878 = vunpack.c.l.b16 %v12728
  %v12879 = vunpack.c.l.b16 %v12729
  %v12880 = vunpack.c.h.b16 %v12728
  %v12881 = vunpack.c.h.b16 %v12729
  %v12882 = vunpack.c.l.b16 %v12730
  %v12883 = vunpack.c.l.b16 %v12731
  %v12884 = vunpack.c.h.b16 %v12730
  %v12885 = vunpack.c.h.b16 %v12731
  %v12886 = vunpack.c.l.b16 %v12732
  %v12887 = vunpack.c.l.b16 %v12733
  %v12888 = vunpack.c.h.b16 %v12732
  %v12889 = vunpack.c.h.b16 %v12733
  %v12890 = vunpack.c.l.b16 %v12734
  %v12891 = vunpack.c.l.b16 %v12735
  %v12892 = vunpack.c.h.b16 %v12734
  %v12893 = vunpack.c.h.b16 %v12735
  %v12894 = vunpack.c.l.b16 %v12736
  %v12895 = vunpack.c.l.b16 %v12737
  %v12896 = vunpack.c.h.b16 %v12736
  %v12897 = vunpack.c.h.b16 %v12737
  %v12898 = vunpack.c.l.b16 %v12738
  %v12899 = vunpack.c.l.b16 %v12739
  %v12900 = vunpack.c.h.b16 %v12738
  %v12901 = vunpack.c.h.b16 %v12739
  %v12902 = vunpack.c.l.b16 %v12740
  %v12903 = vunpack.c.l.b16 %v12741
  %v12904 = vunpack.c.h.b16 %v12740
  %v12905 = vunpack.c.h.b16 %v12741
  %v12906 = vunpack.c.l.b16 %v12742
  %v12907 = vunpack.c.l.b16 %v12743
  %v12908 = vunpack.c.h.b16 %v12742
  %v12909 = vunpack.c.h.b16 %v12743
  %v12910 = vunpack.c.l.b16 %v12744
  %v12911 = vunpack.c.l.b16 %v12745
  %v12912 = vunpack.c.h.b16 %v12744
  %v12913 = vunpack.c.h.b16 %v12745
  %v12914 = vunpack.c.l.b16 %v12746
  %v12915 = vunpack.c.l.b16 %v12747
  %v12916 = vunpack.c.h.b16 %v12746
  %v12917 = vunpack.c.h.b16 %v12747
  %v12918 = vunpack.c.l.b16 %v12748
  %v12919 = vunpack.c.l.b16 %v12749
  %v12920 = vunpack.c.h.b16 %v12748
  %v12921 = vunpack.c.h.b16 %v12749
  %v12922 = vunpack.c.l.b16 %v12750
  %v12923 = vunpack.c.l.b16 %v12751
  %v12924 = vunpack.c.h.b16 %v12750
  %v12925 = vunpack.c.h.b16 %v12751
  %v12926 = vunpack.c.l.b16 %v12752
  %v12927 = vunpack.c.l.b16 %v12753
  %v12928 = vunpack.c.h.b16 %v12752
  %v12929 = vunpack.c.h.b16 %v12753
  %v12930 = vunpack.c.l.b16 %v12754
  %v12931 = vunpack.c.l.b16 %v12755
  %v12932 = vunpack.c.h.b16 %v12754
  %v12933 = vunpack.c.h.b16 %v12755
  %v12934 = vunpack.c.l.b16 %v12756
  %v12935 = vunpack.c.l.b16 %v12757
  %v12936 = vunpack.c.h.b16 %v12756
  %v12937 = vunpack.c.h.b16 %v12757
  %v12938 = vunpack.c.l.b16 %v12758
  %v12939 = vunpack.c.l.b16 %v12759
  %v12940 = vunpack.c.h.b16 %v12758
  %v12941 = vunpack.c.h.b16 %v12759
  %v12942 = vunpack.c.l.b16 %v12760
  %v12943 = vunpack.c.l.b16 %v12761
  %v12944 = vunpack.c.h.b16 %v12760
  %v12945 = vunpack.c.h.b16 %v12761
  %v12946 = vunpack.c.l.b16 %v12762
  %v12947 = vunpack.c.l.b16 %v12763
  %v12948 = vunpack.c.h.b16 %v12762
  %v12949 = vunpack.c.h.b16 %v12763
  %v12950 = vunpack.c.l.b16 %v12764
  %v12951 = vunpack.c.l.b16 %v12765
  %v12952 = vunpack.c.h.b16 %v12764
  %v12953 = vunpack.c.h.b16 %v12765
  %v12954 = vunpack.c.l.b16 %v12766
  %v12955 = vunpack.c.l.b16 %v12767
  %v12956 = vunpack.c.h.b16 %v12766
  %v12957 = vunpack.c.h.b16 %v12767
  %v12958 = vunpack.c.l.b16 %v12768
  %v12959 = vunpack.c.l.b16 %v12769
  %v12960 = vunpack.c.h.b16 %v12768
  %v12961 = vunpack.c.h.b16 %v12769
  %v12962 = vunpack.c.l.b16 %v12770
  %v12963 = vunpack.c.l.b16 %v12771
  %v12964 = vunpack.c.h.b16 %v12770
  %v12965 = vunpack.c.h.b16 %v12771
  %v12966 = vunpack.c.l.b16 %v12772
  %v12967 = vunpack.c.l.b16 %v12773
  %v12968 = vunpack.c.h.b16 %v12772
  %v12969 = vunpack.c.h.b16 %v12773
  %v12970 = vunpack.c.l.b16 %v12774
  %v12971 = vunpack.c.l.b16 %v12775
  %v12972 = vunpack.c.h.b16 %v12774
  %v12973 = vunpack.c.h.b16 %v12775
  %v12974 = vunpack.c.l.b16 %v12776
  %v12975 = vunpack.c.l.b16 %v12777
  %v12976 = vunpack.c.h.b16 %v12776
  %v12977 = vunpack.c.h.b16 %v12777
  %v12978 = vunpack.c.l.b16 %v12778
  %v12979 = vunpack.c.l.b16 %v12779
  %v12980 = vunpack.c.h.b16 %v12778
  %v12981 = vunpack.c.h.b16 %v12779
  %v12982 = vunpack.c.l.b16 %v12780
  %v12983 = vunpack.c.l.b16 %v12781
  %v12984 = vunpack.c.h.b16 %v12780
  %v12985 = vunpack.c.h.b16 %v12781
  %v12986 = vunpack.c.l.b16 %v12782
  %v12987 = vunpack.c.l.b16 %v12783
  %v12988 = vunpack.c.h.b16 %v12782
  %v12989 = vunpack.c.h.b16 %v12783
  %v12990 = vunpack.c.l.b16 %v12784
  %v12991 = vunpack.c.l.b16 %v12785
  %v12992 = vunpack.c.h.b16 %v12784
  %v12993 = vunpack.c.h.b16 %v12785
  %v12994 = vunpack.c.l.b16 %v12786
  %v12995 = vunpack.c.l.b16 %v12787
  %v12996 = vunpack.c.h.b16 %v12786
  %v12997 = vunpack.c.h.b16 %v12787
  %v12998 = vunpack.c.l.b16 %v12788
  %v12999 = vunpack.c.l.b16 %v12789
  %v13000 = vunpack.c.h.b16 %v12788
  %v13001 = vunpack.c.h.b16 %v12789
  %v13002 = vunpack.c.l.b16 %v12790
  %v13003 = vunpack.c.l.b16 %v12791
  %v13004 = vunpack.c.h.b16 %v12790
  %v13005 = vunpack.c.h.b16 %v12791
  %v13006 = vunpack.c.l.b16 %v12792
  %v13007 = vunpack.c.l.b16 %v12793
  %v13008 = vunpack.c.h.b16 %v12792
  %v13009 = vunpack.c.h.b16 %v12793
  %v13010 = vpack.c.b16 %v12867, %v12866
  %v13011 = vpack.c.b16 %v12869, %v12868
  %v13012 = vpack.c.b16 %v12871, %v12870
  %v13013 = vpack.c.b16 %v12873, %v12872
  %v13014 = vpack.c.b16 %v12875, %v12874
  %v13015 = vpack.c.b16 %v12877, %v12876
  %v13016 = vpack.c.b16 %v12879, %v12878
  %v13017 = vpack.c.b16 %v12881, %v12880
  %v13018 = vpack.c.b16 %v12883, %v12882
  %v13019 = vpack.c.b16 %v12885, %v12884
  %v13020 = vpack.c.b16 %v12887, %v12886
  %v13021 = vpack.c.b16 %v12889, %v12888
  %v13022 = vpack.c.b16 %v12891, %v12890
  %v13023 = vpack.c.b16 %v12893, %v12892
  %v13024 = vpack.c.b16 %v12895, %v12894
  %v13025 = vpack.c.b16 %v12897, %v12896
  %v13026 = vpack.c.b16 %v12899, %v12898
  %v13027 = vpack.c.b16 %v12901, %v12900
  %v13028 = vpack.c.b16 %v12903, %v12902
  %v13029 = vpack.c.b16 %v12905, %v12904
  %v13030 = vpack.c.b16 %v12907, %v12906
  %v13031 = vpack.c.b16 %v12909, %v12908
  %v13032 = vpack.c.b16 %v12911, %v12910
  %v13033 = vpack.c.b16 %v12913, %v12912
  %v13034 = vpack.c.b16 %v12915, %v12914
  %v13035 = vpack.c.b16 %v12917, %v12916
  %v13036 = vpack.c.b16 %v12919, %v12918
  %v13037 = vpack.c.b16 %v12921, %v12920
  %v13038 = vpack.c.b16 %v12923, %v12922
  %v13039 = vpack.c.b16 %v12925, %v12924
  %v13040 = vpack.c.b16 %v12927, %v12926
  %v13041 = vpack.c.b16 %v12929, %v12928
  %v13042 = vpack.c.b16 %v12931, %v12930
  %v13043 = vpack.c.b16 %v12933, %v12932
  %v13044 = vpack.c.b16 %v12935, %v12934
  %v13045 = vpack.c.b16 %v12937, %v12936
  %v13046 = vpack.c.b16 %v12939, %v12938
  %v13047 = vpack.c.b16 %v12941, %v12940
  %v13048 = vpack.c.b16 %v12943, %v12942
  %v13049 = vpack.c.b16 %v12945, %v12944
  %v13050 = vpack.c.b16 %v12947, %v12946
  %v13051 = vpack.c.b16 %v12949, %v12948
  %v13052 = vpack.c.b16 %v12951, %v12950
  %v13053 = vpack.c.b16 %v12953, %v12952
  %v13054 = vpack.c.b16 %v12955, %v12954
  %v13055 = vpack.c.b16 %v12957, %v12956
  %v13056 = vpack.c.b16 %v12959, %v12958
  %v13057 = vpack.c.b16 %v12961, %v12960
  %v13058 = vpack.c.b16 %v12963, %v12962
  %v13059 = vpack.c.b16 %v12965, %v12964
  %v13060 = vpack.c.b16 %v12967, %v12966
  %v13061 = vpack.c.b16 %v12969, %v12968
  %v13062 = vpack.c.b16 %v12971, %v12970
  %v13063 = vpack.c.b16 %v12973, %v12972
  %v13064 = vpack.c.b16 %v12975, %v12974
  %v13065 = vpack.c.b16 %v12977, %v12976
  %v13066 = vpack.c.b16 %v12979, %v12978
  %v13067 = vpack.c.b16 %v12981, %v12980
  %v13068 = vpack.c.b16 %v12983, %v12982
  %v13069 = vpack.c.b16 %v12985, %v12984
  %v13070 = vpack.c.b16 %v12987, %v12986
  %v13071 = vpack.c.b16 %v12989, %v12988
  %v13072 = vpack.c.b16 %v12991, %v12990
  %v13073 = vpack.c.b16 %v12993, %v12992
  %v13074 = vpack.c.b16 %v12995, %v12994
  %v13075 = vpack.c.b16 %v12997, %v12996
  %v13076 = vpack.c.b16 %v12999, %v12998
  %v13077 = vpack.c.b16 %v13001, %v13000
  %v13078 = vpack.c.b16 %v13003, %v13002
  %v13079 = vpack.c.b16 %v13005, %v13004
  %v13080 = vpack.c.b16 %v13007, %v13006
  %v13081 = vpack.c.b16 %v13009, %v13008
  %s13154 = scalar_lea.vmem %s5, 1728
  %13155 = vst.msk [vmem:[%s13154] sm:$0xff] %vm5507, %v13010
  %13156 = vst.msk [vmem:[%s13154 + $0x8] sm:$0xff] %vm5507, %v13011
  %13157 = vst.msk [vmem:[%s13154 + $0x10] sm:$0xff] %vm5507, %v13012
  %13158 = vst.msk [vmem:[%s13154 + $0x18] sm:$0xff] %vm5507, %v13013
  %13159 = vst.msk [vmem:[%s13154 + $0x20] sm:$0xff] %vm5507, %v13014
  %13160 = vst.msk [vmem:[%s13154 + $0x28] sm:$0xff] %vm5507, %v13015
  %13161 = vst.msk [vmem:[%s13154 + $0x30] sm:$0xff] %vm5507, %v13016
  %13162 = vst.msk [vmem:[%s13154 + $0x38] sm:$0xff] %vm5507, %v13017
  %13163 = vst.msk [vmem:[%s13154 + $0x40] sm:$0xff] %vm5507, %v13018
  %13164 = vst.msk [vmem:[%s13154 + $0x48] sm:$0xff] %vm5507, %v13019
  %13165 = vst.msk [vmem:[%s13154 + $0x50] sm:$0xff] %vm5507, %v13020
  %13166 = vst.msk [vmem:[%s13154 + $0x58] sm:$0xff] %vm5507, %v13021
  %13167 = vst.msk [vmem:[%s13154 + $0x60] sm:$0xff] %vm5507, %v13022
  %13168 = vst.msk [vmem:[%s13154 + $0x68] sm:$0xff] %vm5507, %v13023
  %13169 = vst.msk [vmem:[%s13154 + $0x70] sm:$0xff] %vm5507, %v13024
  %13170 = vst.msk [vmem:[%s13154 + $0x78] sm:$0xff] %vm5507, %v13025
  %13171 = vst.msk [vmem:[%s13154 + $0x80] sm:$0xff] %vm5507, %v13026
  %13172 = vst.msk [vmem:[%s13154 + $0x88] sm:$0xff] %vm5507, %v13027
  %13173 = vst.msk [vmem:[%s13154 + $0x90] sm:$0xff] %vm5507, %v13028
  %13174 = vst.msk [vmem:[%s13154 + $0x98] sm:$0xff] %vm5507, %v13029
  %13175 = vst.msk [vmem:[%s13154 + $0xa0] sm:$0xff] %vm5507, %v13030
  %13176 = vst.msk [vmem:[%s13154 + $0xa8] sm:$0xff] %vm5507, %v13031
  %13177 = vst.msk [vmem:[%s13154 + $0xb0] sm:$0xff] %vm5507, %v13032
  %13178 = vst.msk [vmem:[%s13154 + $0xb8] sm:$0xff] %vm5507, %v13033
  %13179 = vst.msk [vmem:[%s13154 + $0xc0] sm:$0xff] %vm5507, %v13034
  %13180 = vst.msk [vmem:[%s13154 + $0xc8] sm:$0xff] %vm5507, %v13035
  %13181 = vst.msk [vmem:[%s13154 + $0xd0] sm:$0xff] %vm5507, %v13036
  %13182 = vst.msk [vmem:[%s13154 + $0xd8] sm:$0xff] %vm5507, %v13037
  %13183 = vst.msk [vmem:[%s13154 + $0xe0] sm:$0xff] %vm5507, %v13038
  %13184 = vst.msk [vmem:[%s13154 + $0xe8] sm:$0xff] %vm5507, %v13039
  %13185 = vst.msk [vmem:[%s13154 + $0xf0] sm:$0xff] %vm5507, %v13040
  %13186 = vst.msk [vmem:[%s13154 + $0xf8] sm:$0xff] %vm5507, %v13041
  %13187 = vst.msk [vmem:[%s13154 + $0x100] sm:$0xff] %vm5507, %v13042
  %13188 = vst.msk [vmem:[%s13154 + $0x108] sm:$0xff] %vm5507, %v13043
  %13189 = vst.msk [vmem:[%s13154 + $0x110] sm:$0xff] %vm5507, %v13044
  %13190 = vst.msk [vmem:[%s13154 + $0x118] sm:$0xff] %vm5507, %v13045
  %13191 = vst.msk [vmem:[%s13154 + $0x120] sm:$0xff] %vm5507, %v13046
  %13192 = vst.msk [vmem:[%s13154 + $0x128] sm:$0xff] %vm5507, %v13047
  %13193 = vst.msk [vmem:[%s13154 + $0x130] sm:$0xff] %vm5507, %v13048
  %13194 = vst.msk [vmem:[%s13154 + $0x138] sm:$0xff] %vm5507, %v13049
  %13195 = vst.msk [vmem:[%s13154 + $0x140] sm:$0xff] %vm5507, %v13050
  %13196 = vst.msk [vmem:[%s13154 + $0x148] sm:$0xff] %vm5507, %v13051
  %13197 = vst.msk [vmem:[%s13154 + $0x150] sm:$0xff] %vm5507, %v13052
  %13198 = vst.msk [vmem:[%s13154 + $0x158] sm:$0xff] %vm5507, %v13053
  %13199 = vst.msk [vmem:[%s13154 + $0x160] sm:$0xff] %vm5507, %v13054
  %13200 = vst.msk [vmem:[%s13154 + $0x168] sm:$0xff] %vm5507, %v13055
  %13201 = vst.msk [vmem:[%s13154 + $0x170] sm:$0xff] %vm5507, %v13056
  %13202 = vst.msk [vmem:[%s13154 + $0x178] sm:$0xff] %vm5507, %v13057
  %13203 = vst.msk [vmem:[%s13154 + $0x180] sm:$0xff] %vm5507, %v13058
  %13204 = vst.msk [vmem:[%s13154 + $0x188] sm:$0xff] %vm5507, %v13059
  %13205 = vst.msk [vmem:[%s13154 + $0x190] sm:$0xff] %vm5507, %v13060
  %13206 = vst.msk [vmem:[%s13154 + $0x198] sm:$0xff] %vm5507, %v13061
  %13207 = vst.msk [vmem:[%s13154 + $0x1a0] sm:$0xff] %vm5507, %v13062
  %13208 = vst.msk [vmem:[%s13154 + $0x1a8] sm:$0xff] %vm5507, %v13063
  %13209 = vst.msk [vmem:[%s13154 + $0x1b0] sm:$0xff] %vm5507, %v13064
  %13210 = vst.msk [vmem:[%s13154 + $0x1b8] sm:$0xff] %vm5507, %v13065
  %13211 = vst.msk [vmem:[%s13154 + $0x1c0] sm:$0xff] %vm5507, %v13066
  %13212 = vst.msk [vmem:[%s13154 + $0x1c8] sm:$0xff] %vm5507, %v13067
  %13213 = vst.msk [vmem:[%s13154 + $0x1d0] sm:$0xff] %vm5507, %v13068
  %13214 = vst.msk [vmem:[%s13154 + $0x1d8] sm:$0xff] %vm5507, %v13069
  %13215 = vst.msk [vmem:[%s13154 + $0x1e0] sm:$0xff] %vm5507, %v13070
  %13216 = vst.msk [vmem:[%s13154 + $0x1e8] sm:$0xff] %vm5507, %v13071
  %13217 = vst.msk [vmem:[%s13154 + $0x1f0] sm:$0xff] %vm5507, %v13072
  %13218 = vst.msk [vmem:[%s13154 + $0x1f8] sm:$0xff] %vm5507, %v13073
  %13219 = vst.msk [vmem:[%s13154 + $0x200] sm:$0xff] %vm5507, %v13074
  %13220 = vst.msk [vmem:[%s13154 + $0x208] sm:$0xff] %vm5507, %v13075
  %13221 = vst.msk [vmem:[%s13154 + $0x210] sm:$0xff] %vm5507, %v13076
  %13222 = vst.msk [vmem:[%s13154 + $0x218] sm:$0xff] %vm5507, %v13077
  %13223 = vst.msk [vmem:[%s13154 + $0x220] sm:$0xff] %vm5507, %v13078
  %13224 = vst.msk [vmem:[%s13154 + $0x228] sm:$0xff] %vm5507, %v13079
  %13225 = vst.msk [vmem:[%s13154 + $0x230] sm:$0xff] %vm5507, %v13080
  %13226 = vst.msk [vmem:[%s13154 + $0x238] sm:$0xff] %vm5507, %v13081
  // Predicated region
  $region22: #{tpu_custom_call.1} parent=0 // pred_check
    _
  $region23: #{tpu_custom_call.1} parent=0 // pred_check_branch
    %13228 = sbr.rel (0) target = $region25
  $region24: #{tpu_custom_call.1} parent=0 // pred_region
    _
  $region25: #{tpu_custom_call.1} parent=0 // pred_fallthru
    _
  // Predicated region
  $region26: #{tpu_custom_call.1} parent=0 // pred_check
    _
  $region27: #{tpu_custom_call.1} parent=0 // pred_check_branch
    %13230 = sbr.rel (0) target = $region29
  $region28: #{tpu_custom_call.1} parent=0 // pred_region
    _
  $region29: #{tpu_custom_call.1} parent=0 // pred_fallthru
    _

</llo_original>
